<compile_context>
chip_gen: v6e
topology: v6e:2x2x1
jax: 0.10.0
libtpu: 0.0.40
codegen_flags: <defaults>
</compile_context>

<pallas_src>
import jax
import jax.numpy as jnp
from jax.experimental import pallas as pl
from jax.experimental.pallas import tpu as pltpu


_TAP9 = [(kh, kw) for kh in range(3) for kw in range(3)]
_TAP8 = [(kh, kw) for (kh, kw) in _TAP9 if not (kh == 1 and kw == 1)]


def _vmem_limit_bytes():
    try:
        cap = int(pltpu.get_tpu_info().vmem_capacity_bytes)
    except Exception:
        cap = 128 * 1024 * 1024
    # v7x: 64 MiB physical -> 32 MiB budget; v5e/v6e: 128 MiB -> 64 MiB budget.
    return min(64 * 1024 * 1024, cap // 2)


def _pick_strip(H, W, C, n_taps, budget_bytes=2 * 1024 * 1024):
    """Largest divisor of H whose (strip*W, n_taps*C) bf16 slab fits the budget."""
    per_row = W * n_taps * C * 2
    max_rows = max(1, budget_bytes // per_row)
    best = 1
    for d in range(1, H + 1):
        if H % d == 0 and d <= max_rows:
            best = d
    return best


# ----------------------------- kernel factories -----------------------------

def _make_branches_kernel(rates, rmax, H, W, C, Cq, strip_h):
    """All dilated branches fused: per-branch K=8C slab matmul + shared center
    tap matmul -> bias -> ReLU -> lane-dense channel-concatenated store."""
    M = strip_h * W
    n_strips = H // strip_h

    def kernel(xp_ref, wb_ref, wc_ref, bb_ref, o_ref, slab_ref, acc_ref):
        # xp_ref : (1, H+2*rmax, W+2*rmax, C) bf16  reflect-padded activations
        # wb_ref : (R, 8*C, Cq)                bf16  stacked non-center taps
        # wc_ref : (C, C)                      bf16  concatenated center taps
        # bb_ref : (1, C)                      f32   concatenated branch biases
        # o_ref  : (1, H, W, C)                bf16  channel-concat branch output
        # slab_ref: (M, 8*C) bf16 scratch ; acc_ref: (M, C) f32 scratch
        for s in range(n_strips):
            hs = s * strip_h
            for i, r in enumerate(rates):
                off = rmax - r
                for t, (kh, kw) in enumerate(_TAP8):
                    h0 = off + kh * r + hs
                    w0 = off + kw * r
                    slab_ref[:, t * C:(t + 1) * C] = (
                        xp_ref[0, h0:h0 + strip_h, w0:w0 + W, :].reshape(M, C))
                acc_ref[:, i * Cq:(i + 1) * Cq] = jnp.dot(
                    slab_ref[...], wb_ref[i], preferred_element_type=jnp.float32)
            # Center tap window is identical for every rate -> one (C,C) matmul.
            ctap = xp_ref[0, rmax + hs:rmax + hs + strip_h,
                          rmax:rmax + W, :].reshape(M, C)
            full = acc_ref[...] + jnp.dot(ctap, wc_ref[...],
                                          preferred_element_type=jnp.float32)
            full = full + bb_ref[...]
            o_ref[0, hs:hs + strip_h, :, :] = (
                jnp.maximum(full, 0.0).astype(o_ref.dtype).reshape(strip_h, W, C))

    return kernel


def _make_tail_kernel(H, W, C, strip_h):
    """fuse conv + gate conv (K=9C slab matmuls) + my_layer_norm + sigmoid +
    blend, fully fused; pad-1 reflection of mid rebuilt in-kernel."""
    HW = H * W
    M = strip_h * W
    n_strips = H // strip_h

    def kernel(xp1_ref, mid_ref, x_ref, wf_ref, bf_ref, wg_ref, bg_ref, o_ref,
               mp_ref, fslab_ref, gslab_ref, fuse_ref, gate_ref):
        # xp1_ref : (1, H+2, W+2, C) bf16  reflect-pad(1) window of x (gate input)
        # mid_ref : (1, H, W, C)     bf16  concatenated branch output (unpadded)
        # x_ref   : (1, H, W, C)     f32   original activations (blend)
        # wf/wg   : (9*C, C) bf16 ; bf/bg: (1, C) f32
        # o_ref   : (1, H, W, C)     f32
        # scratch : mp (H+2,W+2,C) bf16, two (M,9C) bf16 slabs, two (HW,C) f32

        # In-kernel reflect-pad(1) of mid (avoids an extra HBM round trip).
        m = mid_ref[0]
        mp_ref[1:H + 1, 1:W + 1, :] = m
        mp_ref[0:1, 1:W + 1, :] = m[1:2]
        mp_ref[H + 1:H + 2, 1:W + 1, :] = m[H - 2:H - 1]
        mp_ref[:, 0:1, :] = mp_ref[:, 2:3, :]
        mp_ref[:, W + 1:W + 2, :] = mp_ref[:, W - 1:W, :]

        for s in range(n_strips):
            hs = s * strip_h
            for t, (kh, kw) in enumerate(_TAP9):
                fslab_ref[:, t * C:(t + 1) * C] = (
                    mp_ref[kh + hs:kh + hs + strip_h, kw:kw + W, :].reshape(M, C))
                gslab_ref[:, t * C:(t + 1) * C] = (
                    xp1_ref[0, kh + hs:kh + hs + strip_h,
                            kw:kw + W, :].reshape(M, C))
            fuse_ref[hs * W:hs * W + M, :] = (
                jnp.dot(fslab_ref[...], wf_ref[...],
                        preferred_element_type=jnp.float32) + bf_ref[...])
            gate_ref[hs * W:hs * W + M, :] = (
                jnp.dot(gslab_ref[...], wg_ref[...],
                        preferred_element_type=jnp.float32) + bg_ref[...])

        # my_layer_norm: per-(n, c) stats over spatial dims; torch.std is
        # unbiased (HW - 1) and epsilon is added to std (not variance).
        gate = gate_ref[...]
        mean = jnp.sum(gate, axis=0, keepdims=True) * (1.0 / HW)
        diff = gate - mean
        var = jnp.sum(diff * diff, axis=0, keepdims=True) * (1.0 / (HW - 1))
        std = jnp.sqrt(var) + 1e-9
        mask = jax.nn.sigmoid(5.0 * (2.0 * diff / std - 1.0))

        x = x_ref[0].reshape(HW, C)
        out = x * (1.0 - mask) + fuse_ref[...] * mask
        o_ref[0] = out.reshape(H, W, C).astype(o_ref.dtype)

    return kernel


# --------------------------------- wrapper ----------------------------------

def init_params(key, dim, rates):
    params = {}
    keys = jax.random.split(key, 2 * len(rates) + 4)
    ki = 0
    for i, _ in enumerate(rates):
        params[f'block{i:02d}_w'] = 0.1 * jax.random.normal(
            keys[ki], (dim // 4, dim, 3, 3), jnp.float32); ki += 1
        params[f'block{i:02d}_b'] = 0.1 * jax.random.normal(
            keys[ki], (dim // 4,), jnp.float32); ki += 1
    params['fuse_w'] = 0.1 * jax.random.normal(keys[ki], (dim, dim, 3, 3), jnp.float32); ki += 1
    params['fuse_b'] = 0.1 * jax.random.normal(keys[ki], (dim,), jnp.float32); ki += 1
    params['gate_w'] = 0.1 * jax.random.normal(keys[ki], (dim, dim, 3, 3), jnp.float32); ki += 1
    params['gate_b'] = 0.1 * jax.random.normal(keys[ki], (dim,), jnp.float32); ki += 1
    return params


def _stack_taps(w_oihw, taps):
    """OIHW conv weight -> (len(taps)*Cin, Cout) stacked per-tap matrices."""
    mats = [jnp.transpose(w_oihw[:, :, kh, kw], (1, 0)) for (kh, kw) in taps]
    return jnp.concatenate(mats, axis=0)


def aot_block(x_nchw, params, rates):
    rates = tuple(rates)
    N, C, H, W = x_nchw.shape
    R = len(rates)
    Cq = C // 4
    assert R * Cq == C, "concat of branches must reproduce `dim` channels"
    HW = H * W
    rmax = max(rates)
    assert rmax <= H - 1 and rmax <= W - 1, "reflection pad requires rate < H, W"
    assert H >= 2 and W >= 2
    Hp, Wp = H + 2 * rmax, W + 2 * rmax
    vmem_limit = _vmem_limit_bytes()

    # TODO(synk): drop these NCHW<->NHWC transposes if the surrounding model
    # can produce/consume NHWC directly.
    x = jnp.transpose(x_nchw, (0, 2, 3, 1)).astype(jnp.float32)       # NHWC

    # Single reflection pad by max(rates); each branch's reflect-pad(r) (and
    # the pad-1 window for the gate conv) is the central sub-window of this.
    xp = jnp.pad(x, ((0, 0), (rmax, rmax), (rmax, rmax), (0, 0)),
                 mode='reflect').astype(jnp.bfloat16)

    # Compact branch weights: non-center taps stacked along K -> (R, 8C, Cq);
    # the R center taps (identical input window for every rate) concatenated
    # along the output channels -> (C, C).
    wb = jnp.stack([_stack_taps(params[f'block{i:02d}_w'], _TAP8)
                    for i in range(R)], axis=0).astype(jnp.bfloat16)   # (R,8C,Cq)
    wc = jnp.concatenate(
        [jnp.transpose(params[f'block{i:02d}_w'][:, :, 1, 1], (1, 0))
         for i in range(R)], axis=1).astype(jnp.bfloat16)              # (C, C)
    bb = jnp.concatenate([params[f'block{i:02d}_b'] for i in range(R)]
                         ).reshape(1, C).astype(jnp.float32)

    strip_b = _pick_strip(H, W, C, 8)
    branches_kernel = _make_branches_kernel(rates, rmax, H, W, C, Cq, strip_b)
    mid = pl.pallas_call(
        branches_kernel,
        out_shape=jax.ShapeDtypeStruct((N, H, W, C), jnp.bfloat16),
        grid=(N,),
        in_specs=[
            pl.BlockSpec((1, Hp, Wp, C), lambda n: (n, 0, 0, 0)),
            pl.BlockSpec((R, 8 * C, Cq), lambda n: (0, 0, 0)),
            pl.BlockSpec((C, C), lambda n: (0, 0)),
            pl.BlockSpec((1, C), lambda n: (0, 0)),
        ],
        out_specs=pl.BlockSpec((1, H, W, C), lambda n: (n, 0, 0, 0)),
        scratch_shapes=[pltpu.VMEM((strip_b * W, 8 * C), jnp.bfloat16),
                        pltpu.VMEM((strip_b * W, C), jnp.float32)],
        compiler_params=pltpu.CompilerParams(
            dimension_semantics=("parallel",),
            vmem_limit_bytes=vmem_limit),
        cost_estimate=pl.CostEstimate(
            flops=int(2 * N * HW * 9 * C * C),
            transcendentals=0,
            bytes_accessed=int(2 * N * Hp * Wp * C + 2 * N * HW * C
                               + 2 * (R * 8 * C * Cq + C * C) + 4 * C)),
    )(xp, wb, wc, bb)

    # Gate conv only needs the central pad-1 window of the padded input.
    xp1 = xp[:, rmax - 1:rmax + H + 1, rmax - 1:rmax + W + 1, :]

    wf = _stack_taps(params['fuse_w'], _TAP9).astype(jnp.bfloat16)     # (9C, C)
    bf = params['fuse_b'].reshape(1, C).astype(jnp.float32)
    wg = _stack_taps(params['gate_w'], _TAP9).astype(jnp.bfloat16)     # (9C, C)
    bg = params['gate_b'].reshape(1, C).astype(jnp.float32)

    strip_t = _pick_strip(H, W, C, 9)
    tail_kernel = _make_tail_kernel(H, W, C, strip_t)
    out = pl.pallas_call(
        tail_kernel,
        out_shape=jax.ShapeDtypeStruct((N, H, W, C), jnp.float32),
        grid=(N,),
        in_specs=[
            pl.BlockSpec((1, H + 2, W + 2, C), lambda n: (n, 0, 0, 0)),
            pl.BlockSpec((1, H, W, C), lambda n: (n, 0, 0, 0)),
            pl.BlockSpec((1, H, W, C), lambda n: (n, 0, 0, 0)),
            pl.BlockSpec((9 * C, C), lambda n: (0, 0)),
            pl.BlockSpec((1, C), lambda n: (0, 0)),
            pl.BlockSpec((9 * C, C), lambda n: (0, 0)),
            pl.BlockSpec((1, C), lambda n: (0, 0)),
        ],
        out_specs=pl.BlockSpec((1, H, W, C), lambda n: (n, 0, 0, 0)),
        scratch_shapes=[
            pltpu.VMEM((H + 2, W + 2, C), jnp.bfloat16),    # reflect-pad(1) of mid
            pltpu.VMEM((strip_t * W, 9 * C), jnp.bfloat16), # fuse slab
            pltpu.VMEM((strip_t * W, 9 * C), jnp.bfloat16), # gate slab
            pltpu.VMEM((HW, C), jnp.float32),               # fuse result
            pltpu.VMEM((HW, C), jnp.float32),               # gate result
        ],
        compiler_params=pltpu.CompilerParams(
            dimension_semantics=("parallel",),
            vmem_limit_bytes=vmem_limit),
        cost_estimate=pl.CostEstimate(
            flops=int(4 * N * HW * 9 * C * C),
            transcendentals=int(N * HW * C),
            bytes_accessed=int(2 * N * (H + 2) * (W + 2) * C    # xp1
                               + 2 * N * HW * C                 # mid
                               + 4 * N * HW * C                 # x
                               + 4 * N * HW * C                 # out
                               + 2 * 2 * 9 * C * C + 8 * C)),
    )(xp1, mid, x, wf, bf, wg, bg)

    return jnp.transpose(out, (0, 3, 1, 2))                            # NCHW


if __name__ == "__main__":
    N, dim, H, W = 2, 16, 16, 16
    rates = [1, 2, 4, 8]          # rmax=8 < H, W (reflect-pad constraint)

    x = jax.random.normal(jax.random.PRNGKey(0), (N, dim, H, W), jnp.float32)
    params = init_params(jax.random.PRNGKey(1), dim, rates)

    y = aot_block(x, params, rates)
    jax.block_until_ready(y)
    assert y.shape == (N, dim, H, W) and y.dtype == jnp.float32
    assert bool(jnp.all(jnp.isfinite(y)))
    print("KERNEL_OK")
</pallas_src>

<mosaic_0001>
module attributes {stable_mosaic.version = 11 : i64} {
  func.func @kernel(%arg0: i32, %arg1: memref<1x32x32x16xbf16, #tpu.memory_space<vmem>>, %arg2: memref<4x128x4xbf16, #tpu.memory_space<vmem>>, %arg3: memref<16x16xbf16, #tpu.memory_space<vmem>>, %arg4: memref<1x16xf32, #tpu.memory_space<vmem>>, %arg5: memref<1x16x16x16xbf16, #tpu.memory_space<vmem>>, %arg6: memref<256x128xbf16, #tpu.memory_space<vmem>>, %arg7: memref<256x16xf32, #tpu.memory_space<vmem>>) attributes {dimension_semantics = [#tpu.dimension_semantics<parallel>], iteration_bounds = array<i64: 2>, scalar_prefetch = 0 : i64, scratch_operands = 2 : i64, tpu.core_type = #tpu.core_type<tc>, window_params = [{transform_indices = @transform_0, window_bounds = array<i64: 1, 32, 32, 16>}, {pipeline_mode = #tpu.pipeline_mode<synchronous>, transform_indices = @transform_1, window_bounds = array<i64: 4, 128, 4>}, {pipeline_mode = #tpu.pipeline_mode<synchronous>, transform_indices = @transform_2, window_bounds = array<i64: 16, 16>}, {pipeline_mode = #tpu.pipeline_mode<synchronous>, transform_indices = @transform_3, window_bounds = array<i64: 1, 16>}, {transform_indices = @transform_4, window_bounds = array<i64: 1, 16, 16, 16>}]} {
    %c0 = arith.constant 0 : index
    %c7 = arith.constant 7 : index
    %c7_0 = arith.constant 7 : index
    %c0_1 = arith.constant 0 : index
    %0 = vector.load %arg1[%c0, %c7, %c7_0, %c0_1] : memref<1x32x32x16xbf16, #tpu.memory_space<vmem>>, vector<1x16x16x16xbf16>
    %1 = vector.shape_cast %0 : vector<1x16x16x16xbf16> to vector<16x16x16xbf16>
    %2 = vector.shape_cast %1 : vector<16x16x16xbf16> to vector<256x16xbf16>
    %c0_2 = arith.constant 0 : index
    %c0_3 = arith.constant 0 : index
    %3 = vector.load %arg6[%c0_2, %c0_3] : memref<256x128xbf16, #tpu.memory_space<vmem>>, vector<256x16xbf16>
    tpu.vector_store %arg6[%c0_2, %c0_3], %2 {strides = array<i32>} : memref<256x128xbf16, #tpu.memory_space<vmem>>, vector<256x16xbf16>,
    %c0_4 = arith.constant 0 : index
    %c7_5 = arith.constant 7 : index
    %c8 = arith.constant 8 : index
    %c0_6 = arith.constant 0 : index
    %4 = vector.load %arg1[%c0_4, %c7_5, %c8, %c0_6] : memref<1x32x32x16xbf16, #tpu.memory_space<vmem>>, vector<1x16x16x16xbf16>
    %5 = vector.shape_cast %4 : vector<1x16x16x16xbf16> to vector<16x16x16xbf16>
    %6 = vector.shape_cast %5 : vector<16x16x16xbf16> to vector<256x16xbf16>
    %c0_7 = arith.constant 0 : index
    %c16 = arith.constant 16 : index
    %7 = vector.load %arg6[%c0_7, %c16] : memref<256x128xbf16, #tpu.memory_space<vmem>>, vector<256x16xbf16>
    tpu.vector_store %arg6[%c0_7, %c16], %6 {strides = array<i32>} : memref<256x128xbf16, #tpu.memory_space<vmem>>, vector<256x16xbf16>,
    %c0_8 = arith.constant 0 : index
    %c7_9 = arith.constant 7 : index
    %c9 = arith.constant 9 : index
    %c0_10 = arith.constant 0 : index
    %8 = vector.load %arg1[%c0_8, %c7_9, %c9, %c0_10] : memref<1x32x32x16xbf16, #tpu.memory_space<vmem>>, vector<1x16x16x16xbf16>
    %9 = vector.shape_cast %8 : vector<1x16x16x16xbf16> to vector<16x16x16xbf16>
    %10 = vector.shape_cast %9 : vector<16x16x16xbf16> to vector<256x16xbf16>
    %c0_11 = arith.constant 0 : index
    %c32 = arith.constant 32 : index
    %11 = vector.load %arg6[%c0_11, %c32] : memref<256x128xbf16, #tpu.memory_space<vmem>>, vector<256x16xbf16>
    tpu.vector_store %arg6[%c0_11, %c32], %10 {strides = array<i32>} : memref<256x128xbf16, #tpu.memory_space<vmem>>, vector<256x16xbf16>,
    %c0_12 = arith.constant 0 : index
    %c8_13 = arith.constant 8 : index
    %c7_14 = arith.constant 7 : index
    %c0_15 = arith.constant 0 : index
    %12 = vector.load %arg1[%c0_12, %c8_13, %c7_14, %c0_15] : memref<1x32x32x16xbf16, #tpu.memory_space<vmem>>, vector<1x16x16x16xbf16>
    %13 = vector.shape_cast %12 : vector<1x16x16x16xbf16> to vector<16x16x16xbf16>
    %14 = vector.shape_cast %13 : vector<16x16x16xbf16> to vector<256x16xbf16>
    %c0_16 = arith.constant 0 : index
    %c48 = arith.constant 48 : index
    %15 = vector.load %arg6[%c0_16, %c48] : memref<256x128xbf16, #tpu.memory_space<vmem>>, vector<256x16xbf16>
    tpu.vector_store %arg6[%c0_16, %c48], %14 {strides = array<i32>} : memref<256x128xbf16, #tpu.memory_space<vmem>>, vector<256x16xbf16>,
    %c0_17 = arith.constant 0 : index
    %c8_18 = arith.constant 8 : index
    %c9_19 = arith.constant 9 : index
    %c0_20 = arith.constant 0 : index
    %16 = vector.load %arg1[%c0_17, %c8_18, %c9_19, %c0_20] : memref<1x32x32x16xbf16, #tpu.memory_space<vmem>>, vector<1x16x16x16xbf16>
    %17 = vector.shape_cast %16 : vector<1x16x16x16xbf16> to vector<16x16x16xbf16>
    %18 = vector.shape_cast %17 : vector<16x16x16xbf16> to vector<256x16xbf16>
    %c0_21 = arith.constant 0 : index
    %c64 = arith.constant 64 : index
    %19 = vector.load %arg6[%c0_21, %c64] : memref<256x128xbf16, #tpu.memory_space<vmem>>, vector<256x16xbf16>
    tpu.vector_store %arg6[%c0_21, %c64], %18 {strides = array<i32>} : memref<256x128xbf16, #tpu.memory_space<vmem>>, vector<256x16xbf16>,
    %c0_22 = arith.constant 0 : index
    %c9_23 = arith.constant 9 : index
    %c7_24 = arith.constant 7 : index
    %c0_25 = arith.constant 0 : index
    %20 = vector.load %arg1[%c0_22, %c9_23, %c7_24, %c0_25] : memref<1x32x32x16xbf16, #tpu.memory_space<vmem>>, vector<1x16x16x16xbf16>
    %21 = vector.shape_cast %20 : vector<1x16x16x16xbf16> to vector<16x16x16xbf16>
    %22 = vector.shape_cast %21 : vector<16x16x16xbf16> to vector<256x16xbf16>
    %c0_26 = arith.constant 0 : index
    %c80 = arith.constant 80 : index
    %23 = vector.load %arg6[%c0_26, %c80] : memref<256x128xbf16, #tpu.memory_space<vmem>>, vector<256x16xbf16>
    tpu.vector_store %arg6[%c0_26, %c80], %22 {strides = array<i32>} : memref<256x128xbf16, #tpu.memory_space<vmem>>, vector<256x16xbf16>,
    %c0_27 = arith.constant 0 : index
    %c9_28 = arith.constant 9 : index
    %c8_29 = arith.constant 8 : index
    %c0_30 = arith.constant 0 : index
    %24 = vector.load %arg1[%c0_27, %c9_28, %c8_29, %c0_30] : memref<1x32x32x16xbf16, #tpu.memory_space<vmem>>, vector<1x16x16x16xbf16>
    %25 = vector.shape_cast %24 : vector<1x16x16x16xbf16> to vector<16x16x16xbf16>
    %26 = vector.shape_cast %25 : vector<16x16x16xbf16> to vector<256x16xbf16>
    %c0_31 = arith.constant 0 : index
    %c96 = arith.constant 96 : index
    %27 = vector.load %arg6[%c0_31, %c96] : memref<256x128xbf16, #tpu.memory_space<vmem>>, vector<256x16xbf16>
    tpu.vector_store %arg6[%c0_31, %c96], %26 {strides = array<i32>} : memref<256x128xbf16, #tpu.memory_space<vmem>>, vector<256x16xbf16>,
    %c0_32 = arith.constant 0 : index
    %c9_33 = arith.constant 9 : index
    %c9_34 = arith.constant 9 : index
    %c0_35 = arith.constant 0 : index
    %28 = vector.load %arg1[%c0_32, %c9_33, %c9_34, %c0_35] : memref<1x32x32x16xbf16, #tpu.memory_space<vmem>>, vector<1x16x16x16xbf16>
    %29 = vector.shape_cast %28 : vector<1x16x16x16xbf16> to vector<16x16x16xbf16>
    %30 = vector.shape_cast %29 : vector<16x16x16xbf16> to vector<256x16xbf16>
    %c0_36 = arith.constant 0 : index
    %c112 = arith.constant 112 : index
    %31 = vector.load %arg6[%c0_36, %c112] : memref<256x128xbf16, #tpu.memory_space<vmem>>, vector<256x16xbf16>
    tpu.vector_store %arg6[%c0_36, %c112], %30 {strides = array<i32>} : memref<256x128xbf16, #tpu.memory_space<vmem>>, vector<256x16xbf16>,
    %c0_37 = arith.constant 0 : index
    %c0_38 = arith.constant 0 : index
    %32 = vector.load %arg6[%c0_37, %c0_38] : memref<256x128xbf16, #tpu.memory_space<vmem>>, vector<256x128xbf16>
    %c0_39 = arith.constant 0 : index
    %c0_40 = arith.constant 0 : index
    %c0_41 = arith.constant 0 : index
    %33 = vector.load %arg2[%c0_39, %c0_40, %c0_41] : memref<4x128x4xbf16, #tpu.memory_space<vmem>>, vector<1x128x4xbf16>
    %34 = vector.shape_cast %33 : vector<1x128x4xbf16> to vector<128x4xbf16>
    %cst = arith.constant dense<0.000000e+00> : vector<256x4xf32>
    %35 = tpu.matmul %32, %34, %cst {dimension_numbers = #tpu.dot_dimension_numbers<[1], [0], [0], [1], [0, 0, 1, 1], [], []>} : vector<256x128xbf16>, vector<128x4xbf16>, vector<256x4xf32> -> vector<256x4xf32>
    %c0_42 = arith.constant 0 : index
    %c0_43 = arith.constant 0 : index
    %36 = vector.load %arg7[%c0_42, %c0_43] : memref<256x16xf32, #tpu.memory_space<vmem>>, vector<256x4xf32>
    tpu.vector_store %arg7[%c0_42, %c0_43], %35 {strides = array<i32>} : memref<256x16xf32, #tpu.memory_space<vmem>>, vector<256x4xf32>,
    %c0_44 = arith.constant 0 : index
    %c6 = arith.constant 6 : index
    %c6_45 = arith.constant 6 : index
    %c0_46 = arith.constant 0 : index
    %37 = vector.load %arg1[%c0_44, %c6, %c6_45, %c0_46] : memref<1x32x32x16xbf16, #tpu.memory_space<vmem>>, vector<1x16x16x16xbf16>
    %38 = vector.shape_cast %37 : vector<1x16x16x16xbf16> to vector<16x16x16xbf16>
    %39 = vector.shape_cast %38 : vector<16x16x16xbf16> to vector<256x16xbf16>
    %c0_47 = arith.constant 0 : index
    %c0_48 = arith.constant 0 : index
    %40 = vector.load %arg6[%c0_47, %c0_48] : memref<256x128xbf16, #tpu.memory_space<vmem>>, vector<256x16xbf16>
    tpu.vector_store %arg6[%c0_47, %c0_48], %39 {strides = array<i32>} : memref<256x128xbf16, #tpu.memory_space<vmem>>, vector<256x16xbf16>,
    %c0_49 = arith.constant 0 : index
    %c6_50 = arith.constant 6 : index
    %c8_51 = arith.constant 8 : index
    %c0_52 = arith.constant 0 : index
    %41 = vector.load %arg1[%c0_49, %c6_50, %c8_51, %c0_52] : memref<1x32x32x16xbf16, #tpu.memory_space<vmem>>, vector<1x16x16x16xbf16>
    %42 = vector.shape_cast %41 : vector<1x16x16x16xbf16> to vector<16x16x16xbf16>
    %43 = vector.shape_cast %42 : vector<16x16x16xbf16> to vector<256x16xbf16>
    %c0_53 = arith.constant 0 : index
    %c16_54 = arith.constant 16 : index
    %44 = vector.load %arg6[%c0_53, %c16_54] : memref<256x128xbf16, #tpu.memory_space<vmem>>, vector<256x16xbf16>
    tpu.vector_store %arg6[%c0_53, %c16_54], %43 {strides = array<i32>} : memref<256x128xbf16, #tpu.memory_space<vmem>>, vector<256x16xbf16>,
    %c0_55 = arith.constant 0 : index
    %c6_56 = arith.constant 6 : index
    %c10 = arith.constant 10 : index
    %c0_57 = arith.constant 0 : index
    %45 = vector.load %arg1[%c0_55, %c6_56, %c10, %c0_57] : memref<1x32x32x16xbf16, #tpu.memory_space<vmem>>, vector<1x16x16x16xbf16>
    %46 = vector.shape_cast %45 : vector<1x16x16x16xbf16> to vector<16x16x16xbf16>
    %47 = vector.shape_cast %46 : vector<16x16x16xbf16> to vector<256x16xbf16>
    %c0_58 = arith.constant 0 : index
    %c32_59 = arith.constant 32 : index
    %48 = vector.load %arg6[%c0_58, %c32_59] : memref<256x128xbf16, #tpu.memory_space<vmem>>, vector<256x16xbf16>
    tpu.vector_store %arg6[%c0_58, %c32_59], %47 {strides = array<i32>} : memref<256x128xbf16, #tpu.memory_space<vmem>>, vector<256x16xbf16>,
    %c0_60 = arith.constant 0 : index
    %c8_61 = arith.constant 8 : index
    %c6_62 = arith.constant 6 : index
    %c0_63 = arith.constant 0 : index
    %49 = vector.load %arg1[%c0_60, %c8_61, %c6_62, %c0_63] : memref<1x32x32x16xbf16, #tpu.memory_space<vmem>>, vector<1x16x16x16xbf16>
    %50 = vector.shape_cast %49 : vector<1x16x16x16xbf16> to vector<16x16x16xbf16>
    %51 = vector.shape_cast %50 : vector<16x16x16xbf16> to vector<256x16xbf16>
    %c0_64 = arith.constant 0 : index
    %c48_65 = arith.constant 48 : index
    %52 = vector.load %arg6[%c0_64, %c48_65] : memref<256x128xbf16, #tpu.memory_space<vmem>>, vector<256x16xbf16>
    tpu.vector_store %arg6[%c0_64, %c48_65], %51 {strides = array<i32>} : memref<256x128xbf16, #tpu.memory_space<vmem>>, vector<256x16xbf16>,
    %c0_66 = arith.constant 0 : index
    %c8_67 = arith.constant 8 : index
    %c10_68 = arith.constant 10 : index
    %c0_69 = arith.constant 0 : index
    %53 = vector.load %arg1[%c0_66, %c8_67, %c10_68, %c0_69] : memref<1x32x32x16xbf16, #tpu.memory_space<vmem>>, vector<1x16x16x16xbf16>
    %54 = vector.shape_cast %53 : vector<1x16x16x16xbf16> to vector<16x16x16xbf16>
    %55 = vector.shape_cast %54 : vector<16x16x16xbf16> to vector<256x16xbf16>
    %c0_70 = arith.constant 0 : index
    %c64_71 = arith.constant 64 : index
    %56 = vector.load %arg6[%c0_70, %c64_71] : memref<256x128xbf16, #tpu.memory_space<vmem>>, vector<256x16xbf16>
    tpu.vector_store %arg6[%c0_70, %c64_71], %55 {strides = array<i32>} : memref<256x128xbf16, #tpu.memory_space<vmem>>, vector<256x16xbf16>,
    %c0_72 = arith.constant 0 : index
    %c10_73 = arith.constant 10 : index
    %c6_74 = arith.constant 6 : index
    %c0_75 = arith.constant 0 : index
    %57 = vector.load %arg1[%c0_72, %c10_73, %c6_74, %c0_75] : memref<1x32x32x16xbf16, #tpu.memory_space<vmem>>, vector<1x16x16x16xbf16>
    %58 = vector.shape_cast %57 : vector<1x16x16x16xbf16> to vector<16x16x16xbf16>
    %59 = vector.shape_cast %58 : vector<16x16x16xbf16> to vector<256x16xbf16>
    %c0_76 = arith.constant 0 : index
    %c80_77 = arith.constant 80 : index
    %60 = vector.load %arg6[%c0_76, %c80_77] : memref<256x128xbf16, #tpu.memory_space<vmem>>, vector<256x16xbf16>
    tpu.vector_store %arg6[%c0_76, %c80_77], %59 {strides = array<i32>} : memref<256x128xbf16, #tpu.memory_space<vmem>>, vector<256x16xbf16>,
    %c0_78 = arith.constant 0 : index
    %c10_79 = arith.constant 10 : index
    %c8_80 = arith.constant 8 : index
    %c0_81 = arith.constant 0 : index
    %61 = vector.load %arg1[%c0_78, %c10_79, %c8_80, %c0_81] : memref<1x32x32x16xbf16, #tpu.memory_space<vmem>>, vector<1x16x16x16xbf16>
    %62 = vector.shape_cast %61 : vector<1x16x16x16xbf16> to vector<16x16x16xbf16>
    %63 = vector.shape_cast %62 : vector<16x16x16xbf16> to vector<256x16xbf16>
    %c0_82 = arith.constant 0 : index
    %c96_83 = arith.constant 96 : index
    %64 = vector.load %arg6[%c0_82, %c96_83] : memref<256x128xbf16, #tpu.memory_space<vmem>>, vector<256x16xbf16>
    tpu.vector_store %arg6[%c0_82, %c96_83], %63 {strides = array<i32>} : memref<256x128xbf16, #tpu.memory_space<vmem>>, vector<256x16xbf16>,
    %c0_84 = arith.constant 0 : index
    %c10_85 = arith.constant 10 : index
    %c10_86 = arith.constant 10 : index
    %c0_87 = arith.constant 0 : index
    %65 = vector.load %arg1[%c0_84, %c10_85, %c10_86, %c0_87] : memref<1x32x32x16xbf16, #tpu.memory_space<vmem>>, vector<1x16x16x16xbf16>
    %66 = vector.shape_cast %65 : vector<1x16x16x16xbf16> to vector<16x16x16xbf16>
    %67 = vector.shape_cast %66 : vector<16x16x16xbf16> to vector<256x16xbf16>
    %c0_88 = arith.constant 0 : index
    %c112_89 = arith.constant 112 : index
    %68 = vector.load %arg6[%c0_88, %c112_89] : memref<256x128xbf16, #tpu.memory_space<vmem>>, vector<256x16xbf16>
    tpu.vector_store %arg6[%c0_88, %c112_89], %67 {strides = array<i32>} : memref<256x128xbf16, #tpu.memory_space<vmem>>, vector<256x16xbf16>,
    %c0_90 = arith.constant 0 : index
    %c0_91 = arith.constant 0 : index
    %69 = vector.load %arg6[%c0_90, %c0_91] : memref<256x128xbf16, #tpu.memory_space<vmem>>, vector<256x128xbf16>
    %c1 = arith.constant 1 : index
    %c0_92 = arith.constant 0 : index
    %c0_93 = arith.constant 0 : index
    %70 = vector.load %arg2[%c1, %c0_92, %c0_93] : memref<4x128x4xbf16, #tpu.memory_space<vmem>>, vector<1x128x4xbf16>
    %71 = vector.shape_cast %70 : vector<1x128x4xbf16> to vector<128x4xbf16>
    %cst_94 = arith.constant dense<0.000000e+00> : vector<256x4xf32>
    %72 = tpu.matmul %69, %71, %cst_94 {dimension_numbers = #tpu.dot_dimension_numbers<[1], [0], [0], [1], [0, 0, 1, 1], [], []>} : vector<256x128xbf16>, vector<128x4xbf16>, vector<256x4xf32> -> vector<256x4xf32>
    %c0_95 = arith.constant 0 : index
    %c4 = arith.constant 4 : index
    %73 = vector.load %arg7[%c0_95, %c4] : memref<256x16xf32, #tpu.memory_space<vmem>>, vector<256x4xf32>
    tpu.vector_store %arg7[%c0_95, %c4], %72 {strides = array<i32>} : memref<256x16xf32, #tpu.memory_space<vmem>>, vector<256x4xf32>,
    %c0_96 = arith.constant 0 : index
    %c4_97 = arith.constant 4 : index
    %c4_98 = arith.constant 4 : index
    %c0_99 = arith.constant 0 : index
    %74 = vector.load %arg1[%c0_96, %c4_97, %c4_98, %c0_99] : memref<1x32x32x16xbf16, #tpu.memory_space<vmem>>, vector<1x16x16x16xbf16>
    %75 = vector.shape_cast %74 : vector<1x16x16x16xbf16> to vector<16x16x16xbf16>
    %76 = vector.shape_cast %75 : vector<16x16x16xbf16> to vector<256x16xbf16>
    %c0_100 = arith.constant 0 : index
    %c0_101 = arith.constant 0 : index
    %77 = vector.load %arg6[%c0_100, %c0_101] : memref<256x128xbf16, #tpu.memory_space<vmem>>, vector<256x16xbf16>
    tpu.vector_store %arg6[%c0_100, %c0_101], %76 {strides = array<i32>} : memref<256x128xbf16, #tpu.memory_space<vmem>>, vector<256x16xbf16>,
    %c0_102 = arith.constant 0 : index
    %c4_103 = arith.constant 4 : index
    %c8_104 = arith.constant 8 : index
    %c0_105 = arith.constant 0 : index
    %78 = vector.load %arg1[%c0_102, %c4_103, %c8_104, %c0_105] : memref<1x32x32x16xbf16, #tpu.memory_space<vmem>>, vector<1x16x16x16xbf16>
    %79 = vector.shape_cast %78 : vector<1x16x16x16xbf16> to vector<16x16x16xbf16>
    %80 = vector.shape_cast %79 : vector<16x16x16xbf16> to vector<256x16xbf16>
    %c0_106 = arith.constant 0 : index
    %c16_107 = arith.constant 16 : index
    %81 = vector.load %arg6[%c0_106, %c16_107] : memref<256x128xbf16, #tpu.memory_space<vmem>>, vector<256x16xbf16>
    tpu.vector_store %arg6[%c0_106, %c16_107], %80 {strides = array<i32>} : memref<256x128xbf16, #tpu.memory_space<vmem>>, vector<256x16xbf16>,
    %c0_108 = arith.constant 0 : index
    %c4_109 = arith.constant 4 : index
    %c12 = arith.constant 12 : index
    %c0_110 = arith.constant 0 : index
    %82 = vector.load %arg1[%c0_108, %c4_109, %c12, %c0_110] : memref<1x32x32x16xbf16, #tpu.memory_space<vmem>>, vector<1x16x16x16xbf16>
    %83 = vector.shape_cast %82 : vector<1x16x16x16xbf16> to vector<16x16x16xbf16>
    %84 = vector.shape_cast %83 : vector<16x16x16xbf16> to vector<256x16xbf16>
    %c0_111 = arith.constant 0 : index
    %c32_112 = arith.constant 32 : index
    %85 = vector.load %arg6[%c0_111, %c32_112] : memref<256x128xbf16, #tpu.memory_space<vmem>>, vector<256x16xbf16>
    tpu.vector_store %arg6[%c0_111, %c32_112], %84 {strides = array<i32>} : memref<256x128xbf16, #tpu.memory_space<vmem>>, vector<256x16xbf16>,
    %c0_113 = arith.constant 0 : index
    %c8_114 = arith.constant 8 : index
    %c4_115 = arith.constant 4 : index
    %c0_116 = arith.constant 0 : index
    %86 = vector.load %arg1[%c0_113, %c8_114, %c4_115, %c0_116] : memref<1x32x32x16xbf16, #tpu.memory_space<vmem>>, vector<1x16x16x16xbf16>
    %87 = vector.shape_cast %86 : vector<1x16x16x16xbf16> to vector<16x16x16xbf16>
    %88 = vector.shape_cast %87 : vector<16x16x16xbf16> to vector<256x16xbf16>
    %c0_117 = arith.constant 0 : index
    %c48_118 = arith.constant 48 : index
    %89 = vector.load %arg6[%c0_117, %c48_118] : memref<256x128xbf16, #tpu.memory_space<vmem>>, vector<256x16xbf16>
    tpu.vector_store %arg6[%c0_117, %c48_118], %88 {strides = array<i32>} : memref<256x128xbf16, #tpu.memory_space<vmem>>, vector<256x16xbf16>,
    %c0_119 = arith.constant 0 : index
    %c8_120 = arith.constant 8 : index
    %c12_121 = arith.constant 12 : index
    %c0_122 = arith.constant 0 : index
    %90 = vector.load %arg1[%c0_119, %c8_120, %c12_121, %c0_122] : memref<1x32x32x16xbf16, #tpu.memory_space<vmem>>, vector<1x16x16x16xbf16>
    %91 = vector.shape_cast %90 : vector<1x16x16x16xbf16> to vector<16x16x16xbf16>
    %92 = vector.shape_cast %91 : vector<16x16x16xbf16> to vector<256x16xbf16>
    %c0_123 = arith.constant 0 : index
    %c64_124 = arith.constant 64 : index
    %93 = vector.load %arg6[%c0_123, %c64_124] : memref<256x128xbf16, #tpu.memory_space<vmem>>, vector<256x16xbf16>
    tpu.vector_store %arg6[%c0_123, %c64_124], %92 {strides = array<i32>} : memref<256x128xbf16, #tpu.memory_space<vmem>>, vector<256x16xbf16>,
    %c0_125 = arith.constant 0 : index
    %c12_126 = arith.constant 12 : index
    %c4_127 = arith.constant 4 : index
    %c0_128 = arith.constant 0 : index
    %94 = vector.load %arg1[%c0_125, %c12_126, %c4_127, %c0_128] : memref<1x32x32x16xbf16, #tpu.memory_space<vmem>>, vector<1x16x16x16xbf16>
    %95 = vector.shape_cast %94 : vector<1x16x16x16xbf16> to vector<16x16x16xbf16>
    %96 = vector.shape_cast %95 : vector<16x16x16xbf16> to vector<256x16xbf16>
    %c0_129 = arith.constant 0 : index
    %c80_130 = arith.constant 80 : index
    %97 = vector.load %arg6[%c0_129, %c80_130] : memref<256x128xbf16, #tpu.memory_space<vmem>>, vector<256x16xbf16>
    tpu.vector_store %arg6[%c0_129, %c80_130], %96 {strides = array<i32>} : memref<256x128xbf16, #tpu.memory_space<vmem>>, vector<256x16xbf16>,
    %c0_131 = arith.constant 0 : index
    %c12_132 = arith.constant 12 : index
    %c8_133 = arith.constant 8 : index
    %c0_134 = arith.constant 0 : index
    %98 = vector.load %arg1[%c0_131, %c12_132, %c8_133, %c0_134] : memref<1x32x32x16xbf16, #tpu.memory_space<vmem>>, vector<1x16x16x16xbf16>
    %99 = vector.shape_cast %98 : vector<1x16x16x16xbf16> to vector<16x16x16xbf16>
    %100 = vector.shape_cast %99 : vector<16x16x16xbf16> to vector<256x16xbf16>
    %c0_135 = arith.constant 0 : index
    %c96_136 = arith.constant 96 : index
    %101 = vector.load %arg6[%c0_135, %c96_136] : memref<256x128xbf16, #tpu.memory_space<vmem>>, vector<256x16xbf16>
    tpu.vector_store %arg6[%c0_135, %c96_136], %100 {strides = array<i32>} : memref<256x128xbf16, #tpu.memory_space<vmem>>, vector<256x16xbf16>,
    %c0_137 = arith.constant 0 : index
    %c12_138 = arith.constant 12 : index
    %c12_139 = arith.constant 12 : index
    %c0_140 = arith.constant 0 : index
    %102 = vector.load %arg1[%c0_137, %c12_138, %c12_139, %c0_140] : memref<1x32x32x16xbf16, #tpu.memory_space<vmem>>, vector<1x16x16x16xbf16>
    %103 = vector.shape_cast %102 : vector<1x16x16x16xbf16> to vector<16x16x16xbf16>
    %104 = vector.shape_cast %103 : vector<16x16x16xbf16> to vector<256x16xbf16>
    %c0_141 = arith.constant 0 : index
    %c112_142 = arith.constant 112 : index
    %105 = vector.load %arg6[%c0_141, %c112_142] : memref<256x128xbf16, #tpu.memory_space<vmem>>, vector<256x16xbf16>
    tpu.vector_store %arg6[%c0_141, %c112_142], %104 {strides = array<i32>} : memref<256x128xbf16, #tpu.memory_space<vmem>>, vector<256x16xbf16>,
    %c0_143 = arith.constant 0 : index
    %c0_144 = arith.constant 0 : index
    %106 = vector.load %arg6[%c0_143, %c0_144] : memref<256x128xbf16, #tpu.memory_space<vmem>>, vector<256x128xbf16>
    %c2 = arith.constant 2 : index
    %c0_145 = arith.constant 0 : index
    %c0_146 = arith.constant 0 : index
    %107 = vector.load %arg2[%c2, %c0_145, %c0_146] : memref<4x128x4xbf16, #tpu.memory_space<vmem>>, vector<1x128x4xbf16>
    %108 = vector.shape_cast %107 : vector<1x128x4xbf16> to vector<128x4xbf16>
    %cst_147 = arith.constant dense<0.000000e+00> : vector<256x4xf32>
    %109 = tpu.matmul %106, %108, %cst_147 {dimension_numbers = #tpu.dot_dimension_numbers<[1], [0], [0], [1], [0, 0, 1, 1], [], []>} : vector<256x128xbf16>, vector<128x4xbf16>, vector<256x4xf32> -> vector<256x4xf32>
    %c0_148 = arith.constant 0 : index
    %c8_149 = arith.constant 8 : index
    %110 = vector.load %arg7[%c0_148, %c8_149] : memref<256x16xf32, #tpu.memory_space<vmem>>, vector<256x4xf32>
    tpu.vector_store %arg7[%c0_148, %c8_149], %109 {strides = array<i32>} : memref<256x16xf32, #tpu.memory_space<vmem>>, vector<256x4xf32>,
    %c0_150 = arith.constant 0 : index
    %c0_151 = arith.constant 0 : index
    %c0_152 = arith.constant 0 : index
    %c0_153 = arith.constant 0 : index
    %111 = vector.load %arg1[%c0_150, %c0_151, %c0_152, %c0_153] : memref<1x32x32x16xbf16, #tpu.memory_space<vmem>>, vector<1x16x16x16xbf16>
    %112 = vector.shape_cast %111 : vector<1x16x16x16xbf16> to vector<16x16x16xbf16>
    %113 = vector.shape_cast %112 : vector<16x16x16xbf16> to vector<256x16xbf16>
    %c0_154 = arith.constant 0 : index
    %c0_155 = arith.constant 0 : index
    %114 = vector.load %arg6[%c0_154, %c0_155] : memref<256x128xbf16, #tpu.memory_space<vmem>>, vector<256x16xbf16>
    tpu.vector_store %arg6[%c0_154, %c0_155], %113 {strides = array<i32>} : memref<256x128xbf16, #tpu.memory_space<vmem>>, vector<256x16xbf16>,
    %c0_156 = arith.constant 0 : index
    %c0_157 = arith.constant 0 : index
    %c8_158 = arith.constant 8 : index
    %c0_159 = arith.constant 0 : index
    %115 = vector.load %arg1[%c0_156, %c0_157, %c8_158, %c0_159] : memref<1x32x32x16xbf16, #tpu.memory_space<vmem>>, vector<1x16x16x16xbf16>
    %116 = vector.shape_cast %115 : vector<1x16x16x16xbf16> to vector<16x16x16xbf16>
    %117 = vector.shape_cast %116 : vector<16x16x16xbf16> to vector<256x16xbf16>
    %c0_160 = arith.constant 0 : index
    %c16_161 = arith.constant 16 : index
    %118 = vector.load %arg6[%c0_160, %c16_161] : memref<256x128xbf16, #tpu.memory_space<vmem>>, vector<256x16xbf16>
    tpu.vector_store %arg6[%c0_160, %c16_161], %117 {strides = array<i32>} : memref<256x128xbf16, #tpu.memory_space<vmem>>, vector<256x16xbf16>,
    %c0_162 = arith.constant 0 : index
    %c0_163 = arith.constant 0 : index
    %c16_164 = arith.constant 16 : index
    %c0_165 = arith.constant 0 : index
    %119 = vector.load %arg1[%c0_162, %c0_163, %c16_164, %c0_165] : memref<1x32x32x16xbf16, #tpu.memory_space<vmem>>, vector<1x16x16x16xbf16>
    %120 = vector.shape_cast %119 : vector<1x16x16x16xbf16> to vector<16x16x16xbf16>
    %121 = vector.shape_cast %120 : vector<16x16x16xbf16> to vector<256x16xbf16>
    %c0_166 = arith.constant 0 : index
    %c32_167 = arith.constant 32 : index
    %122 = vector.load %arg6[%c0_166, %c32_167] : memref<256x128xbf16, #tpu.memory_space<vmem>>, vector<256x16xbf16>
    tpu.vector_store %arg6[%c0_166, %c32_167], %121 {strides = array<i32>} : memref<256x128xbf16, #tpu.memory_space<vmem>>, vector<256x16xbf16>,
    %c0_168 = arith.constant 0 : index
    %c8_169 = arith.constant 8 : index
    %c0_170 = arith.constant 0 : index
    %c0_171 = arith.constant 0 : index
    %123 = vector.load %arg1[%c0_168, %c8_169, %c0_170, %c0_171] : memref<1x32x32x16xbf16, #tpu.memory_space<vmem>>, vector<1x16x16x16xbf16>
    %124 = vector.shape_cast %123 : vector<1x16x16x16xbf16> to vector<16x16x16xbf16>
    %125 = vector.shape_cast %124 : vector<16x16x16xbf16> to vector<256x16xbf16>
    %c0_172 = arith.constant 0 : index
    %c48_173 = arith.constant 48 : index
    %126 = vector.load %arg6[%c0_172, %c48_173] : memref<256x128xbf16, #tpu.memory_space<vmem>>, vector<256x16xbf16>
    tpu.vector_store %arg6[%c0_172, %c48_173], %125 {strides = array<i32>} : memref<256x128xbf16, #tpu.memory_space<vmem>>, vector<256x16xbf16>,
    %c0_174 = arith.constant 0 : index
    %c8_175 = arith.constant 8 : index
    %c16_176 = arith.constant 16 : index
    %c0_177 = arith.constant 0 : index
    %127 = vector.load %arg1[%c0_174, %c8_175, %c16_176, %c0_177] : memref<1x32x32x16xbf16, #tpu.memory_space<vmem>>, vector<1x16x16x16xbf16>
    %128 = vector.shape_cast %127 : vector<1x16x16x16xbf16> to vector<16x16x16xbf16>
    %129 = vector.shape_cast %128 : vector<16x16x16xbf16> to vector<256x16xbf16>
    %c0_178 = arith.constant 0 : index
    %c64_179 = arith.constant 64 : index
    %130 = vector.load %arg6[%c0_178, %c64_179] : memref<256x128xbf16, #tpu.memory_space<vmem>>, vector<256x16xbf16>
    tpu.vector_store %arg6[%c0_178, %c64_179], %129 {strides = array<i32>} : memref<256x128xbf16, #tpu.memory_space<vmem>>, vector<256x16xbf16>,
    %c0_180 = arith.constant 0 : index
    %c16_181 = arith.constant 16 : index
    %c0_182 = arith.constant 0 : index
    %c0_183 = arith.constant 0 : index
    %131 = vector.load %arg1[%c0_180, %c16_181, %c0_182, %c0_183] : memref<1x32x32x16xbf16, #tpu.memory_space<vmem>>, vector<1x16x16x16xbf16>
    %132 = vector.shape_cast %131 : vector<1x16x16x16xbf16> to vector<16x16x16xbf16>
    %133 = vector.shape_cast %132 : vector<16x16x16xbf16> to vector<256x16xbf16>
    %c0_184 = arith.constant 0 : index
    %c80_185 = arith.constant 80 : index
    %134 = vector.load %arg6[%c0_184, %c80_185] : memref<256x128xbf16, #tpu.memory_space<vmem>>, vector<256x16xbf16>
    tpu.vector_store %arg6[%c0_184, %c80_185], %133 {strides = array<i32>} : memref<256x128xbf16, #tpu.memory_space<vmem>>, vector<256x16xbf16>,
    %c0_186 = arith.constant 0 : index
    %c16_187 = arith.constant 16 : index
    %c8_188 = arith.constant 8 : index
    %c0_189 = arith.constant 0 : index
    %135 = vector.load %arg1[%c0_186, %c16_187, %c8_188, %c0_189] : memref<1x32x32x16xbf16, #tpu.memory_space<vmem>>, vector<1x16x16x16xbf16>
    %136 = vector.shape_cast %135 : vector<1x16x16x16xbf16> to vector<16x16x16xbf16>
    %137 = vector.shape_cast %136 : vector<16x16x16xbf16> to vector<256x16xbf16>
    %c0_190 = arith.constant 0 : index
    %c96_191 = arith.constant 96 : index
    %138 = vector.load %arg6[%c0_190, %c96_191] : memref<256x128xbf16, #tpu.memory_space<vmem>>, vector<256x16xbf16>
    tpu.vector_store %arg6[%c0_190, %c96_191], %137 {strides = array<i32>} : memref<256x128xbf16, #tpu.memory_space<vmem>>, vector<256x16xbf16>,
    %c0_192 = arith.constant 0 : index
    %c16_193 = arith.constant 16 : index
    %c16_194 = arith.constant 16 : index
    %c0_195 = arith.constant 0 : index
    %139 = vector.load %arg1[%c0_192, %c16_193, %c16_194, %c0_195] : memref<1x32x32x16xbf16, #tpu.memory_space<vmem>>, vector<1x16x16x16xbf16>
    %140 = vector.shape_cast %139 : vector<1x16x16x16xbf16> to vector<16x16x16xbf16>
    %141 = vector.shape_cast %140 : vector<16x16x16xbf16> to vector<256x16xbf16>
    %c0_196 = arith.constant 0 : index
    %c112_197 = arith.constant 112 : index
    %142 = vector.load %arg6[%c0_196, %c112_197] : memref<256x128xbf16, #tpu.memory_space<vmem>>, vector<256x16xbf16>
    tpu.vector_store %arg6[%c0_196, %c112_197], %141 {strides = array<i32>} : memref<256x128xbf16, #tpu.memory_space<vmem>>, vector<256x16xbf16>,
    %c0_198 = arith.constant 0 : index
    %c0_199 = arith.constant 0 : index
    %143 = vector.load %arg6[%c0_198, %c0_199] : memref<256x128xbf16, #tpu.memory_space<vmem>>, vector<256x128xbf16>
    %c3 = arith.constant 3 : index
    %c0_200 = arith.constant 0 : index
    %c0_201 = arith.constant 0 : index
    %144 = vector.load %arg2[%c3, %c0_200, %c0_201] : memref<4x128x4xbf16, #tpu.memory_space<vmem>>, vector<1x128x4xbf16>
    %145 = vector.shape_cast %144 : vector<1x128x4xbf16> to vector<128x4xbf16>
    %cst_202 = arith.constant dense<0.000000e+00> : vector<256x4xf32>
    %146 = tpu.matmul %143, %145, %cst_202 {dimension_numbers = #tpu.dot_dimension_numbers<[1], [0], [0], [1], [0, 0, 1, 1], [], []>} : vector<256x128xbf16>, vector<128x4xbf16>, vector<256x4xf32> -> vector<256x4xf32>
    %c0_203 = arith.constant 0 : index
    %c12_204 = arith.constant 12 : index
    %147 = vector.load %arg7[%c0_203, %c12_204] : memref<256x16xf32, #tpu.memory_space<vmem>>, vector<256x4xf32>
    tpu.vector_store %arg7[%c0_203, %c12_204], %146 {strides = array<i32>} : memref<256x16xf32, #tpu.memory_space<vmem>>, vector<256x4xf32>,
    %c0_205 = arith.constant 0 : index
    %c8_206 = arith.constant 8 : index
    %c8_207 = arith.constant 8 : index
    %c0_208 = arith.constant 0 : index
    %148 = vector.load %arg1[%c0_205, %c8_206, %c8_207, %c0_208] : memref<1x32x32x16xbf16, #tpu.memory_space<vmem>>, vector<1x16x16x16xbf16>
    %149 = vector.shape_cast %148 : vector<1x16x16x16xbf16> to vector<16x16x16xbf16>
    %150 = vector.shape_cast %149 : vector<16x16x16xbf16> to vector<256x16xbf16>
    %c0_209 = arith.constant 0 : index
    %c0_210 = arith.constant 0 : index
    %151 = vector.load %arg7[%c0_209, %c0_210] : memref<256x16xf32, #tpu.memory_space<vmem>>, vector<256x16xf32>
    %c0_211 = arith.constant 0 : index
    %c0_212 = arith.constant 0 : index
    %152 = vector.load %arg3[%c0_211, %c0_212] : memref<16x16xbf16, #tpu.memory_space<vmem>>, vector<16x16xbf16>
    %cst_213 = arith.constant dense<0.000000e+00> : vector<256x16xf32>
    %153 = tpu.matmul %150, %152, %cst_213 {dimension_numbers = #tpu.dot_dimension_numbers<[1], [0], [0], [1], [0, 0, 1, 1], [], []>} : vector<256x16xbf16>, vector<16x16xbf16>, vector<256x16xf32> -> vector<256x16xf32>
    %154 = arith.addf %151, %153 : vector<256x16xf32>
    %c0_214 = arith.constant 0 : index
    %c0_215 = arith.constant 0 : index
    %155 = vector.load %arg4[%c0_214, %c0_215] : memref<1x16xf32, #tpu.memory_space<vmem>>, vector<1x16xf32>
    %156 = vector.broadcast %155 : vector<1x16xf32> to vector<256x16xf32>
    %157 = arith.addf %154, %156 : vector<256x16xf32>
    %cst_216 = arith.constant 0.000000e+00 : f32
    %158 = vector.broadcast %cst_216 : f32 to vector<256x16xf32>
    %159 = arith.maximumf %157, %158 : vector<256x16xf32>
    %160 = arith.truncf %159 : vector<256x16xf32> to vector<256x16xbf16>
    %161 = vector.shape_cast %160 : vector<256x16xbf16> to vector<16x16x16xbf16>
    %c0_217 = arith.constant 0 : index
    %c0_218 = arith.constant 0 : index
    %c0_219 = arith.constant 0 : index
    %c0_220 = arith.constant 0 : index
    %162 = vector.load %arg5[%c0_217, %c0_218, %c0_219, %c0_220] : memref<1x16x16x16xbf16, #tpu.memory_space<vmem>>, vector<1x16x16x16xbf16>
    %163 = vector.shape_cast %162 : vector<1x16x16x16xbf16> to vector<16x16x16xbf16>
    %164 = vector.shape_cast %161 : vector<16x16x16xbf16> to vector<1x16x16x16xbf16>
    tpu.vector_store %arg5[%c0_217, %c0_218, %c0_219, %c0_220], %164 {strides = array<i32>} : memref<1x16x16x16xbf16, #tpu.memory_space<vmem>>, vector<1x16x16x16xbf16>,
    return
  }
  func.func @transform_0(%arg0: i32) -> (i32, i32, i32, i32) {
    %c0_i32 = arith.constant 0 : i32
    %c0_i32_0 = arith.constant 0 : i32
    %c0_i32_1 = arith.constant 0 : i32
    %c0_i32_2 = arith.constant 0 : i32
    return %arg0, %c0_i32, %c0_i32_0, %c0_i32_1 : i32, i32, i32, i32
  }
  func.func @transform_1(%arg0: i32) -> (i32, i32, i32) {
    %c0_i32 = arith.constant 0 : i32
    %c0_i32_0 = arith.constant 0 : i32
    %c0_i32_1 = arith.constant 0 : i32
    %c0_i32_2 = arith.constant 0 : i32
    return %c0_i32, %c0_i32_0, %c0_i32_1 : i32, i32, i32
  }
  func.func @transform_2(%arg0: i32) -> (i32, i32) {
    %c0_i32 = arith.constant 0 : i32
    %c0_i32_0 = arith.constant 0 : i32
    %c0_i32_1 = arith.constant 0 : i32
    return %c0_i32, %c0_i32_0 : i32, i32
  }
  func.func @transform_3(%arg0: i32) -> (i32, i32) {
    %c0_i32 = arith.constant 0 : i32
    %c0_i32_0 = arith.constant 0 : i32
    %c0_i32_1 = arith.constant 0 : i32
    return %c0_i32, %c0_i32_0 : i32, i32
  }
  func.func @transform_4(%arg0: i32) -> (i32, i32, i32, i32) {
    %c0_i32 = arith.constant 0 : i32
    %c0_i32_0 = arith.constant 0 : i32
    %c0_i32_1 = arith.constant 0 : i32
    %c0_i32_2 = arith.constant 0 : i32
    return %arg0, %c0_i32, %c0_i32_0, %c0_i32_1 : i32, i32, i32, i32
  }
}

</mosaic_0001>

<llo_original>
// kernel: tpu_custom_call.1
$region0: #{tpu_custom_call.1}
  #allocation0 [shape = 'u32[]', space=smem, size = 0x4, offset = 0x4, fixed_abs, tag = 'smem constant byte address 0x4 - core index']
  #allocation1 [shape = 'u32[144,128]{1,0:T(1,128)}', space=vmem, size = 0x12000, scoped, tag = 'internal scratch']
  #allocation2 [shape = 'bf16[256,128]{1,0:T(8,128)(2,1)}', space=vmem, size = 0x10000, scoped, tag = 'scratch operand']
  #allocation3 [shape = 'f32[256,16]{1,0:T(8,128)}', space=vmem, size = 0x20000, scoped, tag = 'scratch operand']
  %s0 = inlined_call_operand.vmem [shape: bf16[2,32,32,16], index: 0, kind: input, shape index: {}]
  %s1 = inlined_call_operand.vmem [shape: bf16[4,128,4], index: 1, kind: input, shape index: {}]
  %s2 = inlined_call_operand.vmem [shape: bf16[16,16], index: 2, kind: input, shape index: {}]
  %s3 = inlined_call_operand.vmem [shape: f32[1,16], index: 3, kind: input, shape index: {}]
  %s4 = inlined_call_operand.hbm [shape: bf16[2,16,16,16], index: 4, kind: output, shape index: {}]
  %s5 = sld [smem:[#allocation0]]
  $region49: #{tpu_custom_call.1} parent=0
    _
  %s7 = ssub.s32 1, %s5
  %s8 = scalar_select 0, %s7, %s5
  $region1: #{tpu_custom_call.1} parent=0
    #allocation4 [shape = 'u8[131072]{0}', space=vmem, size = 0x20000, scoped, tag = 'output window, operand 0']
    #allocation5 [shape = 's32[2]{0}', space=sflag, size = 0x8, scoped, tag = 'scoped memory for tpu_custom_call.1']
    %9 = vsyncpa [#allocation5], 0
    %s10 = scalar_lea.sflag [#allocation5], 1
    %11 = vsyncpa %s10, 0
    loop: start=0, step=1, limit=4
    $region2: #{tpu_custom_call.1} parent=1 // loop_pre_header
      _
    $region3: #{tpu_custom_call.1} parent=1 // loop_header
      %s13 = sphi 0, %s17
      %p14 = scmp.ge.s32.totalorder %s13, 4
      %s23 = sphi 0, %s25
      %s26 = sphi 0, %s23
      %s27 = sphi 0, %s26
      %s43 = sphi 0, %s27
      %s47 = sphi 0, %s47
      %s49 = sphi 0, %s47
      %s50 = sphi 0, %s49
      %s64 = sphi 0, %s50
      %s68 = sphi 0, %s68
      %s70 = sphi 0, %s68
      %s71 = sphi 0, %s70
      %s85 = sphi 0, %s71
      %s89 = sphi 0, %s89
      %s91 = sphi 0, %s89
      %s92 = sphi 0, %s91
      %s106 = sphi 0, %s92
      %s112 = sphi 0, %s114
      %s115 = sphi 0, %s112
      %s116 = sphi 0, %s115
      %s132 = sphi 0, %s116
    $region4: #{tpu_custom_call.1} parent=1 // loop_header_branch
      %16 = sbr.rel (%p14) target = $region8
    $region5: #{tpu_custom_call.1} parent=1 // loop_body
      %s18 = ssub.s32 %s13, 1
      %s19 = ssub.s32 %s13, 2
      %s20 = sadd.s32 %s13, 1
      %s21 = ssub.s32 %s13, %s20
      %p22 = scmp.eq.s32.totalorder %s21, 0
      %s24 = sadd.s32 %s23, 1
      %s25 = scalar_select %p22, %s23, %s24
      %p28 = pneg %p22
      %p29 = scmp.eq.s32.totalorder %s13, 1
      %p30 = por %p28, %p29
      %p31 = scmp.ne.s32.totalorder %s23, %s26
      %p32 = scmp.eq.s32.totalorder %s13, 0
      %p33 = por %p31, %p32
      %p34 = scmp.ne.s32.totalorder %s23, %s26
      %p35 = scmp.eq.s32.totalorder %s18, 1
      %p36 = por %p34, %p35
      %p37 = scmp.ne.s32.totalorder %s26, %s27
      %p38 = scmp.eq.s32.totalorder %s18, 0
      %p39 = por %p37, %p38
      %p40 = scmp.ne.s32.totalorder %s26, %s27
      %p41 = scmp.eq.s32.totalorder %s19, 1
      %p42 = por %p40, %p41
      %p44 = scmp.ne.s32.totalorder %s27, %s43
      %p45 = scmp.eq.s32.totalorder %s19, 0
      %p46 = por %p44, %p45
      %s48 = sadd.s32 %s47, 1
      %p51 = scmp.eq.s32.totalorder %s13, 1
      %p52 = scmp.ne.s32.totalorder %s47, %s49
      %p53 = scmp.eq.s32.totalorder %s13, 0
      %p54 = por %p52, %p53
      %p55 = scmp.ne.s32.totalorder %s47, %s49
      %p56 = scmp.eq.s32.totalorder %s18, 1
      %p57 = por %p55, %p56
      %p58 = scmp.ne.s32.totalorder %s49, %s50
      %p59 = scmp.eq.s32.totalorder %s18, 0
      %p60 = por %p58, %p59
      %p61 = scmp.ne.s32.totalorder %s49, %s50
      %p62 = scmp.eq.s32.totalorder %s19, 1
      %p63 = por %p61, %p62
      %p65 = scmp.ne.s32.totalorder %s50, %s64
      %p66 = scmp.eq.s32.totalorder %s19, 0
      %p67 = por %p65, %p66
      %s69 = sadd.s32 %s68, 1
      %p72 = scmp.eq.s32.totalorder %s13, 1
      %p73 = scmp.ne.s32.totalorder %s68, %s70
      %p74 = scmp.eq.s32.totalorder %s13, 0
      %p75 = por %p73, %p74
      %p76 = scmp.ne.s32.totalorder %s68, %s70
      %p77 = scmp.eq.s32.totalorder %s18, 1
      %p78 = por %p76, %p77
      %p79 = scmp.ne.s32.totalorder %s70, %s71
      %p80 = scmp.eq.s32.totalorder %s18, 0
      %p81 = por %p79, %p80
      %p82 = scmp.ne.s32.totalorder %s70, %s71
      %p83 = scmp.eq.s32.totalorder %s19, 1
      %p84 = por %p82, %p83
      %p86 = scmp.ne.s32.totalorder %s71, %s85
      %p87 = scmp.eq.s32.totalorder %s19, 0
      %p88 = por %p86, %p87
      %s90 = sadd.s32 %s89, 1
      %p93 = scmp.eq.s32.totalorder %s13, 1
      %p94 = scmp.ne.s32.totalorder %s89, %s91
      %p95 = scmp.eq.s32.totalorder %s13, 0
      %p96 = por %p94, %p95
      %p97 = scmp.ne.s32.totalorder %s89, %s91
      %p98 = scmp.eq.s32.totalorder %s18, 1
      %p99 = por %p97, %p98
      %p100 = scmp.ne.s32.totalorder %s91, %s92
      %p101 = scmp.eq.s32.totalorder %s18, 0
      %p102 = por %p100, %p101
      %p103 = scmp.ne.s32.totalorder %s91, %s92
      %p104 = scmp.eq.s32.totalorder %s19, 1
      %p105 = por %p103, %p104
      %p107 = scmp.ne.s32.totalorder %s92, %s106
      %p108 = scmp.eq.s32.totalorder %s19, 0
      %p109 = por %p107, %p108
      %s110 = ssub.s32 %s13, %s20
      %p111 = scmp.eq.s32.totalorder %s110, 0
      %s113 = sadd.s32 %s112, 1
      %s114 = scalar_select %p111, %s112, %s113
      %p117 = pneg %p111
      %p118 = scmp.eq.s32.totalorder %s13, 1
      %p119 = por %p117, %p118
      %p120 = scmp.ne.s32.totalorder %s112, %s115
      %p121 = scmp.eq.s32.totalorder %s13, 0
      %p122 = por %p120, %p121
      %p123 = scmp.ne.s32.totalorder %s112, %s115
      %p124 = scmp.eq.s32.totalorder %s18, 1
      %p125 = por %p123, %p124
      %p126 = scmp.ne.s32.totalorder %s115, %s116
      %p127 = scmp.eq.s32.totalorder %s18, 0
      %p128 = por %p126, %p127
      %p129 = scmp.ne.s32.totalorder %s115, %s116
      %p130 = scmp.eq.s32.totalorder %s19, 1
      %p131 = por %p129, %p130
      %p133 = scmp.ne.s32.totalorder %s116, %s132
      %p134 = scmp.eq.s32.totalorder %s19, 0
      %p135 = por %p133, %p134
      %p136 = scmp.le.s32.totalorder 1, %s13
      %p137 = scmp.lt.s32.totalorder %s13, 3
      %p138 = pnand %p136, %p137
      %p139 = pneg %p138
      // Predicated region
      $region9: #{tpu_custom_call.1} parent=5 // pred_check
        _
      $region10: #{tpu_custom_call.1} parent=5 // pred_check_branch
        %141 = sbr.rel (%p138) target = $region12
      $region11: #{tpu_custom_call.1} parent=5 // pred_region
        %s142 = ssub.s32 %s13, 1
        // Predicated region
        $region13: #{tpu_custom_call.1} parent=11 // pred_check
          %p143 = pneg %p60
        $region14: #{tpu_custom_call.1} parent=11 // pred_check_branch
          %145 = sbr.rel (%p143) target = $region16
        $region15: #{tpu_custom_call.1} parent=11 // pred_region
          _
        $region16: #{tpu_custom_call.1} parent=11 // pred_fallthru
          _
        // Predicated region
        $region17: #{tpu_custom_call.1} parent=11 // pred_check
          %p146 = pneg %p81
        $region18: #{tpu_custom_call.1} parent=11 // pred_check_branch
          %148 = sbr.rel (%p146) target = $region20
        $region19: #{tpu_custom_call.1} parent=11 // pred_region
          _
        $region20: #{tpu_custom_call.1} parent=11 // pred_fallthru
          _
        // Predicated region
        $region21: #{tpu_custom_call.1} parent=11 // pred_check
          %p149 = pneg %p102
        $region22: #{tpu_custom_call.1} parent=11 // pred_check_branch
          %151 = sbr.rel (%p149) target = $region24
        $region23: #{tpu_custom_call.1} parent=11 // pred_region
          _
        $region24: #{tpu_custom_call.1} parent=11 // pred_fallthru
          _
      $region12: #{tpu_custom_call.1} parent=5 // pred_fallthru
        _
      %p152 = scmp.lt.s32.totalorder %s13, 2
      // Predicated region
      $region25: #{tpu_custom_call.1} parent=5 // pred_check
        %p153 = pneg %p152
      $region26: #{tpu_custom_call.1} parent=5 // pred_check_branch
        %155 = sbr.rel (%p153) target = $region28
      $region27: #{tpu_custom_call.1} parent=5 // pred_region
        // Predicated region
        $region29: #{tpu_custom_call.1} parent=27 // pred_check
          %p156 = pneg %p33
        $region30: #{tpu_custom_call.1} parent=27 // pred_check_branch
          %158 = sbr.rel (%p156) target = $region32
        $region31: #{tpu_custom_call.1} parent=27 // pred_region
          %p159 = scmp.lt.s32.totalorder %s13, 1
          %s160 = scalar_select %p159, %s13, 1
          %s161 = smul.addr %s160, 128
          %s162 = smul.addr %s161, 4
          %s163 = scalar_lea.vmem %s0, %s162
        $region32: #{tpu_custom_call.1} parent=27 // pred_fallthru
          _
      $region28: #{tpu_custom_call.1} parent=5 // pred_fallthru
        _
      %p164 = scmp.le.s32.totalorder 1, %s13
      %p165 = scmp.lt.s32.totalorder %s13, 3
      %p166 = pnand %p164, %p165
      %p167 = pneg %p166
      // Predicated region
      $region33: #{tpu_custom_call.1} parent=5 // pred_check
        _
      $region34: #{tpu_custom_call.1} parent=5 // pred_check_branch
        %169 = sbr.rel (%p166) target = $region36
      $region35: #{tpu_custom_call.1} parent=5 // pred_region
        %s170 = ssub.s32 %s13, 1
        %p171 = scmp.lt.s32.totalorder %s18, 1
        %s172 = scalar_select %p171, %s18, 1
        %s173 = smul.addr %s172, 128
        %s174 = smul.addr %s173, 4
        %s175 = scalar_lea.vmem %s0, %s174
        %p176 = pneg %p39
        %p177 = pneg %p36
        %p178 = pneg %p60
        %p179 = pneg %p57
        %p180 = pneg %p81
        %p181 = pneg %p78
        %p182 = pneg %p102
        %p183 = pneg %p99
        %p184 = pneg %p128
        %p185 = pneg %p125
        %s186 = sand.u32 %s115, 1
        %s187 = scalar_lea.sflag [#allocation5], %s186
        %s188 = sand.u32 %s115, 1
        %s189 = smul.addr %s188, 128
        %s190 = scalar_lea.vmem [#allocation4], %s189
        %p191 = scmp.lt.s32.totalorder %s18, 1
        %s192 = scalar_select %p191, %s18, 1
        %s193 = smul.addr %s192, 128
        %s194 = smul.addr %s193, 4
        %s195 = scalar_lea.vmem %s0, %s194
        %s197 = scalar_lea.vmem %s195, 112
        %v198 = vld [vmem:[%s197] sm:$0x8]
        %v199 = vld [vmem:[%s197 + $0x4] sm:$0xf]
        %v200 = vld [vmem:[%s197 + $0x8] sm:$0xf]
        %v201 = vld [vmem:[%s197 + $0x10] sm:$0x8]
        %v202 = vld [vmem:[%s197 + $0x14] sm:$0xf]
        %v203 = vld [vmem:[%s197 + $0x18] sm:$0xf]
        %v204 = vld [vmem:[%s197 + $0x20] sm:$0x8]
        %v205 = vld [vmem:[%s197 + $0x24] sm:$0xf]
        %v206 = vld [vmem:[%s197 + $0x28] sm:$0xf]
        %v207 = vld [vmem:[%s197 + $0x30] sm:$0x8]
        %v208 = vld [vmem:[%s197 + $0x34] sm:$0xf]
        %v209 = vld [vmem:[%s197 + $0x38] sm:$0xf]
        %v210 = vld [vmem:[%s197 + $0x40] sm:$0x8]
        %v211 = vld [vmem:[%s197 + $0x44] sm:$0xf]
        %v212 = vld [vmem:[%s197 + $0x48] sm:$0xf]
        %v213 = vld [vmem:[%s197 + $0x50] sm:$0x8]
        %v214 = vld [vmem:[%s197 + $0x54] sm:$0xf]
        %v215 = vld [vmem:[%s197 + $0x58] sm:$0xf]
        %v216 = vld [vmem:[%s197 + $0x60] sm:$0x8]
        %v217 = vld [vmem:[%s197 + $0x64] sm:$0xf]
        %v218 = vld [vmem:[%s197 + $0x68] sm:$0xf]
        %v219 = vld [vmem:[%s197 + $0x70] sm:$0x8]
        %v220 = vld [vmem:[%s197 + $0x74] sm:$0xf]
        %v221 = vld [vmem:[%s197 + $0x78] sm:$0xf]
        %v222 = vld [vmem:[%s197 + $0x80] sm:$0x8]
        %v223 = vld [vmem:[%s197 + $0x84] sm:$0xf]
        %v224 = vld [vmem:[%s197 + $0x88] sm:$0xf]
        %v225 = vld [vmem:[%s197 + $0x90] sm:$0x8]
        %v226 = vld [vmem:[%s197 + $0x94] sm:$0xf]
        %v227 = vld [vmem:[%s197 + $0x98] sm:$0xf]
        %v228 = vld [vmem:[%s197 + $0xa0] sm:$0x8]
        %v229 = vld [vmem:[%s197 + $0xa4] sm:$0xf]
        %v230 = vld [vmem:[%s197 + $0xa8] sm:$0xf]
        %v231 = vld [vmem:[%s197 + $0xb0] sm:$0x8]
        %v232 = vld [vmem:[%s197 + $0xb4] sm:$0xf]
        %v233 = vld [vmem:[%s197 + $0xb8] sm:$0xf]
        %v234 = vld [vmem:[%s197 + $0xc0] sm:$0x8]
        %v235 = vld [vmem:[%s197 + $0xc4] sm:$0xf]
        %v236 = vld [vmem:[%s197 + $0xc8] sm:$0xf]
        %v237 = vld [vmem:[%s197 + $0xd0] sm:$0x8]
        %v238 = vld [vmem:[%s197 + $0xd4] sm:$0xf]
        %v239 = vld [vmem:[%s197 + $0xd8] sm:$0xf]
        %v240 = vld [vmem:[%s197 + $0xe0] sm:$0x8]
        %v241 = vld [vmem:[%s197 + $0xe4] sm:$0xf]
        %v242 = vld [vmem:[%s197 + $0xe8] sm:$0xf]
        %v243 = vld [vmem:[%s197 + $0xf0] sm:$0x8]
        %v244 = vld [vmem:[%s197 + $0xf4] sm:$0xf]
        %v245 = vld [vmem:[%s197 + $0xf8] sm:$0xf]
        %vm246 = vsmask.f32 256
        %vm247 = vsmask.f32 4368
        %vm248 = vmor %vm246, %vm247
        %v250 = vshrl.u32 %v198, 16
        %v252 = vrot.slane %v250, 7
        %v253 = vrot.slane %v252, 4
        %v255 = vshrl.u32 %v199, 16
        %v257 = vrot.slane %v255, 7
        %v258 = vshll.u32 %v199, 16
        %v260 = vor.u32 %v257, %v258
        %v261 = vsel %vm248, %v253, %v260
        %v262 = vrot.slane %v257, 4
        %v264 = vshrl.u32 %v200, 16
        %v266 = vrot.slane %v264, 7
        %v267 = vshll.u32 %v200, 16
        %v269 = vor.u32 %v266, %v267
        %v270 = vsel %vm248, %v262, %v269
        %v272 = vshrl.u32 %v201, 16
        %v274 = vrot.slane %v272, 7
        %v275 = vrot.slane %v274, 4
        %v277 = vshrl.u32 %v202, 16
        %v279 = vrot.slane %v277, 7
        %v280 = vshll.u32 %v202, 16
        %v282 = vor.u32 %v279, %v280
        %v283 = vsel %vm248, %v275, %v282
        %v284 = vrot.slane %v279, 4
        %v286 = vshrl.u32 %v203, 16
        %v288 = vrot.slane %v286, 7
        %v289 = vshll.u32 %v203, 16
        %v291 = vor.u32 %v288, %v289
        %v292 = vsel %vm248, %v284, %v291
        %v294 = vshrl.u32 %v204, 16
        %v296 = vrot.slane %v294, 7
        %v297 = vrot.slane %v296, 4
        %v299 = vshrl.u32 %v205, 16
        %v301 = vrot.slane %v299, 7
        %v302 = vshll.u32 %v205, 16
        %v304 = vor.u32 %v301, %v302
        %v305 = vsel %vm248, %v297, %v304
        %v306 = vrot.slane %v301, 4
        %v308 = vshrl.u32 %v206, 16
        %v310 = vrot.slane %v308, 7
        %v311 = vshll.u32 %v206, 16
        %v313 = vor.u32 %v310, %v311
        %v314 = vsel %vm248, %v306, %v313
        %v316 = vshrl.u32 %v207, 16
        %v318 = vrot.slane %v316, 7
        %v319 = vrot.slane %v318, 4
        %v321 = vshrl.u32 %v208, 16
        %v323 = vrot.slane %v321, 7
        %v324 = vshll.u32 %v208, 16
        %v326 = vor.u32 %v323, %v324
        %v327 = vsel %vm248, %v319, %v326
        %v328 = vrot.slane %v323, 4
        %v330 = vshrl.u32 %v209, 16
        %v332 = vrot.slane %v330, 7
        %v333 = vshll.u32 %v209, 16
        %v335 = vor.u32 %v332, %v333
        %v336 = vsel %vm248, %v328, %v335
        %v338 = vshrl.u32 %v210, 16
        %v340 = vrot.slane %v338, 7
        %v341 = vrot.slane %v340, 4
        %v343 = vshrl.u32 %v211, 16
        %v345 = vrot.slane %v343, 7
        %v346 = vshll.u32 %v211, 16
        %v348 = vor.u32 %v345, %v346
        %v349 = vsel %vm248, %v341, %v348
        %v350 = vrot.slane %v345, 4
        %v352 = vshrl.u32 %v212, 16
        %v354 = vrot.slane %v352, 7
        %v355 = vshll.u32 %v212, 16
        %v357 = vor.u32 %v354, %v355
        %v358 = vsel %vm248, %v350, %v357
        %v360 = vshrl.u32 %v213, 16
        %v362 = vrot.slane %v360, 7
        %v363 = vrot.slane %v362, 4
        %v365 = vshrl.u32 %v214, 16
        %v367 = vrot.slane %v365, 7
        %v368 = vshll.u32 %v214, 16
        %v370 = vor.u32 %v367, %v368
        %v371 = vsel %vm248, %v363, %v370
        %v372 = vrot.slane %v367, 4
        %v374 = vshrl.u32 %v215, 16
        %v376 = vrot.slane %v374, 7
        %v377 = vshll.u32 %v215, 16
        %v379 = vor.u32 %v376, %v377
        %v380 = vsel %vm248, %v372, %v379
        %v382 = vshrl.u32 %v216, 16
        %v384 = vrot.slane %v382, 7
        %v385 = vrot.slane %v384, 4
        %v387 = vshrl.u32 %v217, 16
        %v389 = vrot.slane %v387, 7
        %v390 = vshll.u32 %v217, 16
        %v392 = vor.u32 %v389, %v390
        %v393 = vsel %vm248, %v385, %v392
        %v394 = vrot.slane %v389, 4
        %v396 = vshrl.u32 %v218, 16
        %v398 = vrot.slane %v396, 7
        %v399 = vshll.u32 %v218, 16
        %v401 = vor.u32 %v398, %v399
        %v402 = vsel %vm248, %v394, %v401
        %v404 = vshrl.u32 %v219, 16
        %v406 = vrot.slane %v404, 7
        %v407 = vrot.slane %v406, 4
        %v409 = vshrl.u32 %v220, 16
        %v411 = vrot.slane %v409, 7
        %v412 = vshll.u32 %v220, 16
        %v414 = vor.u32 %v411, %v412
        %v415 = vsel %vm248, %v407, %v414
        %v416 = vrot.slane %v411, 4
        %v418 = vshrl.u32 %v221, 16
        %v420 = vrot.slane %v418, 7
        %v421 = vshll.u32 %v221, 16
        %v423 = vor.u32 %v420, %v421
        %v424 = vsel %vm248, %v416, %v423
        %v426 = vshrl.u32 %v222, 16
        %v428 = vrot.slane %v426, 7
        %v429 = vrot.slane %v428, 4
        %v431 = vshrl.u32 %v223, 16
        %v433 = vrot.slane %v431, 7
        %v434 = vshll.u32 %v223, 16
        %v436 = vor.u32 %v433, %v434
        %v437 = vsel %vm248, %v429, %v436
        %v438 = vrot.slane %v433, 4
        %v440 = vshrl.u32 %v224, 16
        %v442 = vrot.slane %v440, 7
        %v443 = vshll.u32 %v224, 16
        %v445 = vor.u32 %v442, %v443
        %v446 = vsel %vm248, %v438, %v445
        %v448 = vshrl.u32 %v225, 16
        %v450 = vrot.slane %v448, 7
        %v451 = vrot.slane %v450, 4
        %v453 = vshrl.u32 %v226, 16
        %v455 = vrot.slane %v453, 7
        %v456 = vshll.u32 %v226, 16
        %v458 = vor.u32 %v455, %v456
        %v459 = vsel %vm248, %v451, %v458
        %v460 = vrot.slane %v455, 4
        %v462 = vshrl.u32 %v227, 16
        %v464 = vrot.slane %v462, 7
        %v465 = vshll.u32 %v227, 16
        %v467 = vor.u32 %v464, %v465
        %v468 = vsel %vm248, %v460, %v467
        %v470 = vshrl.u32 %v228, 16
        %v472 = vrot.slane %v470, 7
        %v473 = vrot.slane %v472, 4
        %v475 = vshrl.u32 %v229, 16
        %v477 = vrot.slane %v475, 7
        %v478 = vshll.u32 %v229, 16
        %v480 = vor.u32 %v477, %v478
        %v481 = vsel %vm248, %v473, %v480
        %v482 = vrot.slane %v477, 4
        %v484 = vshrl.u32 %v230, 16
        %v486 = vrot.slane %v484, 7
        %v487 = vshll.u32 %v230, 16
        %v489 = vor.u32 %v486, %v487
        %v490 = vsel %vm248, %v482, %v489
        %v492 = vshrl.u32 %v231, 16
        %v494 = vrot.slane %v492, 7
        %v495 = vrot.slane %v494, 4
        %v497 = vshrl.u32 %v232, 16
        %v499 = vrot.slane %v497, 7
        %v500 = vshll.u32 %v232, 16
        %v502 = vor.u32 %v499, %v500
        %v503 = vsel %vm248, %v495, %v502
        %v504 = vrot.slane %v499, 4
        %v506 = vshrl.u32 %v233, 16
        %v508 = vrot.slane %v506, 7
        %v509 = vshll.u32 %v233, 16
        %v511 = vor.u32 %v508, %v509
        %v512 = vsel %vm248, %v504, %v511
        %v514 = vshrl.u32 %v234, 16
        %v516 = vrot.slane %v514, 7
        %v517 = vrot.slane %v516, 4
        %v519 = vshrl.u32 %v235, 16
        %v521 = vrot.slane %v519, 7
        %v522 = vshll.u32 %v235, 16
        %v524 = vor.u32 %v521, %v522
        %v525 = vsel %vm248, %v517, %v524
        %v526 = vrot.slane %v521, 4
        %v528 = vshrl.u32 %v236, 16
        %v530 = vrot.slane %v528, 7
        %v531 = vshll.u32 %v236, 16
        %v533 = vor.u32 %v530, %v531
        %v534 = vsel %vm248, %v526, %v533
        %v536 = vshrl.u32 %v237, 16
        %v538 = vrot.slane %v536, 7
        %v539 = vrot.slane %v538, 4
        %v541 = vshrl.u32 %v238, 16
        %v543 = vrot.slane %v541, 7
        %v544 = vshll.u32 %v238, 16
        %v546 = vor.u32 %v543, %v544
        %v547 = vsel %vm248, %v539, %v546
        %v548 = vrot.slane %v543, 4
        %v550 = vshrl.u32 %v239, 16
        %v552 = vrot.slane %v550, 7
        %v553 = vshll.u32 %v239, 16
        %v555 = vor.u32 %v552, %v553
        %v556 = vsel %vm248, %v548, %v555
        %v558 = vshrl.u32 %v240, 16
        %v560 = vrot.slane %v558, 7
        %v561 = vrot.slane %v560, 4
        %v563 = vshrl.u32 %v241, 16
        %v565 = vrot.slane %v563, 7
        %v566 = vshll.u32 %v241, 16
        %v568 = vor.u32 %v565, %v566
        %v569 = vsel %vm248, %v561, %v568
        %v570 = vrot.slane %v565, 4
        %v572 = vshrl.u32 %v242, 16
        %v574 = vrot.slane %v572, 7
        %v575 = vshll.u32 %v242, 16
        %v577 = vor.u32 %v574, %v575
        %v578 = vsel %vm248, %v570, %v577
        %v580 = vshrl.u32 %v243, 16
        %v582 = vrot.slane %v580, 7
        %v583 = vrot.slane %v582, 4
        %v585 = vshrl.u32 %v244, 16
        %v587 = vrot.slane %v585, 7
        %v588 = vshll.u32 %v244, 16
        %v590 = vor.u32 %v587, %v588
        %v591 = vsel %vm248, %v583, %v590
        %v592 = vrot.slane %v587, 4
        %v594 = vshrl.u32 %v245, 16
        %v596 = vrot.slane %v594, 7
        %v597 = vshll.u32 %v245, 16
        %v599 = vor.u32 %v596, %v597
        %v600 = vsel %vm248, %v592, %v599
        %vm633 = vcmask 125952
        %634 = vst.msk [vmem:[#allocation2] sm:$0xf] %vm633, %v261
        %635 = vst.msk [vmem:[#allocation2 + $0x4] sm:$0xf] %vm633, %v270
        %636 = vst.msk [vmem:[#allocation2 + $0x8] sm:$0xf] %vm633, %v283
        %637 = vst.msk [vmem:[#allocation2 + $0xc] sm:$0xf] %vm633, %v292
        %638 = vst.msk [vmem:[#allocation2 + $0x10] sm:$0xf] %vm633, %v305
        %639 = vst.msk [vmem:[#allocation2 + $0x14] sm:$0xf] %vm633, %v314
        %640 = vst.msk [vmem:[#allocation2 + $0x18] sm:$0xf] %vm633, %v327
        %641 = vst.msk [vmem:[#allocation2 + $0x1c] sm:$0xf] %vm633, %v336
        %642 = vst.msk [vmem:[#allocation2 + $0x20] sm:$0xf] %vm633, %v349
        %643 = vst.msk [vmem:[#allocation2 + $0x24] sm:$0xf] %vm633, %v358
        %644 = vst.msk [vmem:[#allocation2 + $0x28] sm:$0xf] %vm633, %v371
        %645 = vst.msk [vmem:[#allocation2 + $0x2c] sm:$0xf] %vm633, %v380
        %646 = vst.msk [vmem:[#allocation2 + $0x30] sm:$0xf] %vm633, %v393
        %647 = vst.msk [vmem:[#allocation2 + $0x34] sm:$0xf] %vm633, %v402
        %648 = vst.msk [vmem:[#allocation2 + $0x38] sm:$0xf] %vm633, %v415
        %649 = vst.msk [vmem:[#allocation2 + $0x3c] sm:$0xf] %vm633, %v424
        %650 = vst.msk [vmem:[#allocation2 + $0x40] sm:$0xf] %vm633, %v437
        %651 = vst.msk [vmem:[#allocation2 + $0x44] sm:$0xf] %vm633, %v446
        %652 = vst.msk [vmem:[#allocation2 + $0x48] sm:$0xf] %vm633, %v459
        %653 = vst.msk [vmem:[#allocation2 + $0x4c] sm:$0xf] %vm633, %v468
        %654 = vst.msk [vmem:[#allocation2 + $0x50] sm:$0xf] %vm633, %v481
        %655 = vst.msk [vmem:[#allocation2 + $0x54] sm:$0xf] %vm633, %v490
        %656 = vst.msk [vmem:[#allocation2 + $0x58] sm:$0xf] %vm633, %v503
        %657 = vst.msk [vmem:[#allocation2 + $0x5c] sm:$0xf] %vm633, %v512
        %658 = vst.msk [vmem:[#allocation2 + $0x60] sm:$0xf] %vm633, %v525
        %659 = vst.msk [vmem:[#allocation2 + $0x64] sm:$0xf] %vm633, %v534
        %660 = vst.msk [vmem:[#allocation2 + $0x68] sm:$0xf] %vm633, %v547
        %661 = vst.msk [vmem:[#allocation2 + $0x6c] sm:$0xf] %vm633, %v556
        %662 = vst.msk [vmem:[#allocation2 + $0x70] sm:$0xf] %vm633, %v569
        %663 = vst.msk [vmem:[#allocation2 + $0x74] sm:$0xf] %vm633, %v578
        %664 = vst.msk [vmem:[#allocation2 + $0x78] sm:$0xf] %vm633, %v591
        %665 = vst.msk [vmem:[#allocation2 + $0x7c] sm:$0xf] %vm633, %v600
        %v666 = vld [vmem:[%s197 + $0x4] sm:$0xf]
        %v667 = vld [vmem:[%s197 + $0x8] sm:$0xf]
        %v668 = vld [vmem:[%s197 + $0x14] sm:$0xf]
        %v669 = vld [vmem:[%s197 + $0x18] sm:$0xf]
        %v670 = vld [vmem:[%s197 + $0x24] sm:$0xf]
        %v671 = vld [vmem:[%s197 + $0x28] sm:$0xf]
        %v672 = vld [vmem:[%s197 + $0x34] sm:$0xf]
        %v673 = vld [vmem:[%s197 + $0x38] sm:$0xf]
        %v674 = vld [vmem:[%s197 + $0x44] sm:$0xf]
        %v675 = vld [vmem:[%s197 + $0x48] sm:$0xf]
        %v676 = vld [vmem:[%s197 + $0x54] sm:$0xf]
        %v677 = vld [vmem:[%s197 + $0x58] sm:$0xf]
        %v678 = vld [vmem:[%s197 + $0x64] sm:$0xf]
        %v679 = vld [vmem:[%s197 + $0x68] sm:$0xf]
        %v680 = vld [vmem:[%s197 + $0x74] sm:$0xf]
        %v681 = vld [vmem:[%s197 + $0x78] sm:$0xf]
        %v682 = vld [vmem:[%s197 + $0x84] sm:$0xf]
        %v683 = vld [vmem:[%s197 + $0x88] sm:$0xf]
        %v684 = vld [vmem:[%s197 + $0x94] sm:$0xf]
        %v685 = vld [vmem:[%s197 + $0x98] sm:$0xf]
        %v686 = vld [vmem:[%s197 + $0xa4] sm:$0xf]
        %v687 = vld [vmem:[%s197 + $0xa8] sm:$0xf]
        %v688 = vld [vmem:[%s197 + $0xb4] sm:$0xf]
        %v689 = vld [vmem:[%s197 + $0xb8] sm:$0xf]
        %v690 = vld [vmem:[%s197 + $0xc4] sm:$0xf]
        %v691 = vld [vmem:[%s197 + $0xc8] sm:$0xf]
        %v692 = vld [vmem:[%s197 + $0xd4] sm:$0xf]
        %v693 = vld [vmem:[%s197 + $0xd8] sm:$0xf]
        %v694 = vld [vmem:[%s197 + $0xe4] sm:$0xf]
        %v695 = vld [vmem:[%s197 + $0xe8] sm:$0xf]
        %v696 = vld [vmem:[%s197 + $0xf4] sm:$0xf]
        %v697 = vld [vmem:[%s197 + $0xf8] sm:$0xf]
        %730 = vrot.lane.b32.xlu0 %v666, 16
        %v731 = vpop.permute.xlu0 %730
        %732 = vrot.lane.b32.xlu0 %v667, 16
        %v733 = vpop.permute.xlu0 %732
        %734 = vrot.lane.b32.xlu0 %v668, 16
        %v735 = vpop.permute.xlu0 %734
        %736 = vrot.lane.b32.xlu0 %v669, 16
        %v737 = vpop.permute.xlu0 %736
        %738 = vrot.lane.b32.xlu0 %v670, 16
        %v739 = vpop.permute.xlu0 %738
        %740 = vrot.lane.b32.xlu0 %v671, 16
        %v741 = vpop.permute.xlu0 %740
        %742 = vrot.lane.b32.xlu0 %v672, 16
        %v743 = vpop.permute.xlu0 %742
        %744 = vrot.lane.b32.xlu0 %v673, 16
        %v745 = vpop.permute.xlu0 %744
        %746 = vrot.lane.b32.xlu0 %v674, 16
        %v747 = vpop.permute.xlu0 %746
        %748 = vrot.lane.b32.xlu0 %v675, 16
        %v749 = vpop.permute.xlu0 %748
        %750 = vrot.lane.b32.xlu0 %v676, 16
        %v751 = vpop.permute.xlu0 %750
        %752 = vrot.lane.b32.xlu0 %v677, 16
        %v753 = vpop.permute.xlu0 %752
        %754 = vrot.lane.b32.xlu0 %v678, 16
        %v755 = vpop.permute.xlu0 %754
        %756 = vrot.lane.b32.xlu0 %v679, 16
        %v757 = vpop.permute.xlu0 %756
        %758 = vrot.lane.b32.xlu0 %v680, 16
        %v759 = vpop.permute.xlu0 %758
        %760 = vrot.lane.b32.xlu0 %v681, 16
        %v761 = vpop.permute.xlu0 %760
        %762 = vrot.lane.b32.xlu0 %v682, 16
        %v763 = vpop.permute.xlu0 %762
        %764 = vrot.lane.b32.xlu0 %v683, 16
        %v765 = vpop.permute.xlu0 %764
        %766 = vrot.lane.b32.xlu0 %v684, 16
        %v767 = vpop.permute.xlu0 %766
        %768 = vrot.lane.b32.xlu0 %v685, 16
        %v769 = vpop.permute.xlu0 %768
        %770 = vrot.lane.b32.xlu0 %v686, 16
        %v771 = vpop.permute.xlu0 %770
        %772 = vrot.lane.b32.xlu0 %v687, 16
        %v773 = vpop.permute.xlu0 %772
        %774 = vrot.lane.b32.xlu0 %v688, 16
        %v775 = vpop.permute.xlu0 %774
        %776 = vrot.lane.b32.xlu0 %v689, 16
        %v777 = vpop.permute.xlu0 %776
        %778 = vrot.lane.b32.xlu0 %v690, 16
        %v779 = vpop.permute.xlu0 %778
        %780 = vrot.lane.b32.xlu0 %v691, 16
        %v781 = vpop.permute.xlu0 %780
        %782 = vrot.lane.b32.xlu0 %v692, 16
        %v783 = vpop.permute.xlu0 %782
        %784 = vrot.lane.b32.xlu0 %v693, 16
        %v785 = vpop.permute.xlu0 %784
        %786 = vrot.lane.b32.xlu0 %v694, 16
        %v787 = vpop.permute.xlu0 %786
        %788 = vrot.lane.b32.xlu0 %v695, 16
        %v789 = vpop.permute.xlu0 %788
        %790 = vrot.lane.b32.xlu0 %v696, 16
        %v791 = vpop.permute.xlu0 %790
        %792 = vrot.lane.b32.xlu0 %v697, 16
        %v793 = vpop.permute.xlu0 %792
        %vm826 = vcmask 257152
        %827 = vst.msk [vmem:[#allocation2] sm:$0xf] %vm826, %v731
        %828 = vst.msk [vmem:[#allocation2 + $0x4] sm:$0xf] %vm826, %v733
        %829 = vst.msk [vmem:[#allocation2 + $0x8] sm:$0xf] %vm826, %v735
        %830 = vst.msk [vmem:[#allocation2 + $0xc] sm:$0xf] %vm826, %v737
        %831 = vst.msk [vmem:[#allocation2 + $0x10] sm:$0xf] %vm826, %v739
        %832 = vst.msk [vmem:[#allocation2 + $0x14] sm:$0xf] %vm826, %v741
        %833 = vst.msk [vmem:[#allocation2 + $0x18] sm:$0xf] %vm826, %v743
        %834 = vst.msk [vmem:[#allocation2 + $0x1c] sm:$0xf] %vm826, %v745
        %835 = vst.msk [vmem:[#allocation2 + $0x20] sm:$0xf] %vm826, %v747
        %836 = vst.msk [vmem:[#allocation2 + $0x24] sm:$0xf] %vm826, %v749
        %837 = vst.msk [vmem:[#allocation2 + $0x28] sm:$0xf] %vm826, %v751
        %838 = vst.msk [vmem:[#allocation2 + $0x2c] sm:$0xf] %vm826, %v753
        %839 = vst.msk [vmem:[#allocation2 + $0x30] sm:$0xf] %vm826, %v755
        %840 = vst.msk [vmem:[#allocation2 + $0x34] sm:$0xf] %vm826, %v757
        %841 = vst.msk [vmem:[#allocation2 + $0x38] sm:$0xf] %vm826, %v759
        %842 = vst.msk [vmem:[#allocation2 + $0x3c] sm:$0xf] %vm826, %v761
        %843 = vst.msk [vmem:[#allocation2 + $0x40] sm:$0xf] %vm826, %v763
        %844 = vst.msk [vmem:[#allocation2 + $0x44] sm:$0xf] %vm826, %v765
        %845 = vst.msk [vmem:[#allocation2 + $0x48] sm:$0xf] %vm826, %v767
        %846 = vst.msk [vmem:[#allocation2 + $0x4c] sm:$0xf] %vm826, %v769
        %847 = vst.msk [vmem:[#allocation2 + $0x50] sm:$0xf] %vm826, %v771
        %848 = vst.msk [vmem:[#allocation2 + $0x54] sm:$0xf] %vm826, %v773
        %849 = vst.msk [vmem:[#allocation2 + $0x58] sm:$0xf] %vm826, %v775
        %850 = vst.msk [vmem:[#allocation2 + $0x5c] sm:$0xf] %vm826, %v777
        %851 = vst.msk [vmem:[#allocation2 + $0x60] sm:$0xf] %vm826, %v779
        %852 = vst.msk [vmem:[#allocation2 + $0x64] sm:$0xf] %vm826, %v781
        %853 = vst.msk [vmem:[#allocation2 + $0x68] sm:$0xf] %vm826, %v783
        %854 = vst.msk [vmem:[#allocation2 + $0x6c] sm:$0xf] %vm826, %v785
        %855 = vst.msk [vmem:[#allocation2 + $0x70] sm:$0xf] %vm826, %v787
        %856 = vst.msk [vmem:[#allocation2 + $0x74] sm:$0xf] %vm826, %v789
        %857 = vst.msk [vmem:[#allocation2 + $0x78] sm:$0xf] %vm826, %v791
        %858 = vst.msk [vmem:[#allocation2 + $0x7c] sm:$0xf] %vm826, %v793
        %v859 = vld [vmem:[%s197 + $0x4] sm:$0xf]
        %v860 = vld [vmem:[%s197 + $0x8] sm:$0xf]
        %v861 = vld [vmem:[%s197 + $0xc] sm:$0x1]
        %v862 = vld [vmem:[%s197 + $0x14] sm:$0xf]
        %v863 = vld [vmem:[%s197 + $0x18] sm:$0xf]
        %v864 = vld [vmem:[%s197 + $0x1c] sm:$0x1]
        %v865 = vld [vmem:[%s197 + $0x24] sm:$0xf]
        %v866 = vld [vmem:[%s197 + $0x28] sm:$0xf]
        %v867 = vld [vmem:[%s197 + $0x2c] sm:$0x1]
        %v868 = vld [vmem:[%s197 + $0x34] sm:$0xf]
        %v869 = vld [vmem:[%s197 + $0x38] sm:$0xf]
        %v870 = vld [vmem:[%s197 + $0x3c] sm:$0x1]
        %v871 = vld [vmem:[%s197 + $0x44] sm:$0xf]
        %v872 = vld [vmem:[%s197 + $0x48] sm:$0xf]
        %v873 = vld [vmem:[%s197 + $0x4c] sm:$0x1]
        %v874 = vld [vmem:[%s197 + $0x54] sm:$0xf]
        %v875 = vld [vmem:[%s197 + $0x58] sm:$0xf]
        %v876 = vld [vmem:[%s197 + $0x5c] sm:$0x1]
        %v877 = vld [vmem:[%s197 + $0x64] sm:$0xf]
        %v878 = vld [vmem:[%s197 + $0x68] sm:$0xf]
        %v879 = vld [vmem:[%s197 + $0x6c] sm:$0x1]
        %v880 = vld [vmem:[%s197 + $0x74] sm:$0xf]
        %v881 = vld [vmem:[%s197 + $0x78] sm:$0xf]
        %v882 = vld [vmem:[%s197 + $0x7c] sm:$0x1]
        %v883 = vld [vmem:[%s197 + $0x84] sm:$0xf]
        %v884 = vld [vmem:[%s197 + $0x88] sm:$0xf]
        %v885 = vld [vmem:[%s197 + $0x8c] sm:$0x1]
        %v886 = vld [vmem:[%s197 + $0x94] sm:$0xf]
        %v887 = vld [vmem:[%s197 + $0x98] sm:$0xf]
        %v888 = vld [vmem:[%s197 + $0x9c] sm:$0x1]
        %v889 = vld [vmem:[%s197 + $0xa4] sm:$0xf]
        %v890 = vld [vmem:[%s197 + $0xa8] sm:$0xf]
        %v891 = vld [vmem:[%s197 + $0xac] sm:$0x1]
        %v892 = vld [vmem:[%s197 + $0xb4] sm:$0xf]
        %v893 = vld [vmem:[%s197 + $0xb8] sm:$0xf]
        %v894 = vld [vmem:[%s197 + $0xbc] sm:$0x1]
        %v895 = vld [vmem:[%s197 + $0xc4] sm:$0xf]
        %v896 = vld [vmem:[%s197 + $0xc8] sm:$0xf]
        %v897 = vld [vmem:[%s197 + $0xcc] sm:$0x1]
        %v898 = vld [vmem:[%s197 + $0xd4] sm:$0xf]
        %v899 = vld [vmem:[%s197 + $0xd8] sm:$0xf]
        %v900 = vld [vmem:[%s197 + $0xdc] sm:$0x1]
        %v901 = vld [vmem:[%s197 + $0xe4] sm:$0xf]
        %v902 = vld [vmem:[%s197 + $0xe8] sm:$0xf]
        %v903 = vld [vmem:[%s197 + $0xec] sm:$0x1]
        %v904 = vld [vmem:[%s197 + $0xf4] sm:$0xf]
        %v905 = vld [vmem:[%s197 + $0xf8] sm:$0xf]
        %v906 = vld [vmem:[%s197 + $0xfc] sm:$0x1]
        %vm907 = vsmask.f32 3328
        %vm908 = vsmask.f32 7440
        %vm909 = vmor %vm907, %vm908
        %v911 = vshrl.u32 %v859, 16
        %v913 = vrot.slane %v911, 4
        %v914 = vshll.u32 %v859, 16
        %v916 = vrot.slane %v914, 5
        %v917 = vor.u32 %v913, %v916
        %v918 = vrot.slane %v917, 4
        %v920 = vshll.u32 %v860, 16
        %v922 = vrot.slane %v920, 5
        %v923 = vsel %vm909, %v918, %v922
        %v924 = vshrl.u32 %v860, 16
        %v926 = vrot.slane %v924, 4
        %v927 = vor.u32 %v926, %v922
        %v928 = vrot.slane %v927, 4
        %v930 = vshll.u32 %v861, 16
        %v932 = vrot.slane %v930, 5
        %v933 = vsel %vm909, %v928, %v932
        %v935 = vshrl.u32 %v862, 16
        %v937 = vrot.slane %v935, 4
        %v938 = vshll.u32 %v862, 16
        %v940 = vrot.slane %v938, 5
        %v941 = vor.u32 %v937, %v940
        %v942 = vrot.slane %v941, 4
        %v944 = vshll.u32 %v863, 16
        %v946 = vrot.slane %v944, 5
        %v947 = vsel %vm909, %v942, %v946
        %v948 = vshrl.u32 %v863, 16
        %v950 = vrot.slane %v948, 4
        %v951 = vor.u32 %v950, %v946
        %v952 = vrot.slane %v951, 4
        %v954 = vshll.u32 %v864, 16
        %v956 = vrot.slane %v954, 5
        %v957 = vsel %vm909, %v952, %v956
        %v959 = vshrl.u32 %v865, 16
        %v961 = vrot.slane %v959, 4
        %v962 = vshll.u32 %v865, 16
        %v964 = vrot.slane %v962, 5
        %v965 = vor.u32 %v961, %v964
        %v966 = vrot.slane %v965, 4
        %v968 = vshll.u32 %v866, 16
        %v970 = vrot.slane %v968, 5
        %v971 = vsel %vm909, %v966, %v970
        %v972 = vshrl.u32 %v866, 16
        %v974 = vrot.slane %v972, 4
        %v975 = vor.u32 %v974, %v970
        %v976 = vrot.slane %v975, 4
        %v978 = vshll.u32 %v867, 16
        %v980 = vrot.slane %v978, 5
        %v981 = vsel %vm909, %v976, %v980
        %v983 = vshrl.u32 %v868, 16
        %v985 = vrot.slane %v983, 4
        %v986 = vshll.u32 %v868, 16
        %v988 = vrot.slane %v986, 5
        %v989 = vor.u32 %v985, %v988
        %v990 = vrot.slane %v989, 4
        %v992 = vshll.u32 %v869, 16
        %v994 = vrot.slane %v992, 5
        %v995 = vsel %vm909, %v990, %v994
        %v996 = vshrl.u32 %v869, 16
        %v998 = vrot.slane %v996, 4
        %v999 = vor.u32 %v998, %v994
        %v1000 = vrot.slane %v999, 4
        %v1002 = vshll.u32 %v870, 16
        %v1004 = vrot.slane %v1002, 5
        %v1005 = vsel %vm909, %v1000, %v1004
        %v1007 = vshrl.u32 %v871, 16
        %v1009 = vrot.slane %v1007, 4
        %v1010 = vshll.u32 %v871, 16
        %v1012 = vrot.slane %v1010, 5
        %v1013 = vor.u32 %v1009, %v1012
        %v1014 = vrot.slane %v1013, 4
        %v1016 = vshll.u32 %v872, 16
        %v1018 = vrot.slane %v1016, 5
        %v1019 = vsel %vm909, %v1014, %v1018
        %v1020 = vshrl.u32 %v872, 16
        %v1022 = vrot.slane %v1020, 4
        %v1023 = vor.u32 %v1022, %v1018
        %v1024 = vrot.slane %v1023, 4
        %v1026 = vshll.u32 %v873, 16
        %v1028 = vrot.slane %v1026, 5
        %v1029 = vsel %vm909, %v1024, %v1028
        %v1031 = vshrl.u32 %v874, 16
        %v1033 = vrot.slane %v1031, 4
        %v1034 = vshll.u32 %v874, 16
        %v1036 = vrot.slane %v1034, 5
        %v1037 = vor.u32 %v1033, %v1036
        %v1038 = vrot.slane %v1037, 4
        %v1040 = vshll.u32 %v875, 16
        %v1042 = vrot.slane %v1040, 5
        %v1043 = vsel %vm909, %v1038, %v1042
        %v1044 = vshrl.u32 %v875, 16
        %v1046 = vrot.slane %v1044, 4
        %v1047 = vor.u32 %v1046, %v1042
        %v1048 = vrot.slane %v1047, 4
        %v1050 = vshll.u32 %v876, 16
        %v1052 = vrot.slane %v1050, 5
        %v1053 = vsel %vm909, %v1048, %v1052
        %v1055 = vshrl.u32 %v877, 16
        %v1057 = vrot.slane %v1055, 4
        %v1058 = vshll.u32 %v877, 16
        %v1060 = vrot.slane %v1058, 5
        %v1061 = vor.u32 %v1057, %v1060
        %v1062 = vrot.slane %v1061, 4
        %v1064 = vshll.u32 %v878, 16
        %v1066 = vrot.slane %v1064, 5
        %v1067 = vsel %vm909, %v1062, %v1066
        %v1068 = vshrl.u32 %v878, 16
        %v1070 = vrot.slane %v1068, 4
        %v1071 = vor.u32 %v1070, %v1066
        %v1072 = vrot.slane %v1071, 4
        %v1074 = vshll.u32 %v879, 16
        %v1076 = vrot.slane %v1074, 5
        %v1077 = vsel %vm909, %v1072, %v1076
        %v1079 = vshrl.u32 %v880, 16
        %v1081 = vrot.slane %v1079, 4
        %v1082 = vshll.u32 %v880, 16
        %v1084 = vrot.slane %v1082, 5
        %v1085 = vor.u32 %v1081, %v1084
        %v1086 = vrot.slane %v1085, 4
        %v1088 = vshll.u32 %v881, 16
        %v1090 = vrot.slane %v1088, 5
        %v1091 = vsel %vm909, %v1086, %v1090
        %v1092 = vshrl.u32 %v881, 16
        %v1094 = vrot.slane %v1092, 4
        %v1095 = vor.u32 %v1094, %v1090
        %v1096 = vrot.slane %v1095, 4
        %v1098 = vshll.u32 %v882, 16
        %v1100 = vrot.slane %v1098, 5
        %v1101 = vsel %vm909, %v1096, %v1100
        %v1103 = vshrl.u32 %v883, 16
        %v1105 = vrot.slane %v1103, 4
        %v1106 = vshll.u32 %v883, 16
        %v1108 = vrot.slane %v1106, 5
        %v1109 = vor.u32 %v1105, %v1108
        %v1110 = vrot.slane %v1109, 4
        %v1112 = vshll.u32 %v884, 16
        %v1114 = vrot.slane %v1112, 5
        %v1115 = vsel %vm909, %v1110, %v1114
        %v1116 = vshrl.u32 %v884, 16
        %v1118 = vrot.slane %v1116, 4
        %v1119 = vor.u32 %v1118, %v1114
        %v1120 = vrot.slane %v1119, 4
        %v1122 = vshll.u32 %v885, 16
        %v1124 = vrot.slane %v1122, 5
        %v1125 = vsel %vm909, %v1120, %v1124
        %v1127 = vshrl.u32 %v886, 16
        %v1129 = vrot.slane %v1127, 4
        %v1130 = vshll.u32 %v886, 16
        %v1132 = vrot.slane %v1130, 5
        %v1133 = vor.u32 %v1129, %v1132
        %v1134 = vrot.slane %v1133, 4
        %v1136 = vshll.u32 %v887, 16
        %v1138 = vrot.slane %v1136, 5
        %v1139 = vsel %vm909, %v1134, %v1138
        %v1140 = vshrl.u32 %v887, 16
        %v1142 = vrot.slane %v1140, 4
        %v1143 = vor.u32 %v1142, %v1138
        %v1144 = vrot.slane %v1143, 4
        %v1146 = vshll.u32 %v888, 16
        %v1148 = vrot.slane %v1146, 5
        %v1149 = vsel %vm909, %v1144, %v1148
        %v1151 = vshrl.u32 %v889, 16
        %v1153 = vrot.slane %v1151, 4
        %v1154 = vshll.u32 %v889, 16
        %v1156 = vrot.slane %v1154, 5
        %v1157 = vor.u32 %v1153, %v1156
        %v1158 = vrot.slane %v1157, 4
        %v1160 = vshll.u32 %v890, 16
        %v1162 = vrot.slane %v1160, 5
        %v1163 = vsel %vm909, %v1158, %v1162
        %v1164 = vshrl.u32 %v890, 16
        %v1166 = vrot.slane %v1164, 4
        %v1167 = vor.u32 %v1166, %v1162
        %v1168 = vrot.slane %v1167, 4
        %v1170 = vshll.u32 %v891, 16
        %v1172 = vrot.slane %v1170, 5
        %v1173 = vsel %vm909, %v1168, %v1172
        %v1175 = vshrl.u32 %v892, 16
        %v1177 = vrot.slane %v1175, 4
        %v1178 = vshll.u32 %v892, 16
        %v1180 = vrot.slane %v1178, 5
        %v1181 = vor.u32 %v1177, %v1180
        %v1182 = vrot.slane %v1181, 4
        %v1184 = vshll.u32 %v893, 16
        %v1186 = vrot.slane %v1184, 5
        %v1187 = vsel %vm909, %v1182, %v1186
        %v1188 = vshrl.u32 %v893, 16
        %v1190 = vrot.slane %v1188, 4
        %v1191 = vor.u32 %v1190, %v1186
        %v1192 = vrot.slane %v1191, 4
        %v1194 = vshll.u32 %v894, 16
        %v1196 = vrot.slane %v1194, 5
        %v1197 = vsel %vm909, %v1192, %v1196
        %v1199 = vshrl.u32 %v895, 16
        %v1201 = vrot.slane %v1199, 4
        %v1202 = vshll.u32 %v895, 16
        %v1204 = vrot.slane %v1202, 5
        %v1205 = vor.u32 %v1201, %v1204
        %v1206 = vrot.slane %v1205, 4
        %v1208 = vshll.u32 %v896, 16
        %v1210 = vrot.slane %v1208, 5
        %v1211 = vsel %vm909, %v1206, %v1210
        %v1212 = vshrl.u32 %v896, 16
        %v1214 = vrot.slane %v1212, 4
        %v1215 = vor.u32 %v1214, %v1210
        %v1216 = vrot.slane %v1215, 4
        %v1218 = vshll.u32 %v897, 16
        %v1220 = vrot.slane %v1218, 5
        %v1221 = vsel %vm909, %v1216, %v1220
        %v1223 = vshrl.u32 %v898, 16
        %v1225 = vrot.slane %v1223, 4
        %v1226 = vshll.u32 %v898, 16
        %v1228 = vrot.slane %v1226, 5
        %v1229 = vor.u32 %v1225, %v1228
        %v1230 = vrot.slane %v1229, 4
        %v1232 = vshll.u32 %v899, 16
        %v1234 = vrot.slane %v1232, 5
        %v1235 = vsel %vm909, %v1230, %v1234
        %v1236 = vshrl.u32 %v899, 16
        %v1238 = vrot.slane %v1236, 4
        %v1239 = vor.u32 %v1238, %v1234
        %v1240 = vrot.slane %v1239, 4
        %v1242 = vshll.u32 %v900, 16
        %v1244 = vrot.slane %v1242, 5
        %v1245 = vsel %vm909, %v1240, %v1244
        %v1247 = vshrl.u32 %v901, 16
        %v1249 = vrot.slane %v1247, 4
        %v1250 = vshll.u32 %v901, 16
        %v1252 = vrot.slane %v1250, 5
        %v1253 = vor.u32 %v1249, %v1252
        %v1254 = vrot.slane %v1253, 4
        %v1256 = vshll.u32 %v902, 16
        %v1258 = vrot.slane %v1256, 5
        %v1259 = vsel %vm909, %v1254, %v1258
        %v1260 = vshrl.u32 %v902, 16
        %v1262 = vrot.slane %v1260, 4
        %v1263 = vor.u32 %v1262, %v1258
        %v1264 = vrot.slane %v1263, 4
        %v1266 = vshll.u32 %v903, 16
        %v1268 = vrot.slane %v1266, 5
        %v1269 = vsel %vm909, %v1264, %v1268
        %v1271 = vshrl.u32 %v904, 16
        %v1273 = vrot.slane %v1271, 4
        %v1274 = vshll.u32 %v904, 16
        %v1276 = vrot.slane %v1274, 5
        %v1277 = vor.u32 %v1273, %v1276
        %v1278 = vrot.slane %v1277, 4
        %v1280 = vshll.u32 %v905, 16
        %v1282 = vrot.slane %v1280, 5
        %v1283 = vsel %vm909, %v1278, %v1282
        %v1284 = vshrl.u32 %v905, 16
        %v1286 = vrot.slane %v1284, 4
        %v1287 = vor.u32 %v1286, %v1282
        %v1288 = vrot.slane %v1287, 4
        %v1290 = vshll.u32 %v906, 16
        %v1292 = vrot.slane %v1290, 5
        %v1293 = vsel %vm909, %v1288, %v1292
        %1294 = vrot.lane.b32.xlu0 %v923, 32
        %v1295 = vpop.permute.xlu0 %1294
        %1296 = vrot.lane.b32.xlu0 %v933, 32
        %v1297 = vpop.permute.xlu0 %1296
        %1298 = vrot.lane.b32.xlu0 %v947, 32
        %v1299 = vpop.permute.xlu0 %1298
        %1300 = vrot.lane.b32.xlu0 %v957, 32
        %v1301 = vpop.permute.xlu0 %1300
        %1302 = vrot.lane.b32.xlu0 %v971, 32
        %v1303 = vpop.permute.xlu0 %1302
        %1304 = vrot.lane.b32.xlu0 %v981, 32
        %v1305 = vpop.permute.xlu0 %1304
        %1306 = vrot.lane.b32.xlu0 %v995, 32
        %v1307 = vpop.permute.xlu0 %1306
        %1308 = vrot.lane.b32.xlu0 %v1005, 32
        %v1309 = vpop.permute.xlu0 %1308
        %1310 = vrot.lane.b32.xlu0 %v1019, 32
        %v1311 = vpop.permute.xlu0 %1310
        %1312 = vrot.lane.b32.xlu0 %v1029, 32
        %v1313 = vpop.permute.xlu0 %1312
        %1314 = vrot.lane.b32.xlu0 %v1043, 32
        %v1315 = vpop.permute.xlu0 %1314
        %1316 = vrot.lane.b32.xlu0 %v1053, 32
        %v1317 = vpop.permute.xlu0 %1316
        %1318 = vrot.lane.b32.xlu0 %v1067, 32
        %v1319 = vpop.permute.xlu0 %1318
        %1320 = vrot.lane.b32.xlu0 %v1077, 32
        %v1321 = vpop.permute.xlu0 %1320
        %1322 = vrot.lane.b32.xlu0 %v1091, 32
        %v1323 = vpop.permute.xlu0 %1322
        %1324 = vrot.lane.b32.xlu0 %v1101, 32
        %v1325 = vpop.permute.xlu0 %1324
        %1326 = vrot.lane.b32.xlu0 %v1115, 32
        %v1327 = vpop.permute.xlu0 %1326
        %1328 = vrot.lane.b32.xlu0 %v1125, 32
        %v1329 = vpop.permute.xlu0 %1328
        %1330 = vrot.lane.b32.xlu0 %v1139, 32
        %v1331 = vpop.permute.xlu0 %1330
        %1332 = vrot.lane.b32.xlu0 %v1149, 32
        %v1333 = vpop.permute.xlu0 %1332
        %1334 = vrot.lane.b32.xlu0 %v1163, 32
        %v1335 = vpop.permute.xlu0 %1334
        %1336 = vrot.lane.b32.xlu0 %v1173, 32
        %v1337 = vpop.permute.xlu0 %1336
        %1338 = vrot.lane.b32.xlu0 %v1187, 32
        %v1339 = vpop.permute.xlu0 %1338
        %1340 = vrot.lane.b32.xlu0 %v1197, 32
        %v1341 = vpop.permute.xlu0 %1340
        %1342 = vrot.lane.b32.xlu0 %v1211, 32
        %v1343 = vpop.permute.xlu0 %1342
        %1344 = vrot.lane.b32.xlu0 %v1221, 32
        %v1345 = vpop.permute.xlu0 %1344
        %1346 = vrot.lane.b32.xlu0 %v1235, 32
        %v1347 = vpop.permute.xlu0 %1346
        %1348 = vrot.lane.b32.xlu0 %v1245, 32
        %v1349 = vpop.permute.xlu0 %1348
        %1350 = vrot.lane.b32.xlu0 %v1259, 32
        %v1351 = vpop.permute.xlu0 %1350
        %1352 = vrot.lane.b32.xlu0 %v1269, 32
        %v1353 = vpop.permute.xlu0 %1352
        %1354 = vrot.lane.b32.xlu0 %v1283, 32
        %v1355 = vpop.permute.xlu0 %1354
        %1356 = vrot.lane.b32.xlu0 %v1293, 32
        %v1357 = vpop.permute.xlu0 %1356
        %vm1390 = vcmask 388352
        %1391 = vst.msk [vmem:[#allocation2] sm:$0xf] %vm1390, %v1295
        %1392 = vst.msk [vmem:[#allocation2 + $0x4] sm:$0xf] %vm1390, %v1297
        %1393 = vst.msk [vmem:[#allocation2 + $0x8] sm:$0xf] %vm1390, %v1299
        %1394 = vst.msk [vmem:[#allocation2 + $0xc] sm:$0xf] %vm1390, %v1301
        %1395 = vst.msk [vmem:[#allocation2 + $0x10] sm:$0xf] %vm1390, %v1303
        %1396 = vst.msk [vmem:[#allocation2 + $0x14] sm:$0xf] %vm1390, %v1305
        %1397 = vst.msk [vmem:[#allocation2 + $0x18] sm:$0xf] %vm1390, %v1307
        %1398 = vst.msk [vmem:[#allocation2 + $0x1c] sm:$0xf] %vm1390, %v1309
        %1399 = vst.msk [vmem:[#allocation2 + $0x20] sm:$0xf] %vm1390, %v1311
        %1400 = vst.msk [vmem:[#allocation2 + $0x24] sm:$0xf] %vm1390, %v1313
        %1401 = vst.msk [vmem:[#allocation2 + $0x28] sm:$0xf] %vm1390, %v1315
        %1402 = vst.msk [vmem:[#allocation2 + $0x2c] sm:$0xf] %vm1390, %v1317
        %1403 = vst.msk [vmem:[#allocation2 + $0x30] sm:$0xf] %vm1390, %v1319
        %1404 = vst.msk [vmem:[#allocation2 + $0x34] sm:$0xf] %vm1390, %v1321
        %1405 = vst.msk [vmem:[#allocation2 + $0x38] sm:$0xf] %vm1390, %v1323
        %1406 = vst.msk [vmem:[#allocation2 + $0x3c] sm:$0xf] %vm1390, %v1325
        %1407 = vst.msk [vmem:[#allocation2 + $0x40] sm:$0xf] %vm1390, %v1327
        %1408 = vst.msk [vmem:[#allocation2 + $0x44] sm:$0xf] %vm1390, %v1329
        %1409 = vst.msk [vmem:[#allocation2 + $0x48] sm:$0xf] %vm1390, %v1331
        %1410 = vst.msk [vmem:[#allocation2 + $0x4c] sm:$0xf] %vm1390, %v1333
        %1411 = vst.msk [vmem:[#allocation2 + $0x50] sm:$0xf] %vm1390, %v1335
        %1412 = vst.msk [vmem:[#allocation2 + $0x54] sm:$0xf] %vm1390, %v1337
        %1413 = vst.msk [vmem:[#allocation2 + $0x58] sm:$0xf] %vm1390, %v1339
        %1414 = vst.msk [vmem:[#allocation2 + $0x5c] sm:$0xf] %vm1390, %v1341
        %1415 = vst.msk [vmem:[#allocation2 + $0x60] sm:$0xf] %vm1390, %v1343
        %1416 = vst.msk [vmem:[#allocation2 + $0x64] sm:$0xf] %vm1390, %v1345
        %1417 = vst.msk [vmem:[#allocation2 + $0x68] sm:$0xf] %vm1390, %v1347
        %1418 = vst.msk [vmem:[#allocation2 + $0x6c] sm:$0xf] %vm1390, %v1349
        %1419 = vst.msk [vmem:[#allocation2 + $0x70] sm:$0xf] %vm1390, %v1351
        %1420 = vst.msk [vmem:[#allocation2 + $0x74] sm:$0xf] %vm1390, %v1353
        %1421 = vst.msk [vmem:[#allocation2 + $0x78] sm:$0xf] %vm1390, %v1355
        %1422 = vst.msk [vmem:[#allocation2 + $0x7c] sm:$0xf] %vm1390, %v1357
        %s1423 = scalar_lea.vmem %s195, 128
        %v1424 = vld [vmem:[%s1423] sm:$0x8]
        %v1425 = vld [vmem:[%s1423 + $0x4] sm:$0xf]
        %v1426 = vld [vmem:[%s1423 + $0x8] sm:$0xf]
        %v1427 = vld [vmem:[%s1423 + $0x10] sm:$0x8]
        %v1428 = vld [vmem:[%s1423 + $0x14] sm:$0xf]
        %v1429 = vld [vmem:[%s1423 + $0x18] sm:$0xf]
        %v1430 = vld [vmem:[%s1423 + $0x20] sm:$0x8]
        %v1431 = vld [vmem:[%s1423 + $0x24] sm:$0xf]
        %v1432 = vld [vmem:[%s1423 + $0x28] sm:$0xf]
        %v1433 = vld [vmem:[%s1423 + $0x30] sm:$0x8]
        %v1434 = vld [vmem:[%s1423 + $0x34] sm:$0xf]
        %v1435 = vld [vmem:[%s1423 + $0x38] sm:$0xf]
        %v1436 = vld [vmem:[%s1423 + $0x40] sm:$0x8]
        %v1437 = vld [vmem:[%s1423 + $0x44] sm:$0xf]
        %v1438 = vld [vmem:[%s1423 + $0x48] sm:$0xf]
        %v1439 = vld [vmem:[%s1423 + $0x50] sm:$0x8]
        %v1440 = vld [vmem:[%s1423 + $0x54] sm:$0xf]
        %v1441 = vld [vmem:[%s1423 + $0x58] sm:$0xf]
        %v1442 = vld [vmem:[%s1423 + $0x60] sm:$0x8]
        %v1443 = vld [vmem:[%s1423 + $0x64] sm:$0xf]
        %v1444 = vld [vmem:[%s1423 + $0x68] sm:$0xf]
        %v1445 = vld [vmem:[%s1423 + $0x70] sm:$0x8]
        %v1446 = vld [vmem:[%s1423 + $0x74] sm:$0xf]
        %v1447 = vld [vmem:[%s1423 + $0x78] sm:$0xf]
        %v1448 = vld [vmem:[%s1423 + $0x80] sm:$0x8]
        %v1449 = vld [vmem:[%s1423 + $0x84] sm:$0xf]
        %v1450 = vld [vmem:[%s1423 + $0x88] sm:$0xf]
        %v1451 = vld [vmem:[%s1423 + $0x90] sm:$0x8]
        %v1452 = vld [vmem:[%s1423 + $0x94] sm:$0xf]
        %v1453 = vld [vmem:[%s1423 + $0x98] sm:$0xf]
        %v1454 = vld [vmem:[%s1423 + $0xa0] sm:$0x8]
        %v1455 = vld [vmem:[%s1423 + $0xa4] sm:$0xf]
        %v1456 = vld [vmem:[%s1423 + $0xa8] sm:$0xf]
        %v1457 = vld [vmem:[%s1423 + $0xb0] sm:$0x8]
        %v1458 = vld [vmem:[%s1423 + $0xb4] sm:$0xf]
        %v1459 = vld [vmem:[%s1423 + $0xb8] sm:$0xf]
        %v1460 = vld [vmem:[%s1423 + $0xc0] sm:$0x8]
        %v1461 = vld [vmem:[%s1423 + $0xc4] sm:$0xf]
        %v1462 = vld [vmem:[%s1423 + $0xc8] sm:$0xf]
        %v1463 = vld [vmem:[%s1423 + $0xd0] sm:$0x8]
        %v1464 = vld [vmem:[%s1423 + $0xd4] sm:$0xf]
        %v1465 = vld [vmem:[%s1423 + $0xd8] sm:$0xf]
        %v1466 = vld [vmem:[%s1423 + $0xe0] sm:$0x8]
        %v1467 = vld [vmem:[%s1423 + $0xe4] sm:$0xf]
        %v1468 = vld [vmem:[%s1423 + $0xe8] sm:$0xf]
        %v1469 = vld [vmem:[%s1423 + $0xf0] sm:$0x8]
        %v1470 = vld [vmem:[%s1423 + $0xf4] sm:$0xf]
        %v1471 = vld [vmem:[%s1423 + $0xf8] sm:$0xf]
        %v1473 = vshrl.u32 %v1424, 16
        %v1475 = vrot.slane %v1473, 7
        %v1476 = vrot.slane %v1475, 4
        %v1478 = vshrl.u32 %v1425, 16
        %v1480 = vrot.slane %v1478, 7
        %v1481 = vshll.u32 %v1425, 16
        %v1483 = vor.u32 %v1480, %v1481
        %v1484 = vsel %vm248, %v1476, %v1483
        %v1485 = vrot.slane %v1480, 4
        %v1487 = vshrl.u32 %v1426, 16
        %v1489 = vrot.slane %v1487, 7
        %v1490 = vshll.u32 %v1426, 16
        %v1492 = vor.u32 %v1489, %v1490
        %v1493 = vsel %vm248, %v1485, %v1492
        %v1495 = vshrl.u32 %v1427, 16
        %v1497 = vrot.slane %v1495, 7
        %v1498 = vrot.slane %v1497, 4
        %v1500 = vshrl.u32 %v1428, 16
        %v1502 = vrot.slane %v1500, 7
        %v1503 = vshll.u32 %v1428, 16
        %v1505 = vor.u32 %v1502, %v1503
        %v1506 = vsel %vm248, %v1498, %v1505
        %v1507 = vrot.slane %v1502, 4
        %v1509 = vshrl.u32 %v1429, 16
        %v1511 = vrot.slane %v1509, 7
        %v1512 = vshll.u32 %v1429, 16
        %v1514 = vor.u32 %v1511, %v1512
        %v1515 = vsel %vm248, %v1507, %v1514
        %v1517 = vshrl.u32 %v1430, 16
        %v1519 = vrot.slane %v1517, 7
        %v1520 = vrot.slane %v1519, 4
        %v1522 = vshrl.u32 %v1431, 16
        %v1524 = vrot.slane %v1522, 7
        %v1525 = vshll.u32 %v1431, 16
        %v1527 = vor.u32 %v1524, %v1525
        %v1528 = vsel %vm248, %v1520, %v1527
        %v1529 = vrot.slane %v1524, 4
        %v1531 = vshrl.u32 %v1432, 16
        %v1533 = vrot.slane %v1531, 7
        %v1534 = vshll.u32 %v1432, 16
        %v1536 = vor.u32 %v1533, %v1534
        %v1537 = vsel %vm248, %v1529, %v1536
        %v1539 = vshrl.u32 %v1433, 16
        %v1541 = vrot.slane %v1539, 7
        %v1542 = vrot.slane %v1541, 4
        %v1544 = vshrl.u32 %v1434, 16
        %v1546 = vrot.slane %v1544, 7
        %v1547 = vshll.u32 %v1434, 16
        %v1549 = vor.u32 %v1546, %v1547
        %v1550 = vsel %vm248, %v1542, %v1549
        %v1551 = vrot.slane %v1546, 4
        %v1553 = vshrl.u32 %v1435, 16
        %v1555 = vrot.slane %v1553, 7
        %v1556 = vshll.u32 %v1435, 16
        %v1558 = vor.u32 %v1555, %v1556
        %v1559 = vsel %vm248, %v1551, %v1558
        %v1561 = vshrl.u32 %v1436, 16
        %v1563 = vrot.slane %v1561, 7
        %v1564 = vrot.slane %v1563, 4
        %v1566 = vshrl.u32 %v1437, 16
        %v1568 = vrot.slane %v1566, 7
        %v1569 = vshll.u32 %v1437, 16
        %v1571 = vor.u32 %v1568, %v1569
        %v1572 = vsel %vm248, %v1564, %v1571
        %v1573 = vrot.slane %v1568, 4
        %v1575 = vshrl.u32 %v1438, 16
        %v1577 = vrot.slane %v1575, 7
        %v1578 = vshll.u32 %v1438, 16
        %v1580 = vor.u32 %v1577, %v1578
        %v1581 = vsel %vm248, %v1573, %v1580
        %v1583 = vshrl.u32 %v1439, 16
        %v1585 = vrot.slane %v1583, 7
        %v1586 = vrot.slane %v1585, 4
        %v1588 = vshrl.u32 %v1440, 16
        %v1590 = vrot.slane %v1588, 7
        %v1591 = vshll.u32 %v1440, 16
        %v1593 = vor.u32 %v1590, %v1591
        %v1594 = vsel %vm248, %v1586, %v1593
        %v1595 = vrot.slane %v1590, 4
        %v1597 = vshrl.u32 %v1441, 16
        %v1599 = vrot.slane %v1597, 7
        %v1600 = vshll.u32 %v1441, 16
        %v1602 = vor.u32 %v1599, %v1600
        %v1603 = vsel %vm248, %v1595, %v1602
        %v1605 = vshrl.u32 %v1442, 16
        %v1607 = vrot.slane %v1605, 7
        %v1608 = vrot.slane %v1607, 4
        %v1610 = vshrl.u32 %v1443, 16
        %v1612 = vrot.slane %v1610, 7
        %v1613 = vshll.u32 %v1443, 16
        %v1615 = vor.u32 %v1612, %v1613
        %v1616 = vsel %vm248, %v1608, %v1615
        %v1617 = vrot.slane %v1612, 4
        %v1619 = vshrl.u32 %v1444, 16
        %v1621 = vrot.slane %v1619, 7
        %v1622 = vshll.u32 %v1444, 16
        %v1624 = vor.u32 %v1621, %v1622
        %v1625 = vsel %vm248, %v1617, %v1624
        %v1627 = vshrl.u32 %v1445, 16
        %v1629 = vrot.slane %v1627, 7
        %v1630 = vrot.slane %v1629, 4
        %v1632 = vshrl.u32 %v1446, 16
        %v1634 = vrot.slane %v1632, 7
        %v1635 = vshll.u32 %v1446, 16
        %v1637 = vor.u32 %v1634, %v1635
        %v1638 = vsel %vm248, %v1630, %v1637
        %v1639 = vrot.slane %v1634, 4
        %v1641 = vshrl.u32 %v1447, 16
        %v1643 = vrot.slane %v1641, 7
        %v1644 = vshll.u32 %v1447, 16
        %v1646 = vor.u32 %v1643, %v1644
        %v1647 = vsel %vm248, %v1639, %v1646
        %v1649 = vshrl.u32 %v1448, 16
        %v1651 = vrot.slane %v1649, 7
        %v1652 = vrot.slane %v1651, 4
        %v1654 = vshrl.u32 %v1449, 16
        %v1656 = vrot.slane %v1654, 7
        %v1657 = vshll.u32 %v1449, 16
        %v1659 = vor.u32 %v1656, %v1657
        %v1660 = vsel %vm248, %v1652, %v1659
        %v1661 = vrot.slane %v1656, 4
        %v1663 = vshrl.u32 %v1450, 16
        %v1665 = vrot.slane %v1663, 7
        %v1666 = vshll.u32 %v1450, 16
        %v1668 = vor.u32 %v1665, %v1666
        %v1669 = vsel %vm248, %v1661, %v1668
        %v1671 = vshrl.u32 %v1451, 16
        %v1673 = vrot.slane %v1671, 7
        %v1674 = vrot.slane %v1673, 4
        %v1676 = vshrl.u32 %v1452, 16
        %v1678 = vrot.slane %v1676, 7
        %v1679 = vshll.u32 %v1452, 16
        %v1681 = vor.u32 %v1678, %v1679
        %v1682 = vsel %vm248, %v1674, %v1681
        %v1683 = vrot.slane %v1678, 4
        %v1685 = vshrl.u32 %v1453, 16
        %v1687 = vrot.slane %v1685, 7
        %v1688 = vshll.u32 %v1453, 16
        %v1690 = vor.u32 %v1687, %v1688
        %v1691 = vsel %vm248, %v1683, %v1690
        %v1693 = vshrl.u32 %v1454, 16
        %v1695 = vrot.slane %v1693, 7
        %v1696 = vrot.slane %v1695, 4
        %v1698 = vshrl.u32 %v1455, 16
        %v1700 = vrot.slane %v1698, 7
        %v1701 = vshll.u32 %v1455, 16
        %v1703 = vor.u32 %v1700, %v1701
        %v1704 = vsel %vm248, %v1696, %v1703
        %v1705 = vrot.slane %v1700, 4
        %v1707 = vshrl.u32 %v1456, 16
        %v1709 = vrot.slane %v1707, 7
        %v1710 = vshll.u32 %v1456, 16
        %v1712 = vor.u32 %v1709, %v1710
        %v1713 = vsel %vm248, %v1705, %v1712
        %v1715 = vshrl.u32 %v1457, 16
        %v1717 = vrot.slane %v1715, 7
        %v1718 = vrot.slane %v1717, 4
        %v1720 = vshrl.u32 %v1458, 16
        %v1722 = vrot.slane %v1720, 7
        %v1723 = vshll.u32 %v1458, 16
        %v1725 = vor.u32 %v1722, %v1723
        %v1726 = vsel %vm248, %v1718, %v1725
        %v1727 = vrot.slane %v1722, 4
        %v1729 = vshrl.u32 %v1459, 16
        %v1731 = vrot.slane %v1729, 7
        %v1732 = vshll.u32 %v1459, 16
        %v1734 = vor.u32 %v1731, %v1732
        %v1735 = vsel %vm248, %v1727, %v1734
        %v1737 = vshrl.u32 %v1460, 16
        %v1739 = vrot.slane %v1737, 7
        %v1740 = vrot.slane %v1739, 4
        %v1742 = vshrl.u32 %v1461, 16
        %v1744 = vrot.slane %v1742, 7
        %v1745 = vshll.u32 %v1461, 16
        %v1747 = vor.u32 %v1744, %v1745
        %v1748 = vsel %vm248, %v1740, %v1747
        %v1749 = vrot.slane %v1744, 4
        %v1751 = vshrl.u32 %v1462, 16
        %v1753 = vrot.slane %v1751, 7
        %v1754 = vshll.u32 %v1462, 16
        %v1756 = vor.u32 %v1753, %v1754
        %v1757 = vsel %vm248, %v1749, %v1756
        %v1759 = vshrl.u32 %v1463, 16
        %v1761 = vrot.slane %v1759, 7
        %v1762 = vrot.slane %v1761, 4
        %v1764 = vshrl.u32 %v1464, 16
        %v1766 = vrot.slane %v1764, 7
        %v1767 = vshll.u32 %v1464, 16
        %v1769 = vor.u32 %v1766, %v1767
        %v1770 = vsel %vm248, %v1762, %v1769
        %v1771 = vrot.slane %v1766, 4
        %v1773 = vshrl.u32 %v1465, 16
        %v1775 = vrot.slane %v1773, 7
        %v1776 = vshll.u32 %v1465, 16
        %v1778 = vor.u32 %v1775, %v1776
        %v1779 = vsel %vm248, %v1771, %v1778
        %v1781 = vshrl.u32 %v1466, 16
        %v1783 = vrot.slane %v1781, 7
        %v1784 = vrot.slane %v1783, 4
        %v1786 = vshrl.u32 %v1467, 16
        %v1788 = vrot.slane %v1786, 7
        %v1789 = vshll.u32 %v1467, 16
        %v1791 = vor.u32 %v1788, %v1789
        %v1792 = vsel %vm248, %v1784, %v1791
        %v1793 = vrot.slane %v1788, 4
        %v1795 = vshrl.u32 %v1468, 16
        %v1797 = vrot.slane %v1795, 7
        %v1798 = vshll.u32 %v1468, 16
        %v1800 = vor.u32 %v1797, %v1798
        %v1801 = vsel %vm248, %v1793, %v1800
        %v1803 = vshrl.u32 %v1469, 16
        %v1805 = vrot.slane %v1803, 7
        %v1806 = vrot.slane %v1805, 4
        %v1808 = vshrl.u32 %v1470, 16
        %v1810 = vrot.slane %v1808, 7
        %v1811 = vshll.u32 %v1470, 16
        %v1813 = vor.u32 %v1810, %v1811
        %v1814 = vsel %vm248, %v1806, %v1813
        %v1815 = vrot.slane %v1810, 4
        %v1817 = vshrl.u32 %v1471, 16
        %v1819 = vrot.slane %v1817, 7
        %v1820 = vshll.u32 %v1471, 16
        %v1822 = vor.u32 %v1819, %v1820
        %v1823 = vsel %vm248, %v1815, %v1822
        %1824 = vrot.lane.b32.xlu0 %v1484, 48
        %v1825 = vpop.permute.xlu0 %1824
        %1826 = vrot.lane.b32.xlu0 %v1493, 48
        %v1827 = vpop.permute.xlu0 %1826
        %1828 = vrot.lane.b32.xlu0 %v1506, 48
        %v1829 = vpop.permute.xlu0 %1828
        %1830 = vrot.lane.b32.xlu0 %v1515, 48
        %v1831 = vpop.permute.xlu0 %1830
        %1832 = vrot.lane.b32.xlu0 %v1528, 48
        %v1833 = vpop.permute.xlu0 %1832
        %1834 = vrot.lane.b32.xlu0 %v1537, 48
        %v1835 = vpop.permute.xlu0 %1834
        %1836 = vrot.lane.b32.xlu0 %v1550, 48
        %v1837 = vpop.permute.xlu0 %1836
        %1838 = vrot.lane.b32.xlu0 %v1559, 48
        %v1839 = vpop.permute.xlu0 %1838
        %1840 = vrot.lane.b32.xlu0 %v1572, 48
        %v1841 = vpop.permute.xlu0 %1840
        %1842 = vrot.lane.b32.xlu0 %v1581, 48
        %v1843 = vpop.permute.xlu0 %1842
        %1844 = vrot.lane.b32.xlu0 %v1594, 48
        %v1845 = vpop.permute.xlu0 %1844
        %1846 = vrot.lane.b32.xlu0 %v1603, 48
        %v1847 = vpop.permute.xlu0 %1846
        %1848 = vrot.lane.b32.xlu0 %v1616, 48
        %v1849 = vpop.permute.xlu0 %1848
        %1850 = vrot.lane.b32.xlu0 %v1625, 48
        %v1851 = vpop.permute.xlu0 %1850
        %1852 = vrot.lane.b32.xlu0 %v1638, 48
        %v1853 = vpop.permute.xlu0 %1852
        %1854 = vrot.lane.b32.xlu0 %v1647, 48
        %v1855 = vpop.permute.xlu0 %1854
        %1856 = vrot.lane.b32.xlu0 %v1660, 48
        %v1857 = vpop.permute.xlu0 %1856
        %1858 = vrot.lane.b32.xlu0 %v1669, 48
        %v1859 = vpop.permute.xlu0 %1858
        %1860 = vrot.lane.b32.xlu0 %v1682, 48
        %v1861 = vpop.permute.xlu0 %1860
        %1862 = vrot.lane.b32.xlu0 %v1691, 48
        %v1863 = vpop.permute.xlu0 %1862
        %1864 = vrot.lane.b32.xlu0 %v1704, 48
        %v1865 = vpop.permute.xlu0 %1864
        %1866 = vrot.lane.b32.xlu0 %v1713, 48
        %v1867 = vpop.permute.xlu0 %1866
        %1868 = vrot.lane.b32.xlu0 %v1726, 48
        %v1869 = vpop.permute.xlu0 %1868
        %1870 = vrot.lane.b32.xlu0 %v1735, 48
        %v1871 = vpop.permute.xlu0 %1870
        %1872 = vrot.lane.b32.xlu0 %v1748, 48
        %v1873 = vpop.permute.xlu0 %1872
        %1874 = vrot.lane.b32.xlu0 %v1757, 48
        %v1875 = vpop.permute.xlu0 %1874
        %1876 = vrot.lane.b32.xlu0 %v1770, 48
        %v1877 = vpop.permute.xlu0 %1876
        %1878 = vrot.lane.b32.xlu0 %v1779, 48
        %v1879 = vpop.permute.xlu0 %1878
        %1880 = vrot.lane.b32.xlu0 %v1792, 48
        %v1881 = vpop.permute.xlu0 %1880
        %1882 = vrot.lane.b32.xlu0 %v1801, 48
        %v1883 = vpop.permute.xlu0 %1882
        %1884 = vrot.lane.b32.xlu0 %v1814, 48
        %v1885 = vpop.permute.xlu0 %1884
        %1886 = vrot.lane.b32.xlu0 %v1823, 48
        %v1887 = vpop.permute.xlu0 %1886
        %vm1920 = vcmask 519552
        %1921 = vst.msk [vmem:[#allocation2] sm:$0xf] %vm1920, %v1825
        %1922 = vst.msk [vmem:[#allocation2 + $0x4] sm:$0xf] %vm1920, %v1827
        %1923 = vst.msk [vmem:[#allocation2 + $0x8] sm:$0xf] %vm1920, %v1829
        %1924 = vst.msk [vmem:[#allocation2 + $0xc] sm:$0xf] %vm1920, %v1831
        %1925 = vst.msk [vmem:[#allocation2 + $0x10] sm:$0xf] %vm1920, %v1833
        %1926 = vst.msk [vmem:[#allocation2 + $0x14] sm:$0xf] %vm1920, %v1835
        %1927 = vst.msk [vmem:[#allocation2 + $0x18] sm:$0xf] %vm1920, %v1837
        %1928 = vst.msk [vmem:[#allocation2 + $0x1c] sm:$0xf] %vm1920, %v1839
        %1929 = vst.msk [vmem:[#allocation2 + $0x20] sm:$0xf] %vm1920, %v1841
        %1930 = vst.msk [vmem:[#allocation2 + $0x24] sm:$0xf] %vm1920, %v1843
        %1931 = vst.msk [vmem:[#allocation2 + $0x28] sm:$0xf] %vm1920, %v1845
        %1932 = vst.msk [vmem:[#allocation2 + $0x2c] sm:$0xf] %vm1920, %v1847
        %1933 = vst.msk [vmem:[#allocation2 + $0x30] sm:$0xf] %vm1920, %v1849
        %1934 = vst.msk [vmem:[#allocation2 + $0x34] sm:$0xf] %vm1920, %v1851
        %1935 = vst.msk [vmem:[#allocation2 + $0x38] sm:$0xf] %vm1920, %v1853
        %1936 = vst.msk [vmem:[#allocation2 + $0x3c] sm:$0xf] %vm1920, %v1855
        %1937 = vst.msk [vmem:[#allocation2 + $0x40] sm:$0xf] %vm1920, %v1857
        %1938 = vst.msk [vmem:[#allocation2 + $0x44] sm:$0xf] %vm1920, %v1859
        %1939 = vst.msk [vmem:[#allocation2 + $0x48] sm:$0xf] %vm1920, %v1861
        %1940 = vst.msk [vmem:[#allocation2 + $0x4c] sm:$0xf] %vm1920, %v1863
        %1941 = vst.msk [vmem:[#allocation2 + $0x50] sm:$0xf] %vm1920, %v1865
        %1942 = vst.msk [vmem:[#allocation2 + $0x54] sm:$0xf] %vm1920, %v1867
        %1943 = vst.msk [vmem:[#allocation2 + $0x58] sm:$0xf] %vm1920, %v1869
        %1944 = vst.msk [vmem:[#allocation2 + $0x5c] sm:$0xf] %vm1920, %v1871
        %1945 = vst.msk [vmem:[#allocation2 + $0x60] sm:$0xf] %vm1920, %v1873
        %1946 = vst.msk [vmem:[#allocation2 + $0x64] sm:$0xf] %vm1920, %v1875
        %1947 = vst.msk [vmem:[#allocation2 + $0x68] sm:$0xf] %vm1920, %v1877
        %1948 = vst.msk [vmem:[#allocation2 + $0x6c] sm:$0xf] %vm1920, %v1879
        %1949 = vst.msk [vmem:[#allocation2 + $0x70] sm:$0xf] %vm1920, %v1881
        %1950 = vst.msk [vmem:[#allocation2 + $0x74] sm:$0xf] %vm1920, %v1883
        %1951 = vst.msk [vmem:[#allocation2 + $0x78] sm:$0xf] %vm1920, %v1885
        %1952 = vst.msk [vmem:[#allocation2 + $0x7c] sm:$0xf] %vm1920, %v1887
        %v1953 = vld [vmem:[%s1423 + $0x4] sm:$0xf]
        %v1954 = vld [vmem:[%s1423 + $0x8] sm:$0xf]
        %v1955 = vld [vmem:[%s1423 + $0xc] sm:$0x1]
        %v1956 = vld [vmem:[%s1423 + $0x14] sm:$0xf]
        %v1957 = vld [vmem:[%s1423 + $0x18] sm:$0xf]
        %v1958 = vld [vmem:[%s1423 + $0x1c] sm:$0x1]
        %v1959 = vld [vmem:[%s1423 + $0x24] sm:$0xf]
        %v1960 = vld [vmem:[%s1423 + $0x28] sm:$0xf]
        %v1961 = vld [vmem:[%s1423 + $0x2c] sm:$0x1]
        %v1962 = vld [vmem:[%s1423 + $0x34] sm:$0xf]
        %v1963 = vld [vmem:[%s1423 + $0x38] sm:$0xf]
        %v1964 = vld [vmem:[%s1423 + $0x3c] sm:$0x1]
        %v1965 = vld [vmem:[%s1423 + $0x44] sm:$0xf]
        %v1966 = vld [vmem:[%s1423 + $0x48] sm:$0xf]
        %v1967 = vld [vmem:[%s1423 + $0x4c] sm:$0x1]
        %v1968 = vld [vmem:[%s1423 + $0x54] sm:$0xf]
        %v1969 = vld [vmem:[%s1423 + $0x58] sm:$0xf]
        %v1970 = vld [vmem:[%s1423 + $0x5c] sm:$0x1]
        %v1971 = vld [vmem:[%s1423 + $0x64] sm:$0xf]
        %v1972 = vld [vmem:[%s1423 + $0x68] sm:$0xf]
        %v1973 = vld [vmem:[%s1423 + $0x6c] sm:$0x1]
        %v1974 = vld [vmem:[%s1423 + $0x74] sm:$0xf]
        %v1975 = vld [vmem:[%s1423 + $0x78] sm:$0xf]
        %v1976 = vld [vmem:[%s1423 + $0x7c] sm:$0x1]
        %v1977 = vld [vmem:[%s1423 + $0x84] sm:$0xf]
        %v1978 = vld [vmem:[%s1423 + $0x88] sm:$0xf]
        %v1979 = vld [vmem:[%s1423 + $0x8c] sm:$0x1]
        %v1980 = vld [vmem:[%s1423 + $0x94] sm:$0xf]
        %v1981 = vld [vmem:[%s1423 + $0x98] sm:$0xf]
        %v1982 = vld [vmem:[%s1423 + $0x9c] sm:$0x1]
        %v1983 = vld [vmem:[%s1423 + $0xa4] sm:$0xf]
        %v1984 = vld [vmem:[%s1423 + $0xa8] sm:$0xf]
        %v1985 = vld [vmem:[%s1423 + $0xac] sm:$0x1]
        %v1986 = vld [vmem:[%s1423 + $0xb4] sm:$0xf]
        %v1987 = vld [vmem:[%s1423 + $0xb8] sm:$0xf]
        %v1988 = vld [vmem:[%s1423 + $0xbc] sm:$0x1]
        %v1989 = vld [vmem:[%s1423 + $0xc4] sm:$0xf]
        %v1990 = vld [vmem:[%s1423 + $0xc8] sm:$0xf]
        %v1991 = vld [vmem:[%s1423 + $0xcc] sm:$0x1]
        %v1992 = vld [vmem:[%s1423 + $0xd4] sm:$0xf]
        %v1993 = vld [vmem:[%s1423 + $0xd8] sm:$0xf]
        %v1994 = vld [vmem:[%s1423 + $0xdc] sm:$0x1]
        %v1995 = vld [vmem:[%s1423 + $0xe4] sm:$0xf]
        %v1996 = vld [vmem:[%s1423 + $0xe8] sm:$0xf]
        %v1997 = vld [vmem:[%s1423 + $0xec] sm:$0x1]
        %v1998 = vld [vmem:[%s1423 + $0xf4] sm:$0xf]
        %v1999 = vld [vmem:[%s1423 + $0xf8] sm:$0xf]
        %v2000 = vld [vmem:[%s1423 + $0xfc] sm:$0x1]
        %v2002 = vshrl.u32 %v1953, 16
        %v2004 = vrot.slane %v2002, 4
        %v2005 = vshll.u32 %v1953, 16
        %v2007 = vrot.slane %v2005, 5
        %v2008 = vor.u32 %v2004, %v2007
        %v2009 = vrot.slane %v2008, 4
        %v2011 = vshll.u32 %v1954, 16
        %v2013 = vrot.slane %v2011, 5
        %v2014 = vsel %vm909, %v2009, %v2013
        %v2015 = vshrl.u32 %v1954, 16
        %v2017 = vrot.slane %v2015, 4
        %v2018 = vor.u32 %v2017, %v2013
        %v2019 = vrot.slane %v2018, 4
        %v2021 = vshll.u32 %v1955, 16
        %v2023 = vrot.slane %v2021, 5
        %v2024 = vsel %vm909, %v2019, %v2023
        %v2026 = vshrl.u32 %v1956, 16
        %v2028 = vrot.slane %v2026, 4
        %v2029 = vshll.u32 %v1956, 16
        %v2031 = vrot.slane %v2029, 5
        %v2032 = vor.u32 %v2028, %v2031
        %v2033 = vrot.slane %v2032, 4
        %v2035 = vshll.u32 %v1957, 16
        %v2037 = vrot.slane %v2035, 5
        %v2038 = vsel %vm909, %v2033, %v2037
        %v2039 = vshrl.u32 %v1957, 16
        %v2041 = vrot.slane %v2039, 4
        %v2042 = vor.u32 %v2041, %v2037
        %v2043 = vrot.slane %v2042, 4
        %v2045 = vshll.u32 %v1958, 16
        %v2047 = vrot.slane %v2045, 5
        %v2048 = vsel %vm909, %v2043, %v2047
        %v2050 = vshrl.u32 %v1959, 16
        %v2052 = vrot.slane %v2050, 4
        %v2053 = vshll.u32 %v1959, 16
        %v2055 = vrot.slane %v2053, 5
        %v2056 = vor.u32 %v2052, %v2055
        %v2057 = vrot.slane %v2056, 4
        %v2059 = vshll.u32 %v1960, 16
        %v2061 = vrot.slane %v2059, 5
        %v2062 = vsel %vm909, %v2057, %v2061
        %v2063 = vshrl.u32 %v1960, 16
        %v2065 = vrot.slane %v2063, 4
        %v2066 = vor.u32 %v2065, %v2061
        %v2067 = vrot.slane %v2066, 4
        %v2069 = vshll.u32 %v1961, 16
        %v2071 = vrot.slane %v2069, 5
        %v2072 = vsel %vm909, %v2067, %v2071
        %v2074 = vshrl.u32 %v1962, 16
        %v2076 = vrot.slane %v2074, 4
        %v2077 = vshll.u32 %v1962, 16
        %v2079 = vrot.slane %v2077, 5
        %v2080 = vor.u32 %v2076, %v2079
        %v2081 = vrot.slane %v2080, 4
        %v2083 = vshll.u32 %v1963, 16
        %v2085 = vrot.slane %v2083, 5
        %v2086 = vsel %vm909, %v2081, %v2085
        %v2087 = vshrl.u32 %v1963, 16
        %v2089 = vrot.slane %v2087, 4
        %v2090 = vor.u32 %v2089, %v2085
        %v2091 = vrot.slane %v2090, 4
        %v2093 = vshll.u32 %v1964, 16
        %v2095 = vrot.slane %v2093, 5
        %v2096 = vsel %vm909, %v2091, %v2095
        %v2098 = vshrl.u32 %v1965, 16
        %v2100 = vrot.slane %v2098, 4
        %v2101 = vshll.u32 %v1965, 16
        %v2103 = vrot.slane %v2101, 5
        %v2104 = vor.u32 %v2100, %v2103
        %v2105 = vrot.slane %v2104, 4
        %v2107 = vshll.u32 %v1966, 16
        %v2109 = vrot.slane %v2107, 5
        %v2110 = vsel %vm909, %v2105, %v2109
        %v2111 = vshrl.u32 %v1966, 16
        %v2113 = vrot.slane %v2111, 4
        %v2114 = vor.u32 %v2113, %v2109
        %v2115 = vrot.slane %v2114, 4
        %v2117 = vshll.u32 %v1967, 16
        %v2119 = vrot.slane %v2117, 5
        %v2120 = vsel %vm909, %v2115, %v2119
        %v2122 = vshrl.u32 %v1968, 16
        %v2124 = vrot.slane %v2122, 4
        %v2125 = vshll.u32 %v1968, 16
        %v2127 = vrot.slane %v2125, 5
        %v2128 = vor.u32 %v2124, %v2127
        %v2129 = vrot.slane %v2128, 4
        %v2131 = vshll.u32 %v1969, 16
        %v2133 = vrot.slane %v2131, 5
        %v2134 = vsel %vm909, %v2129, %v2133
        %v2135 = vshrl.u32 %v1969, 16
        %v2137 = vrot.slane %v2135, 4
        %v2138 = vor.u32 %v2137, %v2133
        %v2139 = vrot.slane %v2138, 4
        %v2141 = vshll.u32 %v1970, 16
        %v2143 = vrot.slane %v2141, 5
        %v2144 = vsel %vm909, %v2139, %v2143
        %v2146 = vshrl.u32 %v1971, 16
        %v2148 = vrot.slane %v2146, 4
        %v2149 = vshll.u32 %v1971, 16
        %v2151 = vrot.slane %v2149, 5
        %v2152 = vor.u32 %v2148, %v2151
        %v2153 = vrot.slane %v2152, 4
        %v2155 = vshll.u32 %v1972, 16
        %v2157 = vrot.slane %v2155, 5
        %v2158 = vsel %vm909, %v2153, %v2157
        %v2159 = vshrl.u32 %v1972, 16
        %v2161 = vrot.slane %v2159, 4
        %v2162 = vor.u32 %v2161, %v2157
        %v2163 = vrot.slane %v2162, 4
        %v2165 = vshll.u32 %v1973, 16
        %v2167 = vrot.slane %v2165, 5
        %v2168 = vsel %vm909, %v2163, %v2167
        %v2170 = vshrl.u32 %v1974, 16
        %v2172 = vrot.slane %v2170, 4
        %v2173 = vshll.u32 %v1974, 16
        %v2175 = vrot.slane %v2173, 5
        %v2176 = vor.u32 %v2172, %v2175
        %v2177 = vrot.slane %v2176, 4
        %v2179 = vshll.u32 %v1975, 16
        %v2181 = vrot.slane %v2179, 5
        %v2182 = vsel %vm909, %v2177, %v2181
        %v2183 = vshrl.u32 %v1975, 16
        %v2185 = vrot.slane %v2183, 4
        %v2186 = vor.u32 %v2185, %v2181
        %v2187 = vrot.slane %v2186, 4
        %v2189 = vshll.u32 %v1976, 16
        %v2191 = vrot.slane %v2189, 5
        %v2192 = vsel %vm909, %v2187, %v2191
        %v2194 = vshrl.u32 %v1977, 16
        %v2196 = vrot.slane %v2194, 4
        %v2197 = vshll.u32 %v1977, 16
        %v2199 = vrot.slane %v2197, 5
        %v2200 = vor.u32 %v2196, %v2199
        %v2201 = vrot.slane %v2200, 4
        %v2203 = vshll.u32 %v1978, 16
        %v2205 = vrot.slane %v2203, 5
        %v2206 = vsel %vm909, %v2201, %v2205
        %v2207 = vshrl.u32 %v1978, 16
        %v2209 = vrot.slane %v2207, 4
        %v2210 = vor.u32 %v2209, %v2205
        %v2211 = vrot.slane %v2210, 4
        %v2213 = vshll.u32 %v1979, 16
        %v2215 = vrot.slane %v2213, 5
        %v2216 = vsel %vm909, %v2211, %v2215
        %v2218 = vshrl.u32 %v1980, 16
        %v2220 = vrot.slane %v2218, 4
        %v2221 = vshll.u32 %v1980, 16
        %v2223 = vrot.slane %v2221, 5
        %v2224 = vor.u32 %v2220, %v2223
        %v2225 = vrot.slane %v2224, 4
        %v2227 = vshll.u32 %v1981, 16
        %v2229 = vrot.slane %v2227, 5
        %v2230 = vsel %vm909, %v2225, %v2229
        %v2231 = vshrl.u32 %v1981, 16
        %v2233 = vrot.slane %v2231, 4
        %v2234 = vor.u32 %v2233, %v2229
        %v2235 = vrot.slane %v2234, 4
        %v2237 = vshll.u32 %v1982, 16
        %v2239 = vrot.slane %v2237, 5
        %v2240 = vsel %vm909, %v2235, %v2239
        %v2242 = vshrl.u32 %v1983, 16
        %v2244 = vrot.slane %v2242, 4
        %v2245 = vshll.u32 %v1983, 16
        %v2247 = vrot.slane %v2245, 5
        %v2248 = vor.u32 %v2244, %v2247
        %v2249 = vrot.slane %v2248, 4
        %v2251 = vshll.u32 %v1984, 16
        %v2253 = vrot.slane %v2251, 5
        %v2254 = vsel %vm909, %v2249, %v2253
        %v2255 = vshrl.u32 %v1984, 16
        %v2257 = vrot.slane %v2255, 4
        %v2258 = vor.u32 %v2257, %v2253
        %v2259 = vrot.slane %v2258, 4
        %v2261 = vshll.u32 %v1985, 16
        %v2263 = vrot.slane %v2261, 5
        %v2264 = vsel %vm909, %v2259, %v2263
        %v2266 = vshrl.u32 %v1986, 16
        %v2268 = vrot.slane %v2266, 4
        %v2269 = vshll.u32 %v1986, 16
        %v2271 = vrot.slane %v2269, 5
        %v2272 = vor.u32 %v2268, %v2271
        %v2273 = vrot.slane %v2272, 4
        %v2275 = vshll.u32 %v1987, 16
        %v2277 = vrot.slane %v2275, 5
        %v2278 = vsel %vm909, %v2273, %v2277
        %v2279 = vshrl.u32 %v1987, 16
        %v2281 = vrot.slane %v2279, 4
        %v2282 = vor.u32 %v2281, %v2277
        %v2283 = vrot.slane %v2282, 4
        %v2285 = vshll.u32 %v1988, 16
        %v2287 = vrot.slane %v2285, 5
        %v2288 = vsel %vm909, %v2283, %v2287
        %v2290 = vshrl.u32 %v1989, 16
        %v2292 = vrot.slane %v2290, 4
        %v2293 = vshll.u32 %v1989, 16
        %v2295 = vrot.slane %v2293, 5
        %v2296 = vor.u32 %v2292, %v2295
        %v2297 = vrot.slane %v2296, 4
        %v2299 = vshll.u32 %v1990, 16
        %v2301 = vrot.slane %v2299, 5
        %v2302 = vsel %vm909, %v2297, %v2301
        %v2303 = vshrl.u32 %v1990, 16
        %v2305 = vrot.slane %v2303, 4
        %v2306 = vor.u32 %v2305, %v2301
        %v2307 = vrot.slane %v2306, 4
        %v2309 = vshll.u32 %v1991, 16
        %v2311 = vrot.slane %v2309, 5
        %v2312 = vsel %vm909, %v2307, %v2311
        %v2314 = vshrl.u32 %v1992, 16
        %v2316 = vrot.slane %v2314, 4
        %v2317 = vshll.u32 %v1992, 16
        %v2319 = vrot.slane %v2317, 5
        %v2320 = vor.u32 %v2316, %v2319
        %v2321 = vrot.slane %v2320, 4
        %v2323 = vshll.u32 %v1993, 16
        %v2325 = vrot.slane %v2323, 5
        %v2326 = vsel %vm909, %v2321, %v2325
        %v2327 = vshrl.u32 %v1993, 16
        %v2329 = vrot.slane %v2327, 4
        %v2330 = vor.u32 %v2329, %v2325
        %v2331 = vrot.slane %v2330, 4
        %v2333 = vshll.u32 %v1994, 16
        %v2335 = vrot.slane %v2333, 5
        %v2336 = vsel %vm909, %v2331, %v2335
        %v2338 = vshrl.u32 %v1995, 16
        %v2340 = vrot.slane %v2338, 4
        %v2341 = vshll.u32 %v1995, 16
        %v2343 = vrot.slane %v2341, 5
        %v2344 = vor.u32 %v2340, %v2343
        %v2345 = vrot.slane %v2344, 4
        %v2347 = vshll.u32 %v1996, 16
        %v2349 = vrot.slane %v2347, 5
        %v2350 = vsel %vm909, %v2345, %v2349
        %v2351 = vshrl.u32 %v1996, 16
        %v2353 = vrot.slane %v2351, 4
        %v2354 = vor.u32 %v2353, %v2349
        %v2355 = vrot.slane %v2354, 4
        %v2357 = vshll.u32 %v1997, 16
        %v2359 = vrot.slane %v2357, 5
        %v2360 = vsel %vm909, %v2355, %v2359
        %v2362 = vshrl.u32 %v1998, 16
        %v2364 = vrot.slane %v2362, 4
        %v2365 = vshll.u32 %v1998, 16
        %v2367 = vrot.slane %v2365, 5
        %v2368 = vor.u32 %v2364, %v2367
        %v2369 = vrot.slane %v2368, 4
        %v2371 = vshll.u32 %v1999, 16
        %v2373 = vrot.slane %v2371, 5
        %v2374 = vsel %vm909, %v2369, %v2373
        %v2375 = vshrl.u32 %v1999, 16
        %v2377 = vrot.slane %v2375, 4
        %v2378 = vor.u32 %v2377, %v2373
        %v2379 = vrot.slane %v2378, 4
        %v2381 = vshll.u32 %v2000, 16
        %v2383 = vrot.slane %v2381, 5
        %v2384 = vsel %vm909, %v2379, %v2383
        %2385 = vrot.lane.b32.xlu0 %v2014, 64
        %v2386 = vpop.permute.xlu0 %2385
        %2387 = vrot.lane.b32.xlu0 %v2024, 64
        %v2388 = vpop.permute.xlu0 %2387
        %2389 = vrot.lane.b32.xlu0 %v2038, 64
        %v2390 = vpop.permute.xlu0 %2389
        %2391 = vrot.lane.b32.xlu0 %v2048, 64
        %v2392 = vpop.permute.xlu0 %2391
        %2393 = vrot.lane.b32.xlu0 %v2062, 64
        %v2394 = vpop.permute.xlu0 %2393
        %2395 = vrot.lane.b32.xlu0 %v2072, 64
        %v2396 = vpop.permute.xlu0 %2395
        %2397 = vrot.lane.b32.xlu0 %v2086, 64
        %v2398 = vpop.permute.xlu0 %2397
        %2399 = vrot.lane.b32.xlu0 %v2096, 64
        %v2400 = vpop.permute.xlu0 %2399
        %2401 = vrot.lane.b32.xlu0 %v2110, 64
        %v2402 = vpop.permute.xlu0 %2401
        %2403 = vrot.lane.b32.xlu0 %v2120, 64
        %v2404 = vpop.permute.xlu0 %2403
        %2405 = vrot.lane.b32.xlu0 %v2134, 64
        %v2406 = vpop.permute.xlu0 %2405
        %2407 = vrot.lane.b32.xlu0 %v2144, 64
        %v2408 = vpop.permute.xlu0 %2407
        %2409 = vrot.lane.b32.xlu0 %v2158, 64
        %v2410 = vpop.permute.xlu0 %2409
        %2411 = vrot.lane.b32.xlu0 %v2168, 64
        %v2412 = vpop.permute.xlu0 %2411
        %2413 = vrot.lane.b32.xlu0 %v2182, 64
        %v2414 = vpop.permute.xlu0 %2413
        %2415 = vrot.lane.b32.xlu0 %v2192, 64
        %v2416 = vpop.permute.xlu0 %2415
        %2417 = vrot.lane.b32.xlu0 %v2206, 64
        %v2418 = vpop.permute.xlu0 %2417
        %2419 = vrot.lane.b32.xlu0 %v2216, 64
        %v2420 = vpop.permute.xlu0 %2419
        %2421 = vrot.lane.b32.xlu0 %v2230, 64
        %v2422 = vpop.permute.xlu0 %2421
        %2423 = vrot.lane.b32.xlu0 %v2240, 64
        %v2424 = vpop.permute.xlu0 %2423
        %2425 = vrot.lane.b32.xlu0 %v2254, 64
        %v2426 = vpop.permute.xlu0 %2425
        %2427 = vrot.lane.b32.xlu0 %v2264, 64
        %v2428 = vpop.permute.xlu0 %2427
        %2429 = vrot.lane.b32.xlu0 %v2278, 64
        %v2430 = vpop.permute.xlu0 %2429
        %2431 = vrot.lane.b32.xlu0 %v2288, 64
        %v2432 = vpop.permute.xlu0 %2431
        %2433 = vrot.lane.b32.xlu0 %v2302, 64
        %v2434 = vpop.permute.xlu0 %2433
        %2435 = vrot.lane.b32.xlu0 %v2312, 64
        %v2436 = vpop.permute.xlu0 %2435
        %2437 = vrot.lane.b32.xlu0 %v2326, 64
        %v2438 = vpop.permute.xlu0 %2437
        %2439 = vrot.lane.b32.xlu0 %v2336, 64
        %v2440 = vpop.permute.xlu0 %2439
        %2441 = vrot.lane.b32.xlu0 %v2350, 64
        %v2442 = vpop.permute.xlu0 %2441
        %2443 = vrot.lane.b32.xlu0 %v2360, 64
        %v2444 = vpop.permute.xlu0 %2443
        %2445 = vrot.lane.b32.xlu0 %v2374, 64
        %v2446 = vpop.permute.xlu0 %2445
        %2447 = vrot.lane.b32.xlu0 %v2384, 64
        %v2448 = vpop.permute.xlu0 %2447
        %vm2481 = vcmask 650752
        %2482 = vst.msk [vmem:[#allocation2] sm:$0xf] %vm2481, %v2386
        %2483 = vst.msk [vmem:[#allocation2 + $0x4] sm:$0xf] %vm2481, %v2388
        %2484 = vst.msk [vmem:[#allocation2 + $0x8] sm:$0xf] %vm2481, %v2390
        %2485 = vst.msk [vmem:[#allocation2 + $0xc] sm:$0xf] %vm2481, %v2392
        %2486 = vst.msk [vmem:[#allocation2 + $0x10] sm:$0xf] %vm2481, %v2394
        %2487 = vst.msk [vmem:[#allocation2 + $0x14] sm:$0xf] %vm2481, %v2396
        %2488 = vst.msk [vmem:[#allocation2 + $0x18] sm:$0xf] %vm2481, %v2398
        %2489 = vst.msk [vmem:[#allocation2 + $0x1c] sm:$0xf] %vm2481, %v2400
        %2490 = vst.msk [vmem:[#allocation2 + $0x20] sm:$0xf] %vm2481, %v2402
        %2491 = vst.msk [vmem:[#allocation2 + $0x24] sm:$0xf] %vm2481, %v2404
        %2492 = vst.msk [vmem:[#allocation2 + $0x28] sm:$0xf] %vm2481, %v2406
        %2493 = vst.msk [vmem:[#allocation2 + $0x2c] sm:$0xf] %vm2481, %v2408
        %2494 = vst.msk [vmem:[#allocation2 + $0x30] sm:$0xf] %vm2481, %v2410
        %2495 = vst.msk [vmem:[#allocation2 + $0x34] sm:$0xf] %vm2481, %v2412
        %2496 = vst.msk [vmem:[#allocation2 + $0x38] sm:$0xf] %vm2481, %v2414
        %2497 = vst.msk [vmem:[#allocation2 + $0x3c] sm:$0xf] %vm2481, %v2416
        %2498 = vst.msk [vmem:[#allocation2 + $0x40] sm:$0xf] %vm2481, %v2418
        %2499 = vst.msk [vmem:[#allocation2 + $0x44] sm:$0xf] %vm2481, %v2420
        %2500 = vst.msk [vmem:[#allocation2 + $0x48] sm:$0xf] %vm2481, %v2422
        %2501 = vst.msk [vmem:[#allocation2 + $0x4c] sm:$0xf] %vm2481, %v2424
        %2502 = vst.msk [vmem:[#allocation2 + $0x50] sm:$0xf] %vm2481, %v2426
        %2503 = vst.msk [vmem:[#allocation2 + $0x54] sm:$0xf] %vm2481, %v2428
        %2504 = vst.msk [vmem:[#allocation2 + $0x58] sm:$0xf] %vm2481, %v2430
        %2505 = vst.msk [vmem:[#allocation2 + $0x5c] sm:$0xf] %vm2481, %v2432
        %2506 = vst.msk [vmem:[#allocation2 + $0x60] sm:$0xf] %vm2481, %v2434
        %2507 = vst.msk [vmem:[#allocation2 + $0x64] sm:$0xf] %vm2481, %v2436
        %2508 = vst.msk [vmem:[#allocation2 + $0x68] sm:$0xf] %vm2481, %v2438
        %2509 = vst.msk [vmem:[#allocation2 + $0x6c] sm:$0xf] %vm2481, %v2440
        %2510 = vst.msk [vmem:[#allocation2 + $0x70] sm:$0xf] %vm2481, %v2442
        %2511 = vst.msk [vmem:[#allocation2 + $0x74] sm:$0xf] %vm2481, %v2444
        %2512 = vst.msk [vmem:[#allocation2 + $0x78] sm:$0xf] %vm2481, %v2446
        %2513 = vst.msk [vmem:[#allocation2 + $0x7c] sm:$0xf] %vm2481, %v2448
        %s2514 = scalar_lea.vmem %s195, 144
        %v2515 = vld [vmem:[%s2514] sm:$0x8]
        %v2516 = vld [vmem:[%s2514 + $0x4] sm:$0xf]
        %v2517 = vld [vmem:[%s2514 + $0x8] sm:$0xf]
        %v2518 = vld [vmem:[%s2514 + $0x10] sm:$0x8]
        %v2519 = vld [vmem:[%s2514 + $0x14] sm:$0xf]
        %v2520 = vld [vmem:[%s2514 + $0x18] sm:$0xf]
        %v2521 = vld [vmem:[%s2514 + $0x20] sm:$0x8]
        %v2522 = vld [vmem:[%s2514 + $0x24] sm:$0xf]
        %v2523 = vld [vmem:[%s2514 + $0x28] sm:$0xf]
        %v2524 = vld [vmem:[%s2514 + $0x30] sm:$0x8]
        %v2525 = vld [vmem:[%s2514 + $0x34] sm:$0xf]
        %v2526 = vld [vmem:[%s2514 + $0x38] sm:$0xf]
        %v2527 = vld [vmem:[%s2514 + $0x40] sm:$0x8]
        %v2528 = vld [vmem:[%s2514 + $0x44] sm:$0xf]
        %v2529 = vld [vmem:[%s2514 + $0x48] sm:$0xf]
        %v2530 = vld [vmem:[%s2514 + $0x50] sm:$0x8]
        %v2531 = vld [vmem:[%s2514 + $0x54] sm:$0xf]
        %v2532 = vld [vmem:[%s2514 + $0x58] sm:$0xf]
        %v2533 = vld [vmem:[%s2514 + $0x60] sm:$0x8]
        %v2534 = vld [vmem:[%s2514 + $0x64] sm:$0xf]
        %v2535 = vld [vmem:[%s2514 + $0x68] sm:$0xf]
        %v2536 = vld [vmem:[%s2514 + $0x70] sm:$0x8]
        %v2537 = vld [vmem:[%s2514 + $0x74] sm:$0xf]
        %v2538 = vld [vmem:[%s2514 + $0x78] sm:$0xf]
        %v2539 = vld [vmem:[%s2514 + $0x80] sm:$0x8]
        %v2540 = vld [vmem:[%s2514 + $0x84] sm:$0xf]
        %v2541 = vld [vmem:[%s2514 + $0x88] sm:$0xf]
        %v2542 = vld [vmem:[%s2514 + $0x90] sm:$0x8]
        %v2543 = vld [vmem:[%s2514 + $0x94] sm:$0xf]
        %v2544 = vld [vmem:[%s2514 + $0x98] sm:$0xf]
        %v2545 = vld [vmem:[%s2514 + $0xa0] sm:$0x8]
        %v2546 = vld [vmem:[%s2514 + $0xa4] sm:$0xf]
        %v2547 = vld [vmem:[%s2514 + $0xa8] sm:$0xf]
        %v2548 = vld [vmem:[%s2514 + $0xb0] sm:$0x8]
        %v2549 = vld [vmem:[%s2514 + $0xb4] sm:$0xf]
        %v2550 = vld [vmem:[%s2514 + $0xb8] sm:$0xf]
        %v2551 = vld [vmem:[%s2514 + $0xc0] sm:$0x8]
        %v2552 = vld [vmem:[%s2514 + $0xc4] sm:$0xf]
        %v2553 = vld [vmem:[%s2514 + $0xc8] sm:$0xf]
        %v2554 = vld [vmem:[%s2514 + $0xd0] sm:$0x8]
        %v2555 = vld [vmem:[%s2514 + $0xd4] sm:$0xf]
        %v2556 = vld [vmem:[%s2514 + $0xd8] sm:$0xf]
        %v2557 = vld [vmem:[%s2514 + $0xe0] sm:$0x8]
        %v2558 = vld [vmem:[%s2514 + $0xe4] sm:$0xf]
        %v2559 = vld [vmem:[%s2514 + $0xe8] sm:$0xf]
        %v2560 = vld [vmem:[%s2514 + $0xf0] sm:$0x8]
        %v2561 = vld [vmem:[%s2514 + $0xf4] sm:$0xf]
        %v2562 = vld [vmem:[%s2514 + $0xf8] sm:$0xf]
        %v2564 = vshrl.u32 %v2515, 16
        %v2566 = vrot.slane %v2564, 7
        %v2567 = vrot.slane %v2566, 4
        %v2569 = vshrl.u32 %v2516, 16
        %v2571 = vrot.slane %v2569, 7
        %v2572 = vshll.u32 %v2516, 16
        %v2574 = vor.u32 %v2571, %v2572
        %v2575 = vsel %vm248, %v2567, %v2574
        %v2576 = vrot.slane %v2571, 4
        %v2578 = vshrl.u32 %v2517, 16
        %v2580 = vrot.slane %v2578, 7
        %v2581 = vshll.u32 %v2517, 16
        %v2583 = vor.u32 %v2580, %v2581
        %v2584 = vsel %vm248, %v2576, %v2583
        %v2586 = vshrl.u32 %v2518, 16
        %v2588 = vrot.slane %v2586, 7
        %v2589 = vrot.slane %v2588, 4
        %v2591 = vshrl.u32 %v2519, 16
        %v2593 = vrot.slane %v2591, 7
        %v2594 = vshll.u32 %v2519, 16
        %v2596 = vor.u32 %v2593, %v2594
        %v2597 = vsel %vm248, %v2589, %v2596
        %v2598 = vrot.slane %v2593, 4
        %v2600 = vshrl.u32 %v2520, 16
        %v2602 = vrot.slane %v2600, 7
        %v2603 = vshll.u32 %v2520, 16
        %v2605 = vor.u32 %v2602, %v2603
        %v2606 = vsel %vm248, %v2598, %v2605
        %v2608 = vshrl.u32 %v2521, 16
        %v2610 = vrot.slane %v2608, 7
        %v2611 = vrot.slane %v2610, 4
        %v2613 = vshrl.u32 %v2522, 16
        %v2615 = vrot.slane %v2613, 7
        %v2616 = vshll.u32 %v2522, 16
        %v2618 = vor.u32 %v2615, %v2616
        %v2619 = vsel %vm248, %v2611, %v2618
        %v2620 = vrot.slane %v2615, 4
        %v2622 = vshrl.u32 %v2523, 16
        %v2624 = vrot.slane %v2622, 7
        %v2625 = vshll.u32 %v2523, 16
        %v2627 = vor.u32 %v2624, %v2625
        %v2628 = vsel %vm248, %v2620, %v2627
        %v2630 = vshrl.u32 %v2524, 16
        %v2632 = vrot.slane %v2630, 7
        %v2633 = vrot.slane %v2632, 4
        %v2635 = vshrl.u32 %v2525, 16
        %v2637 = vrot.slane %v2635, 7
        %v2638 = vshll.u32 %v2525, 16
        %v2640 = vor.u32 %v2637, %v2638
        %v2641 = vsel %vm248, %v2633, %v2640
        %v2642 = vrot.slane %v2637, 4
        %v2644 = vshrl.u32 %v2526, 16
        %v2646 = vrot.slane %v2644, 7
        %v2647 = vshll.u32 %v2526, 16
        %v2649 = vor.u32 %v2646, %v2647
        %v2650 = vsel %vm248, %v2642, %v2649
        %v2652 = vshrl.u32 %v2527, 16
        %v2654 = vrot.slane %v2652, 7
        %v2655 = vrot.slane %v2654, 4
        %v2657 = vshrl.u32 %v2528, 16
        %v2659 = vrot.slane %v2657, 7
        %v2660 = vshll.u32 %v2528, 16
        %v2662 = vor.u32 %v2659, %v2660
        %v2663 = vsel %vm248, %v2655, %v2662
        %v2664 = vrot.slane %v2659, 4
        %v2666 = vshrl.u32 %v2529, 16
        %v2668 = vrot.slane %v2666, 7
        %v2669 = vshll.u32 %v2529, 16
        %v2671 = vor.u32 %v2668, %v2669
        %v2672 = vsel %vm248, %v2664, %v2671
        %v2674 = vshrl.u32 %v2530, 16
        %v2676 = vrot.slane %v2674, 7
        %v2677 = vrot.slane %v2676, 4
        %v2679 = vshrl.u32 %v2531, 16
        %v2681 = vrot.slane %v2679, 7
        %v2682 = vshll.u32 %v2531, 16
        %v2684 = vor.u32 %v2681, %v2682
        %v2685 = vsel %vm248, %v2677, %v2684
        %v2686 = vrot.slane %v2681, 4
        %v2688 = vshrl.u32 %v2532, 16
        %v2690 = vrot.slane %v2688, 7
        %v2691 = vshll.u32 %v2532, 16
        %v2693 = vor.u32 %v2690, %v2691
        %v2694 = vsel %vm248, %v2686, %v2693
        %v2696 = vshrl.u32 %v2533, 16
        %v2698 = vrot.slane %v2696, 7
        %v2699 = vrot.slane %v2698, 4
        %v2701 = vshrl.u32 %v2534, 16
        %v2703 = vrot.slane %v2701, 7
        %v2704 = vshll.u32 %v2534, 16
        %v2706 = vor.u32 %v2703, %v2704
        %v2707 = vsel %vm248, %v2699, %v2706
        %v2708 = vrot.slane %v2703, 4
        %v2710 = vshrl.u32 %v2535, 16
        %v2712 = vrot.slane %v2710, 7
        %v2713 = vshll.u32 %v2535, 16
        %v2715 = vor.u32 %v2712, %v2713
        %v2716 = vsel %vm248, %v2708, %v2715
        %v2718 = vshrl.u32 %v2536, 16
        %v2720 = vrot.slane %v2718, 7
        %v2721 = vrot.slane %v2720, 4
        %v2723 = vshrl.u32 %v2537, 16
        %v2725 = vrot.slane %v2723, 7
        %v2726 = vshll.u32 %v2537, 16
        %v2728 = vor.u32 %v2725, %v2726
        %v2729 = vsel %vm248, %v2721, %v2728
        %v2730 = vrot.slane %v2725, 4
        %v2732 = vshrl.u32 %v2538, 16
        %v2734 = vrot.slane %v2732, 7
        %v2735 = vshll.u32 %v2538, 16
        %v2737 = vor.u32 %v2734, %v2735
        %v2738 = vsel %vm248, %v2730, %v2737
        %v2740 = vshrl.u32 %v2539, 16
        %v2742 = vrot.slane %v2740, 7
        %v2743 = vrot.slane %v2742, 4
        %v2745 = vshrl.u32 %v2540, 16
        %v2747 = vrot.slane %v2745, 7
        %v2748 = vshll.u32 %v2540, 16
        %v2750 = vor.u32 %v2747, %v2748
        %v2751 = vsel %vm248, %v2743, %v2750
        %v2752 = vrot.slane %v2747, 4
        %v2754 = vshrl.u32 %v2541, 16
        %v2756 = vrot.slane %v2754, 7
        %v2757 = vshll.u32 %v2541, 16
        %v2759 = vor.u32 %v2756, %v2757
        %v2760 = vsel %vm248, %v2752, %v2759
        %v2762 = vshrl.u32 %v2542, 16
        %v2764 = vrot.slane %v2762, 7
        %v2765 = vrot.slane %v2764, 4
        %v2767 = vshrl.u32 %v2543, 16
        %v2769 = vrot.slane %v2767, 7
        %v2770 = vshll.u32 %v2543, 16
        %v2772 = vor.u32 %v2769, %v2770
        %v2773 = vsel %vm248, %v2765, %v2772
        %v2774 = vrot.slane %v2769, 4
        %v2776 = vshrl.u32 %v2544, 16
        %v2778 = vrot.slane %v2776, 7
        %v2779 = vshll.u32 %v2544, 16
        %v2781 = vor.u32 %v2778, %v2779
        %v2782 = vsel %vm248, %v2774, %v2781
        %v2784 = vshrl.u32 %v2545, 16
        %v2786 = vrot.slane %v2784, 7
        %v2787 = vrot.slane %v2786, 4
        %v2789 = vshrl.u32 %v2546, 16
        %v2791 = vrot.slane %v2789, 7
        %v2792 = vshll.u32 %v2546, 16
        %v2794 = vor.u32 %v2791, %v2792
        %v2795 = vsel %vm248, %v2787, %v2794
        %v2796 = vrot.slane %v2791, 4
        %v2798 = vshrl.u32 %v2547, 16
        %v2800 = vrot.slane %v2798, 7
        %v2801 = vshll.u32 %v2547, 16
        %v2803 = vor.u32 %v2800, %v2801
        %v2804 = vsel %vm248, %v2796, %v2803
        %v2806 = vshrl.u32 %v2548, 16
        %v2808 = vrot.slane %v2806, 7
        %v2809 = vrot.slane %v2808, 4
        %v2811 = vshrl.u32 %v2549, 16
        %v2813 = vrot.slane %v2811, 7
        %v2814 = vshll.u32 %v2549, 16
        %v2816 = vor.u32 %v2813, %v2814
        %v2817 = vsel %vm248, %v2809, %v2816
        %v2818 = vrot.slane %v2813, 4
        %v2820 = vshrl.u32 %v2550, 16
        %v2822 = vrot.slane %v2820, 7
        %v2823 = vshll.u32 %v2550, 16
        %v2825 = vor.u32 %v2822, %v2823
        %v2826 = vsel %vm248, %v2818, %v2825
        %v2828 = vshrl.u32 %v2551, 16
        %v2830 = vrot.slane %v2828, 7
        %v2831 = vrot.slane %v2830, 4
        %v2833 = vshrl.u32 %v2552, 16
        %v2835 = vrot.slane %v2833, 7
        %v2836 = vshll.u32 %v2552, 16
        %v2838 = vor.u32 %v2835, %v2836
        %v2839 = vsel %vm248, %v2831, %v2838
        %v2840 = vrot.slane %v2835, 4
        %v2842 = vshrl.u32 %v2553, 16
        %v2844 = vrot.slane %v2842, 7
        %v2845 = vshll.u32 %v2553, 16
        %v2847 = vor.u32 %v2844, %v2845
        %v2848 = vsel %vm248, %v2840, %v2847
        %v2850 = vshrl.u32 %v2554, 16
        %v2852 = vrot.slane %v2850, 7
        %v2853 = vrot.slane %v2852, 4
        %v2855 = vshrl.u32 %v2555, 16
        %v2857 = vrot.slane %v2855, 7
        %v2858 = vshll.u32 %v2555, 16
        %v2860 = vor.u32 %v2857, %v2858
        %v2861 = vsel %vm248, %v2853, %v2860
        %v2862 = vrot.slane %v2857, 4
        %v2864 = vshrl.u32 %v2556, 16
        %v2866 = vrot.slane %v2864, 7
        %v2867 = vshll.u32 %v2556, 16
        %v2869 = vor.u32 %v2866, %v2867
        %v2870 = vsel %vm248, %v2862, %v2869
        %v2872 = vshrl.u32 %v2557, 16
        %v2874 = vrot.slane %v2872, 7
        %v2875 = vrot.slane %v2874, 4
        %v2877 = vshrl.u32 %v2558, 16
        %v2879 = vrot.slane %v2877, 7
        %v2880 = vshll.u32 %v2558, 16
        %v2882 = vor.u32 %v2879, %v2880
        %v2883 = vsel %vm248, %v2875, %v2882
        %v2884 = vrot.slane %v2879, 4
        %v2886 = vshrl.u32 %v2559, 16
        %v2888 = vrot.slane %v2886, 7
        %v2889 = vshll.u32 %v2559, 16
        %v2891 = vor.u32 %v2888, %v2889
        %v2892 = vsel %vm248, %v2884, %v2891
        %v2894 = vshrl.u32 %v2560, 16
        %v2896 = vrot.slane %v2894, 7
        %v2897 = vrot.slane %v2896, 4
        %v2899 = vshrl.u32 %v2561, 16
        %v2901 = vrot.slane %v2899, 7
        %v2902 = vshll.u32 %v2561, 16
        %v2904 = vor.u32 %v2901, %v2902
        %v2905 = vsel %vm248, %v2897, %v2904
        %v2906 = vrot.slane %v2901, 4
        %v2908 = vshrl.u32 %v2562, 16
        %v2910 = vrot.slane %v2908, 7
        %v2911 = vshll.u32 %v2562, 16
        %v2913 = vor.u32 %v2910, %v2911
        %v2914 = vsel %vm248, %v2906, %v2913
        %2915 = vrot.lane.b32.xlu0 %v2575, 80
        %v2916 = vpop.permute.xlu0 %2915
        %2917 = vrot.lane.b32.xlu0 %v2584, 80
        %v2918 = vpop.permute.xlu0 %2917
        %2919 = vrot.lane.b32.xlu0 %v2597, 80
        %v2920 = vpop.permute.xlu0 %2919
        %2921 = vrot.lane.b32.xlu0 %v2606, 80
        %v2922 = vpop.permute.xlu0 %2921
        %2923 = vrot.lane.b32.xlu0 %v2619, 80
        %v2924 = vpop.permute.xlu0 %2923
        %2925 = vrot.lane.b32.xlu0 %v2628, 80
        %v2926 = vpop.permute.xlu0 %2925
        %2927 = vrot.lane.b32.xlu0 %v2641, 80
        %v2928 = vpop.permute.xlu0 %2927
        %2929 = vrot.lane.b32.xlu0 %v2650, 80
        %v2930 = vpop.permute.xlu0 %2929
        %2931 = vrot.lane.b32.xlu0 %v2663, 80
        %v2932 = vpop.permute.xlu0 %2931
        %2933 = vrot.lane.b32.xlu0 %v2672, 80
        %v2934 = vpop.permute.xlu0 %2933
        %2935 = vrot.lane.b32.xlu0 %v2685, 80
        %v2936 = vpop.permute.xlu0 %2935
        %2937 = vrot.lane.b32.xlu0 %v2694, 80
        %v2938 = vpop.permute.xlu0 %2937
        %2939 = vrot.lane.b32.xlu0 %v2707, 80
        %v2940 = vpop.permute.xlu0 %2939
        %2941 = vrot.lane.b32.xlu0 %v2716, 80
        %v2942 = vpop.permute.xlu0 %2941
        %2943 = vrot.lane.b32.xlu0 %v2729, 80
        %v2944 = vpop.permute.xlu0 %2943
        %2945 = vrot.lane.b32.xlu0 %v2738, 80
        %v2946 = vpop.permute.xlu0 %2945
        %2947 = vrot.lane.b32.xlu0 %v2751, 80
        %v2948 = vpop.permute.xlu0 %2947
        %2949 = vrot.lane.b32.xlu0 %v2760, 80
        %v2950 = vpop.permute.xlu0 %2949
        %2951 = vrot.lane.b32.xlu0 %v2773, 80
        %v2952 = vpop.permute.xlu0 %2951
        %2953 = vrot.lane.b32.xlu0 %v2782, 80
        %v2954 = vpop.permute.xlu0 %2953
        %2955 = vrot.lane.b32.xlu0 %v2795, 80
        %v2956 = vpop.permute.xlu0 %2955
        %2957 = vrot.lane.b32.xlu0 %v2804, 80
        %v2958 = vpop.permute.xlu0 %2957
        %2959 = vrot.lane.b32.xlu0 %v2817, 80
        %v2960 = vpop.permute.xlu0 %2959
        %2961 = vrot.lane.b32.xlu0 %v2826, 80
        %v2962 = vpop.permute.xlu0 %2961
        %2963 = vrot.lane.b32.xlu0 %v2839, 80
        %v2964 = vpop.permute.xlu0 %2963
        %2965 = vrot.lane.b32.xlu0 %v2848, 80
        %v2966 = vpop.permute.xlu0 %2965
        %2967 = vrot.lane.b32.xlu0 %v2861, 80
        %v2968 = vpop.permute.xlu0 %2967
        %2969 = vrot.lane.b32.xlu0 %v2870, 80
        %v2970 = vpop.permute.xlu0 %2969
        %2971 = vrot.lane.b32.xlu0 %v2883, 80
        %v2972 = vpop.permute.xlu0 %2971
        %2973 = vrot.lane.b32.xlu0 %v2892, 80
        %v2974 = vpop.permute.xlu0 %2973
        %2975 = vrot.lane.b32.xlu0 %v2905, 80
        %v2976 = vpop.permute.xlu0 %2975
        %2977 = vrot.lane.b32.xlu0 %v2914, 80
        %v2978 = vpop.permute.xlu0 %2977
        %vm3011 = vcmask 781952
        %3012 = vst.msk [vmem:[#allocation2] sm:$0xf] %vm3011, %v2916
        %3013 = vst.msk [vmem:[#allocation2 + $0x4] sm:$0xf] %vm3011, %v2918
        %3014 = vst.msk [vmem:[#allocation2 + $0x8] sm:$0xf] %vm3011, %v2920
        %3015 = vst.msk [vmem:[#allocation2 + $0xc] sm:$0xf] %vm3011, %v2922
        %3016 = vst.msk [vmem:[#allocation2 + $0x10] sm:$0xf] %vm3011, %v2924
        %3017 = vst.msk [vmem:[#allocation2 + $0x14] sm:$0xf] %vm3011, %v2926
        %3018 = vst.msk [vmem:[#allocation2 + $0x18] sm:$0xf] %vm3011, %v2928
        %3019 = vst.msk [vmem:[#allocation2 + $0x1c] sm:$0xf] %vm3011, %v2930
        %3020 = vst.msk [vmem:[#allocation2 + $0x20] sm:$0xf] %vm3011, %v2932
        %3021 = vst.msk [vmem:[#allocation2 + $0x24] sm:$0xf] %vm3011, %v2934
        %3022 = vst.msk [vmem:[#allocation2 + $0x28] sm:$0xf] %vm3011, %v2936
        %3023 = vst.msk [vmem:[#allocation2 + $0x2c] sm:$0xf] %vm3011, %v2938
        %3024 = vst.msk [vmem:[#allocation2 + $0x30] sm:$0xf] %vm3011, %v2940
        %3025 = vst.msk [vmem:[#allocation2 + $0x34] sm:$0xf] %vm3011, %v2942
        %3026 = vst.msk [vmem:[#allocation2 + $0x38] sm:$0xf] %vm3011, %v2944
        %3027 = vst.msk [vmem:[#allocation2 + $0x3c] sm:$0xf] %vm3011, %v2946
        %3028 = vst.msk [vmem:[#allocation2 + $0x40] sm:$0xf] %vm3011, %v2948
        %3029 = vst.msk [vmem:[#allocation2 + $0x44] sm:$0xf] %vm3011, %v2950
        %3030 = vst.msk [vmem:[#allocation2 + $0x48] sm:$0xf] %vm3011, %v2952
        %3031 = vst.msk [vmem:[#allocation2 + $0x4c] sm:$0xf] %vm3011, %v2954
        %3032 = vst.msk [vmem:[#allocation2 + $0x50] sm:$0xf] %vm3011, %v2956
        %3033 = vst.msk [vmem:[#allocation2 + $0x54] sm:$0xf] %vm3011, %v2958
        %3034 = vst.msk [vmem:[#allocation2 + $0x58] sm:$0xf] %vm3011, %v2960
        %3035 = vst.msk [vmem:[#allocation2 + $0x5c] sm:$0xf] %vm3011, %v2962
        %3036 = vst.msk [vmem:[#allocation2 + $0x60] sm:$0xf] %vm3011, %v2964
        %3037 = vst.msk [vmem:[#allocation2 + $0x64] sm:$0xf] %vm3011, %v2966
        %3038 = vst.msk [vmem:[#allocation2 + $0x68] sm:$0xf] %vm3011, %v2968
        %3039 = vst.msk [vmem:[#allocation2 + $0x6c] sm:$0xf] %vm3011, %v2970
        %3040 = vst.msk [vmem:[#allocation2 + $0x70] sm:$0xf] %vm3011, %v2972
        %3041 = vst.msk [vmem:[#allocation2 + $0x74] sm:$0xf] %vm3011, %v2974
        %3042 = vst.msk [vmem:[#allocation2 + $0x78] sm:$0xf] %vm3011, %v2976
        %3043 = vst.msk [vmem:[#allocation2 + $0x7c] sm:$0xf] %vm3011, %v2978
        %v3044 = vld [vmem:[%s2514 + $0x4] sm:$0xf]
        %v3045 = vld [vmem:[%s2514 + $0x8] sm:$0xf]
        %v3046 = vld [vmem:[%s2514 + $0x14] sm:$0xf]
        %v3047 = vld [vmem:[%s2514 + $0x18] sm:$0xf]
        %v3048 = vld [vmem:[%s2514 + $0x24] sm:$0xf]
        %v3049 = vld [vmem:[%s2514 + $0x28] sm:$0xf]
        %v3050 = vld [vmem:[%s2514 + $0x34] sm:$0xf]
        %v3051 = vld [vmem:[%s2514 + $0x38] sm:$0xf]
        %v3052 = vld [vmem:[%s2514 + $0x44] sm:$0xf]
        %v3053 = vld [vmem:[%s2514 + $0x48] sm:$0xf]
        %v3054 = vld [vmem:[%s2514 + $0x54] sm:$0xf]
        %v3055 = vld [vmem:[%s2514 + $0x58] sm:$0xf]
        %v3056 = vld [vmem:[%s2514 + $0x64] sm:$0xf]
        %v3057 = vld [vmem:[%s2514 + $0x68] sm:$0xf]
        %v3058 = vld [vmem:[%s2514 + $0x74] sm:$0xf]
        %v3059 = vld [vmem:[%s2514 + $0x78] sm:$0xf]
        %v3060 = vld [vmem:[%s2514 + $0x84] sm:$0xf]
        %v3061 = vld [vmem:[%s2514 + $0x88] sm:$0xf]
        %v3062 = vld [vmem:[%s2514 + $0x94] sm:$0xf]
        %v3063 = vld [vmem:[%s2514 + $0x98] sm:$0xf]
        %v3064 = vld [vmem:[%s2514 + $0xa4] sm:$0xf]
        %v3065 = vld [vmem:[%s2514 + $0xa8] sm:$0xf]
        %v3066 = vld [vmem:[%s2514 + $0xb4] sm:$0xf]
        %v3067 = vld [vmem:[%s2514 + $0xb8] sm:$0xf]
        %v3068 = vld [vmem:[%s2514 + $0xc4] sm:$0xf]
        %v3069 = vld [vmem:[%s2514 + $0xc8] sm:$0xf]
        %v3070 = vld [vmem:[%s2514 + $0xd4] sm:$0xf]
        %v3071 = vld [vmem:[%s2514 + $0xd8] sm:$0xf]
        %v3072 = vld [vmem:[%s2514 + $0xe4] sm:$0xf]
        %v3073 = vld [vmem:[%s2514 + $0xe8] sm:$0xf]
        %v3074 = vld [vmem:[%s2514 + $0xf4] sm:$0xf]
        %v3075 = vld [vmem:[%s2514 + $0xf8] sm:$0xf]
        %3108 = vrot.lane.b32.xlu0 %v3044, 96
        %v3109 = vpop.permute.xlu0 %3108
        %3110 = vrot.lane.b32.xlu0 %v3045, 96
        %v3111 = vpop.permute.xlu0 %3110
        %3112 = vrot.lane.b32.xlu0 %v3046, 96
        %v3113 = vpop.permute.xlu0 %3112
        %3114 = vrot.lane.b32.xlu0 %v3047, 96
        %v3115 = vpop.permute.xlu0 %3114
        %3116 = vrot.lane.b32.xlu0 %v3048, 96
        %v3117 = vpop.permute.xlu0 %3116
        %3118 = vrot.lane.b32.xlu0 %v3049, 96
        %v3119 = vpop.permute.xlu0 %3118
        %3120 = vrot.lane.b32.xlu0 %v3050, 96
        %v3121 = vpop.permute.xlu0 %3120
        %3122 = vrot.lane.b32.xlu0 %v3051, 96
        %v3123 = vpop.permute.xlu0 %3122
        %3124 = vrot.lane.b32.xlu0 %v3052, 96
        %v3125 = vpop.permute.xlu0 %3124
        %3126 = vrot.lane.b32.xlu0 %v3053, 96
        %v3127 = vpop.permute.xlu0 %3126
        %3128 = vrot.lane.b32.xlu0 %v3054, 96
        %v3129 = vpop.permute.xlu0 %3128
        %3130 = vrot.lane.b32.xlu0 %v3055, 96
        %v3131 = vpop.permute.xlu0 %3130
        %3132 = vrot.lane.b32.xlu0 %v3056, 96
        %v3133 = vpop.permute.xlu0 %3132
        %3134 = vrot.lane.b32.xlu0 %v3057, 96
        %v3135 = vpop.permute.xlu0 %3134
        %3136 = vrot.lane.b32.xlu0 %v3058, 96
        %v3137 = vpop.permute.xlu0 %3136
        %3138 = vrot.lane.b32.xlu0 %v3059, 96
        %v3139 = vpop.permute.xlu0 %3138
        %3140 = vrot.lane.b32.xlu0 %v3060, 96
        %v3141 = vpop.permute.xlu0 %3140
        %3142 = vrot.lane.b32.xlu0 %v3061, 96
        %v3143 = vpop.permute.xlu0 %3142
        %3144 = vrot.lane.b32.xlu0 %v3062, 96
        %v3145 = vpop.permute.xlu0 %3144
        %3146 = vrot.lane.b32.xlu0 %v3063, 96
        %v3147 = vpop.permute.xlu0 %3146
        %3148 = vrot.lane.b32.xlu0 %v3064, 96
        %v3149 = vpop.permute.xlu0 %3148
        %3150 = vrot.lane.b32.xlu0 %v3065, 96
        %v3151 = vpop.permute.xlu0 %3150
        %3152 = vrot.lane.b32.xlu0 %v3066, 96
        %v3153 = vpop.permute.xlu0 %3152
        %3154 = vrot.lane.b32.xlu0 %v3067, 96
        %v3155 = vpop.permute.xlu0 %3154
        %3156 = vrot.lane.b32.xlu0 %v3068, 96
        %v3157 = vpop.permute.xlu0 %3156
        %3158 = vrot.lane.b32.xlu0 %v3069, 96
        %v3159 = vpop.permute.xlu0 %3158
        %3160 = vrot.lane.b32.xlu0 %v3070, 96
        %v3161 = vpop.permute.xlu0 %3160
        %3162 = vrot.lane.b32.xlu0 %v3071, 96
        %v3163 = vpop.permute.xlu0 %3162
        %3164 = vrot.lane.b32.xlu0 %v3072, 96
        %v3165 = vpop.permute.xlu0 %3164
        %3166 = vrot.lane.b32.xlu0 %v3073, 96
        %v3167 = vpop.permute.xlu0 %3166
        %3168 = vrot.lane.b32.xlu0 %v3074, 96
        %v3169 = vpop.permute.xlu0 %3168
        %3170 = vrot.lane.b32.xlu0 %v3075, 96
        %v3171 = vpop.permute.xlu0 %3170
        %vm3204 = vcmask 913152
        %3205 = vst.msk [vmem:[#allocation2] sm:$0xf] %vm3204, %v3109
        %3206 = vst.msk [vmem:[#allocation2 + $0x4] sm:$0xf] %vm3204, %v3111
        %3207 = vst.msk [vmem:[#allocation2 + $0x8] sm:$0xf] %vm3204, %v3113
        %3208 = vst.msk [vmem:[#allocation2 + $0xc] sm:$0xf] %vm3204, %v3115
        %3209 = vst.msk [vmem:[#allocation2 + $0x10] sm:$0xf] %vm3204, %v3117
        %3210 = vst.msk [vmem:[#allocation2 + $0x14] sm:$0xf] %vm3204, %v3119
        %3211 = vst.msk [vmem:[#allocation2 + $0x18] sm:$0xf] %vm3204, %v3121
        %3212 = vst.msk [vmem:[#allocation2 + $0x1c] sm:$0xf] %vm3204, %v3123
        %3213 = vst.msk [vmem:[#allocation2 + $0x20] sm:$0xf] %vm3204, %v3125
        %3214 = vst.msk [vmem:[#allocation2 + $0x24] sm:$0xf] %vm3204, %v3127
        %3215 = vst.msk [vmem:[#allocation2 + $0x28] sm:$0xf] %vm3204, %v3129
        %3216 = vst.msk [vmem:[#allocation2 + $0x2c] sm:$0xf] %vm3204, %v3131
        %3217 = vst.msk [vmem:[#allocation2 + $0x30] sm:$0xf] %vm3204, %v3133
        %3218 = vst.msk [vmem:[#allocation2 + $0x34] sm:$0xf] %vm3204, %v3135
        %3219 = vst.msk [vmem:[#allocation2 + $0x38] sm:$0xf] %vm3204, %v3137
        %3220 = vst.msk [vmem:[#allocation2 + $0x3c] sm:$0xf] %vm3204, %v3139
        %3221 = vst.msk [vmem:[#allocation2 + $0x40] sm:$0xf] %vm3204, %v3141
        %3222 = vst.msk [vmem:[#allocation2 + $0x44] sm:$0xf] %vm3204, %v3143
        %3223 = vst.msk [vmem:[#allocation2 + $0x48] sm:$0xf] %vm3204, %v3145
        %3224 = vst.msk [vmem:[#allocation2 + $0x4c] sm:$0xf] %vm3204, %v3147
        %3225 = vst.msk [vmem:[#allocation2 + $0x50] sm:$0xf] %vm3204, %v3149
        %3226 = vst.msk [vmem:[#allocation2 + $0x54] sm:$0xf] %vm3204, %v3151
        %3227 = vst.msk [vmem:[#allocation2 + $0x58] sm:$0xf] %vm3204, %v3153
        %3228 = vst.msk [vmem:[#allocation2 + $0x5c] sm:$0xf] %vm3204, %v3155
        %3229 = vst.msk [vmem:[#allocation2 + $0x60] sm:$0xf] %vm3204, %v3157
        %3230 = vst.msk [vmem:[#allocation2 + $0x64] sm:$0xf] %vm3204, %v3159
        %3231 = vst.msk [vmem:[#allocation2 + $0x68] sm:$0xf] %vm3204, %v3161
        %3232 = vst.msk [vmem:[#allocation2 + $0x6c] sm:$0xf] %vm3204, %v3163
        %3233 = vst.msk [vmem:[#allocation2 + $0x70] sm:$0xf] %vm3204, %v3165
        %3234 = vst.msk [vmem:[#allocation2 + $0x74] sm:$0xf] %vm3204, %v3167
        %3235 = vst.msk [vmem:[#allocation2 + $0x78] sm:$0xf] %vm3204, %v3169
        %3236 = vst.msk [vmem:[#allocation2 + $0x7c] sm:$0xf] %vm3204, %v3171
        %v3237 = vld [vmem:[%s2514 + $0x4] sm:$0xf]
        %v3238 = vld [vmem:[%s2514 + $0x8] sm:$0xf]
        %v3239 = vld [vmem:[%s2514 + $0xc] sm:$0x1]
        %v3240 = vld [vmem:[%s2514 + $0x14] sm:$0xf]
        %v3241 = vld [vmem:[%s2514 + $0x18] sm:$0xf]
        %v3242 = vld [vmem:[%s2514 + $0x1c] sm:$0x1]
        %v3243 = vld [vmem:[%s2514 + $0x24] sm:$0xf]
        %v3244 = vld [vmem:[%s2514 + $0x28] sm:$0xf]
        %v3245 = vld [vmem:[%s2514 + $0x2c] sm:$0x1]
        %v3246 = vld [vmem:[%s2514 + $0x34] sm:$0xf]
        %v3247 = vld [vmem:[%s2514 + $0x38] sm:$0xf]
        %v3248 = vld [vmem:[%s2514 + $0x3c] sm:$0x1]
        %v3249 = vld [vmem:[%s2514 + $0x44] sm:$0xf]
        %v3250 = vld [vmem:[%s2514 + $0x48] sm:$0xf]
        %v3251 = vld [vmem:[%s2514 + $0x4c] sm:$0x1]
        %v3252 = vld [vmem:[%s2514 + $0x54] sm:$0xf]
        %v3253 = vld [vmem:[%s2514 + $0x58] sm:$0xf]
        %v3254 = vld [vmem:[%s2514 + $0x5c] sm:$0x1]
        %v3255 = vld [vmem:[%s2514 + $0x64] sm:$0xf]
        %v3256 = vld [vmem:[%s2514 + $0x68] sm:$0xf]
        %v3257 = vld [vmem:[%s2514 + $0x6c] sm:$0x1]
        %v3258 = vld [vmem:[%s2514 + $0x74] sm:$0xf]
        %v3259 = vld [vmem:[%s2514 + $0x78] sm:$0xf]
        %v3260 = vld [vmem:[%s2514 + $0x7c] sm:$0x1]
        %v3261 = vld [vmem:[%s2514 + $0x84] sm:$0xf]
        %v3262 = vld [vmem:[%s2514 + $0x88] sm:$0xf]
        %v3263 = vld [vmem:[%s2514 + $0x8c] sm:$0x1]
        %v3264 = vld [vmem:[%s2514 + $0x94] sm:$0xf]
        %v3265 = vld [vmem:[%s2514 + $0x98] sm:$0xf]
        %v3266 = vld [vmem:[%s2514 + $0x9c] sm:$0x1]
        %v3267 = vld [vmem:[%s2514 + $0xa4] sm:$0xf]
        %v3268 = vld [vmem:[%s2514 + $0xa8] sm:$0xf]
        %v3269 = vld [vmem:[%s2514 + $0xac] sm:$0x1]
        %v3270 = vld [vmem:[%s2514 + $0xb4] sm:$0xf]
        %v3271 = vld [vmem:[%s2514 + $0xb8] sm:$0xf]
        %v3272 = vld [vmem:[%s2514 + $0xbc] sm:$0x1]
        %v3273 = vld [vmem:[%s2514 + $0xc4] sm:$0xf]
        %v3274 = vld [vmem:[%s2514 + $0xc8] sm:$0xf]
        %v3275 = vld [vmem:[%s2514 + $0xcc] sm:$0x1]
        %v3276 = vld [vmem:[%s2514 + $0xd4] sm:$0xf]
        %v3277 = vld [vmem:[%s2514 + $0xd8] sm:$0xf]
        %v3278 = vld [vmem:[%s2514 + $0xdc] sm:$0x1]
        %v3279 = vld [vmem:[%s2514 + $0xe4] sm:$0xf]
        %v3280 = vld [vmem:[%s2514 + $0xe8] sm:$0xf]
        %v3281 = vld [vmem:[%s2514 + $0xec] sm:$0x1]
        %v3282 = vld [vmem:[%s2514 + $0xf4] sm:$0xf]
        %v3283 = vld [vmem:[%s2514 + $0xf8] sm:$0xf]
        %v3284 = vld [vmem:[%s2514 + $0xfc] sm:$0x1]
        %v3286 = vshrl.u32 %v3237, 16
        %v3288 = vrot.slane %v3286, 4
        %v3289 = vshll.u32 %v3237, 16
        %v3291 = vrot.slane %v3289, 5
        %v3292 = vor.u32 %v3288, %v3291
        %v3293 = vrot.slane %v3292, 4
        %v3295 = vshll.u32 %v3238, 16
        %v3297 = vrot.slane %v3295, 5
        %v3298 = vsel %vm909, %v3293, %v3297
        %v3299 = vshrl.u32 %v3238, 16
        %v3301 = vrot.slane %v3299, 4
        %v3302 = vor.u32 %v3301, %v3297
        %v3303 = vrot.slane %v3302, 4
        %v3305 = vshll.u32 %v3239, 16
        %v3307 = vrot.slane %v3305, 5
        %v3308 = vsel %vm909, %v3303, %v3307
        %v3310 = vshrl.u32 %v3240, 16
        %v3312 = vrot.slane %v3310, 4
        %v3313 = vshll.u32 %v3240, 16
        %v3315 = vrot.slane %v3313, 5
        %v3316 = vor.u32 %v3312, %v3315
        %v3317 = vrot.slane %v3316, 4
        %v3319 = vshll.u32 %v3241, 16
        %v3321 = vrot.slane %v3319, 5
        %v3322 = vsel %vm909, %v3317, %v3321
        %v3323 = vshrl.u32 %v3241, 16
        %v3325 = vrot.slane %v3323, 4
        %v3326 = vor.u32 %v3325, %v3321
        %v3327 = vrot.slane %v3326, 4
        %v3329 = vshll.u32 %v3242, 16
        %v3331 = vrot.slane %v3329, 5
        %v3332 = vsel %vm909, %v3327, %v3331
        %v3334 = vshrl.u32 %v3243, 16
        %v3336 = vrot.slane %v3334, 4
        %v3337 = vshll.u32 %v3243, 16
        %v3339 = vrot.slane %v3337, 5
        %v3340 = vor.u32 %v3336, %v3339
        %v3341 = vrot.slane %v3340, 4
        %v3343 = vshll.u32 %v3244, 16
        %v3345 = vrot.slane %v3343, 5
        %v3346 = vsel %vm909, %v3341, %v3345
        %v3347 = vshrl.u32 %v3244, 16
        %v3349 = vrot.slane %v3347, 4
        %v3350 = vor.u32 %v3349, %v3345
        %v3351 = vrot.slane %v3350, 4
        %v3353 = vshll.u32 %v3245, 16
        %v3355 = vrot.slane %v3353, 5
        %v3356 = vsel %vm909, %v3351, %v3355
        %v3358 = vshrl.u32 %v3246, 16
        %v3360 = vrot.slane %v3358, 4
        %v3361 = vshll.u32 %v3246, 16
        %v3363 = vrot.slane %v3361, 5
        %v3364 = vor.u32 %v3360, %v3363
        %v3365 = vrot.slane %v3364, 4
        %v3367 = vshll.u32 %v3247, 16
        %v3369 = vrot.slane %v3367, 5
        %v3370 = vsel %vm909, %v3365, %v3369
        %v3371 = vshrl.u32 %v3247, 16
        %v3373 = vrot.slane %v3371, 4
        %v3374 = vor.u32 %v3373, %v3369
        %v3375 = vrot.slane %v3374, 4
        %v3377 = vshll.u32 %v3248, 16
        %v3379 = vrot.slane %v3377, 5
        %v3380 = vsel %vm909, %v3375, %v3379
        %v3382 = vshrl.u32 %v3249, 16
        %v3384 = vrot.slane %v3382, 4
        %v3385 = vshll.u32 %v3249, 16
        %v3387 = vrot.slane %v3385, 5
        %v3388 = vor.u32 %v3384, %v3387
        %v3389 = vrot.slane %v3388, 4
        %v3391 = vshll.u32 %v3250, 16
        %v3393 = vrot.slane %v3391, 5
        %v3394 = vsel %vm909, %v3389, %v3393
        %v3395 = vshrl.u32 %v3250, 16
        %v3397 = vrot.slane %v3395, 4
        %v3398 = vor.u32 %v3397, %v3393
        %v3399 = vrot.slane %v3398, 4
        %v3401 = vshll.u32 %v3251, 16
        %v3403 = vrot.slane %v3401, 5
        %v3404 = vsel %vm909, %v3399, %v3403
        %v3406 = vshrl.u32 %v3252, 16
        %v3408 = vrot.slane %v3406, 4
        %v3409 = vshll.u32 %v3252, 16
        %v3411 = vrot.slane %v3409, 5
        %v3412 = vor.u32 %v3408, %v3411
        %v3413 = vrot.slane %v3412, 4
        %v3415 = vshll.u32 %v3253, 16
        %v3417 = vrot.slane %v3415, 5
        %v3418 = vsel %vm909, %v3413, %v3417
        %v3419 = vshrl.u32 %v3253, 16
        %v3421 = vrot.slane %v3419, 4
        %v3422 = vor.u32 %v3421, %v3417
        %v3423 = vrot.slane %v3422, 4
        %v3425 = vshll.u32 %v3254, 16
        %v3427 = vrot.slane %v3425, 5
        %v3428 = vsel %vm909, %v3423, %v3427
        %v3430 = vshrl.u32 %v3255, 16
        %v3432 = vrot.slane %v3430, 4
        %v3433 = vshll.u32 %v3255, 16
        %v3435 = vrot.slane %v3433, 5
        %v3436 = vor.u32 %v3432, %v3435
        %v3437 = vrot.slane %v3436, 4
        %v3439 = vshll.u32 %v3256, 16
        %v3441 = vrot.slane %v3439, 5
        %v3442 = vsel %vm909, %v3437, %v3441
        %v3443 = vshrl.u32 %v3256, 16
        %v3445 = vrot.slane %v3443, 4
        %v3446 = vor.u32 %v3445, %v3441
        %v3447 = vrot.slane %v3446, 4
        %v3449 = vshll.u32 %v3257, 16
        %v3451 = vrot.slane %v3449, 5
        %v3452 = vsel %vm909, %v3447, %v3451
        %v3454 = vshrl.u32 %v3258, 16
        %v3456 = vrot.slane %v3454, 4
        %v3457 = vshll.u32 %v3258, 16
        %v3459 = vrot.slane %v3457, 5
        %v3460 = vor.u32 %v3456, %v3459
        %v3461 = vrot.slane %v3460, 4
        %v3463 = vshll.u32 %v3259, 16
        %v3465 = vrot.slane %v3463, 5
        %v3466 = vsel %vm909, %v3461, %v3465
        %v3467 = vshrl.u32 %v3259, 16
        %v3469 = vrot.slane %v3467, 4
        %v3470 = vor.u32 %v3469, %v3465
        %v3471 = vrot.slane %v3470, 4
        %v3473 = vshll.u32 %v3260, 16
        %v3475 = vrot.slane %v3473, 5
        %v3476 = vsel %vm909, %v3471, %v3475
        %v3478 = vshrl.u32 %v3261, 16
        %v3480 = vrot.slane %v3478, 4
        %v3481 = vshll.u32 %v3261, 16
        %v3483 = vrot.slane %v3481, 5
        %v3484 = vor.u32 %v3480, %v3483
        %v3485 = vrot.slane %v3484, 4
        %v3487 = vshll.u32 %v3262, 16
        %v3489 = vrot.slane %v3487, 5
        %v3490 = vsel %vm909, %v3485, %v3489
        %v3491 = vshrl.u32 %v3262, 16
        %v3493 = vrot.slane %v3491, 4
        %v3494 = vor.u32 %v3493, %v3489
        %v3495 = vrot.slane %v3494, 4
        %v3497 = vshll.u32 %v3263, 16
        %v3499 = vrot.slane %v3497, 5
        %v3500 = vsel %vm909, %v3495, %v3499
        %v3502 = vshrl.u32 %v3264, 16
        %v3504 = vrot.slane %v3502, 4
        %v3505 = vshll.u32 %v3264, 16
        %v3507 = vrot.slane %v3505, 5
        %v3508 = vor.u32 %v3504, %v3507
        %v3509 = vrot.slane %v3508, 4
        %v3511 = vshll.u32 %v3265, 16
        %v3513 = vrot.slane %v3511, 5
        %v3514 = vsel %vm909, %v3509, %v3513
        %v3515 = vshrl.u32 %v3265, 16
        %v3517 = vrot.slane %v3515, 4
        %v3518 = vor.u32 %v3517, %v3513
        %v3519 = vrot.slane %v3518, 4
        %v3521 = vshll.u32 %v3266, 16
        %v3523 = vrot.slane %v3521, 5
        %v3524 = vsel %vm909, %v3519, %v3523
        %v3526 = vshrl.u32 %v3267, 16
        %v3528 = vrot.slane %v3526, 4
        %v3529 = vshll.u32 %v3267, 16
        %v3531 = vrot.slane %v3529, 5
        %v3532 = vor.u32 %v3528, %v3531
        %v3533 = vrot.slane %v3532, 4
        %v3535 = vshll.u32 %v3268, 16
        %v3537 = vrot.slane %v3535, 5
        %v3538 = vsel %vm909, %v3533, %v3537
        %v3539 = vshrl.u32 %v3268, 16
        %v3541 = vrot.slane %v3539, 4
        %v3542 = vor.u32 %v3541, %v3537
        %v3543 = vrot.slane %v3542, 4
        %v3545 = vshll.u32 %v3269, 16
        %v3547 = vrot.slane %v3545, 5
        %v3548 = vsel %vm909, %v3543, %v3547
        %v3550 = vshrl.u32 %v3270, 16
        %v3552 = vrot.slane %v3550, 4
        %v3553 = vshll.u32 %v3270, 16
        %v3555 = vrot.slane %v3553, 5
        %v3556 = vor.u32 %v3552, %v3555
        %v3557 = vrot.slane %v3556, 4
        %v3559 = vshll.u32 %v3271, 16
        %v3561 = vrot.slane %v3559, 5
        %v3562 = vsel %vm909, %v3557, %v3561
        %v3563 = vshrl.u32 %v3271, 16
        %v3565 = vrot.slane %v3563, 4
        %v3566 = vor.u32 %v3565, %v3561
        %v3567 = vrot.slane %v3566, 4
        %v3569 = vshll.u32 %v3272, 16
        %v3571 = vrot.slane %v3569, 5
        %v3572 = vsel %vm909, %v3567, %v3571
        %v3574 = vshrl.u32 %v3273, 16
        %v3576 = vrot.slane %v3574, 4
        %v3577 = vshll.u32 %v3273, 16
        %v3579 = vrot.slane %v3577, 5
        %v3580 = vor.u32 %v3576, %v3579
        %v3581 = vrot.slane %v3580, 4
        %v3583 = vshll.u32 %v3274, 16
        %v3585 = vrot.slane %v3583, 5
        %v3586 = vsel %vm909, %v3581, %v3585
        %v3587 = vshrl.u32 %v3274, 16
        %v3589 = vrot.slane %v3587, 4
        %v3590 = vor.u32 %v3589, %v3585
        %v3591 = vrot.slane %v3590, 4
        %v3593 = vshll.u32 %v3275, 16
        %v3595 = vrot.slane %v3593, 5
        %v3596 = vsel %vm909, %v3591, %v3595
        %v3598 = vshrl.u32 %v3276, 16
        %v3600 = vrot.slane %v3598, 4
        %v3601 = vshll.u32 %v3276, 16
        %v3603 = vrot.slane %v3601, 5
        %v3604 = vor.u32 %v3600, %v3603
        %v3605 = vrot.slane %v3604, 4
        %v3607 = vshll.u32 %v3277, 16
        %v3609 = vrot.slane %v3607, 5
        %v3610 = vsel %vm909, %v3605, %v3609
        %v3611 = vshrl.u32 %v3277, 16
        %v3613 = vrot.slane %v3611, 4
        %v3614 = vor.u32 %v3613, %v3609
        %v3615 = vrot.slane %v3614, 4
        %v3617 = vshll.u32 %v3278, 16
        %v3619 = vrot.slane %v3617, 5
        %v3620 = vsel %vm909, %v3615, %v3619
        %v3622 = vshrl.u32 %v3279, 16
        %v3624 = vrot.slane %v3622, 4
        %v3625 = vshll.u32 %v3279, 16
        %v3627 = vrot.slane %v3625, 5
        %v3628 = vor.u32 %v3624, %v3627
        %v3629 = vrot.slane %v3628, 4
        %v3631 = vshll.u32 %v3280, 16
        %v3633 = vrot.slane %v3631, 5
        %v3634 = vsel %vm909, %v3629, %v3633
        %v3635 = vshrl.u32 %v3280, 16
        %v3637 = vrot.slane %v3635, 4
        %v3638 = vor.u32 %v3637, %v3633
        %v3639 = vrot.slane %v3638, 4
        %v3641 = vshll.u32 %v3281, 16
        %v3643 = vrot.slane %v3641, 5
        %v3644 = vsel %vm909, %v3639, %v3643
        %v3646 = vshrl.u32 %v3282, 16
        %v3648 = vrot.slane %v3646, 4
        %v3649 = vshll.u32 %v3282, 16
        %v3651 = vrot.slane %v3649, 5
        %v3652 = vor.u32 %v3648, %v3651
        %v3653 = vrot.slane %v3652, 4
        %v3655 = vshll.u32 %v3283, 16
        %v3657 = vrot.slane %v3655, 5
        %v3658 = vsel %vm909, %v3653, %v3657
        %v3659 = vshrl.u32 %v3283, 16
        %v3661 = vrot.slane %v3659, 4
        %v3662 = vor.u32 %v3661, %v3657
        %v3663 = vrot.slane %v3662, 4
        %v3665 = vshll.u32 %v3284, 16
        %v3667 = vrot.slane %v3665, 5
        %v3668 = vsel %vm909, %v3663, %v3667
        %3669 = vrot.lane.b32.xlu0 %v3298, 112
        %v3670 = vpop.permute.xlu0 %3669
        %3671 = vrot.lane.b32.xlu0 %v3308, 112
        %v3672 = vpop.permute.xlu0 %3671
        %3673 = vrot.lane.b32.xlu0 %v3322, 112
        %v3674 = vpop.permute.xlu0 %3673
        %3675 = vrot.lane.b32.xlu0 %v3332, 112
        %v3676 = vpop.permute.xlu0 %3675
        %3677 = vrot.lane.b32.xlu0 %v3346, 112
        %v3678 = vpop.permute.xlu0 %3677
        %3679 = vrot.lane.b32.xlu0 %v3356, 112
        %v3680 = vpop.permute.xlu0 %3679
        %3681 = vrot.lane.b32.xlu0 %v3370, 112
        %v3682 = vpop.permute.xlu0 %3681
        %3683 = vrot.lane.b32.xlu0 %v3380, 112
        %v3684 = vpop.permute.xlu0 %3683
        %3685 = vrot.lane.b32.xlu0 %v3394, 112
        %v3686 = vpop.permute.xlu0 %3685
        %3687 = vrot.lane.b32.xlu0 %v3404, 112
        %v3688 = vpop.permute.xlu0 %3687
        %3689 = vrot.lane.b32.xlu0 %v3418, 112
        %v3690 = vpop.permute.xlu0 %3689
        %3691 = vrot.lane.b32.xlu0 %v3428, 112
        %v3692 = vpop.permute.xlu0 %3691
        %3693 = vrot.lane.b32.xlu0 %v3442, 112
        %v3694 = vpop.permute.xlu0 %3693
        %3695 = vrot.lane.b32.xlu0 %v3452, 112
        %v3696 = vpop.permute.xlu0 %3695
        %3697 = vrot.lane.b32.xlu0 %v3466, 112
        %v3698 = vpop.permute.xlu0 %3697
        %3699 = vrot.lane.b32.xlu0 %v3476, 112
        %v3700 = vpop.permute.xlu0 %3699
        %3701 = vrot.lane.b32.xlu0 %v3490, 112
        %v3702 = vpop.permute.xlu0 %3701
        %3703 = vrot.lane.b32.xlu0 %v3500, 112
        %v3704 = vpop.permute.xlu0 %3703
        %3705 = vrot.lane.b32.xlu0 %v3514, 112
        %v3706 = vpop.permute.xlu0 %3705
        %3707 = vrot.lane.b32.xlu0 %v3524, 112
        %v3708 = vpop.permute.xlu0 %3707
        %3709 = vrot.lane.b32.xlu0 %v3538, 112
        %v3710 = vpop.permute.xlu0 %3709
        %3711 = vrot.lane.b32.xlu0 %v3548, 112
        %v3712 = vpop.permute.xlu0 %3711
        %3713 = vrot.lane.b32.xlu0 %v3562, 112
        %v3714 = vpop.permute.xlu0 %3713
        %3715 = vrot.lane.b32.xlu0 %v3572, 112
        %v3716 = vpop.permute.xlu0 %3715
        %3717 = vrot.lane.b32.xlu0 %v3586, 112
        %v3718 = vpop.permute.xlu0 %3717
        %3719 = vrot.lane.b32.xlu0 %v3596, 112
        %v3720 = vpop.permute.xlu0 %3719
        %3721 = vrot.lane.b32.xlu0 %v3610, 112
        %v3722 = vpop.permute.xlu0 %3721
        %3723 = vrot.lane.b32.xlu0 %v3620, 112
        %v3724 = vpop.permute.xlu0 %3723
        %3725 = vrot.lane.b32.xlu0 %v3634, 112
        %v3726 = vpop.permute.xlu0 %3725
        %3727 = vrot.lane.b32.xlu0 %v3644, 112
        %v3728 = vpop.permute.xlu0 %3727
        %3729 = vrot.lane.b32.xlu0 %v3658, 112
        %v3730 = vpop.permute.xlu0 %3729
        %3731 = vrot.lane.b32.xlu0 %v3668, 112
        %v3732 = vpop.permute.xlu0 %3731
        %vm3765 = vcmask 1044352
        %3766 = vst.msk [vmem:[#allocation2] sm:$0xf] %vm3765, %v3670
        %3767 = vst.msk [vmem:[#allocation2 + $0x4] sm:$0xf] %vm3765, %v3672
        %3768 = vst.msk [vmem:[#allocation2 + $0x8] sm:$0xf] %vm3765, %v3674
        %3769 = vst.msk [vmem:[#allocation2 + $0xc] sm:$0xf] %vm3765, %v3676
        %3770 = vst.msk [vmem:[#allocation2 + $0x10] sm:$0xf] %vm3765, %v3678
        %3771 = vst.msk [vmem:[#allocation2 + $0x14] sm:$0xf] %vm3765, %v3680
        %3772 = vst.msk [vmem:[#allocation2 + $0x18] sm:$0xf] %vm3765, %v3682
        %3773 = vst.msk [vmem:[#allocation2 + $0x1c] sm:$0xf] %vm3765, %v3684
        %3774 = vst.msk [vmem:[#allocation2 + $0x20] sm:$0xf] %vm3765, %v3686
        %3775 = vst.msk [vmem:[#allocation2 + $0x24] sm:$0xf] %vm3765, %v3688
        %3776 = vst.msk [vmem:[#allocation2 + $0x28] sm:$0xf] %vm3765, %v3690
        %3777 = vst.msk [vmem:[#allocation2 + $0x2c] sm:$0xf] %vm3765, %v3692
        %3778 = vst.msk [vmem:[#allocation2 + $0x30] sm:$0xf] %vm3765, %v3694
        %3779 = vst.msk [vmem:[#allocation2 + $0x34] sm:$0xf] %vm3765, %v3696
        %3780 = vst.msk [vmem:[#allocation2 + $0x38] sm:$0xf] %vm3765, %v3698
        %3781 = vst.msk [vmem:[#allocation2 + $0x3c] sm:$0xf] %vm3765, %v3700
        %3782 = vst.msk [vmem:[#allocation2 + $0x40] sm:$0xf] %vm3765, %v3702
        %3783 = vst.msk [vmem:[#allocation2 + $0x44] sm:$0xf] %vm3765, %v3704
        %3784 = vst.msk [vmem:[#allocation2 + $0x48] sm:$0xf] %vm3765, %v3706
        %3785 = vst.msk [vmem:[#allocation2 + $0x4c] sm:$0xf] %vm3765, %v3708
        %3786 = vst.msk [vmem:[#allocation2 + $0x50] sm:$0xf] %vm3765, %v3710
        %3787 = vst.msk [vmem:[#allocation2 + $0x54] sm:$0xf] %vm3765, %v3712
        %3788 = vst.msk [vmem:[#allocation2 + $0x58] sm:$0xf] %vm3765, %v3714
        %3789 = vst.msk [vmem:[#allocation2 + $0x5c] sm:$0xf] %vm3765, %v3716
        %3790 = vst.msk [vmem:[#allocation2 + $0x60] sm:$0xf] %vm3765, %v3718
        %3791 = vst.msk [vmem:[#allocation2 + $0x64] sm:$0xf] %vm3765, %v3720
        %3792 = vst.msk [vmem:[#allocation2 + $0x68] sm:$0xf] %vm3765, %v3722
        %3793 = vst.msk [vmem:[#allocation2 + $0x6c] sm:$0xf] %vm3765, %v3724
        %3794 = vst.msk [vmem:[#allocation2 + $0x70] sm:$0xf] %vm3765, %v3726
        %3795 = vst.msk [vmem:[#allocation2 + $0x74] sm:$0xf] %vm3765, %v3728
        %3796 = vst.msk [vmem:[#allocation2 + $0x78] sm:$0xf] %vm3765, %v3730
        %3797 = vst.msk [vmem:[#allocation2 + $0x7c] sm:$0xf] %vm3765, %v3732
        %v3798 = vld [vmem:[#allocation2] sm:$0xf]
        %v3799 = vld [vmem:[#allocation2 + $0x4] sm:$0xf]
        %v3800 = vld [vmem:[#allocation2 + $0x8] sm:$0xf]
        %v3801 = vld [vmem:[#allocation2 + $0xc] sm:$0xf]
        %v3802 = vld [vmem:[#allocation2 + $0x10] sm:$0xf]
        %v3803 = vld [vmem:[#allocation2 + $0x14] sm:$0xf]
        %v3804 = vld [vmem:[#allocation2 + $0x18] sm:$0xf]
        %v3805 = vld [vmem:[#allocation2 + $0x1c] sm:$0xf]
        %v3806 = vld [vmem:[#allocation2 + $0x20] sm:$0xf]
        %v3807 = vld [vmem:[#allocation2 + $0x24] sm:$0xf]
        %v3808 = vld [vmem:[#allocation2 + $0x28] sm:$0xf]
        %v3809 = vld [vmem:[#allocation2 + $0x2c] sm:$0xf]
        %v3810 = vld [vmem:[#allocation2 + $0x30] sm:$0xf]
        %v3811 = vld [vmem:[#allocation2 + $0x34] sm:$0xf]
        %v3812 = vld [vmem:[#allocation2 + $0x38] sm:$0xf]
        %v3813 = vld [vmem:[#allocation2 + $0x3c] sm:$0xf]
        %v3814 = vld [vmem:[#allocation2 + $0x40] sm:$0xf]
        %v3815 = vld [vmem:[#allocation2 + $0x44] sm:$0xf]
        %v3816 = vld [vmem:[#allocation2 + $0x48] sm:$0xf]
        %v3817 = vld [vmem:[#allocation2 + $0x4c] sm:$0xf]
        %v3818 = vld [vmem:[#allocation2 + $0x50] sm:$0xf]
        %v3819 = vld [vmem:[#allocation2 + $0x54] sm:$0xf]
        %v3820 = vld [vmem:[#allocation2 + $0x58] sm:$0xf]
        %v3821 = vld [vmem:[#allocation2 + $0x5c] sm:$0xf]
        %v3822 = vld [vmem:[#allocation2 + $0x60] sm:$0xf]
        %v3823 = vld [vmem:[#allocation2 + $0x64] sm:$0xf]
        %v3824 = vld [vmem:[#allocation2 + $0x68] sm:$0xf]
        %v3825 = vld [vmem:[#allocation2 + $0x6c] sm:$0xf]
        %v3826 = vld [vmem:[#allocation2 + $0x70] sm:$0xf]
        %v3827 = vld [vmem:[#allocation2 + $0x74] sm:$0xf]
        %v3828 = vld [vmem:[#allocation2 + $0x78] sm:$0xf]
        %v3829 = vld [vmem:[#allocation2 + $0x7c] sm:$0xf]
        %v3830 = vld [vmem:[%s1] sm:$0xf]
        %v3831 = vld [vmem:[%s1 + $0x4] sm:$0xf]
        %v3832 = vld [vmem:[%s1 + $0x8] sm:$0xf]
        %v3833 = vld [vmem:[%s1 + $0xc] sm:$0xf]
        %v3834 = vld [vmem:[%s1 + $0x10] sm:$0xf]
        %v3835 = vld [vmem:[%s1 + $0x14] sm:$0xf]
        %v3836 = vld [vmem:[%s1 + $0x18] sm:$0xf]
        %v3837 = vld [vmem:[%s1 + $0x1c] sm:$0xf]
        %v3838 = vld [vmem:[%s1 + $0x20] sm:$0xf]
        %v3839 = vld [vmem:[%s1 + $0x24] sm:$0xf]
        %v3840 = vld [vmem:[%s1 + $0x28] sm:$0xf]
        %v3841 = vld [vmem:[%s1 + $0x2c] sm:$0xf]
        %v3842 = vld [vmem:[%s1 + $0x30] sm:$0xf]
        %v3843 = vld [vmem:[%s1 + $0x34] sm:$0xf]
        %v3844 = vld [vmem:[%s1 + $0x38] sm:$0xf]
        %v3845 = vld [vmem:[%s1 + $0x3c] sm:$0xf]
        %v3878 = vunpack.c.l.b16 %v3798
        %v3879 = vunpack.c.l.b16 %v3799
        %v3880 = vunpack.c.l.b16 %v3800
        %v3881 = vunpack.c.l.b16 %v3801
        %v3882 = vunpack.c.l.b16 %v3802
        %v3883 = vunpack.c.l.b16 %v3803
        %v3884 = vunpack.c.l.b16 %v3804
        %v3885 = vunpack.c.l.b16 %v3805
        %v3886 = vunpack.c.l.b16 %v3806
        %v3887 = vunpack.c.l.b16 %v3807
        %v3888 = vunpack.c.l.b16 %v3808
        %v3889 = vunpack.c.l.b16 %v3809
        %v3890 = vunpack.c.l.b16 %v3810
        %v3891 = vunpack.c.l.b16 %v3811
        %v3892 = vunpack.c.l.b16 %v3812
        %v3893 = vunpack.c.l.b16 %v3813
        %v3894 = vunpack.c.l.b16 %v3814
        %v3895 = vunpack.c.l.b16 %v3815
        %v3896 = vunpack.c.l.b16 %v3816
        %v3897 = vunpack.c.l.b16 %v3817
        %v3898 = vunpack.c.l.b16 %v3818
        %v3899 = vunpack.c.l.b16 %v3819
        %v3900 = vunpack.c.l.b16 %v3820
        %v3901 = vunpack.c.l.b16 %v3821
        %v3902 = vunpack.c.l.b16 %v3822
        %v3903 = vunpack.c.l.b16 %v3823
        %v3904 = vunpack.c.l.b16 %v3824
        %v3905 = vunpack.c.l.b16 %v3825
        %v3906 = vunpack.c.l.b16 %v3826
        %v3907 = vunpack.c.l.b16 %v3827
        %v3908 = vunpack.c.l.b16 %v3828
        %v3909 = vunpack.c.l.b16 %v3829
        %v3910 = vpack.c.b16 %v3879, %v3878
        %v3911 = vpack.c.b16 %v3881, %v3880
        %v3912 = vpack.c.b16 %v3883, %v3882
        %v3913 = vpack.c.b16 %v3885, %v3884
        %v3914 = vpack.c.b16 %v3887, %v3886
        %v3915 = vpack.c.b16 %v3889, %v3888
        %v3916 = vpack.c.b16 %v3891, %v3890
        %v3917 = vpack.c.b16 %v3893, %v3892
        %v3918 = vpack.c.b16 %v3895, %v3894
        %v3919 = vpack.c.b16 %v3897, %v3896
        %v3920 = vpack.c.b16 %v3899, %v3898
        %v3921 = vpack.c.b16 %v3901, %v3900
        %v3922 = vpack.c.b16 %v3903, %v3902
        %v3923 = vpack.c.b16 %v3905, %v3904
        %v3924 = vpack.c.b16 %v3907, %v3906
        %v3925 = vpack.c.b16 %v3909, %v3908
        %v3958 = vunpack.c.l.b16 %v3830
        %v3959 = vunpack.c.l.b16 %v3831
        %v3960 = vunpack.c.l.b16 %v3832
        %v3961 = vunpack.c.l.b16 %v3833
        %v3962 = vunpack.c.l.b16 %v3834
        %v3963 = vunpack.c.l.b16 %v3835
        %v3964 = vunpack.c.l.b16 %v3836
        %v3965 = vunpack.c.l.b16 %v3837
        %v3966 = vunpack.c.l.b16 %v3838
        %v3967 = vunpack.c.l.b16 %v3839
        %v3968 = vunpack.c.l.b16 %v3840
        %v3969 = vunpack.c.l.b16 %v3841
        %v3970 = vunpack.c.l.b16 %v3842
        %v3971 = vunpack.c.l.b16 %v3843
        %v3972 = vunpack.c.l.b16 %v3844
        %v3973 = vunpack.c.l.b16 %v3845
        %v3974 = vpack.c.b16 %v3959, %v3958
        %v3975 = vpack.c.b16 %v3961, %v3960
        %v3976 = vpack.c.b16 %v3963, %v3962
        %v3977 = vpack.c.b16 %v3965, %v3964
        %v3978 = vpack.c.b16 %v3967, %v3966
        %v3979 = vpack.c.b16 %v3969, %v3968
        %v3980 = vpack.c.b16 %v3971, %v3970
        %v3981 = vpack.c.b16 %v3973, %v3972
        %3990 = vmatprep.subr.bf16.mxu0 0
        %3991 = vmatpush1.bf16.msra.mxu0 %v3981
        %3992 = vmatprep.subr.bf16.mxu0 0
        %3993 = vmatpush1.bf16.msra.mxu0 %v3980
        %3994 = vmatprep.subr.bf16.mxu0 0
        %3995 = vmatpush1.bf16.msra.mxu0 %v3979
        %3996 = vmatprep.subr.bf16.mxu0 0
        %3997 = vmatpush1.bf16.msra.mxu0 %v3978
        %3998 = vmatprep.subr.bf16.mxu0 0
        %3999 = vmatpush1.bf16.msra.mxu0 %v3977
        %4000 = vmatprep.subr.bf16.mxu0 0
        %4001 = vmatpush1.bf16.msra.mxu0 %v3976
        %4002 = vmatprep.subr.bf16.mxu0 0
        %4003 = vmatpush1.bf16.msra.mxu0 %v3975
        %4004 = vmatprep.subr.bf16.mxu0 0
        %4005 = vmatpush1.bf16.msra.mxu0 %v3974
        %4006 = vmatprep.subr.bf16.mxu0 0
        %4007 = vmatpush2.bf16.msra.mxu0 0
        %4008 = vmatprep.subr.bf16.mxu0 0
        %4009 = vmatpush2.bf16.msra.mxu0 0
        %4010 = vmatprep.subr.bf16.mxu0 0
        %4011 = vmatpush2.bf16.msra.mxu0 0
        %4012 = vmatprep.subr.bf16.mxu0 0
        %4013 = vmatpush2.bf16.msra.mxu0 0
        %4014 = vmatprep.subr.bf16.mxu0 0
        %4015 = vmatpush2.bf16.msra.mxu0 0
        %4016 = vmatprep.subr.bf16.mxu0 0
        %4017 = vmatpush2.bf16.msra.mxu0 0
        %4018 = vmatprep.subr.bf16.mxu0 0
        %4019 = vmatpush2.bf16.msra.mxu0 0
        %4020 = vmatprep.subr.bf16.mxu0 0
        %4021 = vmatpush2.bf16.msra.mxu0 0
        %4022 = vmatprep.mubr.bf16.mxu0 0
        %4023 = vmatmul.mubr.bf16.gmra.mxu0 %v3910
        %v4024 = vpop.f32.mrf.mxu0
        %v4025 = vadd.f32 0.0, %v4024
        %v4026 = vpop.f32.mrf.mxu0
        %v4027 = vpop.f32.mrf.mxu0
        %v4028 = vadd.f32 0.0, %v4027
        %v4029 = vpop.f32.mrf.mxu0
        %4030 = vmatprep.mubr.bf16.mxu0 0
        %4031 = vmatmul.mubr.bf16.gmra.mxu0 %v3911
        %v4032 = vpop.f32.mrf.mxu0
        %v4033 = vadd.f32 0.0, %v4032
        %v4034 = vpop.f32.mrf.mxu0
        %v4035 = vpop.f32.mrf.mxu0
        %v4036 = vadd.f32 0.0, %v4035
        %v4037 = vpop.f32.mrf.mxu0
        %4038 = vmatprep.mubr.bf16.mxu0 0
        %4039 = vmatmul.mubr.bf16.gmra.mxu0 %v3912
        %v4040 = vpop.f32.mrf.mxu0
        %v4041 = vadd.f32 0.0, %v4040
        %v4042 = vpop.f32.mrf.mxu0
        %v4043 = vpop.f32.mrf.mxu0
        %v4044 = vadd.f32 0.0, %v4043
        %v4045 = vpop.f32.mrf.mxu0
        %4046 = vmatprep.mubr.bf16.mxu0 0
        %4047 = vmatmul.mubr.bf16.gmra.mxu0 %v3913
        %v4048 = vpop.f32.mrf.mxu0
        %v4049 = vadd.f32 0.0, %v4048
        %v4050 = vpop.f32.mrf.mxu0
        %v4051 = vpop.f32.mrf.mxu0
        %v4052 = vadd.f32 0.0, %v4051
        %v4053 = vpop.f32.mrf.mxu0
        %4054 = vmatprep.mubr.bf16.mxu0 0
        %4055 = vmatmul.mubr.bf16.gmra.mxu0 %v3914
        %v4056 = vpop.f32.mrf.mxu0
        %v4057 = vadd.f32 0.0, %v4056
        %v4058 = vpop.f32.mrf.mxu0
        %v4059 = vpop.f32.mrf.mxu0
        %v4060 = vadd.f32 0.0, %v4059
        %v4061 = vpop.f32.mrf.mxu0
        %4062 = vmatprep.mubr.bf16.mxu0 0
        %4063 = vmatmul.mubr.bf16.gmra.mxu0 %v3915
        %v4064 = vpop.f32.mrf.mxu0
        %v4065 = vadd.f32 0.0, %v4064
        %v4066 = vpop.f32.mrf.mxu0
        %v4067 = vpop.f32.mrf.mxu0
        %v4068 = vadd.f32 0.0, %v4067
        %v4069 = vpop.f32.mrf.mxu0
        %4070 = vmatprep.mubr.bf16.mxu0 0
        %4071 = vmatmul.mubr.bf16.gmra.mxu0 %v3916
        %v4072 = vpop.f32.mrf.mxu0
        %v4073 = vadd.f32 0.0, %v4072
        %v4074 = vpop.f32.mrf.mxu0
        %v4075 = vpop.f32.mrf.mxu0
        %v4076 = vadd.f32 0.0, %v4075
        %v4077 = vpop.f32.mrf.mxu0
        %4078 = vmatprep.mubr.bf16.mxu0 0
        %4079 = vmatmul.mubr.bf16.gmra.mxu0 %v3917
        %v4080 = vpop.f32.mrf.mxu0
        %v4081 = vadd.f32 0.0, %v4080
        %v4082 = vpop.f32.mrf.mxu0
        %v4083 = vpop.f32.mrf.mxu0
        %v4084 = vadd.f32 0.0, %v4083
        %v4085 = vpop.f32.mrf.mxu0
        %4086 = vmatprep.mubr.bf16.mxu0 0
        %4087 = vmatmul.mubr.bf16.gmra.mxu0 %v3918
        %v4088 = vpop.f32.mrf.mxu0
        %v4089 = vadd.f32 0.0, %v4088
        %v4090 = vpop.f32.mrf.mxu0
        %v4091 = vpop.f32.mrf.mxu0
        %v4092 = vadd.f32 0.0, %v4091
        %v4093 = vpop.f32.mrf.mxu0
        %4094 = vmatprep.mubr.bf16.mxu0 0
        %4095 = vmatmul.mubr.bf16.gmra.mxu0 %v3919
        %v4096 = vpop.f32.mrf.mxu0
        %v4097 = vadd.f32 0.0, %v4096
        %v4098 = vpop.f32.mrf.mxu0
        %v4099 = vpop.f32.mrf.mxu0
        %v4100 = vadd.f32 0.0, %v4099
        %v4101 = vpop.f32.mrf.mxu0
        %4102 = vmatprep.mubr.bf16.mxu0 0
        %4103 = vmatmul.mubr.bf16.gmra.mxu0 %v3920
        %v4104 = vpop.f32.mrf.mxu0
        %v4105 = vadd.f32 0.0, %v4104
        %v4106 = vpop.f32.mrf.mxu0
        %v4107 = vpop.f32.mrf.mxu0
        %v4108 = vadd.f32 0.0, %v4107
        %v4109 = vpop.f32.mrf.mxu0
        %4110 = vmatprep.mubr.bf16.mxu0 0
        %4111 = vmatmul.mubr.bf16.gmra.mxu0 %v3921
        %v4112 = vpop.f32.mrf.mxu0
        %v4113 = vadd.f32 0.0, %v4112
        %v4114 = vpop.f32.mrf.mxu0
        %v4115 = vpop.f32.mrf.mxu0
        %v4116 = vadd.f32 0.0, %v4115
        %v4117 = vpop.f32.mrf.mxu0
        %4118 = vmatprep.mubr.bf16.mxu0 0
        %4119 = vmatmul.mubr.bf16.gmra.mxu0 %v3922
        %v4120 = vpop.f32.mrf.mxu0
        %v4121 = vadd.f32 0.0, %v4120
        %v4122 = vpop.f32.mrf.mxu0
        %v4123 = vpop.f32.mrf.mxu0
        %v4124 = vadd.f32 0.0, %v4123
        %v4125 = vpop.f32.mrf.mxu0
        %4126 = vmatprep.mubr.bf16.mxu0 0
        %4127 = vmatmul.mubr.bf16.gmra.mxu0 %v3923
        %v4128 = vpop.f32.mrf.mxu0
        %v4129 = vadd.f32 0.0, %v4128
        %v4130 = vpop.f32.mrf.mxu0
        %v4131 = vpop.f32.mrf.mxu0
        %v4132 = vadd.f32 0.0, %v4131
        %v4133 = vpop.f32.mrf.mxu0
        %4134 = vmatprep.mubr.bf16.mxu0 0
        %4135 = vmatmul.mubr.bf16.gmra.mxu0 %v3924
        %v4136 = vpop.f32.mrf.mxu0
        %v4137 = vadd.f32 0.0, %v4136
        %v4138 = vpop.f32.mrf.mxu0
        %v4139 = vpop.f32.mrf.mxu0
        %v4140 = vadd.f32 0.0, %v4139
        %v4141 = vpop.f32.mrf.mxu0
        %4142 = vmatprep.mubr.bf16.mxu0 0
        %4143 = vmatmul.mubr.bf16.gmra.mxu0 %v3925
        %v4144 = vpop.f32.mrf.mxu0
        %v4145 = vadd.f32 0.0, %v4144
        %v4146 = vpop.f32.mrf.mxu0
        %v4147 = vpop.f32.mrf.mxu0
        %v4148 = vadd.f32 0.0, %v4147
        %v4149 = vpop.f32.mrf.mxu0
        %4150 = vdwg.mxu0
        %vm4151 = vcmask 31744
        %4152 = vst.msk [vmem:[#allocation3] sm:$0xff] %vm4151, %v4025
        %4153 = vst.msk [vmem:[#allocation3 + $0x8] sm:$0xff] %vm4151, %v4028
        %4154 = vst.msk [vmem:[#allocation3 + $0x10] sm:$0xff] %vm4151, %v4033
        %4155 = vst.msk [vmem:[#allocation3 + $0x18] sm:$0xff] %vm4151, %v4036
        %4156 = vst.msk [vmem:[#allocation3 + $0x20] sm:$0xff] %vm4151, %v4041
        %4157 = vst.msk [vmem:[#allocation3 + $0x28] sm:$0xff] %vm4151, %v4044
        %4158 = vst.msk [vmem:[#allocation3 + $0x30] sm:$0xff] %vm4151, %v4049
        %4159 = vst.msk [vmem:[#allocation3 + $0x38] sm:$0xff] %vm4151, %v4052
        %4160 = vst.msk [vmem:[#allocation3 + $0x40] sm:$0xff] %vm4151, %v4057
        %4161 = vst.msk [vmem:[#allocation3 + $0x48] sm:$0xff] %vm4151, %v4060
        %4162 = vst.msk [vmem:[#allocation3 + $0x50] sm:$0xff] %vm4151, %v4065
        %4163 = vst.msk [vmem:[#allocation3 + $0x58] sm:$0xff] %vm4151, %v4068
        %4164 = vst.msk [vmem:[#allocation3 + $0x60] sm:$0xff] %vm4151, %v4073
        %4165 = vst.msk [vmem:[#allocation3 + $0x68] sm:$0xff] %vm4151, %v4076
        %4166 = vst.msk [vmem:[#allocation3 + $0x70] sm:$0xff] %vm4151, %v4081
        %4167 = vst.msk [vmem:[#allocation3 + $0x78] sm:$0xff] %vm4151, %v4084
        %4168 = vst.msk [vmem:[#allocation3 + $0x80] sm:$0xff] %vm4151, %v4089
        %4169 = vst.msk [vmem:[#allocation3 + $0x88] sm:$0xff] %vm4151, %v4092
        %4170 = vst.msk [vmem:[#allocation3 + $0x90] sm:$0xff] %vm4151, %v4097
        %4171 = vst.msk [vmem:[#allocation3 + $0x98] sm:$0xff] %vm4151, %v4100
        %4172 = vst.msk [vmem:[#allocation3 + $0xa0] sm:$0xff] %vm4151, %v4105
        %4173 = vst.msk [vmem:[#allocation3 + $0xa8] sm:$0xff] %vm4151, %v4108
        %4174 = vst.msk [vmem:[#allocation3 + $0xb0] sm:$0xff] %vm4151, %v4113
        %4175 = vst.msk [vmem:[#allocation3 + $0xb8] sm:$0xff] %vm4151, %v4116
        %4176 = vst.msk [vmem:[#allocation3 + $0xc0] sm:$0xff] %vm4151, %v4121
        %4177 = vst.msk [vmem:[#allocation3 + $0xc8] sm:$0xff] %vm4151, %v4124
        %4178 = vst.msk [vmem:[#allocation3 + $0xd0] sm:$0xff] %vm4151, %v4129
        %4179 = vst.msk [vmem:[#allocation3 + $0xd8] sm:$0xff] %vm4151, %v4132
        %4180 = vst.msk [vmem:[#allocation3 + $0xe0] sm:$0xff] %vm4151, %v4137
        %4181 = vst.msk [vmem:[#allocation3 + $0xe8] sm:$0xff] %vm4151, %v4140
        %4182 = vst.msk [vmem:[#allocation3 + $0xf0] sm:$0xff] %vm4151, %v4145
        %4183 = vst.msk [vmem:[#allocation3 + $0xf8] sm:$0xff] %vm4151, %v4148
        %s4184 = scalar_lea.vmem %s195, 96
        %v4185 = vld [vmem:[%s4184] sm:$0x8]
        %v4186 = vld [vmem:[%s4184 + $0x4] sm:$0xf]
        %v4187 = vld [vmem:[%s4184 + $0x8] sm:$0x7]
        %v4188 = vld [vmem:[%s4184 + $0x10] sm:$0x8]
        %v4189 = vld [vmem:[%s4184 + $0x14] sm:$0xf]
        %v4190 = vld [vmem:[%s4184 + $0x18] sm:$0x7]
        %v4191 = vld [vmem:[%s4184 + $0x20] sm:$0x8]
        %v4192 = vld [vmem:[%s4184 + $0x24] sm:$0xf]
        %v4193 = vld [vmem:[%s4184 + $0x28] sm:$0x7]
        %v4194 = vld [vmem:[%s4184 + $0x30] sm:$0x8]
        %v4195 = vld [vmem:[%s4184 + $0x34] sm:$0xf]
        %v4196 = vld [vmem:[%s4184 + $0x38] sm:$0x7]
        %v4197 = vld [vmem:[%s4184 + $0x40] sm:$0x8]
        %v4198 = vld [vmem:[%s4184 + $0x44] sm:$0xf]
        %v4199 = vld [vmem:[%s4184 + $0x48] sm:$0x7]
        %v4200 = vld [vmem:[%s4184 + $0x50] sm:$0x8]
        %v4201 = vld [vmem:[%s4184 + $0x54] sm:$0xf]
        %v4202 = vld [vmem:[%s4184 + $0x58] sm:$0x7]
        %v4203 = vld [vmem:[%s4184 + $0x60] sm:$0x8]
        %v4204 = vld [vmem:[%s4184 + $0x64] sm:$0xf]
        %v4205 = vld [vmem:[%s4184 + $0x68] sm:$0x7]
        %v4206 = vld [vmem:[%s4184 + $0x70] sm:$0x8]
        %v4207 = vld [vmem:[%s4184 + $0x74] sm:$0xf]
        %v4208 = vld [vmem:[%s4184 + $0x78] sm:$0x7]
        %v4209 = vld [vmem:[%s4184 + $0x80] sm:$0x8]
        %v4210 = vld [vmem:[%s4184 + $0x84] sm:$0xf]
        %v4211 = vld [vmem:[%s4184 + $0x88] sm:$0x7]
        %v4212 = vld [vmem:[%s4184 + $0x90] sm:$0x8]
        %v4213 = vld [vmem:[%s4184 + $0x94] sm:$0xf]
        %v4214 = vld [vmem:[%s4184 + $0x98] sm:$0x7]
        %v4215 = vld [vmem:[%s4184 + $0xa0] sm:$0x8]
        %v4216 = vld [vmem:[%s4184 + $0xa4] sm:$0xf]
        %v4217 = vld [vmem:[%s4184 + $0xa8] sm:$0x7]
        %v4218 = vld [vmem:[%s4184 + $0xb0] sm:$0x8]
        %v4219 = vld [vmem:[%s4184 + $0xb4] sm:$0xf]
        %v4220 = vld [vmem:[%s4184 + $0xb8] sm:$0x7]
        %v4221 = vld [vmem:[%s4184 + $0xc0] sm:$0x8]
        %v4222 = vld [vmem:[%s4184 + $0xc4] sm:$0xf]
        %v4223 = vld [vmem:[%s4184 + $0xc8] sm:$0x7]
        %v4224 = vld [vmem:[%s4184 + $0xd0] sm:$0x8]
        %v4225 = vld [vmem:[%s4184 + $0xd4] sm:$0xf]
        %v4226 = vld [vmem:[%s4184 + $0xd8] sm:$0x7]
        %v4227 = vld [vmem:[%s4184 + $0xe0] sm:$0x8]
        %v4228 = vld [vmem:[%s4184 + $0xe4] sm:$0xf]
        %v4229 = vld [vmem:[%s4184 + $0xe8] sm:$0x7]
        %v4230 = vld [vmem:[%s4184 + $0xf0] sm:$0x8]
        %v4231 = vld [vmem:[%s4184 + $0xf4] sm:$0xf]
        %v4232 = vld [vmem:[%s4184 + $0xf8] sm:$0x7]
        %vm4281 = vcmask 1040384
        %vm4282 = vcmask 1044484
        %vm4283 = vmor %vm4281, %vm4282
        %v4284 = vrot.slane %v4185, 7
        %v4285 = vrot.slane %v4284, 4
        %v4286 = vrot.slane %v4186, 7
        %v4287 = vsel %vm4283, %v4285, %v4286
        %v4288 = vrot.slane %v4286, 4
        %v4289 = vrot.slane %v4187, 7
        %v4290 = vsel %vm4283, %v4288, %v4289
        %v4291 = vrot.slane %v4188, 7
        %v4292 = vrot.slane %v4291, 4
        %v4293 = vrot.slane %v4189, 7
        %v4294 = vsel %vm4283, %v4292, %v4293
        %v4295 = vrot.slane %v4293, 4
        %v4296 = vrot.slane %v4190, 7
        %v4297 = vsel %vm4283, %v4295, %v4296
        %v4298 = vrot.slane %v4191, 7
        %v4299 = vrot.slane %v4298, 4
        %v4300 = vrot.slane %v4192, 7
        %v4301 = vsel %vm4283, %v4299, %v4300
        %v4302 = vrot.slane %v4300, 4
        %v4303 = vrot.slane %v4193, 7
        %v4304 = vsel %vm4283, %v4302, %v4303
        %v4305 = vrot.slane %v4194, 7
        %v4306 = vrot.slane %v4305, 4
        %v4307 = vrot.slane %v4195, 7
        %v4308 = vsel %vm4283, %v4306, %v4307
        %v4309 = vrot.slane %v4307, 4
        %v4310 = vrot.slane %v4196, 7
        %v4311 = vsel %vm4283, %v4309, %v4310
        %v4312 = vrot.slane %v4197, 7
        %v4313 = vrot.slane %v4312, 4
        %v4314 = vrot.slane %v4198, 7
        %v4315 = vsel %vm4283, %v4313, %v4314
        %v4316 = vrot.slane %v4314, 4
        %v4317 = vrot.slane %v4199, 7
        %v4318 = vsel %vm4283, %v4316, %v4317
        %v4319 = vrot.slane %v4200, 7
        %v4320 = vrot.slane %v4319, 4
        %v4321 = vrot.slane %v4201, 7
        %v4322 = vsel %vm4283, %v4320, %v4321
        %v4323 = vrot.slane %v4321, 4
        %v4324 = vrot.slane %v4202, 7
        %v4325 = vsel %vm4283, %v4323, %v4324
        %v4326 = vrot.slane %v4203, 7
        %v4327 = vrot.slane %v4326, 4
        %v4328 = vrot.slane %v4204, 7
        %v4329 = vsel %vm4283, %v4327, %v4328
        %v4330 = vrot.slane %v4328, 4
        %v4331 = vrot.slane %v4205, 7
        %v4332 = vsel %vm4283, %v4330, %v4331
        %v4333 = vrot.slane %v4206, 7
        %v4334 = vrot.slane %v4333, 4
        %v4335 = vrot.slane %v4207, 7
        %v4336 = vsel %vm4283, %v4334, %v4335
        %v4337 = vrot.slane %v4335, 4
        %v4338 = vrot.slane %v4208, 7
        %v4339 = vsel %vm4283, %v4337, %v4338
        %v4340 = vrot.slane %v4209, 7
        %v4341 = vrot.slane %v4340, 4
        %v4342 = vrot.slane %v4210, 7
        %v4343 = vsel %vm4283, %v4341, %v4342
        %v4344 = vrot.slane %v4342, 4
        %v4345 = vrot.slane %v4211, 7
        %v4346 = vsel %vm4283, %v4344, %v4345
        %v4347 = vrot.slane %v4212, 7
        %v4348 = vrot.slane %v4347, 4
        %v4349 = vrot.slane %v4213, 7
        %v4350 = vsel %vm4283, %v4348, %v4349
        %v4351 = vrot.slane %v4349, 4
        %v4352 = vrot.slane %v4214, 7
        %v4353 = vsel %vm4283, %v4351, %v4352
        %v4354 = vrot.slane %v4215, 7
        %v4355 = vrot.slane %v4354, 4
        %v4356 = vrot.slane %v4216, 7
        %v4357 = vsel %vm4283, %v4355, %v4356
        %v4358 = vrot.slane %v4356, 4
        %v4359 = vrot.slane %v4217, 7
        %v4360 = vsel %vm4283, %v4358, %v4359
        %v4361 = vrot.slane %v4218, 7
        %v4362 = vrot.slane %v4361, 4
        %v4363 = vrot.slane %v4219, 7
        %v4364 = vsel %vm4283, %v4362, %v4363
        %v4365 = vrot.slane %v4363, 4
        %v4366 = vrot.slane %v4220, 7
        %v4367 = vsel %vm4283, %v4365, %v4366
        %v4368 = vrot.slane %v4221, 7
        %v4369 = vrot.slane %v4368, 4
        %v4370 = vrot.slane %v4222, 7
        %v4371 = vsel %vm4283, %v4369, %v4370
        %v4372 = vrot.slane %v4370, 4
        %v4373 = vrot.slane %v4223, 7
        %v4374 = vsel %vm4283, %v4372, %v4373
        %v4375 = vrot.slane %v4224, 7
        %v4376 = vrot.slane %v4375, 4
        %v4377 = vrot.slane %v4225, 7
        %v4378 = vsel %vm4283, %v4376, %v4377
        %v4379 = vrot.slane %v4377, 4
        %v4380 = vrot.slane %v4226, 7
        %v4381 = vsel %vm4283, %v4379, %v4380
        %v4382 = vrot.slane %v4227, 7
        %v4383 = vrot.slane %v4382, 4
        %v4384 = vrot.slane %v4228, 7
        %v4385 = vsel %vm4283, %v4383, %v4384
        %v4386 = vrot.slane %v4384, 4
        %v4387 = vrot.slane %v4229, 7
        %v4388 = vsel %vm4283, %v4386, %v4387
        %v4389 = vrot.slane %v4230, 7
        %v4390 = vrot.slane %v4389, 4
        %v4391 = vrot.slane %v4231, 7
        %v4392 = vsel %vm4283, %v4390, %v4391
        %v4393 = vrot.slane %v4391, 4
        %v4394 = vrot.slane %v4232, 7
        %v4395 = vsel %vm4283, %v4393, %v4394
        %4428 = vst.msk [vmem:[#allocation2] sm:$0xf] %vm633, %v4287
        %4429 = vst.msk [vmem:[#allocation2 + $0x4] sm:$0xf] %vm633, %v4290
        %4430 = vst.msk [vmem:[#allocation2 + $0x8] sm:$0xf] %vm633, %v4294
        %4431 = vst.msk [vmem:[#allocation2 + $0xc] sm:$0xf] %vm633, %v4297
        %4432 = vst.msk [vmem:[#allocation2 + $0x10] sm:$0xf] %vm633, %v4301
        %4433 = vst.msk [vmem:[#allocation2 + $0x14] sm:$0xf] %vm633, %v4304
        %4434 = vst.msk [vmem:[#allocation2 + $0x18] sm:$0xf] %vm633, %v4308
        %4435 = vst.msk [vmem:[#allocation2 + $0x1c] sm:$0xf] %vm633, %v4311
        %4436 = vst.msk [vmem:[#allocation2 + $0x20] sm:$0xf] %vm633, %v4315
        %4437 = vst.msk [vmem:[#allocation2 + $0x24] sm:$0xf] %vm633, %v4318
        %4438 = vst.msk [vmem:[#allocation2 + $0x28] sm:$0xf] %vm633, %v4322
        %4439 = vst.msk [vmem:[#allocation2 + $0x2c] sm:$0xf] %vm633, %v4325
        %4440 = vst.msk [vmem:[#allocation2 + $0x30] sm:$0xf] %vm633, %v4329
        %4441 = vst.msk [vmem:[#allocation2 + $0x34] sm:$0xf] %vm633, %v4332
        %4442 = vst.msk [vmem:[#allocation2 + $0x38] sm:$0xf] %vm633, %v4336
        %4443 = vst.msk [vmem:[#allocation2 + $0x3c] sm:$0xf] %vm633, %v4339
        %4444 = vst.msk [vmem:[#allocation2 + $0x40] sm:$0xf] %vm633, %v4343
        %4445 = vst.msk [vmem:[#allocation2 + $0x44] sm:$0xf] %vm633, %v4346
        %4446 = vst.msk [vmem:[#allocation2 + $0x48] sm:$0xf] %vm633, %v4350
        %4447 = vst.msk [vmem:[#allocation2 + $0x4c] sm:$0xf] %vm633, %v4353
        %4448 = vst.msk [vmem:[#allocation2 + $0x50] sm:$0xf] %vm633, %v4357
        %4449 = vst.msk [vmem:[#allocation2 + $0x54] sm:$0xf] %vm633, %v4360
        %4450 = vst.msk [vmem:[#allocation2 + $0x58] sm:$0xf] %vm633, %v4364
        %4451 = vst.msk [vmem:[#allocation2 + $0x5c] sm:$0xf] %vm633, %v4367
        %4452 = vst.msk [vmem:[#allocation2 + $0x60] sm:$0xf] %vm633, %v4371
        %4453 = vst.msk [vmem:[#allocation2 + $0x64] sm:$0xf] %vm633, %v4374
        %4454 = vst.msk [vmem:[#allocation2 + $0x68] sm:$0xf] %vm633, %v4378
        %4455 = vst.msk [vmem:[#allocation2 + $0x6c] sm:$0xf] %vm633, %v4381
        %4456 = vst.msk [vmem:[#allocation2 + $0x70] sm:$0xf] %vm633, %v4385
        %4457 = vst.msk [vmem:[#allocation2 + $0x74] sm:$0xf] %vm633, %v4388
        %4458 = vst.msk [vmem:[#allocation2 + $0x78] sm:$0xf] %vm633, %v4392
        %4459 = vst.msk [vmem:[#allocation2 + $0x7c] sm:$0xf] %vm633, %v4395
        %v4460 = vld [vmem:[%s4184 + $0x4] sm:$0xf]
        %v4461 = vld [vmem:[%s4184 + $0x8] sm:$0xf]
        %v4462 = vld [vmem:[%s4184 + $0x14] sm:$0xf]
        %v4463 = vld [vmem:[%s4184 + $0x18] sm:$0xf]
        %v4464 = vld [vmem:[%s4184 + $0x24] sm:$0xf]
        %v4465 = vld [vmem:[%s4184 + $0x28] sm:$0xf]
        %v4466 = vld [vmem:[%s4184 + $0x34] sm:$0xf]
        %v4467 = vld [vmem:[%s4184 + $0x38] sm:$0xf]
        %v4468 = vld [vmem:[%s4184 + $0x44] sm:$0xf]
        %v4469 = vld [vmem:[%s4184 + $0x48] sm:$0xf]
        %v4470 = vld [vmem:[%s4184 + $0x54] sm:$0xf]
        %v4471 = vld [vmem:[%s4184 + $0x58] sm:$0xf]
        %v4472 = vld [vmem:[%s4184 + $0x64] sm:$0xf]
        %v4473 = vld [vmem:[%s4184 + $0x68] sm:$0xf]
        %v4474 = vld [vmem:[%s4184 + $0x74] sm:$0xf]
        %v4475 = vld [vmem:[%s4184 + $0x78] sm:$0xf]
        %v4476 = vld [vmem:[%s4184 + $0x84] sm:$0xf]
        %v4477 = vld [vmem:[%s4184 + $0x88] sm:$0xf]
        %v4478 = vld [vmem:[%s4184 + $0x94] sm:$0xf]
        %v4479 = vld [vmem:[%s4184 + $0x98] sm:$0xf]
        %v4480 = vld [vmem:[%s4184 + $0xa4] sm:$0xf]
        %v4481 = vld [vmem:[%s4184 + $0xa8] sm:$0xf]
        %v4482 = vld [vmem:[%s4184 + $0xb4] sm:$0xf]
        %v4483 = vld [vmem:[%s4184 + $0xb8] sm:$0xf]
        %v4484 = vld [vmem:[%s4184 + $0xc4] sm:$0xf]
        %v4485 = vld [vmem:[%s4184 + $0xc8] sm:$0xf]
        %v4486 = vld [vmem:[%s4184 + $0xd4] sm:$0xf]
        %v4487 = vld [vmem:[%s4184 + $0xd8] sm:$0xf]
        %v4488 = vld [vmem:[%s4184 + $0xe4] sm:$0xf]
        %v4489 = vld [vmem:[%s4184 + $0xe8] sm:$0xf]
        %v4490 = vld [vmem:[%s4184 + $0xf4] sm:$0xf]
        %v4491 = vld [vmem:[%s4184 + $0xf8] sm:$0xf]
        %4524 = vrot.lane.b32.xlu0 %v4460, 16
        %v4525 = vpop.permute.xlu0 %4524
        %4526 = vrot.lane.b32.xlu0 %v4461, 16
        %v4527 = vpop.permute.xlu0 %4526
        %4528 = vrot.lane.b32.xlu0 %v4462, 16
        %v4529 = vpop.permute.xlu0 %4528
        %4530 = vrot.lane.b32.xlu0 %v4463, 16
        %v4531 = vpop.permute.xlu0 %4530
        %4532 = vrot.lane.b32.xlu0 %v4464, 16
        %v4533 = vpop.permute.xlu0 %4532
        %4534 = vrot.lane.b32.xlu0 %v4465, 16
        %v4535 = vpop.permute.xlu0 %4534
        %4536 = vrot.lane.b32.xlu0 %v4466, 16
        %v4537 = vpop.permute.xlu0 %4536
        %4538 = vrot.lane.b32.xlu0 %v4467, 16
        %v4539 = vpop.permute.xlu0 %4538
        %4540 = vrot.lane.b32.xlu0 %v4468, 16
        %v4541 = vpop.permute.xlu0 %4540
        %4542 = vrot.lane.b32.xlu0 %v4469, 16
        %v4543 = vpop.permute.xlu0 %4542
        %4544 = vrot.lane.b32.xlu0 %v4470, 16
        %v4545 = vpop.permute.xlu0 %4544
        %4546 = vrot.lane.b32.xlu0 %v4471, 16
        %v4547 = vpop.permute.xlu0 %4546
        %4548 = vrot.lane.b32.xlu0 %v4472, 16
        %v4549 = vpop.permute.xlu0 %4548
        %4550 = vrot.lane.b32.xlu0 %v4473, 16
        %v4551 = vpop.permute.xlu0 %4550
        %4552 = vrot.lane.b32.xlu0 %v4474, 16
        %v4553 = vpop.permute.xlu0 %4552
        %4554 = vrot.lane.b32.xlu0 %v4475, 16
        %v4555 = vpop.permute.xlu0 %4554
        %4556 = vrot.lane.b32.xlu0 %v4476, 16
        %v4557 = vpop.permute.xlu0 %4556
        %4558 = vrot.lane.b32.xlu0 %v4477, 16
        %v4559 = vpop.permute.xlu0 %4558
        %4560 = vrot.lane.b32.xlu0 %v4478, 16
        %v4561 = vpop.permute.xlu0 %4560
        %4562 = vrot.lane.b32.xlu0 %v4479, 16
        %v4563 = vpop.permute.xlu0 %4562
        %4564 = vrot.lane.b32.xlu0 %v4480, 16
        %v4565 = vpop.permute.xlu0 %4564
        %4566 = vrot.lane.b32.xlu0 %v4481, 16
        %v4567 = vpop.permute.xlu0 %4566
        %4568 = vrot.lane.b32.xlu0 %v4482, 16
        %v4569 = vpop.permute.xlu0 %4568
        %4570 = vrot.lane.b32.xlu0 %v4483, 16
        %v4571 = vpop.permute.xlu0 %4570
        %4572 = vrot.lane.b32.xlu0 %v4484, 16
        %v4573 = vpop.permute.xlu0 %4572
        %4574 = vrot.lane.b32.xlu0 %v4485, 16
        %v4575 = vpop.permute.xlu0 %4574
        %4576 = vrot.lane.b32.xlu0 %v4486, 16
        %v4577 = vpop.permute.xlu0 %4576
        %4578 = vrot.lane.b32.xlu0 %v4487, 16
        %v4579 = vpop.permute.xlu0 %4578
        %4580 = vrot.lane.b32.xlu0 %v4488, 16
        %v4581 = vpop.permute.xlu0 %4580
        %4582 = vrot.lane.b32.xlu0 %v4489, 16
        %v4583 = vpop.permute.xlu0 %4582
        %4584 = vrot.lane.b32.xlu0 %v4490, 16
        %v4585 = vpop.permute.xlu0 %4584
        %4586 = vrot.lane.b32.xlu0 %v4491, 16
        %v4587 = vpop.permute.xlu0 %4586
        %4620 = vst.msk [vmem:[#allocation2] sm:$0xf] %vm826, %v4525
        %4621 = vst.msk [vmem:[#allocation2 + $0x4] sm:$0xf] %vm826, %v4527
        %4622 = vst.msk [vmem:[#allocation2 + $0x8] sm:$0xf] %vm826, %v4529
        %4623 = vst.msk [vmem:[#allocation2 + $0xc] sm:$0xf] %vm826, %v4531
        %4624 = vst.msk [vmem:[#allocation2 + $0x10] sm:$0xf] %vm826, %v4533
        %4625 = vst.msk [vmem:[#allocation2 + $0x14] sm:$0xf] %vm826, %v4535
        %4626 = vst.msk [vmem:[#allocation2 + $0x18] sm:$0xf] %vm826, %v4537
        %4627 = vst.msk [vmem:[#allocation2 + $0x1c] sm:$0xf] %vm826, %v4539
        %4628 = vst.msk [vmem:[#allocation2 + $0x20] sm:$0xf] %vm826, %v4541
        %4629 = vst.msk [vmem:[#allocation2 + $0x24] sm:$0xf] %vm826, %v4543
        %4630 = vst.msk [vmem:[#allocation2 + $0x28] sm:$0xf] %vm826, %v4545
        %4631 = vst.msk [vmem:[#allocation2 + $0x2c] sm:$0xf] %vm826, %v4547
        %4632 = vst.msk [vmem:[#allocation2 + $0x30] sm:$0xf] %vm826, %v4549
        %4633 = vst.msk [vmem:[#allocation2 + $0x34] sm:$0xf] %vm826, %v4551
        %4634 = vst.msk [vmem:[#allocation2 + $0x38] sm:$0xf] %vm826, %v4553
        %4635 = vst.msk [vmem:[#allocation2 + $0x3c] sm:$0xf] %vm826, %v4555
        %4636 = vst.msk [vmem:[#allocation2 + $0x40] sm:$0xf] %vm826, %v4557
        %4637 = vst.msk [vmem:[#allocation2 + $0x44] sm:$0xf] %vm826, %v4559
        %4638 = vst.msk [vmem:[#allocation2 + $0x48] sm:$0xf] %vm826, %v4561
        %4639 = vst.msk [vmem:[#allocation2 + $0x4c] sm:$0xf] %vm826, %v4563
        %4640 = vst.msk [vmem:[#allocation2 + $0x50] sm:$0xf] %vm826, %v4565
        %4641 = vst.msk [vmem:[#allocation2 + $0x54] sm:$0xf] %vm826, %v4567
        %4642 = vst.msk [vmem:[#allocation2 + $0x58] sm:$0xf] %vm826, %v4569
        %4643 = vst.msk [vmem:[#allocation2 + $0x5c] sm:$0xf] %vm826, %v4571
        %4644 = vst.msk [vmem:[#allocation2 + $0x60] sm:$0xf] %vm826, %v4573
        %4645 = vst.msk [vmem:[#allocation2 + $0x64] sm:$0xf] %vm826, %v4575
        %4646 = vst.msk [vmem:[#allocation2 + $0x68] sm:$0xf] %vm826, %v4577
        %4647 = vst.msk [vmem:[#allocation2 + $0x6c] sm:$0xf] %vm826, %v4579
        %4648 = vst.msk [vmem:[#allocation2 + $0x70] sm:$0xf] %vm826, %v4581
        %4649 = vst.msk [vmem:[#allocation2 + $0x74] sm:$0xf] %vm826, %v4583
        %4650 = vst.msk [vmem:[#allocation2 + $0x78] sm:$0xf] %vm826, %v4585
        %4651 = vst.msk [vmem:[#allocation2 + $0x7c] sm:$0xf] %vm826, %v4587
        %v4652 = vld [vmem:[%s4184 + $0x4] sm:$0xe]
        %v4653 = vld [vmem:[%s4184 + $0x8] sm:$0xf]
        %v4654 = vld [vmem:[%s4184 + $0xc] sm:$0x1]
        %v4655 = vld [vmem:[%s4184 + $0x14] sm:$0xe]
        %v4656 = vld [vmem:[%s4184 + $0x18] sm:$0xf]
        %v4657 = vld [vmem:[%s4184 + $0x1c] sm:$0x1]
        %v4658 = vld [vmem:[%s4184 + $0x24] sm:$0xe]
        %v4659 = vld [vmem:[%s4184 + $0x28] sm:$0xf]
        %v4660 = vld [vmem:[%s4184 + $0x2c] sm:$0x1]
        %v4661 = vld [vmem:[%s4184 + $0x34] sm:$0xe]
        %v4662 = vld [vmem:[%s4184 + $0x38] sm:$0xf]
        %v4663 = vld [vmem:[%s4184 + $0x3c] sm:$0x1]
        %v4664 = vld [vmem:[%s4184 + $0x44] sm:$0xe]
        %v4665 = vld [vmem:[%s4184 + $0x48] sm:$0xf]
        %v4666 = vld [vmem:[%s4184 + $0x4c] sm:$0x1]
        %v4667 = vld [vmem:[%s4184 + $0x54] sm:$0xe]
        %v4668 = vld [vmem:[%s4184 + $0x58] sm:$0xf]
        %v4669 = vld [vmem:[%s4184 + $0x5c] sm:$0x1]
        %v4670 = vld [vmem:[%s4184 + $0x64] sm:$0xe]
        %v4671 = vld [vmem:[%s4184 + $0x68] sm:$0xf]
        %v4672 = vld [vmem:[%s4184 + $0x6c] sm:$0x1]
        %v4673 = vld [vmem:[%s4184 + $0x74] sm:$0xe]
        %v4674 = vld [vmem:[%s4184 + $0x78] sm:$0xf]
        %v4675 = vld [vmem:[%s4184 + $0x7c] sm:$0x1]
        %v4676 = vld [vmem:[%s4184 + $0x84] sm:$0xe]
        %v4677 = vld [vmem:[%s4184 + $0x88] sm:$0xf]
        %v4678 = vld [vmem:[%s4184 + $0x8c] sm:$0x1]
        %v4679 = vld [vmem:[%s4184 + $0x94] sm:$0xe]
        %v4680 = vld [vmem:[%s4184 + $0x98] sm:$0xf]
        %v4681 = vld [vmem:[%s4184 + $0x9c] sm:$0x1]
        %v4682 = vld [vmem:[%s4184 + $0xa4] sm:$0xe]
        %v4683 = vld [vmem:[%s4184 + $0xa8] sm:$0xf]
        %v4684 = vld [vmem:[%s4184 + $0xac] sm:$0x1]
        %v4685 = vld [vmem:[%s4184 + $0xb4] sm:$0xe]
        %v4686 = vld [vmem:[%s4184 + $0xb8] sm:$0xf]
        %v4687 = vld [vmem:[%s4184 + $0xbc] sm:$0x1]
        %v4688 = vld [vmem:[%s4184 + $0xc4] sm:$0xe]
        %v4689 = vld [vmem:[%s4184 + $0xc8] sm:$0xf]
        %v4690 = vld [vmem:[%s4184 + $0xcc] sm:$0x1]
        %v4691 = vld [vmem:[%s4184 + $0xd4] sm:$0xe]
        %v4692 = vld [vmem:[%s4184 + $0xd8] sm:$0xf]
        %v4693 = vld [vmem:[%s4184 + $0xdc] sm:$0x1]
        %v4694 = vld [vmem:[%s4184 + $0xe4] sm:$0xe]
        %v4695 = vld [vmem:[%s4184 + $0xe8] sm:$0xf]
        %v4696 = vld [vmem:[%s4184 + $0xec] sm:$0x1]
        %v4697 = vld [vmem:[%s4184 + $0xf4] sm:$0xe]
        %v4698 = vld [vmem:[%s4184 + $0xf8] sm:$0xf]
        %v4699 = vld [vmem:[%s4184 + $0xfc] sm:$0x1]
        %vm4748 = vcmask 1042432
        %vm4749 = vcmask 1046532
        %vm4750 = vmor %vm4748, %vm4749
        %v4751 = vrot.slane %v4652, 5
        %v4752 = vrot.slane %v4751, 4
        %v4753 = vrot.slane %v4653, 5
        %v4754 = vsel %vm4750, %v4752, %v4753
        %v4755 = vrot.slane %v4753, 4
        %v4756 = vrot.slane %v4654, 5
        %v4757 = vsel %vm4750, %v4755, %v4756
        %v4758 = vrot.slane %v4655, 5
        %v4759 = vrot.slane %v4758, 4
        %v4760 = vrot.slane %v4656, 5
        %v4761 = vsel %vm4750, %v4759, %v4760
        %v4762 = vrot.slane %v4760, 4
        %v4763 = vrot.slane %v4657, 5
        %v4764 = vsel %vm4750, %v4762, %v4763
        %v4765 = vrot.slane %v4658, 5
        %v4766 = vrot.slane %v4765, 4
        %v4767 = vrot.slane %v4659, 5
        %v4768 = vsel %vm4750, %v4766, %v4767
        %v4769 = vrot.slane %v4767, 4
        %v4770 = vrot.slane %v4660, 5
        %v4771 = vsel %vm4750, %v4769, %v4770
        %v4772 = vrot.slane %v4661, 5
        %v4773 = vrot.slane %v4772, 4
        %v4774 = vrot.slane %v4662, 5
        %v4775 = vsel %vm4750, %v4773, %v4774
        %v4776 = vrot.slane %v4774, 4
        %v4777 = vrot.slane %v4663, 5
        %v4778 = vsel %vm4750, %v4776, %v4777
        %v4779 = vrot.slane %v4664, 5
        %v4780 = vrot.slane %v4779, 4
        %v4781 = vrot.slane %v4665, 5
        %v4782 = vsel %vm4750, %v4780, %v4781
        %v4783 = vrot.slane %v4781, 4
        %v4784 = vrot.slane %v4666, 5
        %v4785 = vsel %vm4750, %v4783, %v4784
        %v4786 = vrot.slane %v4667, 5
        %v4787 = vrot.slane %v4786, 4
        %v4788 = vrot.slane %v4668, 5
        %v4789 = vsel %vm4750, %v4787, %v4788
        %v4790 = vrot.slane %v4788, 4
        %v4791 = vrot.slane %v4669, 5
        %v4792 = vsel %vm4750, %v4790, %v4791
        %v4793 = vrot.slane %v4670, 5
        %v4794 = vrot.slane %v4793, 4
        %v4795 = vrot.slane %v4671, 5
        %v4796 = vsel %vm4750, %v4794, %v4795
        %v4797 = vrot.slane %v4795, 4
        %v4798 = vrot.slane %v4672, 5
        %v4799 = vsel %vm4750, %v4797, %v4798
        %v4800 = vrot.slane %v4673, 5
        %v4801 = vrot.slane %v4800, 4
        %v4802 = vrot.slane %v4674, 5
        %v4803 = vsel %vm4750, %v4801, %v4802
        %v4804 = vrot.slane %v4802, 4
        %v4805 = vrot.slane %v4675, 5
        %v4806 = vsel %vm4750, %v4804, %v4805
        %v4807 = vrot.slane %v4676, 5
        %v4808 = vrot.slane %v4807, 4
        %v4809 = vrot.slane %v4677, 5
        %v4810 = vsel %vm4750, %v4808, %v4809
        %v4811 = vrot.slane %v4809, 4
        %v4812 = vrot.slane %v4678, 5
        %v4813 = vsel %vm4750, %v4811, %v4812
        %v4814 = vrot.slane %v4679, 5
        %v4815 = vrot.slane %v4814, 4
        %v4816 = vrot.slane %v4680, 5
        %v4817 = vsel %vm4750, %v4815, %v4816
        %v4818 = vrot.slane %v4816, 4
        %v4819 = vrot.slane %v4681, 5
        %v4820 = vsel %vm4750, %v4818, %v4819
        %v4821 = vrot.slane %v4682, 5
        %v4822 = vrot.slane %v4821, 4
        %v4823 = vrot.slane %v4683, 5
        %v4824 = vsel %vm4750, %v4822, %v4823
        %v4825 = vrot.slane %v4823, 4
        %v4826 = vrot.slane %v4684, 5
        %v4827 = vsel %vm4750, %v4825, %v4826
        %v4828 = vrot.slane %v4685, 5
        %v4829 = vrot.slane %v4828, 4
        %v4830 = vrot.slane %v4686, 5
        %v4831 = vsel %vm4750, %v4829, %v4830
        %v4832 = vrot.slane %v4830, 4
        %v4833 = vrot.slane %v4687, 5
        %v4834 = vsel %vm4750, %v4832, %v4833
        %v4835 = vrot.slane %v4688, 5
        %v4836 = vrot.slane %v4835, 4
        %v4837 = vrot.slane %v4689, 5
        %v4838 = vsel %vm4750, %v4836, %v4837
        %v4839 = vrot.slane %v4837, 4
        %v4840 = vrot.slane %v4690, 5
        %v4841 = vsel %vm4750, %v4839, %v4840
        %v4842 = vrot.slane %v4691, 5
        %v4843 = vrot.slane %v4842, 4
        %v4844 = vrot.slane %v4692, 5
        %v4845 = vsel %vm4750, %v4843, %v4844
        %v4846 = vrot.slane %v4844, 4
        %v4847 = vrot.slane %v4693, 5
        %v4848 = vsel %vm4750, %v4846, %v4847
        %v4849 = vrot.slane %v4694, 5
        %v4850 = vrot.slane %v4849, 4
        %v4851 = vrot.slane %v4695, 5
        %v4852 = vsel %vm4750, %v4850, %v4851
        %v4853 = vrot.slane %v4851, 4
        %v4854 = vrot.slane %v4696, 5
        %v4855 = vsel %vm4750, %v4853, %v4854
        %v4856 = vrot.slane %v4697, 5
        %v4857 = vrot.slane %v4856, 4
        %v4858 = vrot.slane %v4698, 5
        %v4859 = vsel %vm4750, %v4857, %v4858
        %v4860 = vrot.slane %v4858, 4
        %v4861 = vrot.slane %v4699, 5
        %v4862 = vsel %vm4750, %v4860, %v4861
        %4863 = vrot.lane.b32.xlu0 %v4754, 32
        %v4864 = vpop.permute.xlu0 %4863
        %4865 = vrot.lane.b32.xlu0 %v4757, 32
        %v4866 = vpop.permute.xlu0 %4865
        %4867 = vrot.lane.b32.xlu0 %v4761, 32
        %v4868 = vpop.permute.xlu0 %4867
        %4869 = vrot.lane.b32.xlu0 %v4764, 32
        %v4870 = vpop.permute.xlu0 %4869
        %4871 = vrot.lane.b32.xlu0 %v4768, 32
        %v4872 = vpop.permute.xlu0 %4871
        %4873 = vrot.lane.b32.xlu0 %v4771, 32
        %v4874 = vpop.permute.xlu0 %4873
        %4875 = vrot.lane.b32.xlu0 %v4775, 32
        %v4876 = vpop.permute.xlu0 %4875
        %4877 = vrot.lane.b32.xlu0 %v4778, 32
        %v4878 = vpop.permute.xlu0 %4877
        %4879 = vrot.lane.b32.xlu0 %v4782, 32
        %v4880 = vpop.permute.xlu0 %4879
        %4881 = vrot.lane.b32.xlu0 %v4785, 32
        %v4882 = vpop.permute.xlu0 %4881
        %4883 = vrot.lane.b32.xlu0 %v4789, 32
        %v4884 = vpop.permute.xlu0 %4883
        %4885 = vrot.lane.b32.xlu0 %v4792, 32
        %v4886 = vpop.permute.xlu0 %4885
        %4887 = vrot.lane.b32.xlu0 %v4796, 32
        %v4888 = vpop.permute.xlu0 %4887
        %4889 = vrot.lane.b32.xlu0 %v4799, 32
        %v4890 = vpop.permute.xlu0 %4889
        %4891 = vrot.lane.b32.xlu0 %v4803, 32
        %v4892 = vpop.permute.xlu0 %4891
        %4893 = vrot.lane.b32.xlu0 %v4806, 32
        %v4894 = vpop.permute.xlu0 %4893
        %4895 = vrot.lane.b32.xlu0 %v4810, 32
        %v4896 = vpop.permute.xlu0 %4895
        %4897 = vrot.lane.b32.xlu0 %v4813, 32
        %v4898 = vpop.permute.xlu0 %4897
        %4899 = vrot.lane.b32.xlu0 %v4817, 32
        %v4900 = vpop.permute.xlu0 %4899
        %4901 = vrot.lane.b32.xlu0 %v4820, 32
        %v4902 = vpop.permute.xlu0 %4901
        %4903 = vrot.lane.b32.xlu0 %v4824, 32
        %v4904 = vpop.permute.xlu0 %4903
        %4905 = vrot.lane.b32.xlu0 %v4827, 32
        %v4906 = vpop.permute.xlu0 %4905
        %4907 = vrot.lane.b32.xlu0 %v4831, 32
        %v4908 = vpop.permute.xlu0 %4907
        %4909 = vrot.lane.b32.xlu0 %v4834, 32
        %v4910 = vpop.permute.xlu0 %4909
        %4911 = vrot.lane.b32.xlu0 %v4838, 32
        %v4912 = vpop.permute.xlu0 %4911
        %4913 = vrot.lane.b32.xlu0 %v4841, 32
        %v4914 = vpop.permute.xlu0 %4913
        %4915 = vrot.lane.b32.xlu0 %v4845, 32
        %v4916 = vpop.permute.xlu0 %4915
        %4917 = vrot.lane.b32.xlu0 %v4848, 32
        %v4918 = vpop.permute.xlu0 %4917
        %4919 = vrot.lane.b32.xlu0 %v4852, 32
        %v4920 = vpop.permute.xlu0 %4919
        %4921 = vrot.lane.b32.xlu0 %v4855, 32
        %v4922 = vpop.permute.xlu0 %4921
        %4923 = vrot.lane.b32.xlu0 %v4859, 32
        %v4924 = vpop.permute.xlu0 %4923
        %4925 = vrot.lane.b32.xlu0 %v4862, 32
        %v4926 = vpop.permute.xlu0 %4925
        %4959 = vst.msk [vmem:[#allocation2] sm:$0xf] %vm1390, %v4864
        %4960 = vst.msk [vmem:[#allocation2 + $0x4] sm:$0xf] %vm1390, %v4866
        %4961 = vst.msk [vmem:[#allocation2 + $0x8] sm:$0xf] %vm1390, %v4868
        %4962 = vst.msk [vmem:[#allocation2 + $0xc] sm:$0xf] %vm1390, %v4870
        %4963 = vst.msk [vmem:[#allocation2 + $0x10] sm:$0xf] %vm1390, %v4872
        %4964 = vst.msk [vmem:[#allocation2 + $0x14] sm:$0xf] %vm1390, %v4874
        %4965 = vst.msk [vmem:[#allocation2 + $0x18] sm:$0xf] %vm1390, %v4876
        %4966 = vst.msk [vmem:[#allocation2 + $0x1c] sm:$0xf] %vm1390, %v4878
        %4967 = vst.msk [vmem:[#allocation2 + $0x20] sm:$0xf] %vm1390, %v4880
        %4968 = vst.msk [vmem:[#allocation2 + $0x24] sm:$0xf] %vm1390, %v4882
        %4969 = vst.msk [vmem:[#allocation2 + $0x28] sm:$0xf] %vm1390, %v4884
        %4970 = vst.msk [vmem:[#allocation2 + $0x2c] sm:$0xf] %vm1390, %v4886
        %4971 = vst.msk [vmem:[#allocation2 + $0x30] sm:$0xf] %vm1390, %v4888
        %4972 = vst.msk [vmem:[#allocation2 + $0x34] sm:$0xf] %vm1390, %v4890
        %4973 = vst.msk [vmem:[#allocation2 + $0x38] sm:$0xf] %vm1390, %v4892
        %4974 = vst.msk [vmem:[#allocation2 + $0x3c] sm:$0xf] %vm1390, %v4894
        %4975 = vst.msk [vmem:[#allocation2 + $0x40] sm:$0xf] %vm1390, %v4896
        %4976 = vst.msk [vmem:[#allocation2 + $0x44] sm:$0xf] %vm1390, %v4898
        %4977 = vst.msk [vmem:[#allocation2 + $0x48] sm:$0xf] %vm1390, %v4900
        %4978 = vst.msk [vmem:[#allocation2 + $0x4c] sm:$0xf] %vm1390, %v4902
        %4979 = vst.msk [vmem:[#allocation2 + $0x50] sm:$0xf] %vm1390, %v4904
        %4980 = vst.msk [vmem:[#allocation2 + $0x54] sm:$0xf] %vm1390, %v4906
        %4981 = vst.msk [vmem:[#allocation2 + $0x58] sm:$0xf] %vm1390, %v4908
        %4982 = vst.msk [vmem:[#allocation2 + $0x5c] sm:$0xf] %vm1390, %v4910
        %4983 = vst.msk [vmem:[#allocation2 + $0x60] sm:$0xf] %vm1390, %v4912
        %4984 = vst.msk [vmem:[#allocation2 + $0x64] sm:$0xf] %vm1390, %v4914
        %4985 = vst.msk [vmem:[#allocation2 + $0x68] sm:$0xf] %vm1390, %v4916
        %4986 = vst.msk [vmem:[#allocation2 + $0x6c] sm:$0xf] %vm1390, %v4918
        %4987 = vst.msk [vmem:[#allocation2 + $0x70] sm:$0xf] %vm1390, %v4920
        %4988 = vst.msk [vmem:[#allocation2 + $0x74] sm:$0xf] %vm1390, %v4922
        %4989 = vst.msk [vmem:[#allocation2 + $0x78] sm:$0xf] %vm1390, %v4924
        %4990 = vst.msk [vmem:[#allocation2 + $0x7c] sm:$0xf] %vm1390, %v4926
        %v4991 = vld [vmem:[%s1423] sm:$0x8]
        %v4992 = vld [vmem:[%s1423 + $0x4] sm:$0xf]
        %v4993 = vld [vmem:[%s1423 + $0x8] sm:$0x7]
        %v4994 = vld [vmem:[%s1423 + $0x10] sm:$0x8]
        %v4995 = vld [vmem:[%s1423 + $0x14] sm:$0xf]
        %v4996 = vld [vmem:[%s1423 + $0x18] sm:$0x7]
        %v4997 = vld [vmem:[%s1423 + $0x20] sm:$0x8]
        %v4998 = vld [vmem:[%s1423 + $0x24] sm:$0xf]
        %v4999 = vld [vmem:[%s1423 + $0x28] sm:$0x7]
        %v5000 = vld [vmem:[%s1423 + $0x30] sm:$0x8]
        %v5001 = vld [vmem:[%s1423 + $0x34] sm:$0xf]
        %v5002 = vld [vmem:[%s1423 + $0x38] sm:$0x7]
        %v5003 = vld [vmem:[%s1423 + $0x40] sm:$0x8]
        %v5004 = vld [vmem:[%s1423 + $0x44] sm:$0xf]
        %v5005 = vld [vmem:[%s1423 + $0x48] sm:$0x7]
        %v5006 = vld [vmem:[%s1423 + $0x50] sm:$0x8]
        %v5007 = vld [vmem:[%s1423 + $0x54] sm:$0xf]
        %v5008 = vld [vmem:[%s1423 + $0x58] sm:$0x7]
        %v5009 = vld [vmem:[%s1423 + $0x60] sm:$0x8]
        %v5010 = vld [vmem:[%s1423 + $0x64] sm:$0xf]
        %v5011 = vld [vmem:[%s1423 + $0x68] sm:$0x7]
        %v5012 = vld [vmem:[%s1423 + $0x70] sm:$0x8]
        %v5013 = vld [vmem:[%s1423 + $0x74] sm:$0xf]
        %v5014 = vld [vmem:[%s1423 + $0x78] sm:$0x7]
        %v5015 = vld [vmem:[%s1423 + $0x80] sm:$0x8]
        %v5016 = vld [vmem:[%s1423 + $0x84] sm:$0xf]
        %v5017 = vld [vmem:[%s1423 + $0x88] sm:$0x7]
        %v5018 = vld [vmem:[%s1423 + $0x90] sm:$0x8]
        %v5019 = vld [vmem:[%s1423 + $0x94] sm:$0xf]
        %v5020 = vld [vmem:[%s1423 + $0x98] sm:$0x7]
        %v5021 = vld [vmem:[%s1423 + $0xa0] sm:$0x8]
        %v5022 = vld [vmem:[%s1423 + $0xa4] sm:$0xf]
        %v5023 = vld [vmem:[%s1423 + $0xa8] sm:$0x7]
        %v5024 = vld [vmem:[%s1423 + $0xb0] sm:$0x8]
        %v5025 = vld [vmem:[%s1423 + $0xb4] sm:$0xf]
        %v5026 = vld [vmem:[%s1423 + $0xb8] sm:$0x7]
        %v5027 = vld [vmem:[%s1423 + $0xc0] sm:$0x8]
        %v5028 = vld [vmem:[%s1423 + $0xc4] sm:$0xf]
        %v5029 = vld [vmem:[%s1423 + $0xc8] sm:$0x7]
        %v5030 = vld [vmem:[%s1423 + $0xd0] sm:$0x8]
        %v5031 = vld [vmem:[%s1423 + $0xd4] sm:$0xf]
        %v5032 = vld [vmem:[%s1423 + $0xd8] sm:$0x7]
        %v5033 = vld [vmem:[%s1423 + $0xe0] sm:$0x8]
        %v5034 = vld [vmem:[%s1423 + $0xe4] sm:$0xf]
        %v5035 = vld [vmem:[%s1423 + $0xe8] sm:$0x7]
        %v5036 = vld [vmem:[%s1423 + $0xf0] sm:$0x8]
        %v5037 = vld [vmem:[%s1423 + $0xf4] sm:$0xf]
        %v5038 = vld [vmem:[%s1423 + $0xf8] sm:$0x7]
        %v5087 = vrot.slane %v4991, 7
        %v5088 = vrot.slane %v5087, 4
        %v5089 = vrot.slane %v4992, 7
        %v5090 = vsel %vm4283, %v5088, %v5089
        %v5091 = vrot.slane %v5089, 4
        %v5092 = vrot.slane %v4993, 7
        %v5093 = vsel %vm4283, %v5091, %v5092
        %v5094 = vrot.slane %v4994, 7
        %v5095 = vrot.slane %v5094, 4
        %v5096 = vrot.slane %v4995, 7
        %v5097 = vsel %vm4283, %v5095, %v5096
        %v5098 = vrot.slane %v5096, 4
        %v5099 = vrot.slane %v4996, 7
        %v5100 = vsel %vm4283, %v5098, %v5099
        %v5101 = vrot.slane %v4997, 7
        %v5102 = vrot.slane %v5101, 4
        %v5103 = vrot.slane %v4998, 7
        %v5104 = vsel %vm4283, %v5102, %v5103
        %v5105 = vrot.slane %v5103, 4
        %v5106 = vrot.slane %v4999, 7
        %v5107 = vsel %vm4283, %v5105, %v5106
        %v5108 = vrot.slane %v5000, 7
        %v5109 = vrot.slane %v5108, 4
        %v5110 = vrot.slane %v5001, 7
        %v5111 = vsel %vm4283, %v5109, %v5110
        %v5112 = vrot.slane %v5110, 4
        %v5113 = vrot.slane %v5002, 7
        %v5114 = vsel %vm4283, %v5112, %v5113
        %v5115 = vrot.slane %v5003, 7
        %v5116 = vrot.slane %v5115, 4
        %v5117 = vrot.slane %v5004, 7
        %v5118 = vsel %vm4283, %v5116, %v5117
        %v5119 = vrot.slane %v5117, 4
        %v5120 = vrot.slane %v5005, 7
        %v5121 = vsel %vm4283, %v5119, %v5120
        %v5122 = vrot.slane %v5006, 7
        %v5123 = vrot.slane %v5122, 4
        %v5124 = vrot.slane %v5007, 7
        %v5125 = vsel %vm4283, %v5123, %v5124
        %v5126 = vrot.slane %v5124, 4
        %v5127 = vrot.slane %v5008, 7
        %v5128 = vsel %vm4283, %v5126, %v5127
        %v5129 = vrot.slane %v5009, 7
        %v5130 = vrot.slane %v5129, 4
        %v5131 = vrot.slane %v5010, 7
        %v5132 = vsel %vm4283, %v5130, %v5131
        %v5133 = vrot.slane %v5131, 4
        %v5134 = vrot.slane %v5011, 7
        %v5135 = vsel %vm4283, %v5133, %v5134
        %v5136 = vrot.slane %v5012, 7
        %v5137 = vrot.slane %v5136, 4
        %v5138 = vrot.slane %v5013, 7
        %v5139 = vsel %vm4283, %v5137, %v5138
        %v5140 = vrot.slane %v5138, 4
        %v5141 = vrot.slane %v5014, 7
        %v5142 = vsel %vm4283, %v5140, %v5141
        %v5143 = vrot.slane %v5015, 7
        %v5144 = vrot.slane %v5143, 4
        %v5145 = vrot.slane %v5016, 7
        %v5146 = vsel %vm4283, %v5144, %v5145
        %v5147 = vrot.slane %v5145, 4
        %v5148 = vrot.slane %v5017, 7
        %v5149 = vsel %vm4283, %v5147, %v5148
        %v5150 = vrot.slane %v5018, 7
        %v5151 = vrot.slane %v5150, 4
        %v5152 = vrot.slane %v5019, 7
        %v5153 = vsel %vm4283, %v5151, %v5152
        %v5154 = vrot.slane %v5152, 4
        %v5155 = vrot.slane %v5020, 7
        %v5156 = vsel %vm4283, %v5154, %v5155
        %v5157 = vrot.slane %v5021, 7
        %v5158 = vrot.slane %v5157, 4
        %v5159 = vrot.slane %v5022, 7
        %v5160 = vsel %vm4283, %v5158, %v5159
        %v5161 = vrot.slane %v5159, 4
        %v5162 = vrot.slane %v5023, 7
        %v5163 = vsel %vm4283, %v5161, %v5162
        %v5164 = vrot.slane %v5024, 7
        %v5165 = vrot.slane %v5164, 4
        %v5166 = vrot.slane %v5025, 7
        %v5167 = vsel %vm4283, %v5165, %v5166
        %v5168 = vrot.slane %v5166, 4
        %v5169 = vrot.slane %v5026, 7
        %v5170 = vsel %vm4283, %v5168, %v5169
        %v5171 = vrot.slane %v5027, 7
        %v5172 = vrot.slane %v5171, 4
        %v5173 = vrot.slane %v5028, 7
        %v5174 = vsel %vm4283, %v5172, %v5173
        %v5175 = vrot.slane %v5173, 4
        %v5176 = vrot.slane %v5029, 7
        %v5177 = vsel %vm4283, %v5175, %v5176
        %v5178 = vrot.slane %v5030, 7
        %v5179 = vrot.slane %v5178, 4
        %v5180 = vrot.slane %v5031, 7
        %v5181 = vsel %vm4283, %v5179, %v5180
        %v5182 = vrot.slane %v5180, 4
        %v5183 = vrot.slane %v5032, 7
        %v5184 = vsel %vm4283, %v5182, %v5183
        %v5185 = vrot.slane %v5033, 7
        %v5186 = vrot.slane %v5185, 4
        %v5187 = vrot.slane %v5034, 7
        %v5188 = vsel %vm4283, %v5186, %v5187
        %v5189 = vrot.slane %v5187, 4
        %v5190 = vrot.slane %v5035, 7
        %v5191 = vsel %vm4283, %v5189, %v5190
        %v5192 = vrot.slane %v5036, 7
        %v5193 = vrot.slane %v5192, 4
        %v5194 = vrot.slane %v5037, 7
        %v5195 = vsel %vm4283, %v5193, %v5194
        %v5196 = vrot.slane %v5194, 4
        %v5197 = vrot.slane %v5038, 7
        %v5198 = vsel %vm4283, %v5196, %v5197
        %5199 = vrot.lane.b32.xlu0 %v5090, 48
        %v5200 = vpop.permute.xlu0 %5199
        %5201 = vrot.lane.b32.xlu0 %v5093, 48
        %v5202 = vpop.permute.xlu0 %5201
        %5203 = vrot.lane.b32.xlu0 %v5097, 48
        %v5204 = vpop.permute.xlu0 %5203
        %5205 = vrot.lane.b32.xlu0 %v5100, 48
        %v5206 = vpop.permute.xlu0 %5205
        %5207 = vrot.lane.b32.xlu0 %v5104, 48
        %v5208 = vpop.permute.xlu0 %5207
        %5209 = vrot.lane.b32.xlu0 %v5107, 48
        %v5210 = vpop.permute.xlu0 %5209
        %5211 = vrot.lane.b32.xlu0 %v5111, 48
        %v5212 = vpop.permute.xlu0 %5211
        %5213 = vrot.lane.b32.xlu0 %v5114, 48
        %v5214 = vpop.permute.xlu0 %5213
        %5215 = vrot.lane.b32.xlu0 %v5118, 48
        %v5216 = vpop.permute.xlu0 %5215
        %5217 = vrot.lane.b32.xlu0 %v5121, 48
        %v5218 = vpop.permute.xlu0 %5217
        %5219 = vrot.lane.b32.xlu0 %v5125, 48
        %v5220 = vpop.permute.xlu0 %5219
        %5221 = vrot.lane.b32.xlu0 %v5128, 48
        %v5222 = vpop.permute.xlu0 %5221
        %5223 = vrot.lane.b32.xlu0 %v5132, 48
        %v5224 = vpop.permute.xlu0 %5223
        %5225 = vrot.lane.b32.xlu0 %v5135, 48
        %v5226 = vpop.permute.xlu0 %5225
        %5227 = vrot.lane.b32.xlu0 %v5139, 48
        %v5228 = vpop.permute.xlu0 %5227
        %5229 = vrot.lane.b32.xlu0 %v5142, 48
        %v5230 = vpop.permute.xlu0 %5229
        %5231 = vrot.lane.b32.xlu0 %v5146, 48
        %v5232 = vpop.permute.xlu0 %5231
        %5233 = vrot.lane.b32.xlu0 %v5149, 48
        %v5234 = vpop.permute.xlu0 %5233
        %5235 = vrot.lane.b32.xlu0 %v5153, 48
        %v5236 = vpop.permute.xlu0 %5235
        %5237 = vrot.lane.b32.xlu0 %v5156, 48
        %v5238 = vpop.permute.xlu0 %5237
        %5239 = vrot.lane.b32.xlu0 %v5160, 48
        %v5240 = vpop.permute.xlu0 %5239
        %5241 = vrot.lane.b32.xlu0 %v5163, 48
        %v5242 = vpop.permute.xlu0 %5241
        %5243 = vrot.lane.b32.xlu0 %v5167, 48
        %v5244 = vpop.permute.xlu0 %5243
        %5245 = vrot.lane.b32.xlu0 %v5170, 48
        %v5246 = vpop.permute.xlu0 %5245
        %5247 = vrot.lane.b32.xlu0 %v5174, 48
        %v5248 = vpop.permute.xlu0 %5247
        %5249 = vrot.lane.b32.xlu0 %v5177, 48
        %v5250 = vpop.permute.xlu0 %5249
        %5251 = vrot.lane.b32.xlu0 %v5181, 48
        %v5252 = vpop.permute.xlu0 %5251
        %5253 = vrot.lane.b32.xlu0 %v5184, 48
        %v5254 = vpop.permute.xlu0 %5253
        %5255 = vrot.lane.b32.xlu0 %v5188, 48
        %v5256 = vpop.permute.xlu0 %5255
        %5257 = vrot.lane.b32.xlu0 %v5191, 48
        %v5258 = vpop.permute.xlu0 %5257
        %5259 = vrot.lane.b32.xlu0 %v5195, 48
        %v5260 = vpop.permute.xlu0 %5259
        %5261 = vrot.lane.b32.xlu0 %v5198, 48
        %v5262 = vpop.permute.xlu0 %5261
        %5295 = vst.msk [vmem:[#allocation2] sm:$0xf] %vm1920, %v5200
        %5296 = vst.msk [vmem:[#allocation2 + $0x4] sm:$0xf] %vm1920, %v5202
        %5297 = vst.msk [vmem:[#allocation2 + $0x8] sm:$0xf] %vm1920, %v5204
        %5298 = vst.msk [vmem:[#allocation2 + $0xc] sm:$0xf] %vm1920, %v5206
        %5299 = vst.msk [vmem:[#allocation2 + $0x10] sm:$0xf] %vm1920, %v5208
        %5300 = vst.msk [vmem:[#allocation2 + $0x14] sm:$0xf] %vm1920, %v5210
        %5301 = vst.msk [vmem:[#allocation2 + $0x18] sm:$0xf] %vm1920, %v5212
        %5302 = vst.msk [vmem:[#allocation2 + $0x1c] sm:$0xf] %vm1920, %v5214
        %5303 = vst.msk [vmem:[#allocation2 + $0x20] sm:$0xf] %vm1920, %v5216
        %5304 = vst.msk [vmem:[#allocation2 + $0x24] sm:$0xf] %vm1920, %v5218
        %5305 = vst.msk [vmem:[#allocation2 + $0x28] sm:$0xf] %vm1920, %v5220
        %5306 = vst.msk [vmem:[#allocation2 + $0x2c] sm:$0xf] %vm1920, %v5222
        %5307 = vst.msk [vmem:[#allocation2 + $0x30] sm:$0xf] %vm1920, %v5224
        %5308 = vst.msk [vmem:[#allocation2 + $0x34] sm:$0xf] %vm1920, %v5226
        %5309 = vst.msk [vmem:[#allocation2 + $0x38] sm:$0xf] %vm1920, %v5228
        %5310 = vst.msk [vmem:[#allocation2 + $0x3c] sm:$0xf] %vm1920, %v5230
        %5311 = vst.msk [vmem:[#allocation2 + $0x40] sm:$0xf] %vm1920, %v5232
        %5312 = vst.msk [vmem:[#allocation2 + $0x44] sm:$0xf] %vm1920, %v5234
        %5313 = vst.msk [vmem:[#allocation2 + $0x48] sm:$0xf] %vm1920, %v5236
        %5314 = vst.msk [vmem:[#allocation2 + $0x4c] sm:$0xf] %vm1920, %v5238
        %5315 = vst.msk [vmem:[#allocation2 + $0x50] sm:$0xf] %vm1920, %v5240
        %5316 = vst.msk [vmem:[#allocation2 + $0x54] sm:$0xf] %vm1920, %v5242
        %5317 = vst.msk [vmem:[#allocation2 + $0x58] sm:$0xf] %vm1920, %v5244
        %5318 = vst.msk [vmem:[#allocation2 + $0x5c] sm:$0xf] %vm1920, %v5246
        %5319 = vst.msk [vmem:[#allocation2 + $0x60] sm:$0xf] %vm1920, %v5248
        %5320 = vst.msk [vmem:[#allocation2 + $0x64] sm:$0xf] %vm1920, %v5250
        %5321 = vst.msk [vmem:[#allocation2 + $0x68] sm:$0xf] %vm1920, %v5252
        %5322 = vst.msk [vmem:[#allocation2 + $0x6c] sm:$0xf] %vm1920, %v5254
        %5323 = vst.msk [vmem:[#allocation2 + $0x70] sm:$0xf] %vm1920, %v5256
        %5324 = vst.msk [vmem:[#allocation2 + $0x74] sm:$0xf] %vm1920, %v5258
        %5325 = vst.msk [vmem:[#allocation2 + $0x78] sm:$0xf] %vm1920, %v5260
        %5326 = vst.msk [vmem:[#allocation2 + $0x7c] sm:$0xf] %vm1920, %v5262
        %v5327 = vld [vmem:[%s1423 + $0x4] sm:$0xe]
        %v5328 = vld [vmem:[%s1423 + $0x8] sm:$0xf]
        %v5329 = vld [vmem:[%s1423 + $0xc] sm:$0x1]
        %v5330 = vld [vmem:[%s1423 + $0x14] sm:$0xe]
        %v5331 = vld [vmem:[%s1423 + $0x18] sm:$0xf]
        %v5332 = vld [vmem:[%s1423 + $0x1c] sm:$0x1]
        %v5333 = vld [vmem:[%s1423 + $0x24] sm:$0xe]
        %v5334 = vld [vmem:[%s1423 + $0x28] sm:$0xf]
        %v5335 = vld [vmem:[%s1423 + $0x2c] sm:$0x1]
        %v5336 = vld [vmem:[%s1423 + $0x34] sm:$0xe]
        %v5337 = vld [vmem:[%s1423 + $0x38] sm:$0xf]
        %v5338 = vld [vmem:[%s1423 + $0x3c] sm:$0x1]
        %v5339 = vld [vmem:[%s1423 + $0x44] sm:$0xe]
        %v5340 = vld [vmem:[%s1423 + $0x48] sm:$0xf]
        %v5341 = vld [vmem:[%s1423 + $0x4c] sm:$0x1]
        %v5342 = vld [vmem:[%s1423 + $0x54] sm:$0xe]
        %v5343 = vld [vmem:[%s1423 + $0x58] sm:$0xf]
        %v5344 = vld [vmem:[%s1423 + $0x5c] sm:$0x1]
        %v5345 = vld [vmem:[%s1423 + $0x64] sm:$0xe]
        %v5346 = vld [vmem:[%s1423 + $0x68] sm:$0xf]
        %v5347 = vld [vmem:[%s1423 + $0x6c] sm:$0x1]
        %v5348 = vld [vmem:[%s1423 + $0x74] sm:$0xe]
        %v5349 = vld [vmem:[%s1423 + $0x78] sm:$0xf]
        %v5350 = vld [vmem:[%s1423 + $0x7c] sm:$0x1]
        %v5351 = vld [vmem:[%s1423 + $0x84] sm:$0xe]
        %v5352 = vld [vmem:[%s1423 + $0x88] sm:$0xf]
        %v5353 = vld [vmem:[%s1423 + $0x8c] sm:$0x1]
        %v5354 = vld [vmem:[%s1423 + $0x94] sm:$0xe]
        %v5355 = vld [vmem:[%s1423 + $0x98] sm:$0xf]
        %v5356 = vld [vmem:[%s1423 + $0x9c] sm:$0x1]
        %v5357 = vld [vmem:[%s1423 + $0xa4] sm:$0xe]
        %v5358 = vld [vmem:[%s1423 + $0xa8] sm:$0xf]
        %v5359 = vld [vmem:[%s1423 + $0xac] sm:$0x1]
        %v5360 = vld [vmem:[%s1423 + $0xb4] sm:$0xe]
        %v5361 = vld [vmem:[%s1423 + $0xb8] sm:$0xf]
        %v5362 = vld [vmem:[%s1423 + $0xbc] sm:$0x1]
        %v5363 = vld [vmem:[%s1423 + $0xc4] sm:$0xe]
        %v5364 = vld [vmem:[%s1423 + $0xc8] sm:$0xf]
        %v5365 = vld [vmem:[%s1423 + $0xcc] sm:$0x1]
        %v5366 = vld [vmem:[%s1423 + $0xd4] sm:$0xe]
        %v5367 = vld [vmem:[%s1423 + $0xd8] sm:$0xf]
        %v5368 = vld [vmem:[%s1423 + $0xdc] sm:$0x1]
        %v5369 = vld [vmem:[%s1423 + $0xe4] sm:$0xe]
        %v5370 = vld [vmem:[%s1423 + $0xe8] sm:$0xf]
        %v5371 = vld [vmem:[%s1423 + $0xec] sm:$0x1]
        %v5372 = vld [vmem:[%s1423 + $0xf4] sm:$0xe]
        %v5373 = vld [vmem:[%s1423 + $0xf8] sm:$0xf]
        %v5374 = vld [vmem:[%s1423 + $0xfc] sm:$0x1]
        %v5423 = vrot.slane %v5327, 5
        %v5424 = vrot.slane %v5423, 4
        %v5425 = vrot.slane %v5328, 5
        %v5426 = vsel %vm4750, %v5424, %v5425
        %v5427 = vrot.slane %v5425, 4
        %v5428 = vrot.slane %v5329, 5
        %v5429 = vsel %vm4750, %v5427, %v5428
        %v5430 = vrot.slane %v5330, 5
        %v5431 = vrot.slane %v5430, 4
        %v5432 = vrot.slane %v5331, 5
        %v5433 = vsel %vm4750, %v5431, %v5432
        %v5434 = vrot.slane %v5432, 4
        %v5435 = vrot.slane %v5332, 5
        %v5436 = vsel %vm4750, %v5434, %v5435
        %v5437 = vrot.slane %v5333, 5
        %v5438 = vrot.slane %v5437, 4
        %v5439 = vrot.slane %v5334, 5
        %v5440 = vsel %vm4750, %v5438, %v5439
        %v5441 = vrot.slane %v5439, 4
        %v5442 = vrot.slane %v5335, 5
        %v5443 = vsel %vm4750, %v5441, %v5442
        %v5444 = vrot.slane %v5336, 5
        %v5445 = vrot.slane %v5444, 4
        %v5446 = vrot.slane %v5337, 5
        %v5447 = vsel %vm4750, %v5445, %v5446
        %v5448 = vrot.slane %v5446, 4
        %v5449 = vrot.slane %v5338, 5
        %v5450 = vsel %vm4750, %v5448, %v5449
        %v5451 = vrot.slane %v5339, 5
        %v5452 = vrot.slane %v5451, 4
        %v5453 = vrot.slane %v5340, 5
        %v5454 = vsel %vm4750, %v5452, %v5453
        %v5455 = vrot.slane %v5453, 4
        %v5456 = vrot.slane %v5341, 5
        %v5457 = vsel %vm4750, %v5455, %v5456
        %v5458 = vrot.slane %v5342, 5
        %v5459 = vrot.slane %v5458, 4
        %v5460 = vrot.slane %v5343, 5
        %v5461 = vsel %vm4750, %v5459, %v5460
        %v5462 = vrot.slane %v5460, 4
        %v5463 = vrot.slane %v5344, 5
        %v5464 = vsel %vm4750, %v5462, %v5463
        %v5465 = vrot.slane %v5345, 5
        %v5466 = vrot.slane %v5465, 4
        %v5467 = vrot.slane %v5346, 5
        %v5468 = vsel %vm4750, %v5466, %v5467
        %v5469 = vrot.slane %v5467, 4
        %v5470 = vrot.slane %v5347, 5
        %v5471 = vsel %vm4750, %v5469, %v5470
        %v5472 = vrot.slane %v5348, 5
        %v5473 = vrot.slane %v5472, 4
        %v5474 = vrot.slane %v5349, 5
        %v5475 = vsel %vm4750, %v5473, %v5474
        %v5476 = vrot.slane %v5474, 4
        %v5477 = vrot.slane %v5350, 5
        %v5478 = vsel %vm4750, %v5476, %v5477
        %v5479 = vrot.slane %v5351, 5
        %v5480 = vrot.slane %v5479, 4
        %v5481 = vrot.slane %v5352, 5
        %v5482 = vsel %vm4750, %v5480, %v5481
        %v5483 = vrot.slane %v5481, 4
        %v5484 = vrot.slane %v5353, 5
        %v5485 = vsel %vm4750, %v5483, %v5484
        %v5486 = vrot.slane %v5354, 5
        %v5487 = vrot.slane %v5486, 4
        %v5488 = vrot.slane %v5355, 5
        %v5489 = vsel %vm4750, %v5487, %v5488
        %v5490 = vrot.slane %v5488, 4
        %v5491 = vrot.slane %v5356, 5
        %v5492 = vsel %vm4750, %v5490, %v5491
        %v5493 = vrot.slane %v5357, 5
        %v5494 = vrot.slane %v5493, 4
        %v5495 = vrot.slane %v5358, 5
        %v5496 = vsel %vm4750, %v5494, %v5495
        %v5497 = vrot.slane %v5495, 4
        %v5498 = vrot.slane %v5359, 5
        %v5499 = vsel %vm4750, %v5497, %v5498
        %v5500 = vrot.slane %v5360, 5
        %v5501 = vrot.slane %v5500, 4
        %v5502 = vrot.slane %v5361, 5
        %v5503 = vsel %vm4750, %v5501, %v5502
        %v5504 = vrot.slane %v5502, 4
        %v5505 = vrot.slane %v5362, 5
        %v5506 = vsel %vm4750, %v5504, %v5505
        %v5507 = vrot.slane %v5363, 5
        %v5508 = vrot.slane %v5507, 4
        %v5509 = vrot.slane %v5364, 5
        %v5510 = vsel %vm4750, %v5508, %v5509
        %v5511 = vrot.slane %v5509, 4
        %v5512 = vrot.slane %v5365, 5
        %v5513 = vsel %vm4750, %v5511, %v5512
        %v5514 = vrot.slane %v5366, 5
        %v5515 = vrot.slane %v5514, 4
        %v5516 = vrot.slane %v5367, 5
        %v5517 = vsel %vm4750, %v5515, %v5516
        %v5518 = vrot.slane %v5516, 4
        %v5519 = vrot.slane %v5368, 5
        %v5520 = vsel %vm4750, %v5518, %v5519
        %v5521 = vrot.slane %v5369, 5
        %v5522 = vrot.slane %v5521, 4
        %v5523 = vrot.slane %v5370, 5
        %v5524 = vsel %vm4750, %v5522, %v5523
        %v5525 = vrot.slane %v5523, 4
        %v5526 = vrot.slane %v5371, 5
        %v5527 = vsel %vm4750, %v5525, %v5526
        %v5528 = vrot.slane %v5372, 5
        %v5529 = vrot.slane %v5528, 4
        %v5530 = vrot.slane %v5373, 5
        %v5531 = vsel %vm4750, %v5529, %v5530
        %v5532 = vrot.slane %v5530, 4
        %v5533 = vrot.slane %v5374, 5
        %v5534 = vsel %vm4750, %v5532, %v5533
        %5535 = vrot.lane.b32.xlu0 %v5426, 64
        %v5536 = vpop.permute.xlu0 %5535
        %5537 = vrot.lane.b32.xlu0 %v5429, 64
        %v5538 = vpop.permute.xlu0 %5537
        %5539 = vrot.lane.b32.xlu0 %v5433, 64
        %v5540 = vpop.permute.xlu0 %5539
        %5541 = vrot.lane.b32.xlu0 %v5436, 64
        %v5542 = vpop.permute.xlu0 %5541
        %5543 = vrot.lane.b32.xlu0 %v5440, 64
        %v5544 = vpop.permute.xlu0 %5543
        %5545 = vrot.lane.b32.xlu0 %v5443, 64
        %v5546 = vpop.permute.xlu0 %5545
        %5547 = vrot.lane.b32.xlu0 %v5447, 64
        %v5548 = vpop.permute.xlu0 %5547
        %5549 = vrot.lane.b32.xlu0 %v5450, 64
        %v5550 = vpop.permute.xlu0 %5549
        %5551 = vrot.lane.b32.xlu0 %v5454, 64
        %v5552 = vpop.permute.xlu0 %5551
        %5553 = vrot.lane.b32.xlu0 %v5457, 64
        %v5554 = vpop.permute.xlu0 %5553
        %5555 = vrot.lane.b32.xlu0 %v5461, 64
        %v5556 = vpop.permute.xlu0 %5555
        %5557 = vrot.lane.b32.xlu0 %v5464, 64
        %v5558 = vpop.permute.xlu0 %5557
        %5559 = vrot.lane.b32.xlu0 %v5468, 64
        %v5560 = vpop.permute.xlu0 %5559
        %5561 = vrot.lane.b32.xlu0 %v5471, 64
        %v5562 = vpop.permute.xlu0 %5561
        %5563 = vrot.lane.b32.xlu0 %v5475, 64
        %v5564 = vpop.permute.xlu0 %5563
        %5565 = vrot.lane.b32.xlu0 %v5478, 64
        %v5566 = vpop.permute.xlu0 %5565
        %5567 = vrot.lane.b32.xlu0 %v5482, 64
        %v5568 = vpop.permute.xlu0 %5567
        %5569 = vrot.lane.b32.xlu0 %v5485, 64
        %v5570 = vpop.permute.xlu0 %5569
        %5571 = vrot.lane.b32.xlu0 %v5489, 64
        %v5572 = vpop.permute.xlu0 %5571
        %5573 = vrot.lane.b32.xlu0 %v5492, 64
        %v5574 = vpop.permute.xlu0 %5573
        %5575 = vrot.lane.b32.xlu0 %v5496, 64
        %v5576 = vpop.permute.xlu0 %5575
        %5577 = vrot.lane.b32.xlu0 %v5499, 64
        %v5578 = vpop.permute.xlu0 %5577
        %5579 = vrot.lane.b32.xlu0 %v5503, 64
        %v5580 = vpop.permute.xlu0 %5579
        %5581 = vrot.lane.b32.xlu0 %v5506, 64
        %v5582 = vpop.permute.xlu0 %5581
        %5583 = vrot.lane.b32.xlu0 %v5510, 64
        %v5584 = vpop.permute.xlu0 %5583
        %5585 = vrot.lane.b32.xlu0 %v5513, 64
        %v5586 = vpop.permute.xlu0 %5585
        %5587 = vrot.lane.b32.xlu0 %v5517, 64
        %v5588 = vpop.permute.xlu0 %5587
        %5589 = vrot.lane.b32.xlu0 %v5520, 64
        %v5590 = vpop.permute.xlu0 %5589
        %5591 = vrot.lane.b32.xlu0 %v5524, 64
        %v5592 = vpop.permute.xlu0 %5591
        %5593 = vrot.lane.b32.xlu0 %v5527, 64
        %v5594 = vpop.permute.xlu0 %5593
        %5595 = vrot.lane.b32.xlu0 %v5531, 64
        %v5596 = vpop.permute.xlu0 %5595
        %5597 = vrot.lane.b32.xlu0 %v5534, 64
        %v5598 = vpop.permute.xlu0 %5597
        %5631 = vst.msk [vmem:[#allocation2] sm:$0xf] %vm2481, %v5536
        %5632 = vst.msk [vmem:[#allocation2 + $0x4] sm:$0xf] %vm2481, %v5538
        %5633 = vst.msk [vmem:[#allocation2 + $0x8] sm:$0xf] %vm2481, %v5540
        %5634 = vst.msk [vmem:[#allocation2 + $0xc] sm:$0xf] %vm2481, %v5542
        %5635 = vst.msk [vmem:[#allocation2 + $0x10] sm:$0xf] %vm2481, %v5544
        %5636 = vst.msk [vmem:[#allocation2 + $0x14] sm:$0xf] %vm2481, %v5546
        %5637 = vst.msk [vmem:[#allocation2 + $0x18] sm:$0xf] %vm2481, %v5548
        %5638 = vst.msk [vmem:[#allocation2 + $0x1c] sm:$0xf] %vm2481, %v5550
        %5639 = vst.msk [vmem:[#allocation2 + $0x20] sm:$0xf] %vm2481, %v5552
        %5640 = vst.msk [vmem:[#allocation2 + $0x24] sm:$0xf] %vm2481, %v5554
        %5641 = vst.msk [vmem:[#allocation2 + $0x28] sm:$0xf] %vm2481, %v5556
        %5642 = vst.msk [vmem:[#allocation2 + $0x2c] sm:$0xf] %vm2481, %v5558
        %5643 = vst.msk [vmem:[#allocation2 + $0x30] sm:$0xf] %vm2481, %v5560
        %5644 = vst.msk [vmem:[#allocation2 + $0x34] sm:$0xf] %vm2481, %v5562
        %5645 = vst.msk [vmem:[#allocation2 + $0x38] sm:$0xf] %vm2481, %v5564
        %5646 = vst.msk [vmem:[#allocation2 + $0x3c] sm:$0xf] %vm2481, %v5566
        %5647 = vst.msk [vmem:[#allocation2 + $0x40] sm:$0xf] %vm2481, %v5568
        %5648 = vst.msk [vmem:[#allocation2 + $0x44] sm:$0xf] %vm2481, %v5570
        %5649 = vst.msk [vmem:[#allocation2 + $0x48] sm:$0xf] %vm2481, %v5572
        %5650 = vst.msk [vmem:[#allocation2 + $0x4c] sm:$0xf] %vm2481, %v5574
        %5651 = vst.msk [vmem:[#allocation2 + $0x50] sm:$0xf] %vm2481, %v5576
        %5652 = vst.msk [vmem:[#allocation2 + $0x54] sm:$0xf] %vm2481, %v5578
        %5653 = vst.msk [vmem:[#allocation2 + $0x58] sm:$0xf] %vm2481, %v5580
        %5654 = vst.msk [vmem:[#allocation2 + $0x5c] sm:$0xf] %vm2481, %v5582
        %5655 = vst.msk [vmem:[#allocation2 + $0x60] sm:$0xf] %vm2481, %v5584
        %5656 = vst.msk [vmem:[#allocation2 + $0x64] sm:$0xf] %vm2481, %v5586
        %5657 = vst.msk [vmem:[#allocation2 + $0x68] sm:$0xf] %vm2481, %v5588
        %5658 = vst.msk [vmem:[#allocation2 + $0x6c] sm:$0xf] %vm2481, %v5590
        %5659 = vst.msk [vmem:[#allocation2 + $0x70] sm:$0xf] %vm2481, %v5592
        %5660 = vst.msk [vmem:[#allocation2 + $0x74] sm:$0xf] %vm2481, %v5594
        %5661 = vst.msk [vmem:[#allocation2 + $0x78] sm:$0xf] %vm2481, %v5596
        %5662 = vst.msk [vmem:[#allocation2 + $0x7c] sm:$0xf] %vm2481, %v5598
        %s5663 = scalar_lea.vmem %s195, 160
        %v5664 = vld [vmem:[%s5663] sm:$0x8]
        %v5665 = vld [vmem:[%s5663 + $0x4] sm:$0xf]
        %v5666 = vld [vmem:[%s5663 + $0x8] sm:$0x7]
        %v5667 = vld [vmem:[%s5663 + $0x10] sm:$0x8]
        %v5668 = vld [vmem:[%s5663 + $0x14] sm:$0xf]
        %v5669 = vld [vmem:[%s5663 + $0x18] sm:$0x7]
        %v5670 = vld [vmem:[%s5663 + $0x20] sm:$0x8]
        %v5671 = vld [vmem:[%s5663 + $0x24] sm:$0xf]
        %v5672 = vld [vmem:[%s5663 + $0x28] sm:$0x7]
        %v5673 = vld [vmem:[%s5663 + $0x30] sm:$0x8]
        %v5674 = vld [vmem:[%s5663 + $0x34] sm:$0xf]
        %v5675 = vld [vmem:[%s5663 + $0x38] sm:$0x7]
        %v5676 = vld [vmem:[%s5663 + $0x40] sm:$0x8]
        %v5677 = vld [vmem:[%s5663 + $0x44] sm:$0xf]
        %v5678 = vld [vmem:[%s5663 + $0x48] sm:$0x7]
        %v5679 = vld [vmem:[%s5663 + $0x50] sm:$0x8]
        %v5680 = vld [vmem:[%s5663 + $0x54] sm:$0xf]
        %v5681 = vld [vmem:[%s5663 + $0x58] sm:$0x7]
        %v5682 = vld [vmem:[%s5663 + $0x60] sm:$0x8]
        %v5683 = vld [vmem:[%s5663 + $0x64] sm:$0xf]
        %v5684 = vld [vmem:[%s5663 + $0x68] sm:$0x7]
        %v5685 = vld [vmem:[%s5663 + $0x70] sm:$0x8]
        %v5686 = vld [vmem:[%s5663 + $0x74] sm:$0xf]
        %v5687 = vld [vmem:[%s5663 + $0x78] sm:$0x7]
        %v5688 = vld [vmem:[%s5663 + $0x80] sm:$0x8]
        %v5689 = vld [vmem:[%s5663 + $0x84] sm:$0xf]
        %v5690 = vld [vmem:[%s5663 + $0x88] sm:$0x7]
        %v5691 = vld [vmem:[%s5663 + $0x90] sm:$0x8]
        %v5692 = vld [vmem:[%s5663 + $0x94] sm:$0xf]
        %v5693 = vld [vmem:[%s5663 + $0x98] sm:$0x7]
        %v5694 = vld [vmem:[%s5663 + $0xa0] sm:$0x8]
        %v5695 = vld [vmem:[%s5663 + $0xa4] sm:$0xf]
        %v5696 = vld [vmem:[%s5663 + $0xa8] sm:$0x7]
        %v5697 = vld [vmem:[%s5663 + $0xb0] sm:$0x8]
        %v5698 = vld [vmem:[%s5663 + $0xb4] sm:$0xf]
        %v5699 = vld [vmem:[%s5663 + $0xb8] sm:$0x7]
        %v5700 = vld [vmem:[%s5663 + $0xc0] sm:$0x8]
        %v5701 = vld [vmem:[%s5663 + $0xc4] sm:$0xf]
        %v5702 = vld [vmem:[%s5663 + $0xc8] sm:$0x7]
        %v5703 = vld [vmem:[%s5663 + $0xd0] sm:$0x8]
        %v5704 = vld [vmem:[%s5663 + $0xd4] sm:$0xf]
        %v5705 = vld [vmem:[%s5663 + $0xd8] sm:$0x7]
        %v5706 = vld [vmem:[%s5663 + $0xe0] sm:$0x8]
        %v5707 = vld [vmem:[%s5663 + $0xe4] sm:$0xf]
        %v5708 = vld [vmem:[%s5663 + $0xe8] sm:$0x7]
        %v5709 = vld [vmem:[%s5663 + $0xf0] sm:$0x8]
        %v5710 = vld [vmem:[%s5663 + $0xf4] sm:$0xf]
        %v5711 = vld [vmem:[%s5663 + $0xf8] sm:$0x7]
        %v5760 = vrot.slane %v5664, 7
        %v5761 = vrot.slane %v5760, 4
        %v5762 = vrot.slane %v5665, 7
        %v5763 = vsel %vm4283, %v5761, %v5762
        %v5764 = vrot.slane %v5762, 4
        %v5765 = vrot.slane %v5666, 7
        %v5766 = vsel %vm4283, %v5764, %v5765
        %v5767 = vrot.slane %v5667, 7
        %v5768 = vrot.slane %v5767, 4
        %v5769 = vrot.slane %v5668, 7
        %v5770 = vsel %vm4283, %v5768, %v5769
        %v5771 = vrot.slane %v5769, 4
        %v5772 = vrot.slane %v5669, 7
        %v5773 = vsel %vm4283, %v5771, %v5772
        %v5774 = vrot.slane %v5670, 7
        %v5775 = vrot.slane %v5774, 4
        %v5776 = vrot.slane %v5671, 7
        %v5777 = vsel %vm4283, %v5775, %v5776
        %v5778 = vrot.slane %v5776, 4
        %v5779 = vrot.slane %v5672, 7
        %v5780 = vsel %vm4283, %v5778, %v5779
        %v5781 = vrot.slane %v5673, 7
        %v5782 = vrot.slane %v5781, 4
        %v5783 = vrot.slane %v5674, 7
        %v5784 = vsel %vm4283, %v5782, %v5783
        %v5785 = vrot.slane %v5783, 4
        %v5786 = vrot.slane %v5675, 7
        %v5787 = vsel %vm4283, %v5785, %v5786
        %v5788 = vrot.slane %v5676, 7
        %v5789 = vrot.slane %v5788, 4
        %v5790 = vrot.slane %v5677, 7
        %v5791 = vsel %vm4283, %v5789, %v5790
        %v5792 = vrot.slane %v5790, 4
        %v5793 = vrot.slane %v5678, 7
        %v5794 = vsel %vm4283, %v5792, %v5793
        %v5795 = vrot.slane %v5679, 7
        %v5796 = vrot.slane %v5795, 4
        %v5797 = vrot.slane %v5680, 7
        %v5798 = vsel %vm4283, %v5796, %v5797
        %v5799 = vrot.slane %v5797, 4
        %v5800 = vrot.slane %v5681, 7
        %v5801 = vsel %vm4283, %v5799, %v5800
        %v5802 = vrot.slane %v5682, 7
        %v5803 = vrot.slane %v5802, 4
        %v5804 = vrot.slane %v5683, 7
        %v5805 = vsel %vm4283, %v5803, %v5804
        %v5806 = vrot.slane %v5804, 4
        %v5807 = vrot.slane %v5684, 7
        %v5808 = vsel %vm4283, %v5806, %v5807
        %v5809 = vrot.slane %v5685, 7
        %v5810 = vrot.slane %v5809, 4
        %v5811 = vrot.slane %v5686, 7
        %v5812 = vsel %vm4283, %v5810, %v5811
        %v5813 = vrot.slane %v5811, 4
        %v5814 = vrot.slane %v5687, 7
        %v5815 = vsel %vm4283, %v5813, %v5814
        %v5816 = vrot.slane %v5688, 7
        %v5817 = vrot.slane %v5816, 4
        %v5818 = vrot.slane %v5689, 7
        %v5819 = vsel %vm4283, %v5817, %v5818
        %v5820 = vrot.slane %v5818, 4
        %v5821 = vrot.slane %v5690, 7
        %v5822 = vsel %vm4283, %v5820, %v5821
        %v5823 = vrot.slane %v5691, 7
        %v5824 = vrot.slane %v5823, 4
        %v5825 = vrot.slane %v5692, 7
        %v5826 = vsel %vm4283, %v5824, %v5825
        %v5827 = vrot.slane %v5825, 4
        %v5828 = vrot.slane %v5693, 7
        %v5829 = vsel %vm4283, %v5827, %v5828
        %v5830 = vrot.slane %v5694, 7
        %v5831 = vrot.slane %v5830, 4
        %v5832 = vrot.slane %v5695, 7
        %v5833 = vsel %vm4283, %v5831, %v5832
        %v5834 = vrot.slane %v5832, 4
        %v5835 = vrot.slane %v5696, 7
        %v5836 = vsel %vm4283, %v5834, %v5835
        %v5837 = vrot.slane %v5697, 7
        %v5838 = vrot.slane %v5837, 4
        %v5839 = vrot.slane %v5698, 7
        %v5840 = vsel %vm4283, %v5838, %v5839
        %v5841 = vrot.slane %v5839, 4
        %v5842 = vrot.slane %v5699, 7
        %v5843 = vsel %vm4283, %v5841, %v5842
        %v5844 = vrot.slane %v5700, 7
        %v5845 = vrot.slane %v5844, 4
        %v5846 = vrot.slane %v5701, 7
        %v5847 = vsel %vm4283, %v5845, %v5846
        %v5848 = vrot.slane %v5846, 4
        %v5849 = vrot.slane %v5702, 7
        %v5850 = vsel %vm4283, %v5848, %v5849
        %v5851 = vrot.slane %v5703, 7
        %v5852 = vrot.slane %v5851, 4
        %v5853 = vrot.slane %v5704, 7
        %v5854 = vsel %vm4283, %v5852, %v5853
        %v5855 = vrot.slane %v5853, 4
        %v5856 = vrot.slane %v5705, 7
        %v5857 = vsel %vm4283, %v5855, %v5856
        %v5858 = vrot.slane %v5706, 7
        %v5859 = vrot.slane %v5858, 4
        %v5860 = vrot.slane %v5707, 7
        %v5861 = vsel %vm4283, %v5859, %v5860
        %v5862 = vrot.slane %v5860, 4
        %v5863 = vrot.slane %v5708, 7
        %v5864 = vsel %vm4283, %v5862, %v5863
        %v5865 = vrot.slane %v5709, 7
        %v5866 = vrot.slane %v5865, 4
        %v5867 = vrot.slane %v5710, 7
        %v5868 = vsel %vm4283, %v5866, %v5867
        %v5869 = vrot.slane %v5867, 4
        %v5870 = vrot.slane %v5711, 7
        %v5871 = vsel %vm4283, %v5869, %v5870
        %5872 = vrot.lane.b32.xlu0 %v5763, 80
        %v5873 = vpop.permute.xlu0 %5872
        %5874 = vrot.lane.b32.xlu0 %v5766, 80
        %v5875 = vpop.permute.xlu0 %5874
        %5876 = vrot.lane.b32.xlu0 %v5770, 80
        %v5877 = vpop.permute.xlu0 %5876
        %5878 = vrot.lane.b32.xlu0 %v5773, 80
        %v5879 = vpop.permute.xlu0 %5878
        %5880 = vrot.lane.b32.xlu0 %v5777, 80
        %v5881 = vpop.permute.xlu0 %5880
        %5882 = vrot.lane.b32.xlu0 %v5780, 80
        %v5883 = vpop.permute.xlu0 %5882
        %5884 = vrot.lane.b32.xlu0 %v5784, 80
        %v5885 = vpop.permute.xlu0 %5884
        %5886 = vrot.lane.b32.xlu0 %v5787, 80
        %v5887 = vpop.permute.xlu0 %5886
        %5888 = vrot.lane.b32.xlu0 %v5791, 80
        %v5889 = vpop.permute.xlu0 %5888
        %5890 = vrot.lane.b32.xlu0 %v5794, 80
        %v5891 = vpop.permute.xlu0 %5890
        %5892 = vrot.lane.b32.xlu0 %v5798, 80
        %v5893 = vpop.permute.xlu0 %5892
        %5894 = vrot.lane.b32.xlu0 %v5801, 80
        %v5895 = vpop.permute.xlu0 %5894
        %5896 = vrot.lane.b32.xlu0 %v5805, 80
        %v5897 = vpop.permute.xlu0 %5896
        %5898 = vrot.lane.b32.xlu0 %v5808, 80
        %v5899 = vpop.permute.xlu0 %5898
        %5900 = vrot.lane.b32.xlu0 %v5812, 80
        %v5901 = vpop.permute.xlu0 %5900
        %5902 = vrot.lane.b32.xlu0 %v5815, 80
        %v5903 = vpop.permute.xlu0 %5902
        %5904 = vrot.lane.b32.xlu0 %v5819, 80
        %v5905 = vpop.permute.xlu0 %5904
        %5906 = vrot.lane.b32.xlu0 %v5822, 80
        %v5907 = vpop.permute.xlu0 %5906
        %5908 = vrot.lane.b32.xlu0 %v5826, 80
        %v5909 = vpop.permute.xlu0 %5908
        %5910 = vrot.lane.b32.xlu0 %v5829, 80
        %v5911 = vpop.permute.xlu0 %5910
        %5912 = vrot.lane.b32.xlu0 %v5833, 80
        %v5913 = vpop.permute.xlu0 %5912
        %5914 = vrot.lane.b32.xlu0 %v5836, 80
        %v5915 = vpop.permute.xlu0 %5914
        %5916 = vrot.lane.b32.xlu0 %v5840, 80
        %v5917 = vpop.permute.xlu0 %5916
        %5918 = vrot.lane.b32.xlu0 %v5843, 80
        %v5919 = vpop.permute.xlu0 %5918
        %5920 = vrot.lane.b32.xlu0 %v5847, 80
        %v5921 = vpop.permute.xlu0 %5920
        %5922 = vrot.lane.b32.xlu0 %v5850, 80
        %v5923 = vpop.permute.xlu0 %5922
        %5924 = vrot.lane.b32.xlu0 %v5854, 80
        %v5925 = vpop.permute.xlu0 %5924
        %5926 = vrot.lane.b32.xlu0 %v5857, 80
        %v5927 = vpop.permute.xlu0 %5926
        %5928 = vrot.lane.b32.xlu0 %v5861, 80
        %v5929 = vpop.permute.xlu0 %5928
        %5930 = vrot.lane.b32.xlu0 %v5864, 80
        %v5931 = vpop.permute.xlu0 %5930
        %5932 = vrot.lane.b32.xlu0 %v5868, 80
        %v5933 = vpop.permute.xlu0 %5932
        %5934 = vrot.lane.b32.xlu0 %v5871, 80
        %v5935 = vpop.permute.xlu0 %5934
        %5968 = vst.msk [vmem:[#allocation2] sm:$0xf] %vm3011, %v5873
        %5969 = vst.msk [vmem:[#allocation2 + $0x4] sm:$0xf] %vm3011, %v5875
        %5970 = vst.msk [vmem:[#allocation2 + $0x8] sm:$0xf] %vm3011, %v5877
        %5971 = vst.msk [vmem:[#allocation2 + $0xc] sm:$0xf] %vm3011, %v5879
        %5972 = vst.msk [vmem:[#allocation2 + $0x10] sm:$0xf] %vm3011, %v5881
        %5973 = vst.msk [vmem:[#allocation2 + $0x14] sm:$0xf] %vm3011, %v5883
        %5974 = vst.msk [vmem:[#allocation2 + $0x18] sm:$0xf] %vm3011, %v5885
        %5975 = vst.msk [vmem:[#allocation2 + $0x1c] sm:$0xf] %vm3011, %v5887
        %5976 = vst.msk [vmem:[#allocation2 + $0x20] sm:$0xf] %vm3011, %v5889
        %5977 = vst.msk [vmem:[#allocation2 + $0x24] sm:$0xf] %vm3011, %v5891
        %5978 = vst.msk [vmem:[#allocation2 + $0x28] sm:$0xf] %vm3011, %v5893
        %5979 = vst.msk [vmem:[#allocation2 + $0x2c] sm:$0xf] %vm3011, %v5895
        %5980 = vst.msk [vmem:[#allocation2 + $0x30] sm:$0xf] %vm3011, %v5897
        %5981 = vst.msk [vmem:[#allocation2 + $0x34] sm:$0xf] %vm3011, %v5899
        %5982 = vst.msk [vmem:[#allocation2 + $0x38] sm:$0xf] %vm3011, %v5901
        %5983 = vst.msk [vmem:[#allocation2 + $0x3c] sm:$0xf] %vm3011, %v5903
        %5984 = vst.msk [vmem:[#allocation2 + $0x40] sm:$0xf] %vm3011, %v5905
        %5985 = vst.msk [vmem:[#allocation2 + $0x44] sm:$0xf] %vm3011, %v5907
        %5986 = vst.msk [vmem:[#allocation2 + $0x48] sm:$0xf] %vm3011, %v5909
        %5987 = vst.msk [vmem:[#allocation2 + $0x4c] sm:$0xf] %vm3011, %v5911
        %5988 = vst.msk [vmem:[#allocation2 + $0x50] sm:$0xf] %vm3011, %v5913
        %5989 = vst.msk [vmem:[#allocation2 + $0x54] sm:$0xf] %vm3011, %v5915
        %5990 = vst.msk [vmem:[#allocation2 + $0x58] sm:$0xf] %vm3011, %v5917
        %5991 = vst.msk [vmem:[#allocation2 + $0x5c] sm:$0xf] %vm3011, %v5919
        %5992 = vst.msk [vmem:[#allocation2 + $0x60] sm:$0xf] %vm3011, %v5921
        %5993 = vst.msk [vmem:[#allocation2 + $0x64] sm:$0xf] %vm3011, %v5923
        %5994 = vst.msk [vmem:[#allocation2 + $0x68] sm:$0xf] %vm3011, %v5925
        %5995 = vst.msk [vmem:[#allocation2 + $0x6c] sm:$0xf] %vm3011, %v5927
        %5996 = vst.msk [vmem:[#allocation2 + $0x70] sm:$0xf] %vm3011, %v5929
        %5997 = vst.msk [vmem:[#allocation2 + $0x74] sm:$0xf] %vm3011, %v5931
        %5998 = vst.msk [vmem:[#allocation2 + $0x78] sm:$0xf] %vm3011, %v5933
        %5999 = vst.msk [vmem:[#allocation2 + $0x7c] sm:$0xf] %vm3011, %v5935
        %v6000 = vld [vmem:[%s5663 + $0x4] sm:$0xf]
        %v6001 = vld [vmem:[%s5663 + $0x8] sm:$0xf]
        %v6002 = vld [vmem:[%s5663 + $0x14] sm:$0xf]
        %v6003 = vld [vmem:[%s5663 + $0x18] sm:$0xf]
        %v6004 = vld [vmem:[%s5663 + $0x24] sm:$0xf]
        %v6005 = vld [vmem:[%s5663 + $0x28] sm:$0xf]
        %v6006 = vld [vmem:[%s5663 + $0x34] sm:$0xf]
        %v6007 = vld [vmem:[%s5663 + $0x38] sm:$0xf]
        %v6008 = vld [vmem:[%s5663 + $0x44] sm:$0xf]
        %v6009 = vld [vmem:[%s5663 + $0x48] sm:$0xf]
        %v6010 = vld [vmem:[%s5663 + $0x54] sm:$0xf]
        %v6011 = vld [vmem:[%s5663 + $0x58] sm:$0xf]
        %v6012 = vld [vmem:[%s5663 + $0x64] sm:$0xf]
        %v6013 = vld [vmem:[%s5663 + $0x68] sm:$0xf]
        %v6014 = vld [vmem:[%s5663 + $0x74] sm:$0xf]
        %v6015 = vld [vmem:[%s5663 + $0x78] sm:$0xf]
        %v6016 = vld [vmem:[%s5663 + $0x84] sm:$0xf]
        %v6017 = vld [vmem:[%s5663 + $0x88] sm:$0xf]
        %v6018 = vld [vmem:[%s5663 + $0x94] sm:$0xf]
        %v6019 = vld [vmem:[%s5663 + $0x98] sm:$0xf]
        %v6020 = vld [vmem:[%s5663 + $0xa4] sm:$0xf]
        %v6021 = vld [vmem:[%s5663 + $0xa8] sm:$0xf]
        %v6022 = vld [vmem:[%s5663 + $0xb4] sm:$0xf]
        %v6023 = vld [vmem:[%s5663 + $0xb8] sm:$0xf]
        %v6024 = vld [vmem:[%s5663 + $0xc4] sm:$0xf]
        %v6025 = vld [vmem:[%s5663 + $0xc8] sm:$0xf]
        %v6026 = vld [vmem:[%s5663 + $0xd4] sm:$0xf]
        %v6027 = vld [vmem:[%s5663 + $0xd8] sm:$0xf]
        %v6028 = vld [vmem:[%s5663 + $0xe4] sm:$0xf]
        %v6029 = vld [vmem:[%s5663 + $0xe8] sm:$0xf]
        %v6030 = vld [vmem:[%s5663 + $0xf4] sm:$0xf]
        %v6031 = vld [vmem:[%s5663 + $0xf8] sm:$0xf]
        %6064 = vrot.lane.b32.xlu0 %v6000, 96
        %v6065 = vpop.permute.xlu0 %6064
        %6066 = vrot.lane.b32.xlu0 %v6001, 96
        %v6067 = vpop.permute.xlu0 %6066
        %6068 = vrot.lane.b32.xlu0 %v6002, 96
        %v6069 = vpop.permute.xlu0 %6068
        %6070 = vrot.lane.b32.xlu0 %v6003, 96
        %v6071 = vpop.permute.xlu0 %6070
        %6072 = vrot.lane.b32.xlu0 %v6004, 96
        %v6073 = vpop.permute.xlu0 %6072
        %6074 = vrot.lane.b32.xlu0 %v6005, 96
        %v6075 = vpop.permute.xlu0 %6074
        %6076 = vrot.lane.b32.xlu0 %v6006, 96
        %v6077 = vpop.permute.xlu0 %6076
        %6078 = vrot.lane.b32.xlu0 %v6007, 96
        %v6079 = vpop.permute.xlu0 %6078
        %6080 = vrot.lane.b32.xlu0 %v6008, 96
        %v6081 = vpop.permute.xlu0 %6080
        %6082 = vrot.lane.b32.xlu0 %v6009, 96
        %v6083 = vpop.permute.xlu0 %6082
        %6084 = vrot.lane.b32.xlu0 %v6010, 96
        %v6085 = vpop.permute.xlu0 %6084
        %6086 = vrot.lane.b32.xlu0 %v6011, 96
        %v6087 = vpop.permute.xlu0 %6086
        %6088 = vrot.lane.b32.xlu0 %v6012, 96
        %v6089 = vpop.permute.xlu0 %6088
        %6090 = vrot.lane.b32.xlu0 %v6013, 96
        %v6091 = vpop.permute.xlu0 %6090
        %6092 = vrot.lane.b32.xlu0 %v6014, 96
        %v6093 = vpop.permute.xlu0 %6092
        %6094 = vrot.lane.b32.xlu0 %v6015, 96
        %v6095 = vpop.permute.xlu0 %6094
        %6096 = vrot.lane.b32.xlu0 %v6016, 96
        %v6097 = vpop.permute.xlu0 %6096
        %6098 = vrot.lane.b32.xlu0 %v6017, 96
        %v6099 = vpop.permute.xlu0 %6098
        %6100 = vrot.lane.b32.xlu0 %v6018, 96
        %v6101 = vpop.permute.xlu0 %6100
        %6102 = vrot.lane.b32.xlu0 %v6019, 96
        %v6103 = vpop.permute.xlu0 %6102
        %6104 = vrot.lane.b32.xlu0 %v6020, 96
        %v6105 = vpop.permute.xlu0 %6104
        %6106 = vrot.lane.b32.xlu0 %v6021, 96
        %v6107 = vpop.permute.xlu0 %6106
        %6108 = vrot.lane.b32.xlu0 %v6022, 96
        %v6109 = vpop.permute.xlu0 %6108
        %6110 = vrot.lane.b32.xlu0 %v6023, 96
        %v6111 = vpop.permute.xlu0 %6110
        %6112 = vrot.lane.b32.xlu0 %v6024, 96
        %v6113 = vpop.permute.xlu0 %6112
        %6114 = vrot.lane.b32.xlu0 %v6025, 96
        %v6115 = vpop.permute.xlu0 %6114
        %6116 = vrot.lane.b32.xlu0 %v6026, 96
        %v6117 = vpop.permute.xlu0 %6116
        %6118 = vrot.lane.b32.xlu0 %v6027, 96
        %v6119 = vpop.permute.xlu0 %6118
        %6120 = vrot.lane.b32.xlu0 %v6028, 96
        %v6121 = vpop.permute.xlu0 %6120
        %6122 = vrot.lane.b32.xlu0 %v6029, 96
        %v6123 = vpop.permute.xlu0 %6122
        %6124 = vrot.lane.b32.xlu0 %v6030, 96
        %v6125 = vpop.permute.xlu0 %6124
        %6126 = vrot.lane.b32.xlu0 %v6031, 96
        %v6127 = vpop.permute.xlu0 %6126
        %6160 = vst.msk [vmem:[#allocation2] sm:$0xf] %vm3204, %v6065
        %6161 = vst.msk [vmem:[#allocation2 + $0x4] sm:$0xf] %vm3204, %v6067
        %6162 = vst.msk [vmem:[#allocation2 + $0x8] sm:$0xf] %vm3204, %v6069
        %6163 = vst.msk [vmem:[#allocation2 + $0xc] sm:$0xf] %vm3204, %v6071
        %6164 = vst.msk [vmem:[#allocation2 + $0x10] sm:$0xf] %vm3204, %v6073
        %6165 = vst.msk [vmem:[#allocation2 + $0x14] sm:$0xf] %vm3204, %v6075
        %6166 = vst.msk [vmem:[#allocation2 + $0x18] sm:$0xf] %vm3204, %v6077
        %6167 = vst.msk [vmem:[#allocation2 + $0x1c] sm:$0xf] %vm3204, %v6079
        %6168 = vst.msk [vmem:[#allocation2 + $0x20] sm:$0xf] %vm3204, %v6081
        %6169 = vst.msk [vmem:[#allocation2 + $0x24] sm:$0xf] %vm3204, %v6083
        %6170 = vst.msk [vmem:[#allocation2 + $0x28] sm:$0xf] %vm3204, %v6085
        %6171 = vst.msk [vmem:[#allocation2 + $0x2c] sm:$0xf] %vm3204, %v6087
        %6172 = vst.msk [vmem:[#allocation2 + $0x30] sm:$0xf] %vm3204, %v6089
        %6173 = vst.msk [vmem:[#allocation2 + $0x34] sm:$0xf] %vm3204, %v6091
        %6174 = vst.msk [vmem:[#allocation2 + $0x38] sm:$0xf] %vm3204, %v6093
        %6175 = vst.msk [vmem:[#allocation2 + $0x3c] sm:$0xf] %vm3204, %v6095
        %6176 = vst.msk [vmem:[#allocation2 + $0x40] sm:$0xf] %vm3204, %v6097
        %6177 = vst.msk [vmem:[#allocation2 + $0x44] sm:$0xf] %vm3204, %v6099
        %6178 = vst.msk [vmem:[#allocation2 + $0x48] sm:$0xf] %vm3204, %v6101
        %6179 = vst.msk [vmem:[#allocation2 + $0x4c] sm:$0xf] %vm3204, %v6103
        %6180 = vst.msk [vmem:[#allocation2 + $0x50] sm:$0xf] %vm3204, %v6105
        %6181 = vst.msk [vmem:[#allocation2 + $0x54] sm:$0xf] %vm3204, %v6107
        %6182 = vst.msk [vmem:[#allocation2 + $0x58] sm:$0xf] %vm3204, %v6109
        %6183 = vst.msk [vmem:[#allocation2 + $0x5c] sm:$0xf] %vm3204, %v6111
        %6184 = vst.msk [vmem:[#allocation2 + $0x60] sm:$0xf] %vm3204, %v6113
        %6185 = vst.msk [vmem:[#allocation2 + $0x64] sm:$0xf] %vm3204, %v6115
        %6186 = vst.msk [vmem:[#allocation2 + $0x68] sm:$0xf] %vm3204, %v6117
        %6187 = vst.msk [vmem:[#allocation2 + $0x6c] sm:$0xf] %vm3204, %v6119
        %6188 = vst.msk [vmem:[#allocation2 + $0x70] sm:$0xf] %vm3204, %v6121
        %6189 = vst.msk [vmem:[#allocation2 + $0x74] sm:$0xf] %vm3204, %v6123
        %6190 = vst.msk [vmem:[#allocation2 + $0x78] sm:$0xf] %vm3204, %v6125
        %6191 = vst.msk [vmem:[#allocation2 + $0x7c] sm:$0xf] %vm3204, %v6127
        %v6192 = vld [vmem:[%s5663 + $0x4] sm:$0xe]
        %v6193 = vld [vmem:[%s5663 + $0x8] sm:$0xf]
        %v6194 = vld [vmem:[%s5663 + $0xc] sm:$0x1]
        %v6195 = vld [vmem:[%s5663 + $0x14] sm:$0xe]
        %v6196 = vld [vmem:[%s5663 + $0x18] sm:$0xf]
        %v6197 = vld [vmem:[%s5663 + $0x1c] sm:$0x1]
        %v6198 = vld [vmem:[%s5663 + $0x24] sm:$0xe]
        %v6199 = vld [vmem:[%s5663 + $0x28] sm:$0xf]
        %v6200 = vld [vmem:[%s5663 + $0x2c] sm:$0x1]
        %v6201 = vld [vmem:[%s5663 + $0x34] sm:$0xe]
        %v6202 = vld [vmem:[%s5663 + $0x38] sm:$0xf]
        %v6203 = vld [vmem:[%s5663 + $0x3c] sm:$0x1]
        %v6204 = vld [vmem:[%s5663 + $0x44] sm:$0xe]
        %v6205 = vld [vmem:[%s5663 + $0x48] sm:$0xf]
        %v6206 = vld [vmem:[%s5663 + $0x4c] sm:$0x1]
        %v6207 = vld [vmem:[%s5663 + $0x54] sm:$0xe]
        %v6208 = vld [vmem:[%s5663 + $0x58] sm:$0xf]
        %v6209 = vld [vmem:[%s5663 + $0x5c] sm:$0x1]
        %v6210 = vld [vmem:[%s5663 + $0x64] sm:$0xe]
        %v6211 = vld [vmem:[%s5663 + $0x68] sm:$0xf]
        %v6212 = vld [vmem:[%s5663 + $0x6c] sm:$0x1]
        %v6213 = vld [vmem:[%s5663 + $0x74] sm:$0xe]
        %v6214 = vld [vmem:[%s5663 + $0x78] sm:$0xf]
        %v6215 = vld [vmem:[%s5663 + $0x7c] sm:$0x1]
        %v6216 = vld [vmem:[%s5663 + $0x84] sm:$0xe]
        %v6217 = vld [vmem:[%s5663 + $0x88] sm:$0xf]
        %v6218 = vld [vmem:[%s5663 + $0x8c] sm:$0x1]
        %v6219 = vld [vmem:[%s5663 + $0x94] sm:$0xe]
        %v6220 = vld [vmem:[%s5663 + $0x98] sm:$0xf]
        %v6221 = vld [vmem:[%s5663 + $0x9c] sm:$0x1]
        %v6222 = vld [vmem:[%s5663 + $0xa4] sm:$0xe]
        %v6223 = vld [vmem:[%s5663 + $0xa8] sm:$0xf]
        %v6224 = vld [vmem:[%s5663 + $0xac] sm:$0x1]
        %v6225 = vld [vmem:[%s5663 + $0xb4] sm:$0xe]
        %v6226 = vld [vmem:[%s5663 + $0xb8] sm:$0xf]
        %v6227 = vld [vmem:[%s5663 + $0xbc] sm:$0x1]
        %v6228 = vld [vmem:[%s5663 + $0xc4] sm:$0xe]
        %v6229 = vld [vmem:[%s5663 + $0xc8] sm:$0xf]
        %v6230 = vld [vmem:[%s5663 + $0xcc] sm:$0x1]
        %v6231 = vld [vmem:[%s5663 + $0xd4] sm:$0xe]
        %v6232 = vld [vmem:[%s5663 + $0xd8] sm:$0xf]
        %v6233 = vld [vmem:[%s5663 + $0xdc] sm:$0x1]
        %v6234 = vld [vmem:[%s5663 + $0xe4] sm:$0xe]
        %v6235 = vld [vmem:[%s5663 + $0xe8] sm:$0xf]
        %v6236 = vld [vmem:[%s5663 + $0xec] sm:$0x1]
        %v6237 = vld [vmem:[%s5663 + $0xf4] sm:$0xe]
        %v6238 = vld [vmem:[%s5663 + $0xf8] sm:$0xf]
        %v6239 = vld [vmem:[%s5663 + $0xfc] sm:$0x1]
        %v6288 = vrot.slane %v6192, 5
        %v6289 = vrot.slane %v6288, 4
        %v6290 = vrot.slane %v6193, 5
        %v6291 = vsel %vm4750, %v6289, %v6290
        %v6292 = vrot.slane %v6290, 4
        %v6293 = vrot.slane %v6194, 5
        %v6294 = vsel %vm4750, %v6292, %v6293
        %v6295 = vrot.slane %v6195, 5
        %v6296 = vrot.slane %v6295, 4
        %v6297 = vrot.slane %v6196, 5
        %v6298 = vsel %vm4750, %v6296, %v6297
        %v6299 = vrot.slane %v6297, 4
        %v6300 = vrot.slane %v6197, 5
        %v6301 = vsel %vm4750, %v6299, %v6300
        %v6302 = vrot.slane %v6198, 5
        %v6303 = vrot.slane %v6302, 4
        %v6304 = vrot.slane %v6199, 5
        %v6305 = vsel %vm4750, %v6303, %v6304
        %v6306 = vrot.slane %v6304, 4
        %v6307 = vrot.slane %v6200, 5
        %v6308 = vsel %vm4750, %v6306, %v6307
        %v6309 = vrot.slane %v6201, 5
        %v6310 = vrot.slane %v6309, 4
        %v6311 = vrot.slane %v6202, 5
        %v6312 = vsel %vm4750, %v6310, %v6311
        %v6313 = vrot.slane %v6311, 4
        %v6314 = vrot.slane %v6203, 5
        %v6315 = vsel %vm4750, %v6313, %v6314
        %v6316 = vrot.slane %v6204, 5
        %v6317 = vrot.slane %v6316, 4
        %v6318 = vrot.slane %v6205, 5
        %v6319 = vsel %vm4750, %v6317, %v6318
        %v6320 = vrot.slane %v6318, 4
        %v6321 = vrot.slane %v6206, 5
        %v6322 = vsel %vm4750, %v6320, %v6321
        %v6323 = vrot.slane %v6207, 5
        %v6324 = vrot.slane %v6323, 4
        %v6325 = vrot.slane %v6208, 5
        %v6326 = vsel %vm4750, %v6324, %v6325
        %v6327 = vrot.slane %v6325, 4
        %v6328 = vrot.slane %v6209, 5
        %v6329 = vsel %vm4750, %v6327, %v6328
        %v6330 = vrot.slane %v6210, 5
        %v6331 = vrot.slane %v6330, 4
        %v6332 = vrot.slane %v6211, 5
        %v6333 = vsel %vm4750, %v6331, %v6332
        %v6334 = vrot.slane %v6332, 4
        %v6335 = vrot.slane %v6212, 5
        %v6336 = vsel %vm4750, %v6334, %v6335
        %v6337 = vrot.slane %v6213, 5
        %v6338 = vrot.slane %v6337, 4
        %v6339 = vrot.slane %v6214, 5
        %v6340 = vsel %vm4750, %v6338, %v6339
        %v6341 = vrot.slane %v6339, 4
        %v6342 = vrot.slane %v6215, 5
        %v6343 = vsel %vm4750, %v6341, %v6342
        %v6344 = vrot.slane %v6216, 5
        %v6345 = vrot.slane %v6344, 4
        %v6346 = vrot.slane %v6217, 5
        %v6347 = vsel %vm4750, %v6345, %v6346
        %v6348 = vrot.slane %v6346, 4
        %v6349 = vrot.slane %v6218, 5
        %v6350 = vsel %vm4750, %v6348, %v6349
        %v6351 = vrot.slane %v6219, 5
        %v6352 = vrot.slane %v6351, 4
        %v6353 = vrot.slane %v6220, 5
        %v6354 = vsel %vm4750, %v6352, %v6353
        %v6355 = vrot.slane %v6353, 4
        %v6356 = vrot.slane %v6221, 5
        %v6357 = vsel %vm4750, %v6355, %v6356
        %v6358 = vrot.slane %v6222, 5
        %v6359 = vrot.slane %v6358, 4
        %v6360 = vrot.slane %v6223, 5
        %v6361 = vsel %vm4750, %v6359, %v6360
        %v6362 = vrot.slane %v6360, 4
        %v6363 = vrot.slane %v6224, 5
        %v6364 = vsel %vm4750, %v6362, %v6363
        %v6365 = vrot.slane %v6225, 5
        %v6366 = vrot.slane %v6365, 4
        %v6367 = vrot.slane %v6226, 5
        %v6368 = vsel %vm4750, %v6366, %v6367
        %v6369 = vrot.slane %v6367, 4
        %v6370 = vrot.slane %v6227, 5
        %v6371 = vsel %vm4750, %v6369, %v6370
        %v6372 = vrot.slane %v6228, 5
        %v6373 = vrot.slane %v6372, 4
        %v6374 = vrot.slane %v6229, 5
        %v6375 = vsel %vm4750, %v6373, %v6374
        %v6376 = vrot.slane %v6374, 4
        %v6377 = vrot.slane %v6230, 5
        %v6378 = vsel %vm4750, %v6376, %v6377
        %v6379 = vrot.slane %v6231, 5
        %v6380 = vrot.slane %v6379, 4
        %v6381 = vrot.slane %v6232, 5
        %v6382 = vsel %vm4750, %v6380, %v6381
        %v6383 = vrot.slane %v6381, 4
        %v6384 = vrot.slane %v6233, 5
        %v6385 = vsel %vm4750, %v6383, %v6384
        %v6386 = vrot.slane %v6234, 5
        %v6387 = vrot.slane %v6386, 4
        %v6388 = vrot.slane %v6235, 5
        %v6389 = vsel %vm4750, %v6387, %v6388
        %v6390 = vrot.slane %v6388, 4
        %v6391 = vrot.slane %v6236, 5
        %v6392 = vsel %vm4750, %v6390, %v6391
        %v6393 = vrot.slane %v6237, 5
        %v6394 = vrot.slane %v6393, 4
        %v6395 = vrot.slane %v6238, 5
        %v6396 = vsel %vm4750, %v6394, %v6395
        %v6397 = vrot.slane %v6395, 4
        %v6398 = vrot.slane %v6239, 5
        %v6399 = vsel %vm4750, %v6397, %v6398
        %6400 = vrot.lane.b32.xlu0 %v6291, 112
        %v6401 = vpop.permute.xlu0 %6400
        %6402 = vrot.lane.b32.xlu0 %v6294, 112
        %v6403 = vpop.permute.xlu0 %6402
        %6404 = vrot.lane.b32.xlu0 %v6298, 112
        %v6405 = vpop.permute.xlu0 %6404
        %6406 = vrot.lane.b32.xlu0 %v6301, 112
        %v6407 = vpop.permute.xlu0 %6406
        %6408 = vrot.lane.b32.xlu0 %v6305, 112
        %v6409 = vpop.permute.xlu0 %6408
        %6410 = vrot.lane.b32.xlu0 %v6308, 112
        %v6411 = vpop.permute.xlu0 %6410
        %6412 = vrot.lane.b32.xlu0 %v6312, 112
        %v6413 = vpop.permute.xlu0 %6412
        %6414 = vrot.lane.b32.xlu0 %v6315, 112
        %v6415 = vpop.permute.xlu0 %6414
        %6416 = vrot.lane.b32.xlu0 %v6319, 112
        %v6417 = vpop.permute.xlu0 %6416
        %6418 = vrot.lane.b32.xlu0 %v6322, 112
        %v6419 = vpop.permute.xlu0 %6418
        %6420 = vrot.lane.b32.xlu0 %v6326, 112
        %v6421 = vpop.permute.xlu0 %6420
        %6422 = vrot.lane.b32.xlu0 %v6329, 112
        %v6423 = vpop.permute.xlu0 %6422
        %6424 = vrot.lane.b32.xlu0 %v6333, 112
        %v6425 = vpop.permute.xlu0 %6424
        %6426 = vrot.lane.b32.xlu0 %v6336, 112
        %v6427 = vpop.permute.xlu0 %6426
        %6428 = vrot.lane.b32.xlu0 %v6340, 112
        %v6429 = vpop.permute.xlu0 %6428
        %6430 = vrot.lane.b32.xlu0 %v6343, 112
        %v6431 = vpop.permute.xlu0 %6430
        %6432 = vrot.lane.b32.xlu0 %v6347, 112
        %v6433 = vpop.permute.xlu0 %6432
        %6434 = vrot.lane.b32.xlu0 %v6350, 112
        %v6435 = vpop.permute.xlu0 %6434
        %6436 = vrot.lane.b32.xlu0 %v6354, 112
        %v6437 = vpop.permute.xlu0 %6436
        %6438 = vrot.lane.b32.xlu0 %v6357, 112
        %v6439 = vpop.permute.xlu0 %6438
        %6440 = vrot.lane.b32.xlu0 %v6361, 112
        %v6441 = vpop.permute.xlu0 %6440
        %6442 = vrot.lane.b32.xlu0 %v6364, 112
        %v6443 = vpop.permute.xlu0 %6442
        %6444 = vrot.lane.b32.xlu0 %v6368, 112
        %v6445 = vpop.permute.xlu0 %6444
        %6446 = vrot.lane.b32.xlu0 %v6371, 112
        %v6447 = vpop.permute.xlu0 %6446
        %6448 = vrot.lane.b32.xlu0 %v6375, 112
        %v6449 = vpop.permute.xlu0 %6448
        %6450 = vrot.lane.b32.xlu0 %v6378, 112
        %v6451 = vpop.permute.xlu0 %6450
        %6452 = vrot.lane.b32.xlu0 %v6382, 112
        %v6453 = vpop.permute.xlu0 %6452
        %6454 = vrot.lane.b32.xlu0 %v6385, 112
        %v6455 = vpop.permute.xlu0 %6454
        %6456 = vrot.lane.b32.xlu0 %v6389, 112
        %v6457 = vpop.permute.xlu0 %6456
        %6458 = vrot.lane.b32.xlu0 %v6392, 112
        %v6459 = vpop.permute.xlu0 %6458
        %6460 = vrot.lane.b32.xlu0 %v6396, 112
        %v6461 = vpop.permute.xlu0 %6460
        %6462 = vrot.lane.b32.xlu0 %v6399, 112
        %v6463 = vpop.permute.xlu0 %6462
        %6496 = vst.msk [vmem:[#allocation2] sm:$0xf] %vm3765, %v6401
        %6497 = vst.msk [vmem:[#allocation2 + $0x4] sm:$0xf] %vm3765, %v6403
        %6498 = vst.msk [vmem:[#allocation2 + $0x8] sm:$0xf] %vm3765, %v6405
        %6499 = vst.msk [vmem:[#allocation2 + $0xc] sm:$0xf] %vm3765, %v6407
        %6500 = vst.msk [vmem:[#allocation2 + $0x10] sm:$0xf] %vm3765, %v6409
        %6501 = vst.msk [vmem:[#allocation2 + $0x14] sm:$0xf] %vm3765, %v6411
        %6502 = vst.msk [vmem:[#allocation2 + $0x18] sm:$0xf] %vm3765, %v6413
        %6503 = vst.msk [vmem:[#allocation2 + $0x1c] sm:$0xf] %vm3765, %v6415
        %6504 = vst.msk [vmem:[#allocation2 + $0x20] sm:$0xf] %vm3765, %v6417
        %6505 = vst.msk [vmem:[#allocation2 + $0x24] sm:$0xf] %vm3765, %v6419
        %6506 = vst.msk [vmem:[#allocation2 + $0x28] sm:$0xf] %vm3765, %v6421
        %6507 = vst.msk [vmem:[#allocation2 + $0x2c] sm:$0xf] %vm3765, %v6423
        %6508 = vst.msk [vmem:[#allocation2 + $0x30] sm:$0xf] %vm3765, %v6425
        %6509 = vst.msk [vmem:[#allocation2 + $0x34] sm:$0xf] %vm3765, %v6427
        %6510 = vst.msk [vmem:[#allocation2 + $0x38] sm:$0xf] %vm3765, %v6429
        %6511 = vst.msk [vmem:[#allocation2 + $0x3c] sm:$0xf] %vm3765, %v6431
        %6512 = vst.msk [vmem:[#allocation2 + $0x40] sm:$0xf] %vm3765, %v6433
        %6513 = vst.msk [vmem:[#allocation2 + $0x44] sm:$0xf] %vm3765, %v6435
        %6514 = vst.msk [vmem:[#allocation2 + $0x48] sm:$0xf] %vm3765, %v6437
        %6515 = vst.msk [vmem:[#allocation2 + $0x4c] sm:$0xf] %vm3765, %v6439
        %6516 = vst.msk [vmem:[#allocation2 + $0x50] sm:$0xf] %vm3765, %v6441
        %6517 = vst.msk [vmem:[#allocation2 + $0x54] sm:$0xf] %vm3765, %v6443
        %6518 = vst.msk [vmem:[#allocation2 + $0x58] sm:$0xf] %vm3765, %v6445
        %6519 = vst.msk [vmem:[#allocation2 + $0x5c] sm:$0xf] %vm3765, %v6447
        %6520 = vst.msk [vmem:[#allocation2 + $0x60] sm:$0xf] %vm3765, %v6449
        %6521 = vst.msk [vmem:[#allocation2 + $0x64] sm:$0xf] %vm3765, %v6451
        %6522 = vst.msk [vmem:[#allocation2 + $0x68] sm:$0xf] %vm3765, %v6453
        %6523 = vst.msk [vmem:[#allocation2 + $0x6c] sm:$0xf] %vm3765, %v6455
        %6524 = vst.msk [vmem:[#allocation2 + $0x70] sm:$0xf] %vm3765, %v6457
        %6525 = vst.msk [vmem:[#allocation2 + $0x74] sm:$0xf] %vm3765, %v6459
        %6526 = vst.msk [vmem:[#allocation2 + $0x78] sm:$0xf] %vm3765, %v6461
        %6527 = vst.msk [vmem:[#allocation2 + $0x7c] sm:$0xf] %vm3765, %v6463
        %v6528 = vld [vmem:[#allocation2] sm:$0xf]
        %v6529 = vld [vmem:[#allocation2 + $0x4] sm:$0xf]
        %v6530 = vld [vmem:[#allocation2 + $0x8] sm:$0xf]
        %v6531 = vld [vmem:[#allocation2 + $0xc] sm:$0xf]
        %v6532 = vld [vmem:[#allocation2 + $0x10] sm:$0xf]
        %v6533 = vld [vmem:[#allocation2 + $0x14] sm:$0xf]
        %v6534 = vld [vmem:[#allocation2 + $0x18] sm:$0xf]
        %v6535 = vld [vmem:[#allocation2 + $0x1c] sm:$0xf]
        %v6536 = vld [vmem:[#allocation2 + $0x20] sm:$0xf]
        %v6537 = vld [vmem:[#allocation2 + $0x24] sm:$0xf]
        %v6538 = vld [vmem:[#allocation2 + $0x28] sm:$0xf]
        %v6539 = vld [vmem:[#allocation2 + $0x2c] sm:$0xf]
        %v6540 = vld [vmem:[#allocation2 + $0x30] sm:$0xf]
        %v6541 = vld [vmem:[#allocation2 + $0x34] sm:$0xf]
        %v6542 = vld [vmem:[#allocation2 + $0x38] sm:$0xf]
        %v6543 = vld [vmem:[#allocation2 + $0x3c] sm:$0xf]
        %v6544 = vld [vmem:[#allocation2 + $0x40] sm:$0xf]
        %v6545 = vld [vmem:[#allocation2 + $0x44] sm:$0xf]
        %v6546 = vld [vmem:[#allocation2 + $0x48] sm:$0xf]
        %v6547 = vld [vmem:[#allocation2 + $0x4c] sm:$0xf]
        %v6548 = vld [vmem:[#allocation2 + $0x50] sm:$0xf]
        %v6549 = vld [vmem:[#allocation2 + $0x54] sm:$0xf]
        %v6550 = vld [vmem:[#allocation2 + $0x58] sm:$0xf]
        %v6551 = vld [vmem:[#allocation2 + $0x5c] sm:$0xf]
        %v6552 = vld [vmem:[#allocation2 + $0x60] sm:$0xf]
        %v6553 = vld [vmem:[#allocation2 + $0x64] sm:$0xf]
        %v6554 = vld [vmem:[#allocation2 + $0x68] sm:$0xf]
        %v6555 = vld [vmem:[#allocation2 + $0x6c] sm:$0xf]
        %v6556 = vld [vmem:[#allocation2 + $0x70] sm:$0xf]
        %v6557 = vld [vmem:[#allocation2 + $0x74] sm:$0xf]
        %v6558 = vld [vmem:[#allocation2 + $0x78] sm:$0xf]
        %v6559 = vld [vmem:[#allocation2 + $0x7c] sm:$0xf]
        %s6560 = scalar_lea.vmem %s1, 64
        %v6561 = vld [vmem:[%s6560] sm:$0xf]
        %v6562 = vld [vmem:[%s6560 + $0x4] sm:$0xf]
        %v6563 = vld [vmem:[%s6560 + $0x8] sm:$0xf]
        %v6564 = vld [vmem:[%s6560 + $0xc] sm:$0xf]
        %v6565 = vld [vmem:[%s6560 + $0x10] sm:$0xf]
        %v6566 = vld [vmem:[%s6560 + $0x14] sm:$0xf]
        %v6567 = vld [vmem:[%s6560 + $0x18] sm:$0xf]
        %v6568 = vld [vmem:[%s6560 + $0x1c] sm:$0xf]
        %v6569 = vld [vmem:[%s6560 + $0x20] sm:$0xf]
        %v6570 = vld [vmem:[%s6560 + $0x24] sm:$0xf]
        %v6571 = vld [vmem:[%s6560 + $0x28] sm:$0xf]
        %v6572 = vld [vmem:[%s6560 + $0x2c] sm:$0xf]
        %v6573 = vld [vmem:[%s6560 + $0x30] sm:$0xf]
        %v6574 = vld [vmem:[%s6560 + $0x34] sm:$0xf]
        %v6575 = vld [vmem:[%s6560 + $0x38] sm:$0xf]
        %v6576 = vld [vmem:[%s6560 + $0x3c] sm:$0xf]
        %v6609 = vunpack.c.l.b16 %v6528
        %v6610 = vunpack.c.l.b16 %v6529
        %v6611 = vunpack.c.l.b16 %v6530
        %v6612 = vunpack.c.l.b16 %v6531
        %v6613 = vunpack.c.l.b16 %v6532
        %v6614 = vunpack.c.l.b16 %v6533
        %v6615 = vunpack.c.l.b16 %v6534
        %v6616 = vunpack.c.l.b16 %v6535
        %v6617 = vunpack.c.l.b16 %v6536
        %v6618 = vunpack.c.l.b16 %v6537
        %v6619 = vunpack.c.l.b16 %v6538
        %v6620 = vunpack.c.l.b16 %v6539
        %v6621 = vunpack.c.l.b16 %v6540
        %v6622 = vunpack.c.l.b16 %v6541
        %v6623 = vunpack.c.l.b16 %v6542
        %v6624 = vunpack.c.l.b16 %v6543
        %v6625 = vunpack.c.l.b16 %v6544
        %v6626 = vunpack.c.l.b16 %v6545
        %v6627 = vunpack.c.l.b16 %v6546
        %v6628 = vunpack.c.l.b16 %v6547
        %v6629 = vunpack.c.l.b16 %v6548
        %v6630 = vunpack.c.l.b16 %v6549
        %v6631 = vunpack.c.l.b16 %v6550
        %v6632 = vunpack.c.l.b16 %v6551
        %v6633 = vunpack.c.l.b16 %v6552
        %v6634 = vunpack.c.l.b16 %v6553
        %v6635 = vunpack.c.l.b16 %v6554
        %v6636 = vunpack.c.l.b16 %v6555
        %v6637 = vunpack.c.l.b16 %v6556
        %v6638 = vunpack.c.l.b16 %v6557
        %v6639 = vunpack.c.l.b16 %v6558
        %v6640 = vunpack.c.l.b16 %v6559
        %v6641 = vpack.c.b16 %v6610, %v6609
        %v6642 = vpack.c.b16 %v6612, %v6611
        %v6643 = vpack.c.b16 %v6614, %v6613
        %v6644 = vpack.c.b16 %v6616, %v6615
        %v6645 = vpack.c.b16 %v6618, %v6617
        %v6646 = vpack.c.b16 %v6620, %v6619
        %v6647 = vpack.c.b16 %v6622, %v6621
        %v6648 = vpack.c.b16 %v6624, %v6623
        %v6649 = vpack.c.b16 %v6626, %v6625
        %v6650 = vpack.c.b16 %v6628, %v6627
        %v6651 = vpack.c.b16 %v6630, %v6629
        %v6652 = vpack.c.b16 %v6632, %v6631
        %v6653 = vpack.c.b16 %v6634, %v6633
        %v6654 = vpack.c.b16 %v6636, %v6635
        %v6655 = vpack.c.b16 %v6638, %v6637
        %v6656 = vpack.c.b16 %v6640, %v6639
        %v6689 = vunpack.c.l.b16 %v6561
        %v6690 = vunpack.c.l.b16 %v6562
        %v6691 = vunpack.c.l.b16 %v6563
        %v6692 = vunpack.c.l.b16 %v6564
        %v6693 = vunpack.c.l.b16 %v6565
        %v6694 = vunpack.c.l.b16 %v6566
        %v6695 = vunpack.c.l.b16 %v6567
        %v6696 = vunpack.c.l.b16 %v6568
        %v6697 = vunpack.c.l.b16 %v6569
        %v6698 = vunpack.c.l.b16 %v6570
        %v6699 = vunpack.c.l.b16 %v6571
        %v6700 = vunpack.c.l.b16 %v6572
        %v6701 = vunpack.c.l.b16 %v6573
        %v6702 = vunpack.c.l.b16 %v6574
        %v6703 = vunpack.c.l.b16 %v6575
        %v6704 = vunpack.c.l.b16 %v6576
        %v6705 = vpack.c.b16 %v6690, %v6689
        %v6706 = vpack.c.b16 %v6692, %v6691
        %v6707 = vpack.c.b16 %v6694, %v6693
        %v6708 = vpack.c.b16 %v6696, %v6695
        %v6709 = vpack.c.b16 %v6698, %v6697
        %v6710 = vpack.c.b16 %v6700, %v6699
        %v6711 = vpack.c.b16 %v6702, %v6701
        %v6712 = vpack.c.b16 %v6704, %v6703
        %6721 = vmatprep.subr.bf16.mxu0 0
        %6722 = vmatpush1.bf16.msra.mxu0 %v6712
        %6723 = vmatprep.subr.bf16.mxu0 0
        %6724 = vmatpush1.bf16.msra.mxu0 %v6711
        %6725 = vmatprep.subr.bf16.mxu0 0
        %6726 = vmatpush1.bf16.msra.mxu0 %v6710
        %6727 = vmatprep.subr.bf16.mxu0 0
        %6728 = vmatpush1.bf16.msra.mxu0 %v6709
        %6729 = vmatprep.subr.bf16.mxu0 0
        %6730 = vmatpush1.bf16.msra.mxu0 %v6708
        %6731 = vmatprep.subr.bf16.mxu0 0
        %6732 = vmatpush1.bf16.msra.mxu0 %v6707
        %6733 = vmatprep.subr.bf16.mxu0 0
        %6734 = vmatpush1.bf16.msra.mxu0 %v6706
        %6735 = vmatprep.subr.bf16.mxu0 0
        %6736 = vmatpush1.bf16.msra.mxu0 %v6705
        %6737 = vmatprep.subr.bf16.mxu0 0
        %6738 = vmatpush2.bf16.msra.mxu0 0
        %6739 = vmatprep.subr.bf16.mxu0 0
        %6740 = vmatpush2.bf16.msra.mxu0 0
        %6741 = vmatprep.subr.bf16.mxu0 0
        %6742 = vmatpush2.bf16.msra.mxu0 0
        %6743 = vmatprep.subr.bf16.mxu0 0
        %6744 = vmatpush2.bf16.msra.mxu0 0
        %6745 = vmatprep.subr.bf16.mxu0 0
        %6746 = vmatpush2.bf16.msra.mxu0 0
        %6747 = vmatprep.subr.bf16.mxu0 0
        %6748 = vmatpush2.bf16.msra.mxu0 0
        %6749 = vmatprep.subr.bf16.mxu0 0
        %6750 = vmatpush2.bf16.msra.mxu0 0
        %6751 = vmatprep.subr.bf16.mxu0 0
        %6752 = vmatpush2.bf16.msra.mxu0 0
        %6753 = vmatprep.mubr.bf16.mxu0 0
        %6754 = vmatmul.mubr.bf16.gmra.mxu0 %v6641
        %v6755 = vpop.f32.mrf.mxu0
        %v6756 = vadd.f32 0.0, %v6755
        %v6757 = vpop.f32.mrf.mxu0
        %v6758 = vpop.f32.mrf.mxu0
        %v6759 = vadd.f32 0.0, %v6758
        %v6760 = vpop.f32.mrf.mxu0
        %6761 = vmatprep.mubr.bf16.mxu0 0
        %6762 = vmatmul.mubr.bf16.gmra.mxu0 %v6642
        %v6763 = vpop.f32.mrf.mxu0
        %v6764 = vadd.f32 0.0, %v6763
        %v6765 = vpop.f32.mrf.mxu0
        %v6766 = vpop.f32.mrf.mxu0
        %v6767 = vadd.f32 0.0, %v6766
        %v6768 = vpop.f32.mrf.mxu0
        %6769 = vmatprep.mubr.bf16.mxu0 0
        %6770 = vmatmul.mubr.bf16.gmra.mxu0 %v6643
        %v6771 = vpop.f32.mrf.mxu0
        %v6772 = vadd.f32 0.0, %v6771
        %v6773 = vpop.f32.mrf.mxu0
        %v6774 = vpop.f32.mrf.mxu0
        %v6775 = vadd.f32 0.0, %v6774
        %v6776 = vpop.f32.mrf.mxu0
        %6777 = vmatprep.mubr.bf16.mxu0 0
        %6778 = vmatmul.mubr.bf16.gmra.mxu0 %v6644
        %v6779 = vpop.f32.mrf.mxu0
        %v6780 = vadd.f32 0.0, %v6779
        %v6781 = vpop.f32.mrf.mxu0
        %v6782 = vpop.f32.mrf.mxu0
        %v6783 = vadd.f32 0.0, %v6782
        %v6784 = vpop.f32.mrf.mxu0
        %6785 = vmatprep.mubr.bf16.mxu0 0
        %6786 = vmatmul.mubr.bf16.gmra.mxu0 %v6645
        %v6787 = vpop.f32.mrf.mxu0
        %v6788 = vadd.f32 0.0, %v6787
        %v6789 = vpop.f32.mrf.mxu0
        %v6790 = vpop.f32.mrf.mxu0
        %v6791 = vadd.f32 0.0, %v6790
        %v6792 = vpop.f32.mrf.mxu0
        %6793 = vmatprep.mubr.bf16.mxu0 0
        %6794 = vmatmul.mubr.bf16.gmra.mxu0 %v6646
        %v6795 = vpop.f32.mrf.mxu0
        %v6796 = vadd.f32 0.0, %v6795
        %v6797 = vpop.f32.mrf.mxu0
        %v6798 = vpop.f32.mrf.mxu0
        %v6799 = vadd.f32 0.0, %v6798
        %v6800 = vpop.f32.mrf.mxu0
        %6801 = vmatprep.mubr.bf16.mxu0 0
        %6802 = vmatmul.mubr.bf16.gmra.mxu0 %v6647
        %v6803 = vpop.f32.mrf.mxu0
        %v6804 = vadd.f32 0.0, %v6803
        %v6805 = vpop.f32.mrf.mxu0
        %v6806 = vpop.f32.mrf.mxu0
        %v6807 = vadd.f32 0.0, %v6806
        %v6808 = vpop.f32.mrf.mxu0
        %6809 = vmatprep.mubr.bf16.mxu0 0
        %6810 = vmatmul.mubr.bf16.gmra.mxu0 %v6648
        %v6811 = vpop.f32.mrf.mxu0
        %v6812 = vadd.f32 0.0, %v6811
        %v6813 = vpop.f32.mrf.mxu0
        %v6814 = vpop.f32.mrf.mxu0
        %v6815 = vadd.f32 0.0, %v6814
        %v6816 = vpop.f32.mrf.mxu0
        %6817 = vmatprep.mubr.bf16.mxu0 0
        %6818 = vmatmul.mubr.bf16.gmra.mxu0 %v6649
        %v6819 = vpop.f32.mrf.mxu0
        %v6820 = vadd.f32 0.0, %v6819
        %v6821 = vpop.f32.mrf.mxu0
        %v6822 = vpop.f32.mrf.mxu0
        %v6823 = vadd.f32 0.0, %v6822
        %v6824 = vpop.f32.mrf.mxu0
        %6825 = vmatprep.mubr.bf16.mxu0 0
        %6826 = vmatmul.mubr.bf16.gmra.mxu0 %v6650
        %v6827 = vpop.f32.mrf.mxu0
        %v6828 = vadd.f32 0.0, %v6827
        %v6829 = vpop.f32.mrf.mxu0
        %v6830 = vpop.f32.mrf.mxu0
        %v6831 = vadd.f32 0.0, %v6830
        %v6832 = vpop.f32.mrf.mxu0
        %6833 = vmatprep.mubr.bf16.mxu0 0
        %6834 = vmatmul.mubr.bf16.gmra.mxu0 %v6651
        %v6835 = vpop.f32.mrf.mxu0
        %v6836 = vadd.f32 0.0, %v6835
        %v6837 = vpop.f32.mrf.mxu0
        %v6838 = vpop.f32.mrf.mxu0
        %v6839 = vadd.f32 0.0, %v6838
        %v6840 = vpop.f32.mrf.mxu0
        %6841 = vmatprep.mubr.bf16.mxu0 0
        %6842 = vmatmul.mubr.bf16.gmra.mxu0 %v6652
        %v6843 = vpop.f32.mrf.mxu0
        %v6844 = vadd.f32 0.0, %v6843
        %v6845 = vpop.f32.mrf.mxu0
        %v6846 = vpop.f32.mrf.mxu0
        %v6847 = vadd.f32 0.0, %v6846
        %v6848 = vpop.f32.mrf.mxu0
        %6849 = vmatprep.mubr.bf16.mxu0 0
        %6850 = vmatmul.mubr.bf16.gmra.mxu0 %v6653
        %v6851 = vpop.f32.mrf.mxu0
        %v6852 = vadd.f32 0.0, %v6851
        %v6853 = vpop.f32.mrf.mxu0
        %v6854 = vpop.f32.mrf.mxu0
        %v6855 = vadd.f32 0.0, %v6854
        %v6856 = vpop.f32.mrf.mxu0
        %6857 = vmatprep.mubr.bf16.mxu0 0
        %6858 = vmatmul.mubr.bf16.gmra.mxu0 %v6654
        %v6859 = vpop.f32.mrf.mxu0
        %v6860 = vadd.f32 0.0, %v6859
        %v6861 = vpop.f32.mrf.mxu0
        %v6862 = vpop.f32.mrf.mxu0
        %v6863 = vadd.f32 0.0, %v6862
        %v6864 = vpop.f32.mrf.mxu0
        %6865 = vmatprep.mubr.bf16.mxu0 0
        %6866 = vmatmul.mubr.bf16.gmra.mxu0 %v6655
        %v6867 = vpop.f32.mrf.mxu0
        %v6868 = vadd.f32 0.0, %v6867
        %v6869 = vpop.f32.mrf.mxu0
        %v6870 = vpop.f32.mrf.mxu0
        %v6871 = vadd.f32 0.0, %v6870
        %v6872 = vpop.f32.mrf.mxu0
        %6873 = vmatprep.mubr.bf16.mxu0 0
        %6874 = vmatmul.mubr.bf16.gmra.mxu0 %v6656
        %v6875 = vpop.f32.mrf.mxu0
        %v6876 = vadd.f32 0.0, %v6875
        %v6877 = vpop.f32.mrf.mxu0
        %v6878 = vpop.f32.mrf.mxu0
        %v6879 = vadd.f32 0.0, %v6878
        %v6880 = vpop.f32.mrf.mxu0
        %6881 = vdwg.mxu0
        %6914 = vrot.lane.b32.xlu0 %v6756, 4
        %v6915 = vpop.permute.xlu0 %6914
        %6916 = vrot.lane.b32.xlu0 %v6759, 4
        %v6917 = vpop.permute.xlu0 %6916
        %6918 = vrot.lane.b32.xlu0 %v6764, 4
        %v6919 = vpop.permute.xlu0 %6918
        %6920 = vrot.lane.b32.xlu0 %v6767, 4
        %v6921 = vpop.permute.xlu0 %6920
        %6922 = vrot.lane.b32.xlu0 %v6772, 4
        %v6923 = vpop.permute.xlu0 %6922
        %6924 = vrot.lane.b32.xlu0 %v6775, 4
        %v6925 = vpop.permute.xlu0 %6924
        %6926 = vrot.lane.b32.xlu0 %v6780, 4
        %v6927 = vpop.permute.xlu0 %6926
        %6928 = vrot.lane.b32.xlu0 %v6783, 4
        %v6929 = vpop.permute.xlu0 %6928
        %6930 = vrot.lane.b32.xlu0 %v6788, 4
        %v6931 = vpop.permute.xlu0 %6930
        %6932 = vrot.lane.b32.xlu0 %v6791, 4
        %v6933 = vpop.permute.xlu0 %6932
        %6934 = vrot.lane.b32.xlu0 %v6796, 4
        %v6935 = vpop.permute.xlu0 %6934
        %6936 = vrot.lane.b32.xlu0 %v6799, 4
        %v6937 = vpop.permute.xlu0 %6936
        %6938 = vrot.lane.b32.xlu0 %v6804, 4
        %v6939 = vpop.permute.xlu0 %6938
        %6940 = vrot.lane.b32.xlu0 %v6807, 4
        %v6941 = vpop.permute.xlu0 %6940
        %6942 = vrot.lane.b32.xlu0 %v6812, 4
        %v6943 = vpop.permute.xlu0 %6942
        %6944 = vrot.lane.b32.xlu0 %v6815, 4
        %v6945 = vpop.permute.xlu0 %6944
        %6946 = vrot.lane.b32.xlu0 %v6820, 4
        %v6947 = vpop.permute.xlu0 %6946
        %6948 = vrot.lane.b32.xlu0 %v6823, 4
        %v6949 = vpop.permute.xlu0 %6948
        %6950 = vrot.lane.b32.xlu0 %v6828, 4
        %v6951 = vpop.permute.xlu0 %6950
        %6952 = vrot.lane.b32.xlu0 %v6831, 4
        %v6953 = vpop.permute.xlu0 %6952
        %6954 = vrot.lane.b32.xlu0 %v6836, 4
        %v6955 = vpop.permute.xlu0 %6954
        %6956 = vrot.lane.b32.xlu0 %v6839, 4
        %v6957 = vpop.permute.xlu0 %6956
        %6958 = vrot.lane.b32.xlu0 %v6844, 4
        %v6959 = vpop.permute.xlu0 %6958
        %6960 = vrot.lane.b32.xlu0 %v6847, 4
        %v6961 = vpop.permute.xlu0 %6960
        %6962 = vrot.lane.b32.xlu0 %v6852, 4
        %v6963 = vpop.permute.xlu0 %6962
        %6964 = vrot.lane.b32.xlu0 %v6855, 4
        %v6965 = vpop.permute.xlu0 %6964
        %6966 = vrot.lane.b32.xlu0 %v6860, 4
        %v6967 = vpop.permute.xlu0 %6966
        %6968 = vrot.lane.b32.xlu0 %v6863, 4
        %v6969 = vpop.permute.xlu0 %6968
        %6970 = vrot.lane.b32.xlu0 %v6868, 4
        %v6971 = vpop.permute.xlu0 %6970
        %6972 = vrot.lane.b32.xlu0 %v6871, 4
        %v6973 = vpop.permute.xlu0 %6972
        %6974 = vrot.lane.b32.xlu0 %v6876, 4
        %v6975 = vpop.permute.xlu0 %6974
        %6976 = vrot.lane.b32.xlu0 %v6879, 4
        %v6977 = vpop.permute.xlu0 %6976
        %vm7010 = vcmask 64544
        %7011 = vst.msk [vmem:[#allocation3] sm:$0xff] %vm7010, %v6915
        %7012 = vst.msk [vmem:[#allocation3 + $0x8] sm:$0xff] %vm7010, %v6917
        %7013 = vst.msk [vmem:[#allocation3 + $0x10] sm:$0xff] %vm7010, %v6919
        %7014 = vst.msk [vmem:[#allocation3 + $0x18] sm:$0xff] %vm7010, %v6921
        %7015 = vst.msk [vmem:[#allocation3 + $0x20] sm:$0xff] %vm7010, %v6923
        %7016 = vst.msk [vmem:[#allocation3 + $0x28] sm:$0xff] %vm7010, %v6925
        %7017 = vst.msk [vmem:[#allocation3 + $0x30] sm:$0xff] %vm7010, %v6927
        %7018 = vst.msk [vmem:[#allocation3 + $0x38] sm:$0xff] %vm7010, %v6929
        %7019 = vst.msk [vmem:[#allocation3 + $0x40] sm:$0xff] %vm7010, %v6931
        %7020 = vst.msk [vmem:[#allocation3 + $0x48] sm:$0xff] %vm7010, %v6933
        %7021 = vst.msk [vmem:[#allocation3 + $0x50] sm:$0xff] %vm7010, %v6935
        %7022 = vst.msk [vmem:[#allocation3 + $0x58] sm:$0xff] %vm7010, %v6937
        %7023 = vst.msk [vmem:[#allocation3 + $0x60] sm:$0xff] %vm7010, %v6939
        %7024 = vst.msk [vmem:[#allocation3 + $0x68] sm:$0xff] %vm7010, %v6941
        %7025 = vst.msk [vmem:[#allocation3 + $0x70] sm:$0xff] %vm7010, %v6943
        %7026 = vst.msk [vmem:[#allocation3 + $0x78] sm:$0xff] %vm7010, %v6945
        %7027 = vst.msk [vmem:[#allocation3 + $0x80] sm:$0xff] %vm7010, %v6947
        %7028 = vst.msk [vmem:[#allocation3 + $0x88] sm:$0xff] %vm7010, %v6949
        %7029 = vst.msk [vmem:[#allocation3 + $0x90] sm:$0xff] %vm7010, %v6951
        %7030 = vst.msk [vmem:[#allocation3 + $0x98] sm:$0xff] %vm7010, %v6953
        %7031 = vst.msk [vmem:[#allocation3 + $0xa0] sm:$0xff] %vm7010, %v6955
        %7032 = vst.msk [vmem:[#allocation3 + $0xa8] sm:$0xff] %vm7010, %v6957
        %7033 = vst.msk [vmem:[#allocation3 + $0xb0] sm:$0xff] %vm7010, %v6959
        %7034 = vst.msk [vmem:[#allocation3 + $0xb8] sm:$0xff] %vm7010, %v6961
        %7035 = vst.msk [vmem:[#allocation3 + $0xc0] sm:$0xff] %vm7010, %v6963
        %7036 = vst.msk [vmem:[#allocation3 + $0xc8] sm:$0xff] %vm7010, %v6965
        %7037 = vst.msk [vmem:[#allocation3 + $0xd0] sm:$0xff] %vm7010, %v6967
        %7038 = vst.msk [vmem:[#allocation3 + $0xd8] sm:$0xff] %vm7010, %v6969
        %7039 = vst.msk [vmem:[#allocation3 + $0xe0] sm:$0xff] %vm7010, %v6971
        %7040 = vst.msk [vmem:[#allocation3 + $0xe8] sm:$0xff] %vm7010, %v6973
        %7041 = vst.msk [vmem:[#allocation3 + $0xf0] sm:$0xff] %vm7010, %v6975
        %7042 = vst.msk [vmem:[#allocation3 + $0xf8] sm:$0xff] %vm7010, %v6977
        %s7043 = scalar_lea.vmem %s195, 64
        %v7044 = vld [vmem:[%s7043] sm:$0xc]
        %v7045 = vld [vmem:[%s7043 + $0x4] sm:$0xf]
        %v7046 = vld [vmem:[%s7043 + $0x8] sm:$0x3]
        %v7047 = vld [vmem:[%s7043 + $0x10] sm:$0xc]
        %v7048 = vld [vmem:[%s7043 + $0x14] sm:$0xf]
        %v7049 = vld [vmem:[%s7043 + $0x18] sm:$0x3]
        %v7050 = vld [vmem:[%s7043 + $0x20] sm:$0xc]
        %v7051 = vld [vmem:[%s7043 + $0x24] sm:$0xf]
        %v7052 = vld [vmem:[%s7043 + $0x28] sm:$0x3]
        %v7053 = vld [vmem:[%s7043 + $0x30] sm:$0xc]
        %v7054 = vld [vmem:[%s7043 + $0x34] sm:$0xf]
        %v7055 = vld [vmem:[%s7043 + $0x38] sm:$0x3]
        %v7056 = vld [vmem:[%s7043 + $0x40] sm:$0xc]
        %v7057 = vld [vmem:[%s7043 + $0x44] sm:$0xf]
        %v7058 = vld [vmem:[%s7043 + $0x48] sm:$0x3]
        %v7059 = vld [vmem:[%s7043 + $0x50] sm:$0xc]
        %v7060 = vld [vmem:[%s7043 + $0x54] sm:$0xf]
        %v7061 = vld [vmem:[%s7043 + $0x58] sm:$0x3]
        %v7062 = vld [vmem:[%s7043 + $0x60] sm:$0xc]
        %v7063 = vld [vmem:[%s7043 + $0x64] sm:$0xf]
        %v7064 = vld [vmem:[%s7043 + $0x68] sm:$0x3]
        %v7065 = vld [vmem:[%s7043 + $0x70] sm:$0xc]
        %v7066 = vld [vmem:[%s7043 + $0x74] sm:$0xf]
        %v7067 = vld [vmem:[%s7043 + $0x78] sm:$0x3]
        %v7068 = vld [vmem:[%s7043 + $0x80] sm:$0xc]
        %v7069 = vld [vmem:[%s7043 + $0x84] sm:$0xf]
        %v7070 = vld [vmem:[%s7043 + $0x88] sm:$0x3]
        %v7071 = vld [vmem:[%s7043 + $0x90] sm:$0xc]
        %v7072 = vld [vmem:[%s7043 + $0x94] sm:$0xf]
        %v7073 = vld [vmem:[%s7043 + $0x98] sm:$0x3]
        %v7074 = vld [vmem:[%s7043 + $0xa0] sm:$0xc]
        %v7075 = vld [vmem:[%s7043 + $0xa4] sm:$0xf]
        %v7076 = vld [vmem:[%s7043 + $0xa8] sm:$0x3]
        %v7077 = vld [vmem:[%s7043 + $0xb0] sm:$0xc]
        %v7078 = vld [vmem:[%s7043 + $0xb4] sm:$0xf]
        %v7079 = vld [vmem:[%s7043 + $0xb8] sm:$0x3]
        %v7080 = vld [vmem:[%s7043 + $0xc0] sm:$0xc]
        %v7081 = vld [vmem:[%s7043 + $0xc4] sm:$0xf]
        %v7082 = vld [vmem:[%s7043 + $0xc8] sm:$0x3]
        %v7083 = vld [vmem:[%s7043 + $0xd0] sm:$0xc]
        %v7084 = vld [vmem:[%s7043 + $0xd4] sm:$0xf]
        %v7085 = vld [vmem:[%s7043 + $0xd8] sm:$0x3]
        %v7086 = vld [vmem:[%s7043 + $0xe0] sm:$0xc]
        %v7087 = vld [vmem:[%s7043 + $0xe4] sm:$0xf]
        %v7088 = vld [vmem:[%s7043 + $0xe8] sm:$0x3]
        %v7089 = vld [vmem:[%s7043 + $0xf0] sm:$0xc]
        %v7090 = vld [vmem:[%s7043 + $0xf4] sm:$0xf]
        %v7091 = vld [vmem:[%s7043 + $0xf8] sm:$0x3]
        %vm7140 = vcmask 1041408
        %vm7141 = vcmask 1045508
        %vm7142 = vmor %vm7140, %vm7141
        %v7143 = vrot.slane %v7044, 6
        %v7144 = vrot.slane %v7143, 4
        %v7145 = vrot.slane %v7045, 6
        %v7146 = vsel %vm7142, %v7144, %v7145
        %v7147 = vrot.slane %v7145, 4
        %v7148 = vrot.slane %v7046, 6
        %v7149 = vsel %vm7142, %v7147, %v7148
        %v7150 = vrot.slane %v7047, 6
        %v7151 = vrot.slane %v7150, 4
        %v7152 = vrot.slane %v7048, 6
        %v7153 = vsel %vm7142, %v7151, %v7152
        %v7154 = vrot.slane %v7152, 4
        %v7155 = vrot.slane %v7049, 6
        %v7156 = vsel %vm7142, %v7154, %v7155
        %v7157 = vrot.slane %v7050, 6
        %v7158 = vrot.slane %v7157, 4
        %v7159 = vrot.slane %v7051, 6
        %v7160 = vsel %vm7142, %v7158, %v7159
        %v7161 = vrot.slane %v7159, 4
        %v7162 = vrot.slane %v7052, 6
        %v7163 = vsel %vm7142, %v7161, %v7162
        %v7164 = vrot.slane %v7053, 6
        %v7165 = vrot.slane %v7164, 4
        %v7166 = vrot.slane %v7054, 6
        %v7167 = vsel %vm7142, %v7165, %v7166
        %v7168 = vrot.slane %v7166, 4
        %v7169 = vrot.slane %v7055, 6
        %v7170 = vsel %vm7142, %v7168, %v7169
        %v7171 = vrot.slane %v7056, 6
        %v7172 = vrot.slane %v7171, 4
        %v7173 = vrot.slane %v7057, 6
        %v7174 = vsel %vm7142, %v7172, %v7173
        %v7175 = vrot.slane %v7173, 4
        %v7176 = vrot.slane %v7058, 6
        %v7177 = vsel %vm7142, %v7175, %v7176
        %v7178 = vrot.slane %v7059, 6
        %v7179 = vrot.slane %v7178, 4
        %v7180 = vrot.slane %v7060, 6
        %v7181 = vsel %vm7142, %v7179, %v7180
        %v7182 = vrot.slane %v7180, 4
        %v7183 = vrot.slane %v7061, 6
        %v7184 = vsel %vm7142, %v7182, %v7183
        %v7185 = vrot.slane %v7062, 6
        %v7186 = vrot.slane %v7185, 4
        %v7187 = vrot.slane %v7063, 6
        %v7188 = vsel %vm7142, %v7186, %v7187
        %v7189 = vrot.slane %v7187, 4
        %v7190 = vrot.slane %v7064, 6
        %v7191 = vsel %vm7142, %v7189, %v7190
        %v7192 = vrot.slane %v7065, 6
        %v7193 = vrot.slane %v7192, 4
        %v7194 = vrot.slane %v7066, 6
        %v7195 = vsel %vm7142, %v7193, %v7194
        %v7196 = vrot.slane %v7194, 4
        %v7197 = vrot.slane %v7067, 6
        %v7198 = vsel %vm7142, %v7196, %v7197
        %v7199 = vrot.slane %v7068, 6
        %v7200 = vrot.slane %v7199, 4
        %v7201 = vrot.slane %v7069, 6
        %v7202 = vsel %vm7142, %v7200, %v7201
        %v7203 = vrot.slane %v7201, 4
        %v7204 = vrot.slane %v7070, 6
        %v7205 = vsel %vm7142, %v7203, %v7204
        %v7206 = vrot.slane %v7071, 6
        %v7207 = vrot.slane %v7206, 4
        %v7208 = vrot.slane %v7072, 6
        %v7209 = vsel %vm7142, %v7207, %v7208
        %v7210 = vrot.slane %v7208, 4
        %v7211 = vrot.slane %v7073, 6
        %v7212 = vsel %vm7142, %v7210, %v7211
        %v7213 = vrot.slane %v7074, 6
        %v7214 = vrot.slane %v7213, 4
        %v7215 = vrot.slane %v7075, 6
        %v7216 = vsel %vm7142, %v7214, %v7215
        %v7217 = vrot.slane %v7215, 4
        %v7218 = vrot.slane %v7076, 6
        %v7219 = vsel %vm7142, %v7217, %v7218
        %v7220 = vrot.slane %v7077, 6
        %v7221 = vrot.slane %v7220, 4
        %v7222 = vrot.slane %v7078, 6
        %v7223 = vsel %vm7142, %v7221, %v7222
        %v7224 = vrot.slane %v7222, 4
        %v7225 = vrot.slane %v7079, 6
        %v7226 = vsel %vm7142, %v7224, %v7225
        %v7227 = vrot.slane %v7080, 6
        %v7228 = vrot.slane %v7227, 4
        %v7229 = vrot.slane %v7081, 6
        %v7230 = vsel %vm7142, %v7228, %v7229
        %v7231 = vrot.slane %v7229, 4
        %v7232 = vrot.slane %v7082, 6
        %v7233 = vsel %vm7142, %v7231, %v7232
        %v7234 = vrot.slane %v7083, 6
        %v7235 = vrot.slane %v7234, 4
        %v7236 = vrot.slane %v7084, 6
        %v7237 = vsel %vm7142, %v7235, %v7236
        %v7238 = vrot.slane %v7236, 4
        %v7239 = vrot.slane %v7085, 6
        %v7240 = vsel %vm7142, %v7238, %v7239
        %v7241 = vrot.slane %v7086, 6
        %v7242 = vrot.slane %v7241, 4
        %v7243 = vrot.slane %v7087, 6
        %v7244 = vsel %vm7142, %v7242, %v7243
        %v7245 = vrot.slane %v7243, 4
        %v7246 = vrot.slane %v7088, 6
        %v7247 = vsel %vm7142, %v7245, %v7246
        %v7248 = vrot.slane %v7089, 6
        %v7249 = vrot.slane %v7248, 4
        %v7250 = vrot.slane %v7090, 6
        %v7251 = vsel %vm7142, %v7249, %v7250
        %v7252 = vrot.slane %v7250, 4
        %v7253 = vrot.slane %v7091, 6
        %v7254 = vsel %vm7142, %v7252, %v7253
        %7287 = vst.msk [vmem:[#allocation2] sm:$0xf] %vm633, %v7146
        %7288 = vst.msk [vmem:[#allocation2 + $0x4] sm:$0xf] %vm633, %v7149
        %7289 = vst.msk [vmem:[#allocation2 + $0x8] sm:$0xf] %vm633, %v7153
        %7290 = vst.msk [vmem:[#allocation2 + $0xc] sm:$0xf] %vm633, %v7156
        %7291 = vst.msk [vmem:[#allocation2 + $0x10] sm:$0xf] %vm633, %v7160
        %7292 = vst.msk [vmem:[#allocation2 + $0x14] sm:$0xf] %vm633, %v7163
        %7293 = vst.msk [vmem:[#allocation2 + $0x18] sm:$0xf] %vm633, %v7167
        %7294 = vst.msk [vmem:[#allocation2 + $0x1c] sm:$0xf] %vm633, %v7170
        %7295 = vst.msk [vmem:[#allocation2 + $0x20] sm:$0xf] %vm633, %v7174
        %7296 = vst.msk [vmem:[#allocation2 + $0x24] sm:$0xf] %vm633, %v7177
        %7297 = vst.msk [vmem:[#allocation2 + $0x28] sm:$0xf] %vm633, %v7181
        %7298 = vst.msk [vmem:[#allocation2 + $0x2c] sm:$0xf] %vm633, %v7184
        %7299 = vst.msk [vmem:[#allocation2 + $0x30] sm:$0xf] %vm633, %v7188
        %7300 = vst.msk [vmem:[#allocation2 + $0x34] sm:$0xf] %vm633, %v7191
        %7301 = vst.msk [vmem:[#allocation2 + $0x38] sm:$0xf] %vm633, %v7195
        %7302 = vst.msk [vmem:[#allocation2 + $0x3c] sm:$0xf] %vm633, %v7198
        %7303 = vst.msk [vmem:[#allocation2 + $0x40] sm:$0xf] %vm633, %v7202
        %7304 = vst.msk [vmem:[#allocation2 + $0x44] sm:$0xf] %vm633, %v7205
        %7305 = vst.msk [vmem:[#allocation2 + $0x48] sm:$0xf] %vm633, %v7209
        %7306 = vst.msk [vmem:[#allocation2 + $0x4c] sm:$0xf] %vm633, %v7212
        %7307 = vst.msk [vmem:[#allocation2 + $0x50] sm:$0xf] %vm633, %v7216
        %7308 = vst.msk [vmem:[#allocation2 + $0x54] sm:$0xf] %vm633, %v7219
        %7309 = vst.msk [vmem:[#allocation2 + $0x58] sm:$0xf] %vm633, %v7223
        %7310 = vst.msk [vmem:[#allocation2 + $0x5c] sm:$0xf] %vm633, %v7226
        %7311 = vst.msk [vmem:[#allocation2 + $0x60] sm:$0xf] %vm633, %v7230
        %7312 = vst.msk [vmem:[#allocation2 + $0x64] sm:$0xf] %vm633, %v7233
        %7313 = vst.msk [vmem:[#allocation2 + $0x68] sm:$0xf] %vm633, %v7237
        %7314 = vst.msk [vmem:[#allocation2 + $0x6c] sm:$0xf] %vm633, %v7240
        %7315 = vst.msk [vmem:[#allocation2 + $0x70] sm:$0xf] %vm633, %v7244
        %7316 = vst.msk [vmem:[#allocation2 + $0x74] sm:$0xf] %vm633, %v7247
        %7317 = vst.msk [vmem:[#allocation2 + $0x78] sm:$0xf] %vm633, %v7251
        %7318 = vst.msk [vmem:[#allocation2 + $0x7c] sm:$0xf] %vm633, %v7254
        %v7319 = vld [vmem:[%s7043 + $0x4] sm:$0xf]
        %v7320 = vld [vmem:[%s7043 + $0x8] sm:$0xf]
        %v7321 = vld [vmem:[%s7043 + $0x14] sm:$0xf]
        %v7322 = vld [vmem:[%s7043 + $0x18] sm:$0xf]
        %v7323 = vld [vmem:[%s7043 + $0x24] sm:$0xf]
        %v7324 = vld [vmem:[%s7043 + $0x28] sm:$0xf]
        %v7325 = vld [vmem:[%s7043 + $0x34] sm:$0xf]
        %v7326 = vld [vmem:[%s7043 + $0x38] sm:$0xf]
        %v7327 = vld [vmem:[%s7043 + $0x44] sm:$0xf]
        %v7328 = vld [vmem:[%s7043 + $0x48] sm:$0xf]
        %v7329 = vld [vmem:[%s7043 + $0x54] sm:$0xf]
        %v7330 = vld [vmem:[%s7043 + $0x58] sm:$0xf]
        %v7331 = vld [vmem:[%s7043 + $0x64] sm:$0xf]
        %v7332 = vld [vmem:[%s7043 + $0x68] sm:$0xf]
        %v7333 = vld [vmem:[%s7043 + $0x74] sm:$0xf]
        %v7334 = vld [vmem:[%s7043 + $0x78] sm:$0xf]
        %v7335 = vld [vmem:[%s7043 + $0x84] sm:$0xf]
        %v7336 = vld [vmem:[%s7043 + $0x88] sm:$0xf]
        %v7337 = vld [vmem:[%s7043 + $0x94] sm:$0xf]
        %v7338 = vld [vmem:[%s7043 + $0x98] sm:$0xf]
        %v7339 = vld [vmem:[%s7043 + $0xa4] sm:$0xf]
        %v7340 = vld [vmem:[%s7043 + $0xa8] sm:$0xf]
        %v7341 = vld [vmem:[%s7043 + $0xb4] sm:$0xf]
        %v7342 = vld [vmem:[%s7043 + $0xb8] sm:$0xf]
        %v7343 = vld [vmem:[%s7043 + $0xc4] sm:$0xf]
        %v7344 = vld [vmem:[%s7043 + $0xc8] sm:$0xf]
        %v7345 = vld [vmem:[%s7043 + $0xd4] sm:$0xf]
        %v7346 = vld [vmem:[%s7043 + $0xd8] sm:$0xf]
        %v7347 = vld [vmem:[%s7043 + $0xe4] sm:$0xf]
        %v7348 = vld [vmem:[%s7043 + $0xe8] sm:$0xf]
        %v7349 = vld [vmem:[%s7043 + $0xf4] sm:$0xf]
        %v7350 = vld [vmem:[%s7043 + $0xf8] sm:$0xf]
        %7383 = vrot.lane.b32.xlu0 %v7319, 16
        %v7384 = vpop.permute.xlu0 %7383
        %7385 = vrot.lane.b32.xlu0 %v7320, 16
        %v7386 = vpop.permute.xlu0 %7385
        %7387 = vrot.lane.b32.xlu0 %v7321, 16
        %v7388 = vpop.permute.xlu0 %7387
        %7389 = vrot.lane.b32.xlu0 %v7322, 16
        %v7390 = vpop.permute.xlu0 %7389
        %7391 = vrot.lane.b32.xlu0 %v7323, 16
        %v7392 = vpop.permute.xlu0 %7391
        %7393 = vrot.lane.b32.xlu0 %v7324, 16
        %v7394 = vpop.permute.xlu0 %7393
        %7395 = vrot.lane.b32.xlu0 %v7325, 16
        %v7396 = vpop.permute.xlu0 %7395
        %7397 = vrot.lane.b32.xlu0 %v7326, 16
        %v7398 = vpop.permute.xlu0 %7397
        %7399 = vrot.lane.b32.xlu0 %v7327, 16
        %v7400 = vpop.permute.xlu0 %7399
        %7401 = vrot.lane.b32.xlu0 %v7328, 16
        %v7402 = vpop.permute.xlu0 %7401
        %7403 = vrot.lane.b32.xlu0 %v7329, 16
        %v7404 = vpop.permute.xlu0 %7403
        %7405 = vrot.lane.b32.xlu0 %v7330, 16
        %v7406 = vpop.permute.xlu0 %7405
        %7407 = vrot.lane.b32.xlu0 %v7331, 16
        %v7408 = vpop.permute.xlu0 %7407
        %7409 = vrot.lane.b32.xlu0 %v7332, 16
        %v7410 = vpop.permute.xlu0 %7409
        %7411 = vrot.lane.b32.xlu0 %v7333, 16
        %v7412 = vpop.permute.xlu0 %7411
        %7413 = vrot.lane.b32.xlu0 %v7334, 16
        %v7414 = vpop.permute.xlu0 %7413
        %7415 = vrot.lane.b32.xlu0 %v7335, 16
        %v7416 = vpop.permute.xlu0 %7415
        %7417 = vrot.lane.b32.xlu0 %v7336, 16
        %v7418 = vpop.permute.xlu0 %7417
        %7419 = vrot.lane.b32.xlu0 %v7337, 16
        %v7420 = vpop.permute.xlu0 %7419
        %7421 = vrot.lane.b32.xlu0 %v7338, 16
        %v7422 = vpop.permute.xlu0 %7421
        %7423 = vrot.lane.b32.xlu0 %v7339, 16
        %v7424 = vpop.permute.xlu0 %7423
        %7425 = vrot.lane.b32.xlu0 %v7340, 16
        %v7426 = vpop.permute.xlu0 %7425
        %7427 = vrot.lane.b32.xlu0 %v7341, 16
        %v7428 = vpop.permute.xlu0 %7427
        %7429 = vrot.lane.b32.xlu0 %v7342, 16
        %v7430 = vpop.permute.xlu0 %7429
        %7431 = vrot.lane.b32.xlu0 %v7343, 16
        %v7432 = vpop.permute.xlu0 %7431
        %7433 = vrot.lane.b32.xlu0 %v7344, 16
        %v7434 = vpop.permute.xlu0 %7433
        %7435 = vrot.lane.b32.xlu0 %v7345, 16
        %v7436 = vpop.permute.xlu0 %7435
        %7437 = vrot.lane.b32.xlu0 %v7346, 16
        %v7438 = vpop.permute.xlu0 %7437
        %7439 = vrot.lane.b32.xlu0 %v7347, 16
        %v7440 = vpop.permute.xlu0 %7439
        %7441 = vrot.lane.b32.xlu0 %v7348, 16
        %v7442 = vpop.permute.xlu0 %7441
        %7443 = vrot.lane.b32.xlu0 %v7349, 16
        %v7444 = vpop.permute.xlu0 %7443
        %7445 = vrot.lane.b32.xlu0 %v7350, 16
        %v7446 = vpop.permute.xlu0 %7445
        %7479 = vst.msk [vmem:[#allocation2] sm:$0xf] %vm826, %v7384
        %7480 = vst.msk [vmem:[#allocation2 + $0x4] sm:$0xf] %vm826, %v7386
        %7481 = vst.msk [vmem:[#allocation2 + $0x8] sm:$0xf] %vm826, %v7388
        %7482 = vst.msk [vmem:[#allocation2 + $0xc] sm:$0xf] %vm826, %v7390
        %7483 = vst.msk [vmem:[#allocation2 + $0x10] sm:$0xf] %vm826, %v7392
        %7484 = vst.msk [vmem:[#allocation2 + $0x14] sm:$0xf] %vm826, %v7394
        %7485 = vst.msk [vmem:[#allocation2 + $0x18] sm:$0xf] %vm826, %v7396
        %7486 = vst.msk [vmem:[#allocation2 + $0x1c] sm:$0xf] %vm826, %v7398
        %7487 = vst.msk [vmem:[#allocation2 + $0x20] sm:$0xf] %vm826, %v7400
        %7488 = vst.msk [vmem:[#allocation2 + $0x24] sm:$0xf] %vm826, %v7402
        %7489 = vst.msk [vmem:[#allocation2 + $0x28] sm:$0xf] %vm826, %v7404
        %7490 = vst.msk [vmem:[#allocation2 + $0x2c] sm:$0xf] %vm826, %v7406
        %7491 = vst.msk [vmem:[#allocation2 + $0x30] sm:$0xf] %vm826, %v7408
        %7492 = vst.msk [vmem:[#allocation2 + $0x34] sm:$0xf] %vm826, %v7410
        %7493 = vst.msk [vmem:[#allocation2 + $0x38] sm:$0xf] %vm826, %v7412
        %7494 = vst.msk [vmem:[#allocation2 + $0x3c] sm:$0xf] %vm826, %v7414
        %7495 = vst.msk [vmem:[#allocation2 + $0x40] sm:$0xf] %vm826, %v7416
        %7496 = vst.msk [vmem:[#allocation2 + $0x44] sm:$0xf] %vm826, %v7418
        %7497 = vst.msk [vmem:[#allocation2 + $0x48] sm:$0xf] %vm826, %v7420
        %7498 = vst.msk [vmem:[#allocation2 + $0x4c] sm:$0xf] %vm826, %v7422
        %7499 = vst.msk [vmem:[#allocation2 + $0x50] sm:$0xf] %vm826, %v7424
        %7500 = vst.msk [vmem:[#allocation2 + $0x54] sm:$0xf] %vm826, %v7426
        %7501 = vst.msk [vmem:[#allocation2 + $0x58] sm:$0xf] %vm826, %v7428
        %7502 = vst.msk [vmem:[#allocation2 + $0x5c] sm:$0xf] %vm826, %v7430
        %7503 = vst.msk [vmem:[#allocation2 + $0x60] sm:$0xf] %vm826, %v7432
        %7504 = vst.msk [vmem:[#allocation2 + $0x64] sm:$0xf] %vm826, %v7434
        %7505 = vst.msk [vmem:[#allocation2 + $0x68] sm:$0xf] %vm826, %v7436
        %7506 = vst.msk [vmem:[#allocation2 + $0x6c] sm:$0xf] %vm826, %v7438
        %7507 = vst.msk [vmem:[#allocation2 + $0x70] sm:$0xf] %vm826, %v7440
        %7508 = vst.msk [vmem:[#allocation2 + $0x74] sm:$0xf] %vm826, %v7442
        %7509 = vst.msk [vmem:[#allocation2 + $0x78] sm:$0xf] %vm826, %v7444
        %7510 = vst.msk [vmem:[#allocation2 + $0x7c] sm:$0xf] %vm826, %v7446
        %v7511 = vld [vmem:[%s7043 + $0x4] sm:$0xc]
        %v7512 = vld [vmem:[%s7043 + $0x8] sm:$0xf]
        %v7513 = vld [vmem:[%s7043 + $0xc] sm:$0x3]
        %v7514 = vld [vmem:[%s7043 + $0x14] sm:$0xc]
        %v7515 = vld [vmem:[%s7043 + $0x18] sm:$0xf]
        %v7516 = vld [vmem:[%s7043 + $0x1c] sm:$0x3]
        %v7517 = vld [vmem:[%s7043 + $0x24] sm:$0xc]
        %v7518 = vld [vmem:[%s7043 + $0x28] sm:$0xf]
        %v7519 = vld [vmem:[%s7043 + $0x2c] sm:$0x3]
        %v7520 = vld [vmem:[%s7043 + $0x34] sm:$0xc]
        %v7521 = vld [vmem:[%s7043 + $0x38] sm:$0xf]
        %v7522 = vld [vmem:[%s7043 + $0x3c] sm:$0x3]
        %v7523 = vld [vmem:[%s7043 + $0x44] sm:$0xc]
        %v7524 = vld [vmem:[%s7043 + $0x48] sm:$0xf]
        %v7525 = vld [vmem:[%s7043 + $0x4c] sm:$0x3]
        %v7526 = vld [vmem:[%s7043 + $0x54] sm:$0xc]
        %v7527 = vld [vmem:[%s7043 + $0x58] sm:$0xf]
        %v7528 = vld [vmem:[%s7043 + $0x5c] sm:$0x3]
        %v7529 = vld [vmem:[%s7043 + $0x64] sm:$0xc]
        %v7530 = vld [vmem:[%s7043 + $0x68] sm:$0xf]
        %v7531 = vld [vmem:[%s7043 + $0x6c] sm:$0x3]
        %v7532 = vld [vmem:[%s7043 + $0x74] sm:$0xc]
        %v7533 = vld [vmem:[%s7043 + $0x78] sm:$0xf]
        %v7534 = vld [vmem:[%s7043 + $0x7c] sm:$0x3]
        %v7535 = vld [vmem:[%s7043 + $0x84] sm:$0xc]
        %v7536 = vld [vmem:[%s7043 + $0x88] sm:$0xf]
        %v7537 = vld [vmem:[%s7043 + $0x8c] sm:$0x3]
        %v7538 = vld [vmem:[%s7043 + $0x94] sm:$0xc]
        %v7539 = vld [vmem:[%s7043 + $0x98] sm:$0xf]
        %v7540 = vld [vmem:[%s7043 + $0x9c] sm:$0x3]
        %v7541 = vld [vmem:[%s7043 + $0xa4] sm:$0xc]
        %v7542 = vld [vmem:[%s7043 + $0xa8] sm:$0xf]
        %v7543 = vld [vmem:[%s7043 + $0xac] sm:$0x3]
        %v7544 = vld [vmem:[%s7043 + $0xb4] sm:$0xc]
        %v7545 = vld [vmem:[%s7043 + $0xb8] sm:$0xf]
        %v7546 = vld [vmem:[%s7043 + $0xbc] sm:$0x3]
        %v7547 = vld [vmem:[%s7043 + $0xc4] sm:$0xc]
        %v7548 = vld [vmem:[%s7043 + $0xc8] sm:$0xf]
        %v7549 = vld [vmem:[%s7043 + $0xcc] sm:$0x3]
        %v7550 = vld [vmem:[%s7043 + $0xd4] sm:$0xc]
        %v7551 = vld [vmem:[%s7043 + $0xd8] sm:$0xf]
        %v7552 = vld [vmem:[%s7043 + $0xdc] sm:$0x3]
        %v7553 = vld [vmem:[%s7043 + $0xe4] sm:$0xc]
        %v7554 = vld [vmem:[%s7043 + $0xe8] sm:$0xf]
        %v7555 = vld [vmem:[%s7043 + $0xec] sm:$0x3]
        %v7556 = vld [vmem:[%s7043 + $0xf4] sm:$0xc]
        %v7557 = vld [vmem:[%s7043 + $0xf8] sm:$0xf]
        %v7558 = vld [vmem:[%s7043 + $0xfc] sm:$0x3]
        %v7607 = vrot.slane %v7511, 6
        %v7608 = vrot.slane %v7607, 4
        %v7609 = vrot.slane %v7512, 6
        %v7610 = vsel %vm7142, %v7608, %v7609
        %v7611 = vrot.slane %v7609, 4
        %v7612 = vrot.slane %v7513, 6
        %v7613 = vsel %vm7142, %v7611, %v7612
        %v7614 = vrot.slane %v7514, 6
        %v7615 = vrot.slane %v7614, 4
        %v7616 = vrot.slane %v7515, 6
        %v7617 = vsel %vm7142, %v7615, %v7616
        %v7618 = vrot.slane %v7616, 4
        %v7619 = vrot.slane %v7516, 6
        %v7620 = vsel %vm7142, %v7618, %v7619
        %v7621 = vrot.slane %v7517, 6
        %v7622 = vrot.slane %v7621, 4
        %v7623 = vrot.slane %v7518, 6
        %v7624 = vsel %vm7142, %v7622, %v7623
        %v7625 = vrot.slane %v7623, 4
        %v7626 = vrot.slane %v7519, 6
        %v7627 = vsel %vm7142, %v7625, %v7626
        %v7628 = vrot.slane %v7520, 6
        %v7629 = vrot.slane %v7628, 4
        %v7630 = vrot.slane %v7521, 6
        %v7631 = vsel %vm7142, %v7629, %v7630
        %v7632 = vrot.slane %v7630, 4
        %v7633 = vrot.slane %v7522, 6
        %v7634 = vsel %vm7142, %v7632, %v7633
        %v7635 = vrot.slane %v7523, 6
        %v7636 = vrot.slane %v7635, 4
        %v7637 = vrot.slane %v7524, 6
        %v7638 = vsel %vm7142, %v7636, %v7637
        %v7639 = vrot.slane %v7637, 4
        %v7640 = vrot.slane %v7525, 6
        %v7641 = vsel %vm7142, %v7639, %v7640
        %v7642 = vrot.slane %v7526, 6
        %v7643 = vrot.slane %v7642, 4
        %v7644 = vrot.slane %v7527, 6
        %v7645 = vsel %vm7142, %v7643, %v7644
        %v7646 = vrot.slane %v7644, 4
        %v7647 = vrot.slane %v7528, 6
        %v7648 = vsel %vm7142, %v7646, %v7647
        %v7649 = vrot.slane %v7529, 6
        %v7650 = vrot.slane %v7649, 4
        %v7651 = vrot.slane %v7530, 6
        %v7652 = vsel %vm7142, %v7650, %v7651
        %v7653 = vrot.slane %v7651, 4
        %v7654 = vrot.slane %v7531, 6
        %v7655 = vsel %vm7142, %v7653, %v7654
        %v7656 = vrot.slane %v7532, 6
        %v7657 = vrot.slane %v7656, 4
        %v7658 = vrot.slane %v7533, 6
        %v7659 = vsel %vm7142, %v7657, %v7658
        %v7660 = vrot.slane %v7658, 4
        %v7661 = vrot.slane %v7534, 6
        %v7662 = vsel %vm7142, %v7660, %v7661
        %v7663 = vrot.slane %v7535, 6
        %v7664 = vrot.slane %v7663, 4
        %v7665 = vrot.slane %v7536, 6
        %v7666 = vsel %vm7142, %v7664, %v7665
        %v7667 = vrot.slane %v7665, 4
        %v7668 = vrot.slane %v7537, 6
        %v7669 = vsel %vm7142, %v7667, %v7668
        %v7670 = vrot.slane %v7538, 6
        %v7671 = vrot.slane %v7670, 4
        %v7672 = vrot.slane %v7539, 6
        %v7673 = vsel %vm7142, %v7671, %v7672
        %v7674 = vrot.slane %v7672, 4
        %v7675 = vrot.slane %v7540, 6
        %v7676 = vsel %vm7142, %v7674, %v7675
        %v7677 = vrot.slane %v7541, 6
        %v7678 = vrot.slane %v7677, 4
        %v7679 = vrot.slane %v7542, 6
        %v7680 = vsel %vm7142, %v7678, %v7679
        %v7681 = vrot.slane %v7679, 4
        %v7682 = vrot.slane %v7543, 6
        %v7683 = vsel %vm7142, %v7681, %v7682
        %v7684 = vrot.slane %v7544, 6
        %v7685 = vrot.slane %v7684, 4
        %v7686 = vrot.slane %v7545, 6
        %v7687 = vsel %vm7142, %v7685, %v7686
        %v7688 = vrot.slane %v7686, 4
        %v7689 = vrot.slane %v7546, 6
        %v7690 = vsel %vm7142, %v7688, %v7689
        %v7691 = vrot.slane %v7547, 6
        %v7692 = vrot.slane %v7691, 4
        %v7693 = vrot.slane %v7548, 6
        %v7694 = vsel %vm7142, %v7692, %v7693
        %v7695 = vrot.slane %v7693, 4
        %v7696 = vrot.slane %v7549, 6
        %v7697 = vsel %vm7142, %v7695, %v7696
        %v7698 = vrot.slane %v7550, 6
        %v7699 = vrot.slane %v7698, 4
        %v7700 = vrot.slane %v7551, 6
        %v7701 = vsel %vm7142, %v7699, %v7700
        %v7702 = vrot.slane %v7700, 4
        %v7703 = vrot.slane %v7552, 6
        %v7704 = vsel %vm7142, %v7702, %v7703
        %v7705 = vrot.slane %v7553, 6
        %v7706 = vrot.slane %v7705, 4
        %v7707 = vrot.slane %v7554, 6
        %v7708 = vsel %vm7142, %v7706, %v7707
        %v7709 = vrot.slane %v7707, 4
        %v7710 = vrot.slane %v7555, 6
        %v7711 = vsel %vm7142, %v7709, %v7710
        %v7712 = vrot.slane %v7556, 6
        %v7713 = vrot.slane %v7712, 4
        %v7714 = vrot.slane %v7557, 6
        %v7715 = vsel %vm7142, %v7713, %v7714
        %v7716 = vrot.slane %v7714, 4
        %v7717 = vrot.slane %v7558, 6
        %v7718 = vsel %vm7142, %v7716, %v7717
        %7719 = vrot.lane.b32.xlu0 %v7610, 32
        %v7720 = vpop.permute.xlu0 %7719
        %7721 = vrot.lane.b32.xlu0 %v7613, 32
        %v7722 = vpop.permute.xlu0 %7721
        %7723 = vrot.lane.b32.xlu0 %v7617, 32
        %v7724 = vpop.permute.xlu0 %7723
        %7725 = vrot.lane.b32.xlu0 %v7620, 32
        %v7726 = vpop.permute.xlu0 %7725
        %7727 = vrot.lane.b32.xlu0 %v7624, 32
        %v7728 = vpop.permute.xlu0 %7727
        %7729 = vrot.lane.b32.xlu0 %v7627, 32
        %v7730 = vpop.permute.xlu0 %7729
        %7731 = vrot.lane.b32.xlu0 %v7631, 32
        %v7732 = vpop.permute.xlu0 %7731
        %7733 = vrot.lane.b32.xlu0 %v7634, 32
        %v7734 = vpop.permute.xlu0 %7733
        %7735 = vrot.lane.b32.xlu0 %v7638, 32
        %v7736 = vpop.permute.xlu0 %7735
        %7737 = vrot.lane.b32.xlu0 %v7641, 32
        %v7738 = vpop.permute.xlu0 %7737
        %7739 = vrot.lane.b32.xlu0 %v7645, 32
        %v7740 = vpop.permute.xlu0 %7739
        %7741 = vrot.lane.b32.xlu0 %v7648, 32
        %v7742 = vpop.permute.xlu0 %7741
        %7743 = vrot.lane.b32.xlu0 %v7652, 32
        %v7744 = vpop.permute.xlu0 %7743
        %7745 = vrot.lane.b32.xlu0 %v7655, 32
        %v7746 = vpop.permute.xlu0 %7745
        %7747 = vrot.lane.b32.xlu0 %v7659, 32
        %v7748 = vpop.permute.xlu0 %7747
        %7749 = vrot.lane.b32.xlu0 %v7662, 32
        %v7750 = vpop.permute.xlu0 %7749
        %7751 = vrot.lane.b32.xlu0 %v7666, 32
        %v7752 = vpop.permute.xlu0 %7751
        %7753 = vrot.lane.b32.xlu0 %v7669, 32
        %v7754 = vpop.permute.xlu0 %7753
        %7755 = vrot.lane.b32.xlu0 %v7673, 32
        %v7756 = vpop.permute.xlu0 %7755
        %7757 = vrot.lane.b32.xlu0 %v7676, 32
        %v7758 = vpop.permute.xlu0 %7757
        %7759 = vrot.lane.b32.xlu0 %v7680, 32
        %v7760 = vpop.permute.xlu0 %7759
        %7761 = vrot.lane.b32.xlu0 %v7683, 32
        %v7762 = vpop.permute.xlu0 %7761
        %7763 = vrot.lane.b32.xlu0 %v7687, 32
        %v7764 = vpop.permute.xlu0 %7763
        %7765 = vrot.lane.b32.xlu0 %v7690, 32
        %v7766 = vpop.permute.xlu0 %7765
        %7767 = vrot.lane.b32.xlu0 %v7694, 32
        %v7768 = vpop.permute.xlu0 %7767
        %7769 = vrot.lane.b32.xlu0 %v7697, 32
        %v7770 = vpop.permute.xlu0 %7769
        %7771 = vrot.lane.b32.xlu0 %v7701, 32
        %v7772 = vpop.permute.xlu0 %7771
        %7773 = vrot.lane.b32.xlu0 %v7704, 32
        %v7774 = vpop.permute.xlu0 %7773
        %7775 = vrot.lane.b32.xlu0 %v7708, 32
        %v7776 = vpop.permute.xlu0 %7775
        %7777 = vrot.lane.b32.xlu0 %v7711, 32
        %v7778 = vpop.permute.xlu0 %7777
        %7779 = vrot.lane.b32.xlu0 %v7715, 32
        %v7780 = vpop.permute.xlu0 %7779
        %7781 = vrot.lane.b32.xlu0 %v7718, 32
        %v7782 = vpop.permute.xlu0 %7781
        %7815 = vst.msk [vmem:[#allocation2] sm:$0xf] %vm1390, %v7720
        %7816 = vst.msk [vmem:[#allocation2 + $0x4] sm:$0xf] %vm1390, %v7722
        %7817 = vst.msk [vmem:[#allocation2 + $0x8] sm:$0xf] %vm1390, %v7724
        %7818 = vst.msk [vmem:[#allocation2 + $0xc] sm:$0xf] %vm1390, %v7726
        %7819 = vst.msk [vmem:[#allocation2 + $0x10] sm:$0xf] %vm1390, %v7728
        %7820 = vst.msk [vmem:[#allocation2 + $0x14] sm:$0xf] %vm1390, %v7730
        %7821 = vst.msk [vmem:[#allocation2 + $0x18] sm:$0xf] %vm1390, %v7732
        %7822 = vst.msk [vmem:[#allocation2 + $0x1c] sm:$0xf] %vm1390, %v7734
        %7823 = vst.msk [vmem:[#allocation2 + $0x20] sm:$0xf] %vm1390, %v7736
        %7824 = vst.msk [vmem:[#allocation2 + $0x24] sm:$0xf] %vm1390, %v7738
        %7825 = vst.msk [vmem:[#allocation2 + $0x28] sm:$0xf] %vm1390, %v7740
        %7826 = vst.msk [vmem:[#allocation2 + $0x2c] sm:$0xf] %vm1390, %v7742
        %7827 = vst.msk [vmem:[#allocation2 + $0x30] sm:$0xf] %vm1390, %v7744
        %7828 = vst.msk [vmem:[#allocation2 + $0x34] sm:$0xf] %vm1390, %v7746
        %7829 = vst.msk [vmem:[#allocation2 + $0x38] sm:$0xf] %vm1390, %v7748
        %7830 = vst.msk [vmem:[#allocation2 + $0x3c] sm:$0xf] %vm1390, %v7750
        %7831 = vst.msk [vmem:[#allocation2 + $0x40] sm:$0xf] %vm1390, %v7752
        %7832 = vst.msk [vmem:[#allocation2 + $0x44] sm:$0xf] %vm1390, %v7754
        %7833 = vst.msk [vmem:[#allocation2 + $0x48] sm:$0xf] %vm1390, %v7756
        %7834 = vst.msk [vmem:[#allocation2 + $0x4c] sm:$0xf] %vm1390, %v7758
        %7835 = vst.msk [vmem:[#allocation2 + $0x50] sm:$0xf] %vm1390, %v7760
        %7836 = vst.msk [vmem:[#allocation2 + $0x54] sm:$0xf] %vm1390, %v7762
        %7837 = vst.msk [vmem:[#allocation2 + $0x58] sm:$0xf] %vm1390, %v7764
        %7838 = vst.msk [vmem:[#allocation2 + $0x5c] sm:$0xf] %vm1390, %v7766
        %7839 = vst.msk [vmem:[#allocation2 + $0x60] sm:$0xf] %vm1390, %v7768
        %7840 = vst.msk [vmem:[#allocation2 + $0x64] sm:$0xf] %vm1390, %v7770
        %7841 = vst.msk [vmem:[#allocation2 + $0x68] sm:$0xf] %vm1390, %v7772
        %7842 = vst.msk [vmem:[#allocation2 + $0x6c] sm:$0xf] %vm1390, %v7774
        %7843 = vst.msk [vmem:[#allocation2 + $0x70] sm:$0xf] %vm1390, %v7776
        %7844 = vst.msk [vmem:[#allocation2 + $0x74] sm:$0xf] %vm1390, %v7778
        %7845 = vst.msk [vmem:[#allocation2 + $0x78] sm:$0xf] %vm1390, %v7780
        %7846 = vst.msk [vmem:[#allocation2 + $0x7c] sm:$0xf] %vm1390, %v7782
        %v7847 = vld [vmem:[%s1423] sm:$0xc]
        %v7848 = vld [vmem:[%s1423 + $0x4] sm:$0xf]
        %v7849 = vld [vmem:[%s1423 + $0x8] sm:$0x3]
        %v7850 = vld [vmem:[%s1423 + $0x10] sm:$0xc]
        %v7851 = vld [vmem:[%s1423 + $0x14] sm:$0xf]
        %v7852 = vld [vmem:[%s1423 + $0x18] sm:$0x3]
        %v7853 = vld [vmem:[%s1423 + $0x20] sm:$0xc]
        %v7854 = vld [vmem:[%s1423 + $0x24] sm:$0xf]
        %v7855 = vld [vmem:[%s1423 + $0x28] sm:$0x3]
        %v7856 = vld [vmem:[%s1423 + $0x30] sm:$0xc]
        %v7857 = vld [vmem:[%s1423 + $0x34] sm:$0xf]
        %v7858 = vld [vmem:[%s1423 + $0x38] sm:$0x3]
        %v7859 = vld [vmem:[%s1423 + $0x40] sm:$0xc]
        %v7860 = vld [vmem:[%s1423 + $0x44] sm:$0xf]
        %v7861 = vld [vmem:[%s1423 + $0x48] sm:$0x3]
        %v7862 = vld [vmem:[%s1423 + $0x50] sm:$0xc]
        %v7863 = vld [vmem:[%s1423 + $0x54] sm:$0xf]
        %v7864 = vld [vmem:[%s1423 + $0x58] sm:$0x3]
        %v7865 = vld [vmem:[%s1423 + $0x60] sm:$0xc]
        %v7866 = vld [vmem:[%s1423 + $0x64] sm:$0xf]
        %v7867 = vld [vmem:[%s1423 + $0x68] sm:$0x3]
        %v7868 = vld [vmem:[%s1423 + $0x70] sm:$0xc]
        %v7869 = vld [vmem:[%s1423 + $0x74] sm:$0xf]
        %v7870 = vld [vmem:[%s1423 + $0x78] sm:$0x3]
        %v7871 = vld [vmem:[%s1423 + $0x80] sm:$0xc]
        %v7872 = vld [vmem:[%s1423 + $0x84] sm:$0xf]
        %v7873 = vld [vmem:[%s1423 + $0x88] sm:$0x3]
        %v7874 = vld [vmem:[%s1423 + $0x90] sm:$0xc]
        %v7875 = vld [vmem:[%s1423 + $0x94] sm:$0xf]
        %v7876 = vld [vmem:[%s1423 + $0x98] sm:$0x3]
        %v7877 = vld [vmem:[%s1423 + $0xa0] sm:$0xc]
        %v7878 = vld [vmem:[%s1423 + $0xa4] sm:$0xf]
        %v7879 = vld [vmem:[%s1423 + $0xa8] sm:$0x3]
        %v7880 = vld [vmem:[%s1423 + $0xb0] sm:$0xc]
        %v7881 = vld [vmem:[%s1423 + $0xb4] sm:$0xf]
        %v7882 = vld [vmem:[%s1423 + $0xb8] sm:$0x3]
        %v7883 = vld [vmem:[%s1423 + $0xc0] sm:$0xc]
        %v7884 = vld [vmem:[%s1423 + $0xc4] sm:$0xf]
        %v7885 = vld [vmem:[%s1423 + $0xc8] sm:$0x3]
        %v7886 = vld [vmem:[%s1423 + $0xd0] sm:$0xc]
        %v7887 = vld [vmem:[%s1423 + $0xd4] sm:$0xf]
        %v7888 = vld [vmem:[%s1423 + $0xd8] sm:$0x3]
        %v7889 = vld [vmem:[%s1423 + $0xe0] sm:$0xc]
        %v7890 = vld [vmem:[%s1423 + $0xe4] sm:$0xf]
        %v7891 = vld [vmem:[%s1423 + $0xe8] sm:$0x3]
        %v7892 = vld [vmem:[%s1423 + $0xf0] sm:$0xc]
        %v7893 = vld [vmem:[%s1423 + $0xf4] sm:$0xf]
        %v7894 = vld [vmem:[%s1423 + $0xf8] sm:$0x3]
        %v7943 = vrot.slane %v7847, 6
        %v7944 = vrot.slane %v7943, 4
        %v7945 = vrot.slane %v7848, 6
        %v7946 = vsel %vm7142, %v7944, %v7945
        %v7947 = vrot.slane %v7945, 4
        %v7948 = vrot.slane %v7849, 6
        %v7949 = vsel %vm7142, %v7947, %v7948
        %v7950 = vrot.slane %v7850, 6
        %v7951 = vrot.slane %v7950, 4
        %v7952 = vrot.slane %v7851, 6
        %v7953 = vsel %vm7142, %v7951, %v7952
        %v7954 = vrot.slane %v7952, 4
        %v7955 = vrot.slane %v7852, 6
        %v7956 = vsel %vm7142, %v7954, %v7955
        %v7957 = vrot.slane %v7853, 6
        %v7958 = vrot.slane %v7957, 4
        %v7959 = vrot.slane %v7854, 6
        %v7960 = vsel %vm7142, %v7958, %v7959
        %v7961 = vrot.slane %v7959, 4
        %v7962 = vrot.slane %v7855, 6
        %v7963 = vsel %vm7142, %v7961, %v7962
        %v7964 = vrot.slane %v7856, 6
        %v7965 = vrot.slane %v7964, 4
        %v7966 = vrot.slane %v7857, 6
        %v7967 = vsel %vm7142, %v7965, %v7966
        %v7968 = vrot.slane %v7966, 4
        %v7969 = vrot.slane %v7858, 6
        %v7970 = vsel %vm7142, %v7968, %v7969
        %v7971 = vrot.slane %v7859, 6
        %v7972 = vrot.slane %v7971, 4
        %v7973 = vrot.slane %v7860, 6
        %v7974 = vsel %vm7142, %v7972, %v7973
        %v7975 = vrot.slane %v7973, 4
        %v7976 = vrot.slane %v7861, 6
        %v7977 = vsel %vm7142, %v7975, %v7976
        %v7978 = vrot.slane %v7862, 6
        %v7979 = vrot.slane %v7978, 4
        %v7980 = vrot.slane %v7863, 6
        %v7981 = vsel %vm7142, %v7979, %v7980
        %v7982 = vrot.slane %v7980, 4
        %v7983 = vrot.slane %v7864, 6
        %v7984 = vsel %vm7142, %v7982, %v7983
        %v7985 = vrot.slane %v7865, 6
        %v7986 = vrot.slane %v7985, 4
        %v7987 = vrot.slane %v7866, 6
        %v7988 = vsel %vm7142, %v7986, %v7987
        %v7989 = vrot.slane %v7987, 4
        %v7990 = vrot.slane %v7867, 6
        %v7991 = vsel %vm7142, %v7989, %v7990
        %v7992 = vrot.slane %v7868, 6
        %v7993 = vrot.slane %v7992, 4
        %v7994 = vrot.slane %v7869, 6
        %v7995 = vsel %vm7142, %v7993, %v7994
        %v7996 = vrot.slane %v7994, 4
        %v7997 = vrot.slane %v7870, 6
        %v7998 = vsel %vm7142, %v7996, %v7997
        %v7999 = vrot.slane %v7871, 6
        %v8000 = vrot.slane %v7999, 4
        %v8001 = vrot.slane %v7872, 6
        %v8002 = vsel %vm7142, %v8000, %v8001
        %v8003 = vrot.slane %v8001, 4
        %v8004 = vrot.slane %v7873, 6
        %v8005 = vsel %vm7142, %v8003, %v8004
        %v8006 = vrot.slane %v7874, 6
        %v8007 = vrot.slane %v8006, 4
        %v8008 = vrot.slane %v7875, 6
        %v8009 = vsel %vm7142, %v8007, %v8008
        %v8010 = vrot.slane %v8008, 4
        %v8011 = vrot.slane %v7876, 6
        %v8012 = vsel %vm7142, %v8010, %v8011
        %v8013 = vrot.slane %v7877, 6
        %v8014 = vrot.slane %v8013, 4
        %v8015 = vrot.slane %v7878, 6
        %v8016 = vsel %vm7142, %v8014, %v8015
        %v8017 = vrot.slane %v8015, 4
        %v8018 = vrot.slane %v7879, 6
        %v8019 = vsel %vm7142, %v8017, %v8018
        %v8020 = vrot.slane %v7880, 6
        %v8021 = vrot.slane %v8020, 4
        %v8022 = vrot.slane %v7881, 6
        %v8023 = vsel %vm7142, %v8021, %v8022
        %v8024 = vrot.slane %v8022, 4
        %v8025 = vrot.slane %v7882, 6
        %v8026 = vsel %vm7142, %v8024, %v8025
        %v8027 = vrot.slane %v7883, 6
        %v8028 = vrot.slane %v8027, 4
        %v8029 = vrot.slane %v7884, 6
        %v8030 = vsel %vm7142, %v8028, %v8029
        %v8031 = vrot.slane %v8029, 4
        %v8032 = vrot.slane %v7885, 6
        %v8033 = vsel %vm7142, %v8031, %v8032
        %v8034 = vrot.slane %v7886, 6
        %v8035 = vrot.slane %v8034, 4
        %v8036 = vrot.slane %v7887, 6
        %v8037 = vsel %vm7142, %v8035, %v8036
        %v8038 = vrot.slane %v8036, 4
        %v8039 = vrot.slane %v7888, 6
        %v8040 = vsel %vm7142, %v8038, %v8039
        %v8041 = vrot.slane %v7889, 6
        %v8042 = vrot.slane %v8041, 4
        %v8043 = vrot.slane %v7890, 6
        %v8044 = vsel %vm7142, %v8042, %v8043
        %v8045 = vrot.slane %v8043, 4
        %v8046 = vrot.slane %v7891, 6
        %v8047 = vsel %vm7142, %v8045, %v8046
        %v8048 = vrot.slane %v7892, 6
        %v8049 = vrot.slane %v8048, 4
        %v8050 = vrot.slane %v7893, 6
        %v8051 = vsel %vm7142, %v8049, %v8050
        %v8052 = vrot.slane %v8050, 4
        %v8053 = vrot.slane %v7894, 6
        %v8054 = vsel %vm7142, %v8052, %v8053
        %8055 = vrot.lane.b32.xlu0 %v7946, 48
        %v8056 = vpop.permute.xlu0 %8055
        %8057 = vrot.lane.b32.xlu0 %v7949, 48
        %v8058 = vpop.permute.xlu0 %8057
        %8059 = vrot.lane.b32.xlu0 %v7953, 48
        %v8060 = vpop.permute.xlu0 %8059
        %8061 = vrot.lane.b32.xlu0 %v7956, 48
        %v8062 = vpop.permute.xlu0 %8061
        %8063 = vrot.lane.b32.xlu0 %v7960, 48
        %v8064 = vpop.permute.xlu0 %8063
        %8065 = vrot.lane.b32.xlu0 %v7963, 48
        %v8066 = vpop.permute.xlu0 %8065
        %8067 = vrot.lane.b32.xlu0 %v7967, 48
        %v8068 = vpop.permute.xlu0 %8067
        %8069 = vrot.lane.b32.xlu0 %v7970, 48
        %v8070 = vpop.permute.xlu0 %8069
        %8071 = vrot.lane.b32.xlu0 %v7974, 48
        %v8072 = vpop.permute.xlu0 %8071
        %8073 = vrot.lane.b32.xlu0 %v7977, 48
        %v8074 = vpop.permute.xlu0 %8073
        %8075 = vrot.lane.b32.xlu0 %v7981, 48
        %v8076 = vpop.permute.xlu0 %8075
        %8077 = vrot.lane.b32.xlu0 %v7984, 48
        %v8078 = vpop.permute.xlu0 %8077
        %8079 = vrot.lane.b32.xlu0 %v7988, 48
        %v8080 = vpop.permute.xlu0 %8079
        %8081 = vrot.lane.b32.xlu0 %v7991, 48
        %v8082 = vpop.permute.xlu0 %8081
        %8083 = vrot.lane.b32.xlu0 %v7995, 48
        %v8084 = vpop.permute.xlu0 %8083
        %8085 = vrot.lane.b32.xlu0 %v7998, 48
        %v8086 = vpop.permute.xlu0 %8085
        %8087 = vrot.lane.b32.xlu0 %v8002, 48
        %v8088 = vpop.permute.xlu0 %8087
        %8089 = vrot.lane.b32.xlu0 %v8005, 48
        %v8090 = vpop.permute.xlu0 %8089
        %8091 = vrot.lane.b32.xlu0 %v8009, 48
        %v8092 = vpop.permute.xlu0 %8091
        %8093 = vrot.lane.b32.xlu0 %v8012, 48
        %v8094 = vpop.permute.xlu0 %8093
        %8095 = vrot.lane.b32.xlu0 %v8016, 48
        %v8096 = vpop.permute.xlu0 %8095
        %8097 = vrot.lane.b32.xlu0 %v8019, 48
        %v8098 = vpop.permute.xlu0 %8097
        %8099 = vrot.lane.b32.xlu0 %v8023, 48
        %v8100 = vpop.permute.xlu0 %8099
        %8101 = vrot.lane.b32.xlu0 %v8026, 48
        %v8102 = vpop.permute.xlu0 %8101
        %8103 = vrot.lane.b32.xlu0 %v8030, 48
        %v8104 = vpop.permute.xlu0 %8103
        %8105 = vrot.lane.b32.xlu0 %v8033, 48
        %v8106 = vpop.permute.xlu0 %8105
        %8107 = vrot.lane.b32.xlu0 %v8037, 48
        %v8108 = vpop.permute.xlu0 %8107
        %8109 = vrot.lane.b32.xlu0 %v8040, 48
        %v8110 = vpop.permute.xlu0 %8109
        %8111 = vrot.lane.b32.xlu0 %v8044, 48
        %v8112 = vpop.permute.xlu0 %8111
        %8113 = vrot.lane.b32.xlu0 %v8047, 48
        %v8114 = vpop.permute.xlu0 %8113
        %8115 = vrot.lane.b32.xlu0 %v8051, 48
        %v8116 = vpop.permute.xlu0 %8115
        %8117 = vrot.lane.b32.xlu0 %v8054, 48
        %v8118 = vpop.permute.xlu0 %8117
        %8151 = vst.msk [vmem:[#allocation2] sm:$0xf] %vm1920, %v8056
        %8152 = vst.msk [vmem:[#allocation2 + $0x4] sm:$0xf] %vm1920, %v8058
        %8153 = vst.msk [vmem:[#allocation2 + $0x8] sm:$0xf] %vm1920, %v8060
        %8154 = vst.msk [vmem:[#allocation2 + $0xc] sm:$0xf] %vm1920, %v8062
        %8155 = vst.msk [vmem:[#allocation2 + $0x10] sm:$0xf] %vm1920, %v8064
        %8156 = vst.msk [vmem:[#allocation2 + $0x14] sm:$0xf] %vm1920, %v8066
        %8157 = vst.msk [vmem:[#allocation2 + $0x18] sm:$0xf] %vm1920, %v8068
        %8158 = vst.msk [vmem:[#allocation2 + $0x1c] sm:$0xf] %vm1920, %v8070
        %8159 = vst.msk [vmem:[#allocation2 + $0x20] sm:$0xf] %vm1920, %v8072
        %8160 = vst.msk [vmem:[#allocation2 + $0x24] sm:$0xf] %vm1920, %v8074
        %8161 = vst.msk [vmem:[#allocation2 + $0x28] sm:$0xf] %vm1920, %v8076
        %8162 = vst.msk [vmem:[#allocation2 + $0x2c] sm:$0xf] %vm1920, %v8078
        %8163 = vst.msk [vmem:[#allocation2 + $0x30] sm:$0xf] %vm1920, %v8080
        %8164 = vst.msk [vmem:[#allocation2 + $0x34] sm:$0xf] %vm1920, %v8082
        %8165 = vst.msk [vmem:[#allocation2 + $0x38] sm:$0xf] %vm1920, %v8084
        %8166 = vst.msk [vmem:[#allocation2 + $0x3c] sm:$0xf] %vm1920, %v8086
        %8167 = vst.msk [vmem:[#allocation2 + $0x40] sm:$0xf] %vm1920, %v8088
        %8168 = vst.msk [vmem:[#allocation2 + $0x44] sm:$0xf] %vm1920, %v8090
        %8169 = vst.msk [vmem:[#allocation2 + $0x48] sm:$0xf] %vm1920, %v8092
        %8170 = vst.msk [vmem:[#allocation2 + $0x4c] sm:$0xf] %vm1920, %v8094
        %8171 = vst.msk [vmem:[#allocation2 + $0x50] sm:$0xf] %vm1920, %v8096
        %8172 = vst.msk [vmem:[#allocation2 + $0x54] sm:$0xf] %vm1920, %v8098
        %8173 = vst.msk [vmem:[#allocation2 + $0x58] sm:$0xf] %vm1920, %v8100
        %8174 = vst.msk [vmem:[#allocation2 + $0x5c] sm:$0xf] %vm1920, %v8102
        %8175 = vst.msk [vmem:[#allocation2 + $0x60] sm:$0xf] %vm1920, %v8104
        %8176 = vst.msk [vmem:[#allocation2 + $0x64] sm:$0xf] %vm1920, %v8106
        %8177 = vst.msk [vmem:[#allocation2 + $0x68] sm:$0xf] %vm1920, %v8108
        %8178 = vst.msk [vmem:[#allocation2 + $0x6c] sm:$0xf] %vm1920, %v8110
        %8179 = vst.msk [vmem:[#allocation2 + $0x70] sm:$0xf] %vm1920, %v8112
        %8180 = vst.msk [vmem:[#allocation2 + $0x74] sm:$0xf] %vm1920, %v8114
        %8181 = vst.msk [vmem:[#allocation2 + $0x78] sm:$0xf] %vm1920, %v8116
        %8182 = vst.msk [vmem:[#allocation2 + $0x7c] sm:$0xf] %vm1920, %v8118
        %v8183 = vld [vmem:[%s1423 + $0x4] sm:$0xc]
        %v8184 = vld [vmem:[%s1423 + $0x8] sm:$0xf]
        %v8185 = vld [vmem:[%s1423 + $0xc] sm:$0x3]
        %v8186 = vld [vmem:[%s1423 + $0x14] sm:$0xc]
        %v8187 = vld [vmem:[%s1423 + $0x18] sm:$0xf]
        %v8188 = vld [vmem:[%s1423 + $0x1c] sm:$0x3]
        %v8189 = vld [vmem:[%s1423 + $0x24] sm:$0xc]
        %v8190 = vld [vmem:[%s1423 + $0x28] sm:$0xf]
        %v8191 = vld [vmem:[%s1423 + $0x2c] sm:$0x3]
        %v8192 = vld [vmem:[%s1423 + $0x34] sm:$0xc]
        %v8193 = vld [vmem:[%s1423 + $0x38] sm:$0xf]
        %v8194 = vld [vmem:[%s1423 + $0x3c] sm:$0x3]
        %v8195 = vld [vmem:[%s1423 + $0x44] sm:$0xc]
        %v8196 = vld [vmem:[%s1423 + $0x48] sm:$0xf]
        %v8197 = vld [vmem:[%s1423 + $0x4c] sm:$0x3]
        %v8198 = vld [vmem:[%s1423 + $0x54] sm:$0xc]
        %v8199 = vld [vmem:[%s1423 + $0x58] sm:$0xf]
        %v8200 = vld [vmem:[%s1423 + $0x5c] sm:$0x3]
        %v8201 = vld [vmem:[%s1423 + $0x64] sm:$0xc]
        %v8202 = vld [vmem:[%s1423 + $0x68] sm:$0xf]
        %v8203 = vld [vmem:[%s1423 + $0x6c] sm:$0x3]
        %v8204 = vld [vmem:[%s1423 + $0x74] sm:$0xc]
        %v8205 = vld [vmem:[%s1423 + $0x78] sm:$0xf]
        %v8206 = vld [vmem:[%s1423 + $0x7c] sm:$0x3]
        %v8207 = vld [vmem:[%s1423 + $0x84] sm:$0xc]
        %v8208 = vld [vmem:[%s1423 + $0x88] sm:$0xf]
        %v8209 = vld [vmem:[%s1423 + $0x8c] sm:$0x3]
        %v8210 = vld [vmem:[%s1423 + $0x94] sm:$0xc]
        %v8211 = vld [vmem:[%s1423 + $0x98] sm:$0xf]
        %v8212 = vld [vmem:[%s1423 + $0x9c] sm:$0x3]
        %v8213 = vld [vmem:[%s1423 + $0xa4] sm:$0xc]
        %v8214 = vld [vmem:[%s1423 + $0xa8] sm:$0xf]
        %v8215 = vld [vmem:[%s1423 + $0xac] sm:$0x3]
        %v8216 = vld [vmem:[%s1423 + $0xb4] sm:$0xc]
        %v8217 = vld [vmem:[%s1423 + $0xb8] sm:$0xf]
        %v8218 = vld [vmem:[%s1423 + $0xbc] sm:$0x3]
        %v8219 = vld [vmem:[%s1423 + $0xc4] sm:$0xc]
        %v8220 = vld [vmem:[%s1423 + $0xc8] sm:$0xf]
        %v8221 = vld [vmem:[%s1423 + $0xcc] sm:$0x3]
        %v8222 = vld [vmem:[%s1423 + $0xd4] sm:$0xc]
        %v8223 = vld [vmem:[%s1423 + $0xd8] sm:$0xf]
        %v8224 = vld [vmem:[%s1423 + $0xdc] sm:$0x3]
        %v8225 = vld [vmem:[%s1423 + $0xe4] sm:$0xc]
        %v8226 = vld [vmem:[%s1423 + $0xe8] sm:$0xf]
        %v8227 = vld [vmem:[%s1423 + $0xec] sm:$0x3]
        %v8228 = vld [vmem:[%s1423 + $0xf4] sm:$0xc]
        %v8229 = vld [vmem:[%s1423 + $0xf8] sm:$0xf]
        %v8230 = vld [vmem:[%s1423 + $0xfc] sm:$0x3]
        %v8279 = vrot.slane %v8183, 6
        %v8280 = vrot.slane %v8279, 4
        %v8281 = vrot.slane %v8184, 6
        %v8282 = vsel %vm7142, %v8280, %v8281
        %v8283 = vrot.slane %v8281, 4
        %v8284 = vrot.slane %v8185, 6
        %v8285 = vsel %vm7142, %v8283, %v8284
        %v8286 = vrot.slane %v8186, 6
        %v8287 = vrot.slane %v8286, 4
        %v8288 = vrot.slane %v8187, 6
        %v8289 = vsel %vm7142, %v8287, %v8288
        %v8290 = vrot.slane %v8288, 4
        %v8291 = vrot.slane %v8188, 6
        %v8292 = vsel %vm7142, %v8290, %v8291
        %v8293 = vrot.slane %v8189, 6
        %v8294 = vrot.slane %v8293, 4
        %v8295 = vrot.slane %v8190, 6
        %v8296 = vsel %vm7142, %v8294, %v8295
        %v8297 = vrot.slane %v8295, 4
        %v8298 = vrot.slane %v8191, 6
        %v8299 = vsel %vm7142, %v8297, %v8298
        %v8300 = vrot.slane %v8192, 6
        %v8301 = vrot.slane %v8300, 4
        %v8302 = vrot.slane %v8193, 6
        %v8303 = vsel %vm7142, %v8301, %v8302
        %v8304 = vrot.slane %v8302, 4
        %v8305 = vrot.slane %v8194, 6
        %v8306 = vsel %vm7142, %v8304, %v8305
        %v8307 = vrot.slane %v8195, 6
        %v8308 = vrot.slane %v8307, 4
        %v8309 = vrot.slane %v8196, 6
        %v8310 = vsel %vm7142, %v8308, %v8309
        %v8311 = vrot.slane %v8309, 4
        %v8312 = vrot.slane %v8197, 6
        %v8313 = vsel %vm7142, %v8311, %v8312
        %v8314 = vrot.slane %v8198, 6
        %v8315 = vrot.slane %v8314, 4
        %v8316 = vrot.slane %v8199, 6
        %v8317 = vsel %vm7142, %v8315, %v8316
        %v8318 = vrot.slane %v8316, 4
        %v8319 = vrot.slane %v8200, 6
        %v8320 = vsel %vm7142, %v8318, %v8319
        %v8321 = vrot.slane %v8201, 6
        %v8322 = vrot.slane %v8321, 4
        %v8323 = vrot.slane %v8202, 6
        %v8324 = vsel %vm7142, %v8322, %v8323
        %v8325 = vrot.slane %v8323, 4
        %v8326 = vrot.slane %v8203, 6
        %v8327 = vsel %vm7142, %v8325, %v8326
        %v8328 = vrot.slane %v8204, 6
        %v8329 = vrot.slane %v8328, 4
        %v8330 = vrot.slane %v8205, 6
        %v8331 = vsel %vm7142, %v8329, %v8330
        %v8332 = vrot.slane %v8330, 4
        %v8333 = vrot.slane %v8206, 6
        %v8334 = vsel %vm7142, %v8332, %v8333
        %v8335 = vrot.slane %v8207, 6
        %v8336 = vrot.slane %v8335, 4
        %v8337 = vrot.slane %v8208, 6
        %v8338 = vsel %vm7142, %v8336, %v8337
        %v8339 = vrot.slane %v8337, 4
        %v8340 = vrot.slane %v8209, 6
        %v8341 = vsel %vm7142, %v8339, %v8340
        %v8342 = vrot.slane %v8210, 6
        %v8343 = vrot.slane %v8342, 4
        %v8344 = vrot.slane %v8211, 6
        %v8345 = vsel %vm7142, %v8343, %v8344
        %v8346 = vrot.slane %v8344, 4
        %v8347 = vrot.slane %v8212, 6
        %v8348 = vsel %vm7142, %v8346, %v8347
        %v8349 = vrot.slane %v8213, 6
        %v8350 = vrot.slane %v8349, 4
        %v8351 = vrot.slane %v8214, 6
        %v8352 = vsel %vm7142, %v8350, %v8351
        %v8353 = vrot.slane %v8351, 4
        %v8354 = vrot.slane %v8215, 6
        %v8355 = vsel %vm7142, %v8353, %v8354
        %v8356 = vrot.slane %v8216, 6
        %v8357 = vrot.slane %v8356, 4
        %v8358 = vrot.slane %v8217, 6
        %v8359 = vsel %vm7142, %v8357, %v8358
        %v8360 = vrot.slane %v8358, 4
        %v8361 = vrot.slane %v8218, 6
        %v8362 = vsel %vm7142, %v8360, %v8361
        %v8363 = vrot.slane %v8219, 6
        %v8364 = vrot.slane %v8363, 4
        %v8365 = vrot.slane %v8220, 6
        %v8366 = vsel %vm7142, %v8364, %v8365
        %v8367 = vrot.slane %v8365, 4
        %v8368 = vrot.slane %v8221, 6
        %v8369 = vsel %vm7142, %v8367, %v8368
        %v8370 = vrot.slane %v8222, 6
        %v8371 = vrot.slane %v8370, 4
        %v8372 = vrot.slane %v8223, 6
        %v8373 = vsel %vm7142, %v8371, %v8372
        %v8374 = vrot.slane %v8372, 4
        %v8375 = vrot.slane %v8224, 6
        %v8376 = vsel %vm7142, %v8374, %v8375
        %v8377 = vrot.slane %v8225, 6
        %v8378 = vrot.slane %v8377, 4
        %v8379 = vrot.slane %v8226, 6
        %v8380 = vsel %vm7142, %v8378, %v8379
        %v8381 = vrot.slane %v8379, 4
        %v8382 = vrot.slane %v8227, 6
        %v8383 = vsel %vm7142, %v8381, %v8382
        %v8384 = vrot.slane %v8228, 6
        %v8385 = vrot.slane %v8384, 4
        %v8386 = vrot.slane %v8229, 6
        %v8387 = vsel %vm7142, %v8385, %v8386
        %v8388 = vrot.slane %v8386, 4
        %v8389 = vrot.slane %v8230, 6
        %v8390 = vsel %vm7142, %v8388, %v8389
        %8391 = vrot.lane.b32.xlu0 %v8282, 64
        %v8392 = vpop.permute.xlu0 %8391
        %8393 = vrot.lane.b32.xlu0 %v8285, 64
        %v8394 = vpop.permute.xlu0 %8393
        %8395 = vrot.lane.b32.xlu0 %v8289, 64
        %v8396 = vpop.permute.xlu0 %8395
        %8397 = vrot.lane.b32.xlu0 %v8292, 64
        %v8398 = vpop.permute.xlu0 %8397
        %8399 = vrot.lane.b32.xlu0 %v8296, 64
        %v8400 = vpop.permute.xlu0 %8399
        %8401 = vrot.lane.b32.xlu0 %v8299, 64
        %v8402 = vpop.permute.xlu0 %8401
        %8403 = vrot.lane.b32.xlu0 %v8303, 64
        %v8404 = vpop.permute.xlu0 %8403
        %8405 = vrot.lane.b32.xlu0 %v8306, 64
        %v8406 = vpop.permute.xlu0 %8405
        %8407 = vrot.lane.b32.xlu0 %v8310, 64
        %v8408 = vpop.permute.xlu0 %8407
        %8409 = vrot.lane.b32.xlu0 %v8313, 64
        %v8410 = vpop.permute.xlu0 %8409
        %8411 = vrot.lane.b32.xlu0 %v8317, 64
        %v8412 = vpop.permute.xlu0 %8411
        %8413 = vrot.lane.b32.xlu0 %v8320, 64
        %v8414 = vpop.permute.xlu0 %8413
        %8415 = vrot.lane.b32.xlu0 %v8324, 64
        %v8416 = vpop.permute.xlu0 %8415
        %8417 = vrot.lane.b32.xlu0 %v8327, 64
        %v8418 = vpop.permute.xlu0 %8417
        %8419 = vrot.lane.b32.xlu0 %v8331, 64
        %v8420 = vpop.permute.xlu0 %8419
        %8421 = vrot.lane.b32.xlu0 %v8334, 64
        %v8422 = vpop.permute.xlu0 %8421
        %8423 = vrot.lane.b32.xlu0 %v8338, 64
        %v8424 = vpop.permute.xlu0 %8423
        %8425 = vrot.lane.b32.xlu0 %v8341, 64
        %v8426 = vpop.permute.xlu0 %8425
        %8427 = vrot.lane.b32.xlu0 %v8345, 64
        %v8428 = vpop.permute.xlu0 %8427
        %8429 = vrot.lane.b32.xlu0 %v8348, 64
        %v8430 = vpop.permute.xlu0 %8429
        %8431 = vrot.lane.b32.xlu0 %v8352, 64
        %v8432 = vpop.permute.xlu0 %8431
        %8433 = vrot.lane.b32.xlu0 %v8355, 64
        %v8434 = vpop.permute.xlu0 %8433
        %8435 = vrot.lane.b32.xlu0 %v8359, 64
        %v8436 = vpop.permute.xlu0 %8435
        %8437 = vrot.lane.b32.xlu0 %v8362, 64
        %v8438 = vpop.permute.xlu0 %8437
        %8439 = vrot.lane.b32.xlu0 %v8366, 64
        %v8440 = vpop.permute.xlu0 %8439
        %8441 = vrot.lane.b32.xlu0 %v8369, 64
        %v8442 = vpop.permute.xlu0 %8441
        %8443 = vrot.lane.b32.xlu0 %v8373, 64
        %v8444 = vpop.permute.xlu0 %8443
        %8445 = vrot.lane.b32.xlu0 %v8376, 64
        %v8446 = vpop.permute.xlu0 %8445
        %8447 = vrot.lane.b32.xlu0 %v8380, 64
        %v8448 = vpop.permute.xlu0 %8447
        %8449 = vrot.lane.b32.xlu0 %v8383, 64
        %v8450 = vpop.permute.xlu0 %8449
        %8451 = vrot.lane.b32.xlu0 %v8387, 64
        %v8452 = vpop.permute.xlu0 %8451
        %8453 = vrot.lane.b32.xlu0 %v8390, 64
        %v8454 = vpop.permute.xlu0 %8453
        %8487 = vst.msk [vmem:[#allocation2] sm:$0xf] %vm2481, %v8392
        %8488 = vst.msk [vmem:[#allocation2 + $0x4] sm:$0xf] %vm2481, %v8394
        %8489 = vst.msk [vmem:[#allocation2 + $0x8] sm:$0xf] %vm2481, %v8396
        %8490 = vst.msk [vmem:[#allocation2 + $0xc] sm:$0xf] %vm2481, %v8398
        %8491 = vst.msk [vmem:[#allocation2 + $0x10] sm:$0xf] %vm2481, %v8400
        %8492 = vst.msk [vmem:[#allocation2 + $0x14] sm:$0xf] %vm2481, %v8402
        %8493 = vst.msk [vmem:[#allocation2 + $0x18] sm:$0xf] %vm2481, %v8404
        %8494 = vst.msk [vmem:[#allocation2 + $0x1c] sm:$0xf] %vm2481, %v8406
        %8495 = vst.msk [vmem:[#allocation2 + $0x20] sm:$0xf] %vm2481, %v8408
        %8496 = vst.msk [vmem:[#allocation2 + $0x24] sm:$0xf] %vm2481, %v8410
        %8497 = vst.msk [vmem:[#allocation2 + $0x28] sm:$0xf] %vm2481, %v8412
        %8498 = vst.msk [vmem:[#allocation2 + $0x2c] sm:$0xf] %vm2481, %v8414
        %8499 = vst.msk [vmem:[#allocation2 + $0x30] sm:$0xf] %vm2481, %v8416
        %8500 = vst.msk [vmem:[#allocation2 + $0x34] sm:$0xf] %vm2481, %v8418
        %8501 = vst.msk [vmem:[#allocation2 + $0x38] sm:$0xf] %vm2481, %v8420
        %8502 = vst.msk [vmem:[#allocation2 + $0x3c] sm:$0xf] %vm2481, %v8422
        %8503 = vst.msk [vmem:[#allocation2 + $0x40] sm:$0xf] %vm2481, %v8424
        %8504 = vst.msk [vmem:[#allocation2 + $0x44] sm:$0xf] %vm2481, %v8426
        %8505 = vst.msk [vmem:[#allocation2 + $0x48] sm:$0xf] %vm2481, %v8428
        %8506 = vst.msk [vmem:[#allocation2 + $0x4c] sm:$0xf] %vm2481, %v8430
        %8507 = vst.msk [vmem:[#allocation2 + $0x50] sm:$0xf] %vm2481, %v8432
        %8508 = vst.msk [vmem:[#allocation2 + $0x54] sm:$0xf] %vm2481, %v8434
        %8509 = vst.msk [vmem:[#allocation2 + $0x58] sm:$0xf] %vm2481, %v8436
        %8510 = vst.msk [vmem:[#allocation2 + $0x5c] sm:$0xf] %vm2481, %v8438
        %8511 = vst.msk [vmem:[#allocation2 + $0x60] sm:$0xf] %vm2481, %v8440
        %8512 = vst.msk [vmem:[#allocation2 + $0x64] sm:$0xf] %vm2481, %v8442
        %8513 = vst.msk [vmem:[#allocation2 + $0x68] sm:$0xf] %vm2481, %v8444
        %8514 = vst.msk [vmem:[#allocation2 + $0x6c] sm:$0xf] %vm2481, %v8446
        %8515 = vst.msk [vmem:[#allocation2 + $0x70] sm:$0xf] %vm2481, %v8448
        %8516 = vst.msk [vmem:[#allocation2 + $0x74] sm:$0xf] %vm2481, %v8450
        %8517 = vst.msk [vmem:[#allocation2 + $0x78] sm:$0xf] %vm2481, %v8452
        %8518 = vst.msk [vmem:[#allocation2 + $0x7c] sm:$0xf] %vm2481, %v8454
        %s8519 = scalar_lea.vmem %s195, 192
        %v8520 = vld [vmem:[%s8519] sm:$0xc]
        %v8521 = vld [vmem:[%s8519 + $0x4] sm:$0xf]
        %v8522 = vld [vmem:[%s8519 + $0x8] sm:$0x3]
        %v8523 = vld [vmem:[%s8519 + $0x10] sm:$0xc]
        %v8524 = vld [vmem:[%s8519 + $0x14] sm:$0xf]
        %v8525 = vld [vmem:[%s8519 + $0x18] sm:$0x3]
        %v8526 = vld [vmem:[%s8519 + $0x20] sm:$0xc]
        %v8527 = vld [vmem:[%s8519 + $0x24] sm:$0xf]
        %v8528 = vld [vmem:[%s8519 + $0x28] sm:$0x3]
        %v8529 = vld [vmem:[%s8519 + $0x30] sm:$0xc]
        %v8530 = vld [vmem:[%s8519 + $0x34] sm:$0xf]
        %v8531 = vld [vmem:[%s8519 + $0x38] sm:$0x3]
        %v8532 = vld [vmem:[%s8519 + $0x40] sm:$0xc]
        %v8533 = vld [vmem:[%s8519 + $0x44] sm:$0xf]
        %v8534 = vld [vmem:[%s8519 + $0x48] sm:$0x3]
        %v8535 = vld [vmem:[%s8519 + $0x50] sm:$0xc]
        %v8536 = vld [vmem:[%s8519 + $0x54] sm:$0xf]
        %v8537 = vld [vmem:[%s8519 + $0x58] sm:$0x3]
        %v8538 = vld [vmem:[%s8519 + $0x60] sm:$0xc]
        %v8539 = vld [vmem:[%s8519 + $0x64] sm:$0xf]
        %v8540 = vld [vmem:[%s8519 + $0x68] sm:$0x3]
        %v8541 = vld [vmem:[%s8519 + $0x70] sm:$0xc]
        %v8542 = vld [vmem:[%s8519 + $0x74] sm:$0xf]
        %v8543 = vld [vmem:[%s8519 + $0x78] sm:$0x3]
        %v8544 = vld [vmem:[%s8519 + $0x80] sm:$0xc]
        %v8545 = vld [vmem:[%s8519 + $0x84] sm:$0xf]
        %v8546 = vld [vmem:[%s8519 + $0x88] sm:$0x3]
        %v8547 = vld [vmem:[%s8519 + $0x90] sm:$0xc]
        %v8548 = vld [vmem:[%s8519 + $0x94] sm:$0xf]
        %v8549 = vld [vmem:[%s8519 + $0x98] sm:$0x3]
        %v8550 = vld [vmem:[%s8519 + $0xa0] sm:$0xc]
        %v8551 = vld [vmem:[%s8519 + $0xa4] sm:$0xf]
        %v8552 = vld [vmem:[%s8519 + $0xa8] sm:$0x3]
        %v8553 = vld [vmem:[%s8519 + $0xb0] sm:$0xc]
        %v8554 = vld [vmem:[%s8519 + $0xb4] sm:$0xf]
        %v8555 = vld [vmem:[%s8519 + $0xb8] sm:$0x3]
        %v8556 = vld [vmem:[%s8519 + $0xc0] sm:$0xc]
        %v8557 = vld [vmem:[%s8519 + $0xc4] sm:$0xf]
        %v8558 = vld [vmem:[%s8519 + $0xc8] sm:$0x3]
        %v8559 = vld [vmem:[%s8519 + $0xd0] sm:$0xc]
        %v8560 = vld [vmem:[%s8519 + $0xd4] sm:$0xf]
        %v8561 = vld [vmem:[%s8519 + $0xd8] sm:$0x3]
        %v8562 = vld [vmem:[%s8519 + $0xe0] sm:$0xc]
        %v8563 = vld [vmem:[%s8519 + $0xe4] sm:$0xf]
        %v8564 = vld [vmem:[%s8519 + $0xe8] sm:$0x3]
        %v8565 = vld [vmem:[%s8519 + $0xf0] sm:$0xc]
        %v8566 = vld [vmem:[%s8519 + $0xf4] sm:$0xf]
        %v8567 = vld [vmem:[%s8519 + $0xf8] sm:$0x3]
        %v8616 = vrot.slane %v8520, 6
        %v8617 = vrot.slane %v8616, 4
        %v8618 = vrot.slane %v8521, 6
        %v8619 = vsel %vm7142, %v8617, %v8618
        %v8620 = vrot.slane %v8618, 4
        %v8621 = vrot.slane %v8522, 6
        %v8622 = vsel %vm7142, %v8620, %v8621
        %v8623 = vrot.slane %v8523, 6
        %v8624 = vrot.slane %v8623, 4
        %v8625 = vrot.slane %v8524, 6
        %v8626 = vsel %vm7142, %v8624, %v8625
        %v8627 = vrot.slane %v8625, 4
        %v8628 = vrot.slane %v8525, 6
        %v8629 = vsel %vm7142, %v8627, %v8628
        %v8630 = vrot.slane %v8526, 6
        %v8631 = vrot.slane %v8630, 4
        %v8632 = vrot.slane %v8527, 6
        %v8633 = vsel %vm7142, %v8631, %v8632
        %v8634 = vrot.slane %v8632, 4
        %v8635 = vrot.slane %v8528, 6
        %v8636 = vsel %vm7142, %v8634, %v8635
        %v8637 = vrot.slane %v8529, 6
        %v8638 = vrot.slane %v8637, 4
        %v8639 = vrot.slane %v8530, 6
        %v8640 = vsel %vm7142, %v8638, %v8639
        %v8641 = vrot.slane %v8639, 4
        %v8642 = vrot.slane %v8531, 6
        %v8643 = vsel %vm7142, %v8641, %v8642
        %v8644 = vrot.slane %v8532, 6
        %v8645 = vrot.slane %v8644, 4
        %v8646 = vrot.slane %v8533, 6
        %v8647 = vsel %vm7142, %v8645, %v8646
        %v8648 = vrot.slane %v8646, 4
        %v8649 = vrot.slane %v8534, 6
        %v8650 = vsel %vm7142, %v8648, %v8649
        %v8651 = vrot.slane %v8535, 6
        %v8652 = vrot.slane %v8651, 4
        %v8653 = vrot.slane %v8536, 6
        %v8654 = vsel %vm7142, %v8652, %v8653
        %v8655 = vrot.slane %v8653, 4
        %v8656 = vrot.slane %v8537, 6
        %v8657 = vsel %vm7142, %v8655, %v8656
        %v8658 = vrot.slane %v8538, 6
        %v8659 = vrot.slane %v8658, 4
        %v8660 = vrot.slane %v8539, 6
        %v8661 = vsel %vm7142, %v8659, %v8660
        %v8662 = vrot.slane %v8660, 4
        %v8663 = vrot.slane %v8540, 6
        %v8664 = vsel %vm7142, %v8662, %v8663
        %v8665 = vrot.slane %v8541, 6
        %v8666 = vrot.slane %v8665, 4
        %v8667 = vrot.slane %v8542, 6
        %v8668 = vsel %vm7142, %v8666, %v8667
        %v8669 = vrot.slane %v8667, 4
        %v8670 = vrot.slane %v8543, 6
        %v8671 = vsel %vm7142, %v8669, %v8670
        %v8672 = vrot.slane %v8544, 6
        %v8673 = vrot.slane %v8672, 4
        %v8674 = vrot.slane %v8545, 6
        %v8675 = vsel %vm7142, %v8673, %v8674
        %v8676 = vrot.slane %v8674, 4
        %v8677 = vrot.slane %v8546, 6
        %v8678 = vsel %vm7142, %v8676, %v8677
        %v8679 = vrot.slane %v8547, 6
        %v8680 = vrot.slane %v8679, 4
        %v8681 = vrot.slane %v8548, 6
        %v8682 = vsel %vm7142, %v8680, %v8681
        %v8683 = vrot.slane %v8681, 4
        %v8684 = vrot.slane %v8549, 6
        %v8685 = vsel %vm7142, %v8683, %v8684
        %v8686 = vrot.slane %v8550, 6
        %v8687 = vrot.slane %v8686, 4
        %v8688 = vrot.slane %v8551, 6
        %v8689 = vsel %vm7142, %v8687, %v8688
        %v8690 = vrot.slane %v8688, 4
        %v8691 = vrot.slane %v8552, 6
        %v8692 = vsel %vm7142, %v8690, %v8691
        %v8693 = vrot.slane %v8553, 6
        %v8694 = vrot.slane %v8693, 4
        %v8695 = vrot.slane %v8554, 6
        %v8696 = vsel %vm7142, %v8694, %v8695
        %v8697 = vrot.slane %v8695, 4
        %v8698 = vrot.slane %v8555, 6
        %v8699 = vsel %vm7142, %v8697, %v8698
        %v8700 = vrot.slane %v8556, 6
        %v8701 = vrot.slane %v8700, 4
        %v8702 = vrot.slane %v8557, 6
        %v8703 = vsel %vm7142, %v8701, %v8702
        %v8704 = vrot.slane %v8702, 4
        %v8705 = vrot.slane %v8558, 6
        %v8706 = vsel %vm7142, %v8704, %v8705
        %v8707 = vrot.slane %v8559, 6
        %v8708 = vrot.slane %v8707, 4
        %v8709 = vrot.slane %v8560, 6
        %v8710 = vsel %vm7142, %v8708, %v8709
        %v8711 = vrot.slane %v8709, 4
        %v8712 = vrot.slane %v8561, 6
        %v8713 = vsel %vm7142, %v8711, %v8712
        %v8714 = vrot.slane %v8562, 6
        %v8715 = vrot.slane %v8714, 4
        %v8716 = vrot.slane %v8563, 6
        %v8717 = vsel %vm7142, %v8715, %v8716
        %v8718 = vrot.slane %v8716, 4
        %v8719 = vrot.slane %v8564, 6
        %v8720 = vsel %vm7142, %v8718, %v8719
        %v8721 = vrot.slane %v8565, 6
        %v8722 = vrot.slane %v8721, 4
        %v8723 = vrot.slane %v8566, 6
        %v8724 = vsel %vm7142, %v8722, %v8723
        %v8725 = vrot.slane %v8723, 4
        %v8726 = vrot.slane %v8567, 6
        %v8727 = vsel %vm7142, %v8725, %v8726
        %8728 = vrot.lane.b32.xlu0 %v8619, 80
        %v8729 = vpop.permute.xlu0 %8728
        %8730 = vrot.lane.b32.xlu0 %v8622, 80
        %v8731 = vpop.permute.xlu0 %8730
        %8732 = vrot.lane.b32.xlu0 %v8626, 80
        %v8733 = vpop.permute.xlu0 %8732
        %8734 = vrot.lane.b32.xlu0 %v8629, 80
        %v8735 = vpop.permute.xlu0 %8734
        %8736 = vrot.lane.b32.xlu0 %v8633, 80
        %v8737 = vpop.permute.xlu0 %8736
        %8738 = vrot.lane.b32.xlu0 %v8636, 80
        %v8739 = vpop.permute.xlu0 %8738
        %8740 = vrot.lane.b32.xlu0 %v8640, 80
        %v8741 = vpop.permute.xlu0 %8740
        %8742 = vrot.lane.b32.xlu0 %v8643, 80
        %v8743 = vpop.permute.xlu0 %8742
        %8744 = vrot.lane.b32.xlu0 %v8647, 80
        %v8745 = vpop.permute.xlu0 %8744
        %8746 = vrot.lane.b32.xlu0 %v8650, 80
        %v8747 = vpop.permute.xlu0 %8746
        %8748 = vrot.lane.b32.xlu0 %v8654, 80
        %v8749 = vpop.permute.xlu0 %8748
        %8750 = vrot.lane.b32.xlu0 %v8657, 80
        %v8751 = vpop.permute.xlu0 %8750
        %8752 = vrot.lane.b32.xlu0 %v8661, 80
        %v8753 = vpop.permute.xlu0 %8752
        %8754 = vrot.lane.b32.xlu0 %v8664, 80
        %v8755 = vpop.permute.xlu0 %8754
        %8756 = vrot.lane.b32.xlu0 %v8668, 80
        %v8757 = vpop.permute.xlu0 %8756
        %8758 = vrot.lane.b32.xlu0 %v8671, 80
        %v8759 = vpop.permute.xlu0 %8758
        %8760 = vrot.lane.b32.xlu0 %v8675, 80
        %v8761 = vpop.permute.xlu0 %8760
        %8762 = vrot.lane.b32.xlu0 %v8678, 80
        %v8763 = vpop.permute.xlu0 %8762
        %8764 = vrot.lane.b32.xlu0 %v8682, 80
        %v8765 = vpop.permute.xlu0 %8764
        %8766 = vrot.lane.b32.xlu0 %v8685, 80
        %v8767 = vpop.permute.xlu0 %8766
        %8768 = vrot.lane.b32.xlu0 %v8689, 80
        %v8769 = vpop.permute.xlu0 %8768
        %8770 = vrot.lane.b32.xlu0 %v8692, 80
        %v8771 = vpop.permute.xlu0 %8770
        %8772 = vrot.lane.b32.xlu0 %v8696, 80
        %v8773 = vpop.permute.xlu0 %8772
        %8774 = vrot.lane.b32.xlu0 %v8699, 80
        %v8775 = vpop.permute.xlu0 %8774
        %8776 = vrot.lane.b32.xlu0 %v8703, 80
        %v8777 = vpop.permute.xlu0 %8776
        %8778 = vrot.lane.b32.xlu0 %v8706, 80
        %v8779 = vpop.permute.xlu0 %8778
        %8780 = vrot.lane.b32.xlu0 %v8710, 80
        %v8781 = vpop.permute.xlu0 %8780
        %8782 = vrot.lane.b32.xlu0 %v8713, 80
        %v8783 = vpop.permute.xlu0 %8782
        %8784 = vrot.lane.b32.xlu0 %v8717, 80
        %v8785 = vpop.permute.xlu0 %8784
        %8786 = vrot.lane.b32.xlu0 %v8720, 80
        %v8787 = vpop.permute.xlu0 %8786
        %8788 = vrot.lane.b32.xlu0 %v8724, 80
        %v8789 = vpop.permute.xlu0 %8788
        %8790 = vrot.lane.b32.xlu0 %v8727, 80
        %v8791 = vpop.permute.xlu0 %8790
        %8824 = vst.msk [vmem:[#allocation2] sm:$0xf] %vm3011, %v8729
        %8825 = vst.msk [vmem:[#allocation2 + $0x4] sm:$0xf] %vm3011, %v8731
        %8826 = vst.msk [vmem:[#allocation2 + $0x8] sm:$0xf] %vm3011, %v8733
        %8827 = vst.msk [vmem:[#allocation2 + $0xc] sm:$0xf] %vm3011, %v8735
        %8828 = vst.msk [vmem:[#allocation2 + $0x10] sm:$0xf] %vm3011, %v8737
        %8829 = vst.msk [vmem:[#allocation2 + $0x14] sm:$0xf] %vm3011, %v8739
        %8830 = vst.msk [vmem:[#allocation2 + $0x18] sm:$0xf] %vm3011, %v8741
        %8831 = vst.msk [vmem:[#allocation2 + $0x1c] sm:$0xf] %vm3011, %v8743
        %8832 = vst.msk [vmem:[#allocation2 + $0x20] sm:$0xf] %vm3011, %v8745
        %8833 = vst.msk [vmem:[#allocation2 + $0x24] sm:$0xf] %vm3011, %v8747
        %8834 = vst.msk [vmem:[#allocation2 + $0x28] sm:$0xf] %vm3011, %v8749
        %8835 = vst.msk [vmem:[#allocation2 + $0x2c] sm:$0xf] %vm3011, %v8751
        %8836 = vst.msk [vmem:[#allocation2 + $0x30] sm:$0xf] %vm3011, %v8753
        %8837 = vst.msk [vmem:[#allocation2 + $0x34] sm:$0xf] %vm3011, %v8755
        %8838 = vst.msk [vmem:[#allocation2 + $0x38] sm:$0xf] %vm3011, %v8757
        %8839 = vst.msk [vmem:[#allocation2 + $0x3c] sm:$0xf] %vm3011, %v8759
        %8840 = vst.msk [vmem:[#allocation2 + $0x40] sm:$0xf] %vm3011, %v8761
        %8841 = vst.msk [vmem:[#allocation2 + $0x44] sm:$0xf] %vm3011, %v8763
        %8842 = vst.msk [vmem:[#allocation2 + $0x48] sm:$0xf] %vm3011, %v8765
        %8843 = vst.msk [vmem:[#allocation2 + $0x4c] sm:$0xf] %vm3011, %v8767
        %8844 = vst.msk [vmem:[#allocation2 + $0x50] sm:$0xf] %vm3011, %v8769
        %8845 = vst.msk [vmem:[#allocation2 + $0x54] sm:$0xf] %vm3011, %v8771
        %8846 = vst.msk [vmem:[#allocation2 + $0x58] sm:$0xf] %vm3011, %v8773
        %8847 = vst.msk [vmem:[#allocation2 + $0x5c] sm:$0xf] %vm3011, %v8775
        %8848 = vst.msk [vmem:[#allocation2 + $0x60] sm:$0xf] %vm3011, %v8777
        %8849 = vst.msk [vmem:[#allocation2 + $0x64] sm:$0xf] %vm3011, %v8779
        %8850 = vst.msk [vmem:[#allocation2 + $0x68] sm:$0xf] %vm3011, %v8781
        %8851 = vst.msk [vmem:[#allocation2 + $0x6c] sm:$0xf] %vm3011, %v8783
        %8852 = vst.msk [vmem:[#allocation2 + $0x70] sm:$0xf] %vm3011, %v8785
        %8853 = vst.msk [vmem:[#allocation2 + $0x74] sm:$0xf] %vm3011, %v8787
        %8854 = vst.msk [vmem:[#allocation2 + $0x78] sm:$0xf] %vm3011, %v8789
        %8855 = vst.msk [vmem:[#allocation2 + $0x7c] sm:$0xf] %vm3011, %v8791
        %v8856 = vld [vmem:[%s8519 + $0x4] sm:$0xf]
        %v8857 = vld [vmem:[%s8519 + $0x8] sm:$0xf]
        %v8858 = vld [vmem:[%s8519 + $0x14] sm:$0xf]
        %v8859 = vld [vmem:[%s8519 + $0x18] sm:$0xf]
        %v8860 = vld [vmem:[%s8519 + $0x24] sm:$0xf]
        %v8861 = vld [vmem:[%s8519 + $0x28] sm:$0xf]
        %v8862 = vld [vmem:[%s8519 + $0x34] sm:$0xf]
        %v8863 = vld [vmem:[%s8519 + $0x38] sm:$0xf]
        %v8864 = vld [vmem:[%s8519 + $0x44] sm:$0xf]
        %v8865 = vld [vmem:[%s8519 + $0x48] sm:$0xf]
        %v8866 = vld [vmem:[%s8519 + $0x54] sm:$0xf]
        %v8867 = vld [vmem:[%s8519 + $0x58] sm:$0xf]
        %v8868 = vld [vmem:[%s8519 + $0x64] sm:$0xf]
        %v8869 = vld [vmem:[%s8519 + $0x68] sm:$0xf]
        %v8870 = vld [vmem:[%s8519 + $0x74] sm:$0xf]
        %v8871 = vld [vmem:[%s8519 + $0x78] sm:$0xf]
        %v8872 = vld [vmem:[%s8519 + $0x84] sm:$0xf]
        %v8873 = vld [vmem:[%s8519 + $0x88] sm:$0xf]
        %v8874 = vld [vmem:[%s8519 + $0x94] sm:$0xf]
        %v8875 = vld [vmem:[%s8519 + $0x98] sm:$0xf]
        %v8876 = vld [vmem:[%s8519 + $0xa4] sm:$0xf]
        %v8877 = vld [vmem:[%s8519 + $0xa8] sm:$0xf]
        %v8878 = vld [vmem:[%s8519 + $0xb4] sm:$0xf]
        %v8879 = vld [vmem:[%s8519 + $0xb8] sm:$0xf]
        %v8880 = vld [vmem:[%s8519 + $0xc4] sm:$0xf]
        %v8881 = vld [vmem:[%s8519 + $0xc8] sm:$0xf]
        %v8882 = vld [vmem:[%s8519 + $0xd4] sm:$0xf]
        %v8883 = vld [vmem:[%s8519 + $0xd8] sm:$0xf]
        %v8884 = vld [vmem:[%s8519 + $0xe4] sm:$0xf]
        %v8885 = vld [vmem:[%s8519 + $0xe8] sm:$0xf]
        %v8886 = vld [vmem:[%s8519 + $0xf4] sm:$0xf]
        %v8887 = vld [vmem:[%s8519 + $0xf8] sm:$0xf]
        %8920 = vrot.lane.b32.xlu0 %v8856, 96
        %v8921 = vpop.permute.xlu0 %8920
        %8922 = vrot.lane.b32.xlu0 %v8857, 96
        %v8923 = vpop.permute.xlu0 %8922
        %8924 = vrot.lane.b32.xlu0 %v8858, 96
        %v8925 = vpop.permute.xlu0 %8924
        %8926 = vrot.lane.b32.xlu0 %v8859, 96
        %v8927 = vpop.permute.xlu0 %8926
        %8928 = vrot.lane.b32.xlu0 %v8860, 96
        %v8929 = vpop.permute.xlu0 %8928
        %8930 = vrot.lane.b32.xlu0 %v8861, 96
        %v8931 = vpop.permute.xlu0 %8930
        %8932 = vrot.lane.b32.xlu0 %v8862, 96
        %v8933 = vpop.permute.xlu0 %8932
        %8934 = vrot.lane.b32.xlu0 %v8863, 96
        %v8935 = vpop.permute.xlu0 %8934
        %8936 = vrot.lane.b32.xlu0 %v8864, 96
        %v8937 = vpop.permute.xlu0 %8936
        %8938 = vrot.lane.b32.xlu0 %v8865, 96
        %v8939 = vpop.permute.xlu0 %8938
        %8940 = vrot.lane.b32.xlu0 %v8866, 96
        %v8941 = vpop.permute.xlu0 %8940
        %8942 = vrot.lane.b32.xlu0 %v8867, 96
        %v8943 = vpop.permute.xlu0 %8942
        %8944 = vrot.lane.b32.xlu0 %v8868, 96
        %v8945 = vpop.permute.xlu0 %8944
        %8946 = vrot.lane.b32.xlu0 %v8869, 96
        %v8947 = vpop.permute.xlu0 %8946
        %8948 = vrot.lane.b32.xlu0 %v8870, 96
        %v8949 = vpop.permute.xlu0 %8948
        %8950 = vrot.lane.b32.xlu0 %v8871, 96
        %v8951 = vpop.permute.xlu0 %8950
        %8952 = vrot.lane.b32.xlu0 %v8872, 96
        %v8953 = vpop.permute.xlu0 %8952
        %8954 = vrot.lane.b32.xlu0 %v8873, 96
        %v8955 = vpop.permute.xlu0 %8954
        %8956 = vrot.lane.b32.xlu0 %v8874, 96
        %v8957 = vpop.permute.xlu0 %8956
        %8958 = vrot.lane.b32.xlu0 %v8875, 96
        %v8959 = vpop.permute.xlu0 %8958
        %8960 = vrot.lane.b32.xlu0 %v8876, 96
        %v8961 = vpop.permute.xlu0 %8960
        %8962 = vrot.lane.b32.xlu0 %v8877, 96
        %v8963 = vpop.permute.xlu0 %8962
        %8964 = vrot.lane.b32.xlu0 %v8878, 96
        %v8965 = vpop.permute.xlu0 %8964
        %8966 = vrot.lane.b32.xlu0 %v8879, 96
        %v8967 = vpop.permute.xlu0 %8966
        %8968 = vrot.lane.b32.xlu0 %v8880, 96
        %v8969 = vpop.permute.xlu0 %8968
        %8970 = vrot.lane.b32.xlu0 %v8881, 96
        %v8971 = vpop.permute.xlu0 %8970
        %8972 = vrot.lane.b32.xlu0 %v8882, 96
        %v8973 = vpop.permute.xlu0 %8972
        %8974 = vrot.lane.b32.xlu0 %v8883, 96
        %v8975 = vpop.permute.xlu0 %8974
        %8976 = vrot.lane.b32.xlu0 %v8884, 96
        %v8977 = vpop.permute.xlu0 %8976
        %8978 = vrot.lane.b32.xlu0 %v8885, 96
        %v8979 = vpop.permute.xlu0 %8978
        %8980 = vrot.lane.b32.xlu0 %v8886, 96
        %v8981 = vpop.permute.xlu0 %8980
        %8982 = vrot.lane.b32.xlu0 %v8887, 96
        %v8983 = vpop.permute.xlu0 %8982
        %9016 = vst.msk [vmem:[#allocation2] sm:$0xf] %vm3204, %v8921
        %9017 = vst.msk [vmem:[#allocation2 + $0x4] sm:$0xf] %vm3204, %v8923
        %9018 = vst.msk [vmem:[#allocation2 + $0x8] sm:$0xf] %vm3204, %v8925
        %9019 = vst.msk [vmem:[#allocation2 + $0xc] sm:$0xf] %vm3204, %v8927
        %9020 = vst.msk [vmem:[#allocation2 + $0x10] sm:$0xf] %vm3204, %v8929
        %9021 = vst.msk [vmem:[#allocation2 + $0x14] sm:$0xf] %vm3204, %v8931
        %9022 = vst.msk [vmem:[#allocation2 + $0x18] sm:$0xf] %vm3204, %v8933
        %9023 = vst.msk [vmem:[#allocation2 + $0x1c] sm:$0xf] %vm3204, %v8935
        %9024 = vst.msk [vmem:[#allocation2 + $0x20] sm:$0xf] %vm3204, %v8937
        %9025 = vst.msk [vmem:[#allocation2 + $0x24] sm:$0xf] %vm3204, %v8939
        %9026 = vst.msk [vmem:[#allocation2 + $0x28] sm:$0xf] %vm3204, %v8941
        %9027 = vst.msk [vmem:[#allocation2 + $0x2c] sm:$0xf] %vm3204, %v8943
        %9028 = vst.msk [vmem:[#allocation2 + $0x30] sm:$0xf] %vm3204, %v8945
        %9029 = vst.msk [vmem:[#allocation2 + $0x34] sm:$0xf] %vm3204, %v8947
        %9030 = vst.msk [vmem:[#allocation2 + $0x38] sm:$0xf] %vm3204, %v8949
        %9031 = vst.msk [vmem:[#allocation2 + $0x3c] sm:$0xf] %vm3204, %v8951
        %9032 = vst.msk [vmem:[#allocation2 + $0x40] sm:$0xf] %vm3204, %v8953
        %9033 = vst.msk [vmem:[#allocation2 + $0x44] sm:$0xf] %vm3204, %v8955
        %9034 = vst.msk [vmem:[#allocation2 + $0x48] sm:$0xf] %vm3204, %v8957
        %9035 = vst.msk [vmem:[#allocation2 + $0x4c] sm:$0xf] %vm3204, %v8959
        %9036 = vst.msk [vmem:[#allocation2 + $0x50] sm:$0xf] %vm3204, %v8961
        %9037 = vst.msk [vmem:[#allocation2 + $0x54] sm:$0xf] %vm3204, %v8963
        %9038 = vst.msk [vmem:[#allocation2 + $0x58] sm:$0xf] %vm3204, %v8965
        %9039 = vst.msk [vmem:[#allocation2 + $0x5c] sm:$0xf] %vm3204, %v8967
        %9040 = vst.msk [vmem:[#allocation2 + $0x60] sm:$0xf] %vm3204, %v8969
        %9041 = vst.msk [vmem:[#allocation2 + $0x64] sm:$0xf] %vm3204, %v8971
        %9042 = vst.msk [vmem:[#allocation2 + $0x68] sm:$0xf] %vm3204, %v8973
        %9043 = vst.msk [vmem:[#allocation2 + $0x6c] sm:$0xf] %vm3204, %v8975
        %9044 = vst.msk [vmem:[#allocation2 + $0x70] sm:$0xf] %vm3204, %v8977
        %9045 = vst.msk [vmem:[#allocation2 + $0x74] sm:$0xf] %vm3204, %v8979
        %9046 = vst.msk [vmem:[#allocation2 + $0x78] sm:$0xf] %vm3204, %v8981
        %9047 = vst.msk [vmem:[#allocation2 + $0x7c] sm:$0xf] %vm3204, %v8983
        %v9048 = vld [vmem:[%s8519 + $0x4] sm:$0xc]
        %v9049 = vld [vmem:[%s8519 + $0x8] sm:$0xf]
        %v9050 = vld [vmem:[%s8519 + $0xc] sm:$0x3]
        %v9051 = vld [vmem:[%s8519 + $0x14] sm:$0xc]
        %v9052 = vld [vmem:[%s8519 + $0x18] sm:$0xf]
        %v9053 = vld [vmem:[%s8519 + $0x1c] sm:$0x3]
        %v9054 = vld [vmem:[%s8519 + $0x24] sm:$0xc]
        %v9055 = vld [vmem:[%s8519 + $0x28] sm:$0xf]
        %v9056 = vld [vmem:[%s8519 + $0x2c] sm:$0x3]
        %v9057 = vld [vmem:[%s8519 + $0x34] sm:$0xc]
        %v9058 = vld [vmem:[%s8519 + $0x38] sm:$0xf]
        %v9059 = vld [vmem:[%s8519 + $0x3c] sm:$0x3]
        %v9060 = vld [vmem:[%s8519 + $0x44] sm:$0xc]
        %v9061 = vld [vmem:[%s8519 + $0x48] sm:$0xf]
        %v9062 = vld [vmem:[%s8519 + $0x4c] sm:$0x3]
        %v9063 = vld [vmem:[%s8519 + $0x54] sm:$0xc]
        %v9064 = vld [vmem:[%s8519 + $0x58] sm:$0xf]
        %v9065 = vld [vmem:[%s8519 + $0x5c] sm:$0x3]
        %v9066 = vld [vmem:[%s8519 + $0x64] sm:$0xc]
        %v9067 = vld [vmem:[%s8519 + $0x68] sm:$0xf]
        %v9068 = vld [vmem:[%s8519 + $0x6c] sm:$0x3]
        %v9069 = vld [vmem:[%s8519 + $0x74] sm:$0xc]
        %v9070 = vld [vmem:[%s8519 + $0x78] sm:$0xf]
        %v9071 = vld [vmem:[%s8519 + $0x7c] sm:$0x3]
        %v9072 = vld [vmem:[%s8519 + $0x84] sm:$0xc]
        %v9073 = vld [vmem:[%s8519 + $0x88] sm:$0xf]
        %v9074 = vld [vmem:[%s8519 + $0x8c] sm:$0x3]
        %v9075 = vld [vmem:[%s8519 + $0x94] sm:$0xc]
        %v9076 = vld [vmem:[%s8519 + $0x98] sm:$0xf]
        %v9077 = vld [vmem:[%s8519 + $0x9c] sm:$0x3]
        %v9078 = vld [vmem:[%s8519 + $0xa4] sm:$0xc]
        %v9079 = vld [vmem:[%s8519 + $0xa8] sm:$0xf]
        %v9080 = vld [vmem:[%s8519 + $0xac] sm:$0x3]
        %v9081 = vld [vmem:[%s8519 + $0xb4] sm:$0xc]
        %v9082 = vld [vmem:[%s8519 + $0xb8] sm:$0xf]
        %v9083 = vld [vmem:[%s8519 + $0xbc] sm:$0x3]
        %v9084 = vld [vmem:[%s8519 + $0xc4] sm:$0xc]
        %v9085 = vld [vmem:[%s8519 + $0xc8] sm:$0xf]
        %v9086 = vld [vmem:[%s8519 + $0xcc] sm:$0x3]
        %v9087 = vld [vmem:[%s8519 + $0xd4] sm:$0xc]
        %v9088 = vld [vmem:[%s8519 + $0xd8] sm:$0xf]
        %v9089 = vld [vmem:[%s8519 + $0xdc] sm:$0x3]
        %v9090 = vld [vmem:[%s8519 + $0xe4] sm:$0xc]
        %v9091 = vld [vmem:[%s8519 + $0xe8] sm:$0xf]
        %v9092 = vld [vmem:[%s8519 + $0xec] sm:$0x3]
        %v9093 = vld [vmem:[%s8519 + $0xf4] sm:$0xc]
        %v9094 = vld [vmem:[%s8519 + $0xf8] sm:$0xf]
        %v9095 = vld [vmem:[%s8519 + $0xfc] sm:$0x3]
        %v9144 = vrot.slane %v9048, 6
        %v9145 = vrot.slane %v9144, 4
        %v9146 = vrot.slane %v9049, 6
        %v9147 = vsel %vm7142, %v9145, %v9146
        %v9148 = vrot.slane %v9146, 4
        %v9149 = vrot.slane %v9050, 6
        %v9150 = vsel %vm7142, %v9148, %v9149
        %v9151 = vrot.slane %v9051, 6
        %v9152 = vrot.slane %v9151, 4
        %v9153 = vrot.slane %v9052, 6
        %v9154 = vsel %vm7142, %v9152, %v9153
        %v9155 = vrot.slane %v9153, 4
        %v9156 = vrot.slane %v9053, 6
        %v9157 = vsel %vm7142, %v9155, %v9156
        %v9158 = vrot.slane %v9054, 6
        %v9159 = vrot.slane %v9158, 4
        %v9160 = vrot.slane %v9055, 6
        %v9161 = vsel %vm7142, %v9159, %v9160
        %v9162 = vrot.slane %v9160, 4
        %v9163 = vrot.slane %v9056, 6
        %v9164 = vsel %vm7142, %v9162, %v9163
        %v9165 = vrot.slane %v9057, 6
        %v9166 = vrot.slane %v9165, 4
        %v9167 = vrot.slane %v9058, 6
        %v9168 = vsel %vm7142, %v9166, %v9167
        %v9169 = vrot.slane %v9167, 4
        %v9170 = vrot.slane %v9059, 6
        %v9171 = vsel %vm7142, %v9169, %v9170
        %v9172 = vrot.slane %v9060, 6
        %v9173 = vrot.slane %v9172, 4
        %v9174 = vrot.slane %v9061, 6
        %v9175 = vsel %vm7142, %v9173, %v9174
        %v9176 = vrot.slane %v9174, 4
        %v9177 = vrot.slane %v9062, 6
        %v9178 = vsel %vm7142, %v9176, %v9177
        %v9179 = vrot.slane %v9063, 6
        %v9180 = vrot.slane %v9179, 4
        %v9181 = vrot.slane %v9064, 6
        %v9182 = vsel %vm7142, %v9180, %v9181
        %v9183 = vrot.slane %v9181, 4
        %v9184 = vrot.slane %v9065, 6
        %v9185 = vsel %vm7142, %v9183, %v9184
        %v9186 = vrot.slane %v9066, 6
        %v9187 = vrot.slane %v9186, 4
        %v9188 = vrot.slane %v9067, 6
        %v9189 = vsel %vm7142, %v9187, %v9188
        %v9190 = vrot.slane %v9188, 4
        %v9191 = vrot.slane %v9068, 6
        %v9192 = vsel %vm7142, %v9190, %v9191
        %v9193 = vrot.slane %v9069, 6
        %v9194 = vrot.slane %v9193, 4
        %v9195 = vrot.slane %v9070, 6
        %v9196 = vsel %vm7142, %v9194, %v9195
        %v9197 = vrot.slane %v9195, 4
        %v9198 = vrot.slane %v9071, 6
        %v9199 = vsel %vm7142, %v9197, %v9198
        %v9200 = vrot.slane %v9072, 6
        %v9201 = vrot.slane %v9200, 4
        %v9202 = vrot.slane %v9073, 6
        %v9203 = vsel %vm7142, %v9201, %v9202
        %v9204 = vrot.slane %v9202, 4
        %v9205 = vrot.slane %v9074, 6
        %v9206 = vsel %vm7142, %v9204, %v9205
        %v9207 = vrot.slane %v9075, 6
        %v9208 = vrot.slane %v9207, 4
        %v9209 = vrot.slane %v9076, 6
        %v9210 = vsel %vm7142, %v9208, %v9209
        %v9211 = vrot.slane %v9209, 4
        %v9212 = vrot.slane %v9077, 6
        %v9213 = vsel %vm7142, %v9211, %v9212
        %v9214 = vrot.slane %v9078, 6
        %v9215 = vrot.slane %v9214, 4
        %v9216 = vrot.slane %v9079, 6
        %v9217 = vsel %vm7142, %v9215, %v9216
        %v9218 = vrot.slane %v9216, 4
        %v9219 = vrot.slane %v9080, 6
        %v9220 = vsel %vm7142, %v9218, %v9219
        %v9221 = vrot.slane %v9081, 6
        %v9222 = vrot.slane %v9221, 4
        %v9223 = vrot.slane %v9082, 6
        %v9224 = vsel %vm7142, %v9222, %v9223
        %v9225 = vrot.slane %v9223, 4
        %v9226 = vrot.slane %v9083, 6
        %v9227 = vsel %vm7142, %v9225, %v9226
        %v9228 = vrot.slane %v9084, 6
        %v9229 = vrot.slane %v9228, 4
        %v9230 = vrot.slane %v9085, 6
        %v9231 = vsel %vm7142, %v9229, %v9230
        %v9232 = vrot.slane %v9230, 4
        %v9233 = vrot.slane %v9086, 6
        %v9234 = vsel %vm7142, %v9232, %v9233
        %v9235 = vrot.slane %v9087, 6
        %v9236 = vrot.slane %v9235, 4
        %v9237 = vrot.slane %v9088, 6
        %v9238 = vsel %vm7142, %v9236, %v9237
        %v9239 = vrot.slane %v9237, 4
        %v9240 = vrot.slane %v9089, 6
        %v9241 = vsel %vm7142, %v9239, %v9240
        %v9242 = vrot.slane %v9090, 6
        %v9243 = vrot.slane %v9242, 4
        %v9244 = vrot.slane %v9091, 6
        %v9245 = vsel %vm7142, %v9243, %v9244
        %v9246 = vrot.slane %v9244, 4
        %v9247 = vrot.slane %v9092, 6
        %v9248 = vsel %vm7142, %v9246, %v9247
        %v9249 = vrot.slane %v9093, 6
        %v9250 = vrot.slane %v9249, 4
        %v9251 = vrot.slane %v9094, 6
        %v9252 = vsel %vm7142, %v9250, %v9251
        %v9253 = vrot.slane %v9251, 4
        %v9254 = vrot.slane %v9095, 6
        %v9255 = vsel %vm7142, %v9253, %v9254
        %9256 = vrot.lane.b32.xlu0 %v9147, 112
        %v9257 = vpop.permute.xlu0 %9256
        %9258 = vrot.lane.b32.xlu0 %v9150, 112
        %v9259 = vpop.permute.xlu0 %9258
        %9260 = vrot.lane.b32.xlu0 %v9154, 112
        %v9261 = vpop.permute.xlu0 %9260
        %9262 = vrot.lane.b32.xlu0 %v9157, 112
        %v9263 = vpop.permute.xlu0 %9262
        %9264 = vrot.lane.b32.xlu0 %v9161, 112
        %v9265 = vpop.permute.xlu0 %9264
        %9266 = vrot.lane.b32.xlu0 %v9164, 112
        %v9267 = vpop.permute.xlu0 %9266
        %9268 = vrot.lane.b32.xlu0 %v9168, 112
        %v9269 = vpop.permute.xlu0 %9268
        %9270 = vrot.lane.b32.xlu0 %v9171, 112
        %v9271 = vpop.permute.xlu0 %9270
        %9272 = vrot.lane.b32.xlu0 %v9175, 112
        %v9273 = vpop.permute.xlu0 %9272
        %9274 = vrot.lane.b32.xlu0 %v9178, 112
        %v9275 = vpop.permute.xlu0 %9274
        %9276 = vrot.lane.b32.xlu0 %v9182, 112
        %v9277 = vpop.permute.xlu0 %9276
        %9278 = vrot.lane.b32.xlu0 %v9185, 112
        %v9279 = vpop.permute.xlu0 %9278
        %9280 = vrot.lane.b32.xlu0 %v9189, 112
        %v9281 = vpop.permute.xlu0 %9280
        %9282 = vrot.lane.b32.xlu0 %v9192, 112
        %v9283 = vpop.permute.xlu0 %9282
        %9284 = vrot.lane.b32.xlu0 %v9196, 112
        %v9285 = vpop.permute.xlu0 %9284
        %9286 = vrot.lane.b32.xlu0 %v9199, 112
        %v9287 = vpop.permute.xlu0 %9286
        %9288 = vrot.lane.b32.xlu0 %v9203, 112
        %v9289 = vpop.permute.xlu0 %9288
        %9290 = vrot.lane.b32.xlu0 %v9206, 112
        %v9291 = vpop.permute.xlu0 %9290
        %9292 = vrot.lane.b32.xlu0 %v9210, 112
        %v9293 = vpop.permute.xlu0 %9292
        %9294 = vrot.lane.b32.xlu0 %v9213, 112
        %v9295 = vpop.permute.xlu0 %9294
        %9296 = vrot.lane.b32.xlu0 %v9217, 112
        %v9297 = vpop.permute.xlu0 %9296
        %9298 = vrot.lane.b32.xlu0 %v9220, 112
        %v9299 = vpop.permute.xlu0 %9298
        %9300 = vrot.lane.b32.xlu0 %v9224, 112
        %v9301 = vpop.permute.xlu0 %9300
        %9302 = vrot.lane.b32.xlu0 %v9227, 112
        %v9303 = vpop.permute.xlu0 %9302
        %9304 = vrot.lane.b32.xlu0 %v9231, 112
        %v9305 = vpop.permute.xlu0 %9304
        %9306 = vrot.lane.b32.xlu0 %v9234, 112
        %v9307 = vpop.permute.xlu0 %9306
        %9308 = vrot.lane.b32.xlu0 %v9238, 112
        %v9309 = vpop.permute.xlu0 %9308
        %9310 = vrot.lane.b32.xlu0 %v9241, 112
        %v9311 = vpop.permute.xlu0 %9310
        %9312 = vrot.lane.b32.xlu0 %v9245, 112
        %v9313 = vpop.permute.xlu0 %9312
        %9314 = vrot.lane.b32.xlu0 %v9248, 112
        %v9315 = vpop.permute.xlu0 %9314
        %9316 = vrot.lane.b32.xlu0 %v9252, 112
        %v9317 = vpop.permute.xlu0 %9316
        %9318 = vrot.lane.b32.xlu0 %v9255, 112
        %v9319 = vpop.permute.xlu0 %9318
        %9352 = vst.msk [vmem:[#allocation2] sm:$0xf] %vm3765, %v9257
        %9353 = vst.msk [vmem:[#allocation2 + $0x4] sm:$0xf] %vm3765, %v9259
        %9354 = vst.msk [vmem:[#allocation2 + $0x8] sm:$0xf] %vm3765, %v9261
        %9355 = vst.msk [vmem:[#allocation2 + $0xc] sm:$0xf] %vm3765, %v9263
        %9356 = vst.msk [vmem:[#allocation2 + $0x10] sm:$0xf] %vm3765, %v9265
        %9357 = vst.msk [vmem:[#allocation2 + $0x14] sm:$0xf] %vm3765, %v9267
        %9358 = vst.msk [vmem:[#allocation2 + $0x18] sm:$0xf] %vm3765, %v9269
        %9359 = vst.msk [vmem:[#allocation2 + $0x1c] sm:$0xf] %vm3765, %v9271
        %9360 = vst.msk [vmem:[#allocation2 + $0x20] sm:$0xf] %vm3765, %v9273
        %9361 = vst.msk [vmem:[#allocation2 + $0x24] sm:$0xf] %vm3765, %v9275
        %9362 = vst.msk [vmem:[#allocation2 + $0x28] sm:$0xf] %vm3765, %v9277
        %9363 = vst.msk [vmem:[#allocation2 + $0x2c] sm:$0xf] %vm3765, %v9279
        %9364 = vst.msk [vmem:[#allocation2 + $0x30] sm:$0xf] %vm3765, %v9281
        %9365 = vst.msk [vmem:[#allocation2 + $0x34] sm:$0xf] %vm3765, %v9283
        %9366 = vst.msk [vmem:[#allocation2 + $0x38] sm:$0xf] %vm3765, %v9285
        %9367 = vst.msk [vmem:[#allocation2 + $0x3c] sm:$0xf] %vm3765, %v9287
        %9368 = vst.msk [vmem:[#allocation2 + $0x40] sm:$0xf] %vm3765, %v9289
        %9369 = vst.msk [vmem:[#allocation2 + $0x44] sm:$0xf] %vm3765, %v9291
        %9370 = vst.msk [vmem:[#allocation2 + $0x48] sm:$0xf] %vm3765, %v9293
        %9371 = vst.msk [vmem:[#allocation2 + $0x4c] sm:$0xf] %vm3765, %v9295
        %9372 = vst.msk [vmem:[#allocation2 + $0x50] sm:$0xf] %vm3765, %v9297
        %9373 = vst.msk [vmem:[#allocation2 + $0x54] sm:$0xf] %vm3765, %v9299
        %9374 = vst.msk [vmem:[#allocation2 + $0x58] sm:$0xf] %vm3765, %v9301
        %9375 = vst.msk [vmem:[#allocation2 + $0x5c] sm:$0xf] %vm3765, %v9303
        %9376 = vst.msk [vmem:[#allocation2 + $0x60] sm:$0xf] %vm3765, %v9305
        %9377 = vst.msk [vmem:[#allocation2 + $0x64] sm:$0xf] %vm3765, %v9307
        %9378 = vst.msk [vmem:[#allocation2 + $0x68] sm:$0xf] %vm3765, %v9309
        %9379 = vst.msk [vmem:[#allocation2 + $0x6c] sm:$0xf] %vm3765, %v9311
        %9380 = vst.msk [vmem:[#allocation2 + $0x70] sm:$0xf] %vm3765, %v9313
        %9381 = vst.msk [vmem:[#allocation2 + $0x74] sm:$0xf] %vm3765, %v9315
        %9382 = vst.msk [vmem:[#allocation2 + $0x78] sm:$0xf] %vm3765, %v9317
        %9383 = vst.msk [vmem:[#allocation2 + $0x7c] sm:$0xf] %vm3765, %v9319
        %v9384 = vld [vmem:[#allocation2] sm:$0xf]
        %v9385 = vld [vmem:[#allocation2 + $0x4] sm:$0xf]
        %v9386 = vld [vmem:[#allocation2 + $0x8] sm:$0xf]
        %v9387 = vld [vmem:[#allocation2 + $0xc] sm:$0xf]
        %v9388 = vld [vmem:[#allocation2 + $0x10] sm:$0xf]
        %v9389 = vld [vmem:[#allocation2 + $0x14] sm:$0xf]
        %v9390 = vld [vmem:[#allocation2 + $0x18] sm:$0xf]
        %v9391 = vld [vmem:[#allocation2 + $0x1c] sm:$0xf]
        %v9392 = vld [vmem:[#allocation2 + $0x20] sm:$0xf]
        %v9393 = vld [vmem:[#allocation2 + $0x24] sm:$0xf]
        %v9394 = vld [vmem:[#allocation2 + $0x28] sm:$0xf]
        %v9395 = vld [vmem:[#allocation2 + $0x2c] sm:$0xf]
        %v9396 = vld [vmem:[#allocation2 + $0x30] sm:$0xf]
        %v9397 = vld [vmem:[#allocation2 + $0x34] sm:$0xf]
        %v9398 = vld [vmem:[#allocation2 + $0x38] sm:$0xf]
        %v9399 = vld [vmem:[#allocation2 + $0x3c] sm:$0xf]
        %v9400 = vld [vmem:[#allocation2 + $0x40] sm:$0xf]
        %v9401 = vld [vmem:[#allocation2 + $0x44] sm:$0xf]
        %v9402 = vld [vmem:[#allocation2 + $0x48] sm:$0xf]
        %v9403 = vld [vmem:[#allocation2 + $0x4c] sm:$0xf]
        %v9404 = vld [vmem:[#allocation2 + $0x50] sm:$0xf]
        %v9405 = vld [vmem:[#allocation2 + $0x54] sm:$0xf]
        %v9406 = vld [vmem:[#allocation2 + $0x58] sm:$0xf]
        %v9407 = vld [vmem:[#allocation2 + $0x5c] sm:$0xf]
        %v9408 = vld [vmem:[#allocation2 + $0x60] sm:$0xf]
        %v9409 = vld [vmem:[#allocation2 + $0x64] sm:$0xf]
        %v9410 = vld [vmem:[#allocation2 + $0x68] sm:$0xf]
        %v9411 = vld [vmem:[#allocation2 + $0x6c] sm:$0xf]
        %v9412 = vld [vmem:[#allocation2 + $0x70] sm:$0xf]
        %v9413 = vld [vmem:[#allocation2 + $0x74] sm:$0xf]
        %v9414 = vld [vmem:[#allocation2 + $0x78] sm:$0xf]
        %v9415 = vld [vmem:[#allocation2 + $0x7c] sm:$0xf]
        %s9416 = scalar_lea.vmem %s1, 128
        %v9417 = vld [vmem:[%s9416] sm:$0xf]
        %v9418 = vld [vmem:[%s9416 + $0x4] sm:$0xf]
        %v9419 = vld [vmem:[%s9416 + $0x8] sm:$0xf]
        %v9420 = vld [vmem:[%s9416 + $0xc] sm:$0xf]
        %v9421 = vld [vmem:[%s9416 + $0x10] sm:$0xf]
        %v9422 = vld [vmem:[%s9416 + $0x14] sm:$0xf]
        %v9423 = vld [vmem:[%s9416 + $0x18] sm:$0xf]
        %v9424 = vld [vmem:[%s9416 + $0x1c] sm:$0xf]
        %v9425 = vld [vmem:[%s9416 + $0x20] sm:$0xf]
        %v9426 = vld [vmem:[%s9416 + $0x24] sm:$0xf]
        %v9427 = vld [vmem:[%s9416 + $0x28] sm:$0xf]
        %v9428 = vld [vmem:[%s9416 + $0x2c] sm:$0xf]
        %v9429 = vld [vmem:[%s9416 + $0x30] sm:$0xf]
        %v9430 = vld [vmem:[%s9416 + $0x34] sm:$0xf]
        %v9431 = vld [vmem:[%s9416 + $0x38] sm:$0xf]
        %v9432 = vld [vmem:[%s9416 + $0x3c] sm:$0xf]
        %v9465 = vunpack.c.l.b16 %v9384
        %v9466 = vunpack.c.l.b16 %v9385
        %v9467 = vunpack.c.l.b16 %v9386
        %v9468 = vunpack.c.l.b16 %v9387
        %v9469 = vunpack.c.l.b16 %v9388
        %v9470 = vunpack.c.l.b16 %v9389
        %v9471 = vunpack.c.l.b16 %v9390
        %v9472 = vunpack.c.l.b16 %v9391
        %v9473 = vunpack.c.l.b16 %v9392
        %v9474 = vunpack.c.l.b16 %v9393
        %v9475 = vunpack.c.l.b16 %v9394
        %v9476 = vunpack.c.l.b16 %v9395
        %v9477 = vunpack.c.l.b16 %v9396
        %v9478 = vunpack.c.l.b16 %v9397
        %v9479 = vunpack.c.l.b16 %v9398
        %v9480 = vunpack.c.l.b16 %v9399
        %v9481 = vunpack.c.l.b16 %v9400
        %v9482 = vunpack.c.l.b16 %v9401
        %v9483 = vunpack.c.l.b16 %v9402
        %v9484 = vunpack.c.l.b16 %v9403
        %v9485 = vunpack.c.l.b16 %v9404
        %v9486 = vunpack.c.l.b16 %v9405
        %v9487 = vunpack.c.l.b16 %v9406
        %v9488 = vunpack.c.l.b16 %v9407
        %v9489 = vunpack.c.l.b16 %v9408
        %v9490 = vunpack.c.l.b16 %v9409
        %v9491 = vunpack.c.l.b16 %v9410
        %v9492 = vunpack.c.l.b16 %v9411
        %v9493 = vunpack.c.l.b16 %v9412
        %v9494 = vunpack.c.l.b16 %v9413
        %v9495 = vunpack.c.l.b16 %v9414
        %v9496 = vunpack.c.l.b16 %v9415
        %v9497 = vpack.c.b16 %v9466, %v9465
        %v9498 = vpack.c.b16 %v9468, %v9467
        %v9499 = vpack.c.b16 %v9470, %v9469
        %v9500 = vpack.c.b16 %v9472, %v9471
        %v9501 = vpack.c.b16 %v9474, %v9473
        %v9502 = vpack.c.b16 %v9476, %v9475
        %v9503 = vpack.c.b16 %v9478, %v9477
        %v9504 = vpack.c.b16 %v9480, %v9479
        %v9505 = vpack.c.b16 %v9482, %v9481
        %v9506 = vpack.c.b16 %v9484, %v9483
        %v9507 = vpack.c.b16 %v9486, %v9485
        %v9508 = vpack.c.b16 %v9488, %v9487
        %v9509 = vpack.c.b16 %v9490, %v9489
        %v9510 = vpack.c.b16 %v9492, %v9491
        %v9511 = vpack.c.b16 %v9494, %v9493
        %v9512 = vpack.c.b16 %v9496, %v9495
        %v9545 = vunpack.c.l.b16 %v9417
        %v9546 = vunpack.c.l.b16 %v9418
        %v9547 = vunpack.c.l.b16 %v9419
        %v9548 = vunpack.c.l.b16 %v9420
        %v9549 = vunpack.c.l.b16 %v9421
        %v9550 = vunpack.c.l.b16 %v9422
        %v9551 = vunpack.c.l.b16 %v9423
        %v9552 = vunpack.c.l.b16 %v9424
        %v9553 = vunpack.c.l.b16 %v9425
        %v9554 = vunpack.c.l.b16 %v9426
        %v9555 = vunpack.c.l.b16 %v9427
        %v9556 = vunpack.c.l.b16 %v9428
        %v9557 = vunpack.c.l.b16 %v9429
        %v9558 = vunpack.c.l.b16 %v9430
        %v9559 = vunpack.c.l.b16 %v9431
        %v9560 = vunpack.c.l.b16 %v9432
        %v9561 = vpack.c.b16 %v9546, %v9545
        %v9562 = vpack.c.b16 %v9548, %v9547
        %v9563 = vpack.c.b16 %v9550, %v9549
        %v9564 = vpack.c.b16 %v9552, %v9551
        %v9565 = vpack.c.b16 %v9554, %v9553
        %v9566 = vpack.c.b16 %v9556, %v9555
        %v9567 = vpack.c.b16 %v9558, %v9557
        %v9568 = vpack.c.b16 %v9560, %v9559
        %9577 = vmatprep.subr.bf16.mxu0 0
        %9578 = vmatpush1.bf16.msra.mxu0 %v9568
        %9579 = vmatprep.subr.bf16.mxu0 0
        %9580 = vmatpush1.bf16.msra.mxu0 %v9567
        %9581 = vmatprep.subr.bf16.mxu0 0
        %9582 = vmatpush1.bf16.msra.mxu0 %v9566
        %9583 = vmatprep.subr.bf16.mxu0 0
        %9584 = vmatpush1.bf16.msra.mxu0 %v9565
        %9585 = vmatprep.subr.bf16.mxu0 0
        %9586 = vmatpush1.bf16.msra.mxu0 %v9564
        %9587 = vmatprep.subr.bf16.mxu0 0
        %9588 = vmatpush1.bf16.msra.mxu0 %v9563
        %9589 = vmatprep.subr.bf16.mxu0 0
        %9590 = vmatpush1.bf16.msra.mxu0 %v9562
        %9591 = vmatprep.subr.bf16.mxu0 0
        %9592 = vmatpush1.bf16.msra.mxu0 %v9561
        %9593 = vmatprep.subr.bf16.mxu0 0
        %9594 = vmatpush2.bf16.msra.mxu0 0
        %9595 = vmatprep.subr.bf16.mxu0 0
        %9596 = vmatpush2.bf16.msra.mxu0 0
        %9597 = vmatprep.subr.bf16.mxu0 0
        %9598 = vmatpush2.bf16.msra.mxu0 0
        %9599 = vmatprep.subr.bf16.mxu0 0
        %9600 = vmatpush2.bf16.msra.mxu0 0
        %9601 = vmatprep.subr.bf16.mxu0 0
        %9602 = vmatpush2.bf16.msra.mxu0 0
        %9603 = vmatprep.subr.bf16.mxu0 0
        %9604 = vmatpush2.bf16.msra.mxu0 0
        %9605 = vmatprep.subr.bf16.mxu0 0
        %9606 = vmatpush2.bf16.msra.mxu0 0
        %9607 = vmatprep.subr.bf16.mxu0 0
        %9608 = vmatpush2.bf16.msra.mxu0 0
        %9609 = vmatprep.mubr.bf16.mxu0 0
        %9610 = vmatmul.mubr.bf16.gmra.mxu0 %v9497
        %v9611 = vpop.f32.mrf.mxu0
        %v9612 = vadd.f32 0.0, %v9611
        %v9613 = vpop.f32.mrf.mxu0
        %v9614 = vpop.f32.mrf.mxu0
        %v9615 = vadd.f32 0.0, %v9614
        %v9616 = vpop.f32.mrf.mxu0
        %9617 = vmatprep.mubr.bf16.mxu0 0
        %9618 = vmatmul.mubr.bf16.gmra.mxu0 %v9498
        %v9619 = vpop.f32.mrf.mxu0
        %v9620 = vadd.f32 0.0, %v9619
        %v9621 = vpop.f32.mrf.mxu0
        %v9622 = vpop.f32.mrf.mxu0
        %v9623 = vadd.f32 0.0, %v9622
        %v9624 = vpop.f32.mrf.mxu0
        %9625 = vmatprep.mubr.bf16.mxu0 0
        %9626 = vmatmul.mubr.bf16.gmra.mxu0 %v9499
        %v9627 = vpop.f32.mrf.mxu0
        %v9628 = vadd.f32 0.0, %v9627
        %v9629 = vpop.f32.mrf.mxu0
        %v9630 = vpop.f32.mrf.mxu0
        %v9631 = vadd.f32 0.0, %v9630
        %v9632 = vpop.f32.mrf.mxu0
        %9633 = vmatprep.mubr.bf16.mxu0 0
        %9634 = vmatmul.mubr.bf16.gmra.mxu0 %v9500
        %v9635 = vpop.f32.mrf.mxu0
        %v9636 = vadd.f32 0.0, %v9635
        %v9637 = vpop.f32.mrf.mxu0
        %v9638 = vpop.f32.mrf.mxu0
        %v9639 = vadd.f32 0.0, %v9638
        %v9640 = vpop.f32.mrf.mxu0
        %9641 = vmatprep.mubr.bf16.mxu0 0
        %9642 = vmatmul.mubr.bf16.gmra.mxu0 %v9501
        %v9643 = vpop.f32.mrf.mxu0
        %v9644 = vadd.f32 0.0, %v9643
        %v9645 = vpop.f32.mrf.mxu0
        %v9646 = vpop.f32.mrf.mxu0
        %v9647 = vadd.f32 0.0, %v9646
        %v9648 = vpop.f32.mrf.mxu0
        %9649 = vmatprep.mubr.bf16.mxu0 0
        %9650 = vmatmul.mubr.bf16.gmra.mxu0 %v9502
        %v9651 = vpop.f32.mrf.mxu0
        %v9652 = vadd.f32 0.0, %v9651
        %v9653 = vpop.f32.mrf.mxu0
        %v9654 = vpop.f32.mrf.mxu0
        %v9655 = vadd.f32 0.0, %v9654
        %v9656 = vpop.f32.mrf.mxu0
        %9657 = vmatprep.mubr.bf16.mxu0 0
        %9658 = vmatmul.mubr.bf16.gmra.mxu0 %v9503
        %v9659 = vpop.f32.mrf.mxu0
        %v9660 = vadd.f32 0.0, %v9659
        %v9661 = vpop.f32.mrf.mxu0
        %v9662 = vpop.f32.mrf.mxu0
        %v9663 = vadd.f32 0.0, %v9662
        %v9664 = vpop.f32.mrf.mxu0
        %9665 = vmatprep.mubr.bf16.mxu0 0
        %9666 = vmatmul.mubr.bf16.gmra.mxu0 %v9504
        %v9667 = vpop.f32.mrf.mxu0
        %v9668 = vadd.f32 0.0, %v9667
        %v9669 = vpop.f32.mrf.mxu0
        %v9670 = vpop.f32.mrf.mxu0
        %v9671 = vadd.f32 0.0, %v9670
        %v9672 = vpop.f32.mrf.mxu0
        %9673 = vmatprep.mubr.bf16.mxu0 0
        %9674 = vmatmul.mubr.bf16.gmra.mxu0 %v9505
        %v9675 = vpop.f32.mrf.mxu0
        %v9676 = vadd.f32 0.0, %v9675
        %v9677 = vpop.f32.mrf.mxu0
        %v9678 = vpop.f32.mrf.mxu0
        %v9679 = vadd.f32 0.0, %v9678
        %v9680 = vpop.f32.mrf.mxu0
        %9681 = vmatprep.mubr.bf16.mxu0 0
        %9682 = vmatmul.mubr.bf16.gmra.mxu0 %v9506
        %v9683 = vpop.f32.mrf.mxu0
        %v9684 = vadd.f32 0.0, %v9683
        %v9685 = vpop.f32.mrf.mxu0
        %v9686 = vpop.f32.mrf.mxu0
        %v9687 = vadd.f32 0.0, %v9686
        %v9688 = vpop.f32.mrf.mxu0
        %9689 = vmatprep.mubr.bf16.mxu0 0
        %9690 = vmatmul.mubr.bf16.gmra.mxu0 %v9507
        %v9691 = vpop.f32.mrf.mxu0
        %v9692 = vadd.f32 0.0, %v9691
        %v9693 = vpop.f32.mrf.mxu0
        %v9694 = vpop.f32.mrf.mxu0
        %v9695 = vadd.f32 0.0, %v9694
        %v9696 = vpop.f32.mrf.mxu0
        %9697 = vmatprep.mubr.bf16.mxu0 0
        %9698 = vmatmul.mubr.bf16.gmra.mxu0 %v9508
        %v9699 = vpop.f32.mrf.mxu0
        %v9700 = vadd.f32 0.0, %v9699
        %v9701 = vpop.f32.mrf.mxu0
        %v9702 = vpop.f32.mrf.mxu0
        %v9703 = vadd.f32 0.0, %v9702
        %v9704 = vpop.f32.mrf.mxu0
        %9705 = vmatprep.mubr.bf16.mxu0 0
        %9706 = vmatmul.mubr.bf16.gmra.mxu0 %v9509
        %v9707 = vpop.f32.mrf.mxu0
        %v9708 = vadd.f32 0.0, %v9707
        %v9709 = vpop.f32.mrf.mxu0
        %v9710 = vpop.f32.mrf.mxu0
        %v9711 = vadd.f32 0.0, %v9710
        %v9712 = vpop.f32.mrf.mxu0
        %9713 = vmatprep.mubr.bf16.mxu0 0
        %9714 = vmatmul.mubr.bf16.gmra.mxu0 %v9510
        %v9715 = vpop.f32.mrf.mxu0
        %v9716 = vadd.f32 0.0, %v9715
        %v9717 = vpop.f32.mrf.mxu0
        %v9718 = vpop.f32.mrf.mxu0
        %v9719 = vadd.f32 0.0, %v9718
        %v9720 = vpop.f32.mrf.mxu0
        %9721 = vmatprep.mubr.bf16.mxu0 0
        %9722 = vmatmul.mubr.bf16.gmra.mxu0 %v9511
        %v9723 = vpop.f32.mrf.mxu0
        %v9724 = vadd.f32 0.0, %v9723
        %v9725 = vpop.f32.mrf.mxu0
        %v9726 = vpop.f32.mrf.mxu0
        %v9727 = vadd.f32 0.0, %v9726
        %v9728 = vpop.f32.mrf.mxu0
        %9729 = vmatprep.mubr.bf16.mxu0 0
        %9730 = vmatmul.mubr.bf16.gmra.mxu0 %v9512
        %v9731 = vpop.f32.mrf.mxu0
        %v9732 = vadd.f32 0.0, %v9731
        %v9733 = vpop.f32.mrf.mxu0
        %v9734 = vpop.f32.mrf.mxu0
        %v9735 = vadd.f32 0.0, %v9734
        %v9736 = vpop.f32.mrf.mxu0
        %9737 = vdwg.mxu0
        %9770 = vrot.lane.b32.xlu0 %v9612, 8
        %v9771 = vpop.permute.xlu0 %9770
        %9772 = vrot.lane.b32.xlu0 %v9615, 8
        %v9773 = vpop.permute.xlu0 %9772
        %9774 = vrot.lane.b32.xlu0 %v9620, 8
        %v9775 = vpop.permute.xlu0 %9774
        %9776 = vrot.lane.b32.xlu0 %v9623, 8
        %v9777 = vpop.permute.xlu0 %9776
        %9778 = vrot.lane.b32.xlu0 %v9628, 8
        %v9779 = vpop.permute.xlu0 %9778
        %9780 = vrot.lane.b32.xlu0 %v9631, 8
        %v9781 = vpop.permute.xlu0 %9780
        %9782 = vrot.lane.b32.xlu0 %v9636, 8
        %v9783 = vpop.permute.xlu0 %9782
        %9784 = vrot.lane.b32.xlu0 %v9639, 8
        %v9785 = vpop.permute.xlu0 %9784
        %9786 = vrot.lane.b32.xlu0 %v9644, 8
        %v9787 = vpop.permute.xlu0 %9786
        %9788 = vrot.lane.b32.xlu0 %v9647, 8
        %v9789 = vpop.permute.xlu0 %9788
        %9790 = vrot.lane.b32.xlu0 %v9652, 8
        %v9791 = vpop.permute.xlu0 %9790
        %9792 = vrot.lane.b32.xlu0 %v9655, 8
        %v9793 = vpop.permute.xlu0 %9792
        %9794 = vrot.lane.b32.xlu0 %v9660, 8
        %v9795 = vpop.permute.xlu0 %9794
        %9796 = vrot.lane.b32.xlu0 %v9663, 8
        %v9797 = vpop.permute.xlu0 %9796
        %9798 = vrot.lane.b32.xlu0 %v9668, 8
        %v9799 = vpop.permute.xlu0 %9798
        %9800 = vrot.lane.b32.xlu0 %v9671, 8
        %v9801 = vpop.permute.xlu0 %9800
        %9802 = vrot.lane.b32.xlu0 %v9676, 8
        %v9803 = vpop.permute.xlu0 %9802
        %9804 = vrot.lane.b32.xlu0 %v9679, 8
        %v9805 = vpop.permute.xlu0 %9804
        %9806 = vrot.lane.b32.xlu0 %v9684, 8
        %v9807 = vpop.permute.xlu0 %9806
        %9808 = vrot.lane.b32.xlu0 %v9687, 8
        %v9809 = vpop.permute.xlu0 %9808
        %9810 = vrot.lane.b32.xlu0 %v9692, 8
        %v9811 = vpop.permute.xlu0 %9810
        %9812 = vrot.lane.b32.xlu0 %v9695, 8
        %v9813 = vpop.permute.xlu0 %9812
        %9814 = vrot.lane.b32.xlu0 %v9700, 8
        %v9815 = vpop.permute.xlu0 %9814
        %9816 = vrot.lane.b32.xlu0 %v9703, 8
        %v9817 = vpop.permute.xlu0 %9816
        %9818 = vrot.lane.b32.xlu0 %v9708, 8
        %v9819 = vpop.permute.xlu0 %9818
        %9820 = vrot.lane.b32.xlu0 %v9711, 8
        %v9821 = vpop.permute.xlu0 %9820
        %9822 = vrot.lane.b32.xlu0 %v9716, 8
        %v9823 = vpop.permute.xlu0 %9822
        %9824 = vrot.lane.b32.xlu0 %v9719, 8
        %v9825 = vpop.permute.xlu0 %9824
        %9826 = vrot.lane.b32.xlu0 %v9724, 8
        %v9827 = vpop.permute.xlu0 %9826
        %9828 = vrot.lane.b32.xlu0 %v9727, 8
        %v9829 = vpop.permute.xlu0 %9828
        %9830 = vrot.lane.b32.xlu0 %v9732, 8
        %v9831 = vpop.permute.xlu0 %9830
        %9832 = vrot.lane.b32.xlu0 %v9735, 8
        %v9833 = vpop.permute.xlu0 %9832
        %vm9866 = vcmask 97344
        %9867 = vst.msk [vmem:[#allocation3] sm:$0xff] %vm9866, %v9771
        %9868 = vst.msk [vmem:[#allocation3 + $0x8] sm:$0xff] %vm9866, %v9773
        %9869 = vst.msk [vmem:[#allocation3 + $0x10] sm:$0xff] %vm9866, %v9775
        %9870 = vst.msk [vmem:[#allocation3 + $0x18] sm:$0xff] %vm9866, %v9777
        %9871 = vst.msk [vmem:[#allocation3 + $0x20] sm:$0xff] %vm9866, %v9779
        %9872 = vst.msk [vmem:[#allocation3 + $0x28] sm:$0xff] %vm9866, %v9781
        %9873 = vst.msk [vmem:[#allocation3 + $0x30] sm:$0xff] %vm9866, %v9783
        %9874 = vst.msk [vmem:[#allocation3 + $0x38] sm:$0xff] %vm9866, %v9785
        %9875 = vst.msk [vmem:[#allocation3 + $0x40] sm:$0xff] %vm9866, %v9787
        %9876 = vst.msk [vmem:[#allocation3 + $0x48] sm:$0xff] %vm9866, %v9789
        %9877 = vst.msk [vmem:[#allocation3 + $0x50] sm:$0xff] %vm9866, %v9791
        %9878 = vst.msk [vmem:[#allocation3 + $0x58] sm:$0xff] %vm9866, %v9793
        %9879 = vst.msk [vmem:[#allocation3 + $0x60] sm:$0xff] %vm9866, %v9795
        %9880 = vst.msk [vmem:[#allocation3 + $0x68] sm:$0xff] %vm9866, %v9797
        %9881 = vst.msk [vmem:[#allocation3 + $0x70] sm:$0xff] %vm9866, %v9799
        %9882 = vst.msk [vmem:[#allocation3 + $0x78] sm:$0xff] %vm9866, %v9801
        %9883 = vst.msk [vmem:[#allocation3 + $0x80] sm:$0xff] %vm9866, %v9803
        %9884 = vst.msk [vmem:[#allocation3 + $0x88] sm:$0xff] %vm9866, %v9805
        %9885 = vst.msk [vmem:[#allocation3 + $0x90] sm:$0xff] %vm9866, %v9807
        %9886 = vst.msk [vmem:[#allocation3 + $0x98] sm:$0xff] %vm9866, %v9809
        %9887 = vst.msk [vmem:[#allocation3 + $0xa0] sm:$0xff] %vm9866, %v9811
        %9888 = vst.msk [vmem:[#allocation3 + $0xa8] sm:$0xff] %vm9866, %v9813
        %9889 = vst.msk [vmem:[#allocation3 + $0xb0] sm:$0xff] %vm9866, %v9815
        %9890 = vst.msk [vmem:[#allocation3 + $0xb8] sm:$0xff] %vm9866, %v9817
        %9891 = vst.msk [vmem:[#allocation3 + $0xc0] sm:$0xff] %vm9866, %v9819
        %9892 = vst.msk [vmem:[#allocation3 + $0xc8] sm:$0xff] %vm9866, %v9821
        %9893 = vst.msk [vmem:[#allocation3 + $0xd0] sm:$0xff] %vm9866, %v9823
        %9894 = vst.msk [vmem:[#allocation3 + $0xd8] sm:$0xff] %vm9866, %v9825
        %9895 = vst.msk [vmem:[#allocation3 + $0xe0] sm:$0xff] %vm9866, %v9827
        %9896 = vst.msk [vmem:[#allocation3 + $0xe8] sm:$0xff] %vm9866, %v9829
        %9897 = vst.msk [vmem:[#allocation3 + $0xf0] sm:$0xff] %vm9866, %v9831
        %9898 = vst.msk [vmem:[#allocation3 + $0xf8] sm:$0xff] %vm9866, %v9833
        %v9899 = vld [vmem:[%s195] sm:$0xf]
        %v9900 = vld [vmem:[%s195 + $0x4] sm:$0xf]
        %v9901 = vld [vmem:[%s195 + $0x10] sm:$0xf]
        %v9902 = vld [vmem:[%s195 + $0x14] sm:$0xf]
        %v9903 = vld [vmem:[%s195 + $0x20] sm:$0xf]
        %v9904 = vld [vmem:[%s195 + $0x24] sm:$0xf]
        %v9905 = vld [vmem:[%s195 + $0x30] sm:$0xf]
        %v9906 = vld [vmem:[%s195 + $0x34] sm:$0xf]
        %v9907 = vld [vmem:[%s195 + $0x40] sm:$0xf]
        %v9908 = vld [vmem:[%s195 + $0x44] sm:$0xf]
        %v9909 = vld [vmem:[%s195 + $0x50] sm:$0xf]
        %v9910 = vld [vmem:[%s195 + $0x54] sm:$0xf]
        %v9911 = vld [vmem:[%s195 + $0x60] sm:$0xf]
        %v9912 = vld [vmem:[%s195 + $0x64] sm:$0xf]
        %v9913 = vld [vmem:[%s195 + $0x70] sm:$0xf]
        %v9914 = vld [vmem:[%s195 + $0x74] sm:$0xf]
        %v9915 = vld [vmem:[%s195 + $0x80] sm:$0xf]
        %v9916 = vld [vmem:[%s195 + $0x84] sm:$0xf]
        %v9917 = vld [vmem:[%s195 + $0x90] sm:$0xf]
        %v9918 = vld [vmem:[%s195 + $0x94] sm:$0xf]
        %v9919 = vld [vmem:[%s195 + $0xa0] sm:$0xf]
        %v9920 = vld [vmem:[%s195 + $0xa4] sm:$0xf]
        %v9921 = vld [vmem:[%s195 + $0xb0] sm:$0xf]
        %v9922 = vld [vmem:[%s195 + $0xb4] sm:$0xf]
        %v9923 = vld [vmem:[%s195 + $0xc0] sm:$0xf]
        %v9924 = vld [vmem:[%s195 + $0xc4] sm:$0xf]
        %v9925 = vld [vmem:[%s195 + $0xd0] sm:$0xf]
        %v9926 = vld [vmem:[%s195 + $0xd4] sm:$0xf]
        %v9927 = vld [vmem:[%s195 + $0xe0] sm:$0xf]
        %v9928 = vld [vmem:[%s195 + $0xe4] sm:$0xf]
        %v9929 = vld [vmem:[%s195 + $0xf0] sm:$0xf]
        %v9930 = vld [vmem:[%s195 + $0xf4] sm:$0xf]
        %9931 = vst.msk [vmem:[#allocation2] sm:$0xf] %vm633, %v9899
        %9932 = vst.msk [vmem:[#allocation2 + $0x4] sm:$0xf] %vm633, %v9900
        %9933 = vst.msk [vmem:[#allocation2 + $0x8] sm:$0xf] %vm633, %v9901
        %9934 = vst.msk [vmem:[#allocation2 + $0xc] sm:$0xf] %vm633, %v9902
        %9935 = vst.msk [vmem:[#allocation2 + $0x10] sm:$0xf] %vm633, %v9903
        %9936 = vst.msk [vmem:[#allocation2 + $0x14] sm:$0xf] %vm633, %v9904
        %9937 = vst.msk [vmem:[#allocation2 + $0x18] sm:$0xf] %vm633, %v9905
        %9938 = vst.msk [vmem:[#allocation2 + $0x1c] sm:$0xf] %vm633, %v9906
        %9939 = vst.msk [vmem:[#allocation2 + $0x20] sm:$0xf] %vm633, %v9907
        %9940 = vst.msk [vmem:[#allocation2 + $0x24] sm:$0xf] %vm633, %v9908
        %9941 = vst.msk [vmem:[#allocation2 + $0x28] sm:$0xf] %vm633, %v9909
        %9942 = vst.msk [vmem:[#allocation2 + $0x2c] sm:$0xf] %vm633, %v9910
        %9943 = vst.msk [vmem:[#allocation2 + $0x30] sm:$0xf] %vm633, %v9911
        %9944 = vst.msk [vmem:[#allocation2 + $0x34] sm:$0xf] %vm633, %v9912
        %9945 = vst.msk [vmem:[#allocation2 + $0x38] sm:$0xf] %vm633, %v9913
        %9946 = vst.msk [vmem:[#allocation2 + $0x3c] sm:$0xf] %vm633, %v9914
        %9947 = vst.msk [vmem:[#allocation2 + $0x40] sm:$0xf] %vm633, %v9915
        %9948 = vst.msk [vmem:[#allocation2 + $0x44] sm:$0xf] %vm633, %v9916
        %9949 = vst.msk [vmem:[#allocation2 + $0x48] sm:$0xf] %vm633, %v9917
        %9950 = vst.msk [vmem:[#allocation2 + $0x4c] sm:$0xf] %vm633, %v9918
        %9951 = vst.msk [vmem:[#allocation2 + $0x50] sm:$0xf] %vm633, %v9919
        %9952 = vst.msk [vmem:[#allocation2 + $0x54] sm:$0xf] %vm633, %v9920
        %9953 = vst.msk [vmem:[#allocation2 + $0x58] sm:$0xf] %vm633, %v9921
        %9954 = vst.msk [vmem:[#allocation2 + $0x5c] sm:$0xf] %vm633, %v9922
        %9955 = vst.msk [vmem:[#allocation2 + $0x60] sm:$0xf] %vm633, %v9923
        %9956 = vst.msk [vmem:[#allocation2 + $0x64] sm:$0xf] %vm633, %v9924
        %9957 = vst.msk [vmem:[#allocation2 + $0x68] sm:$0xf] %vm633, %v9925
        %9958 = vst.msk [vmem:[#allocation2 + $0x6c] sm:$0xf] %vm633, %v9926
        %9959 = vst.msk [vmem:[#allocation2 + $0x70] sm:$0xf] %vm633, %v9927
        %9960 = vst.msk [vmem:[#allocation2 + $0x74] sm:$0xf] %vm633, %v9928
        %9961 = vst.msk [vmem:[#allocation2 + $0x78] sm:$0xf] %vm633, %v9929
        %9962 = vst.msk [vmem:[#allocation2 + $0x7c] sm:$0xf] %vm633, %v9930
        %v9963 = vld [vmem:[%s195 + $0x4] sm:$0xf]
        %v9964 = vld [vmem:[%s195 + $0x8] sm:$0xf]
        %v9965 = vld [vmem:[%s195 + $0x14] sm:$0xf]
        %v9966 = vld [vmem:[%s195 + $0x18] sm:$0xf]
        %v9967 = vld [vmem:[%s195 + $0x24] sm:$0xf]
        %v9968 = vld [vmem:[%s195 + $0x28] sm:$0xf]
        %v9969 = vld [vmem:[%s195 + $0x34] sm:$0xf]
        %v9970 = vld [vmem:[%s195 + $0x38] sm:$0xf]
        %v9971 = vld [vmem:[%s195 + $0x44] sm:$0xf]
        %v9972 = vld [vmem:[%s195 + $0x48] sm:$0xf]
        %v9973 = vld [vmem:[%s195 + $0x54] sm:$0xf]
        %v9974 = vld [vmem:[%s195 + $0x58] sm:$0xf]
        %v9975 = vld [vmem:[%s195 + $0x64] sm:$0xf]
        %v9976 = vld [vmem:[%s195 + $0x68] sm:$0xf]
        %v9977 = vld [vmem:[%s195 + $0x74] sm:$0xf]
        %v9978 = vld [vmem:[%s195 + $0x78] sm:$0xf]
        %v9979 = vld [vmem:[%s195 + $0x84] sm:$0xf]
        %v9980 = vld [vmem:[%s195 + $0x88] sm:$0xf]
        %v9981 = vld [vmem:[%s195 + $0x94] sm:$0xf]
        %v9982 = vld [vmem:[%s195 + $0x98] sm:$0xf]
        %v9983 = vld [vmem:[%s195 + $0xa4] sm:$0xf]
        %v9984 = vld [vmem:[%s195 + $0xa8] sm:$0xf]
        %v9985 = vld [vmem:[%s195 + $0xb4] sm:$0xf]
        %v9986 = vld [vmem:[%s195 + $0xb8] sm:$0xf]
        %v9987 = vld [vmem:[%s195 + $0xc4] sm:$0xf]
        %v9988 = vld [vmem:[%s195 + $0xc8] sm:$0xf]
        %v9989 = vld [vmem:[%s195 + $0xd4] sm:$0xf]
        %v9990 = vld [vmem:[%s195 + $0xd8] sm:$0xf]
        %v9991 = vld [vmem:[%s195 + $0xe4] sm:$0xf]
        %v9992 = vld [vmem:[%s195 + $0xe8] sm:$0xf]
        %v9993 = vld [vmem:[%s195 + $0xf4] sm:$0xf]
        %v9994 = vld [vmem:[%s195 + $0xf8] sm:$0xf]
        %10027 = vrot.lane.b32.xlu0 %v9963, 16
        %v10028 = vpop.permute.xlu0 %10027
        %10029 = vrot.lane.b32.xlu0 %v9964, 16
        %v10030 = vpop.permute.xlu0 %10029
        %10031 = vrot.lane.b32.xlu0 %v9965, 16
        %v10032 = vpop.permute.xlu0 %10031
        %10033 = vrot.lane.b32.xlu0 %v9966, 16
        %v10034 = vpop.permute.xlu0 %10033
        %10035 = vrot.lane.b32.xlu0 %v9967, 16
        %v10036 = vpop.permute.xlu0 %10035
        %10037 = vrot.lane.b32.xlu0 %v9968, 16
        %v10038 = vpop.permute.xlu0 %10037
        %10039 = vrot.lane.b32.xlu0 %v9969, 16
        %v10040 = vpop.permute.xlu0 %10039
        %10041 = vrot.lane.b32.xlu0 %v9970, 16
        %v10042 = vpop.permute.xlu0 %10041
        %10043 = vrot.lane.b32.xlu0 %v9971, 16
        %v10044 = vpop.permute.xlu0 %10043
        %10045 = vrot.lane.b32.xlu0 %v9972, 16
        %v10046 = vpop.permute.xlu0 %10045
        %10047 = vrot.lane.b32.xlu0 %v9973, 16
        %v10048 = vpop.permute.xlu0 %10047
        %10049 = vrot.lane.b32.xlu0 %v9974, 16
        %v10050 = vpop.permute.xlu0 %10049
        %10051 = vrot.lane.b32.xlu0 %v9975, 16
        %v10052 = vpop.permute.xlu0 %10051
        %10053 = vrot.lane.b32.xlu0 %v9976, 16
        %v10054 = vpop.permute.xlu0 %10053
        %10055 = vrot.lane.b32.xlu0 %v9977, 16
        %v10056 = vpop.permute.xlu0 %10055
        %10057 = vrot.lane.b32.xlu0 %v9978, 16
        %v10058 = vpop.permute.xlu0 %10057
        %10059 = vrot.lane.b32.xlu0 %v9979, 16
        %v10060 = vpop.permute.xlu0 %10059
        %10061 = vrot.lane.b32.xlu0 %v9980, 16
        %v10062 = vpop.permute.xlu0 %10061
        %10063 = vrot.lane.b32.xlu0 %v9981, 16
        %v10064 = vpop.permute.xlu0 %10063
        %10065 = vrot.lane.b32.xlu0 %v9982, 16
        %v10066 = vpop.permute.xlu0 %10065
        %10067 = vrot.lane.b32.xlu0 %v9983, 16
        %v10068 = vpop.permute.xlu0 %10067
        %10069 = vrot.lane.b32.xlu0 %v9984, 16
        %v10070 = vpop.permute.xlu0 %10069
        %10071 = vrot.lane.b32.xlu0 %v9985, 16
        %v10072 = vpop.permute.xlu0 %10071
        %10073 = vrot.lane.b32.xlu0 %v9986, 16
        %v10074 = vpop.permute.xlu0 %10073
        %10075 = vrot.lane.b32.xlu0 %v9987, 16
        %v10076 = vpop.permute.xlu0 %10075
        %10077 = vrot.lane.b32.xlu0 %v9988, 16
        %v10078 = vpop.permute.xlu0 %10077
        %10079 = vrot.lane.b32.xlu0 %v9989, 16
        %v10080 = vpop.permute.xlu0 %10079
        %10081 = vrot.lane.b32.xlu0 %v9990, 16
        %v10082 = vpop.permute.xlu0 %10081
        %10083 = vrot.lane.b32.xlu0 %v9991, 16
        %v10084 = vpop.permute.xlu0 %10083
        %10085 = vrot.lane.b32.xlu0 %v9992, 16
        %v10086 = vpop.permute.xlu0 %10085
        %10087 = vrot.lane.b32.xlu0 %v9993, 16
        %v10088 = vpop.permute.xlu0 %10087
        %10089 = vrot.lane.b32.xlu0 %v9994, 16
        %v10090 = vpop.permute.xlu0 %10089
        %10123 = vst.msk [vmem:[#allocation2] sm:$0xf] %vm826, %v10028
        %10124 = vst.msk [vmem:[#allocation2 + $0x4] sm:$0xf] %vm826, %v10030
        %10125 = vst.msk [vmem:[#allocation2 + $0x8] sm:$0xf] %vm826, %v10032
        %10126 = vst.msk [vmem:[#allocation2 + $0xc] sm:$0xf] %vm826, %v10034
        %10127 = vst.msk [vmem:[#allocation2 + $0x10] sm:$0xf] %vm826, %v10036
        %10128 = vst.msk [vmem:[#allocation2 + $0x14] sm:$0xf] %vm826, %v10038
        %10129 = vst.msk [vmem:[#allocation2 + $0x18] sm:$0xf] %vm826, %v10040
        %10130 = vst.msk [vmem:[#allocation2 + $0x1c] sm:$0xf] %vm826, %v10042
        %10131 = vst.msk [vmem:[#allocation2 + $0x20] sm:$0xf] %vm826, %v10044
        %10132 = vst.msk [vmem:[#allocation2 + $0x24] sm:$0xf] %vm826, %v10046
        %10133 = vst.msk [vmem:[#allocation2 + $0x28] sm:$0xf] %vm826, %v10048
        %10134 = vst.msk [vmem:[#allocation2 + $0x2c] sm:$0xf] %vm826, %v10050
        %10135 = vst.msk [vmem:[#allocation2 + $0x30] sm:$0xf] %vm826, %v10052
        %10136 = vst.msk [vmem:[#allocation2 + $0x34] sm:$0xf] %vm826, %v10054
        %10137 = vst.msk [vmem:[#allocation2 + $0x38] sm:$0xf] %vm826, %v10056
        %10138 = vst.msk [vmem:[#allocation2 + $0x3c] sm:$0xf] %vm826, %v10058
        %10139 = vst.msk [vmem:[#allocation2 + $0x40] sm:$0xf] %vm826, %v10060
        %10140 = vst.msk [vmem:[#allocation2 + $0x44] sm:$0xf] %vm826, %v10062
        %10141 = vst.msk [vmem:[#allocation2 + $0x48] sm:$0xf] %vm826, %v10064
        %10142 = vst.msk [vmem:[#allocation2 + $0x4c] sm:$0xf] %vm826, %v10066
        %10143 = vst.msk [vmem:[#allocation2 + $0x50] sm:$0xf] %vm826, %v10068
        %10144 = vst.msk [vmem:[#allocation2 + $0x54] sm:$0xf] %vm826, %v10070
        %10145 = vst.msk [vmem:[#allocation2 + $0x58] sm:$0xf] %vm826, %v10072
        %10146 = vst.msk [vmem:[#allocation2 + $0x5c] sm:$0xf] %vm826, %v10074
        %10147 = vst.msk [vmem:[#allocation2 + $0x60] sm:$0xf] %vm826, %v10076
        %10148 = vst.msk [vmem:[#allocation2 + $0x64] sm:$0xf] %vm826, %v10078
        %10149 = vst.msk [vmem:[#allocation2 + $0x68] sm:$0xf] %vm826, %v10080
        %10150 = vst.msk [vmem:[#allocation2 + $0x6c] sm:$0xf] %vm826, %v10082
        %10151 = vst.msk [vmem:[#allocation2 + $0x70] sm:$0xf] %vm826, %v10084
        %10152 = vst.msk [vmem:[#allocation2 + $0x74] sm:$0xf] %vm826, %v10086
        %10153 = vst.msk [vmem:[#allocation2 + $0x78] sm:$0xf] %vm826, %v10088
        %10154 = vst.msk [vmem:[#allocation2 + $0x7c] sm:$0xf] %vm826, %v10090
        %v10155 = vld [vmem:[%s195 + $0x8] sm:$0xf]
        %v10156 = vld [vmem:[%s195 + $0xc] sm:$0xf]
        %v10157 = vld [vmem:[%s195 + $0x18] sm:$0xf]
        %v10158 = vld [vmem:[%s195 + $0x1c] sm:$0xf]
        %v10159 = vld [vmem:[%s195 + $0x28] sm:$0xf]
        %v10160 = vld [vmem:[%s195 + $0x2c] sm:$0xf]
        %v10161 = vld [vmem:[%s195 + $0x38] sm:$0xf]
        %v10162 = vld [vmem:[%s195 + $0x3c] sm:$0xf]
        %v10163 = vld [vmem:[%s195 + $0x48] sm:$0xf]
        %v10164 = vld [vmem:[%s195 + $0x4c] sm:$0xf]
        %v10165 = vld [vmem:[%s195 + $0x58] sm:$0xf]
        %v10166 = vld [vmem:[%s195 + $0x5c] sm:$0xf]
        %v10167 = vld [vmem:[%s195 + $0x68] sm:$0xf]
        %v10168 = vld [vmem:[%s195 + $0x6c] sm:$0xf]
        %v10169 = vld [vmem:[%s195 + $0x78] sm:$0xf]
        %v10170 = vld [vmem:[%s195 + $0x7c] sm:$0xf]
        %v10171 = vld [vmem:[%s195 + $0x88] sm:$0xf]
        %v10172 = vld [vmem:[%s195 + $0x8c] sm:$0xf]
        %v10173 = vld [vmem:[%s195 + $0x98] sm:$0xf]
        %v10174 = vld [vmem:[%s195 + $0x9c] sm:$0xf]
        %v10175 = vld [vmem:[%s195 + $0xa8] sm:$0xf]
        %v10176 = vld [vmem:[%s195 + $0xac] sm:$0xf]
        %v10177 = vld [vmem:[%s195 + $0xb8] sm:$0xf]
        %v10178 = vld [vmem:[%s195 + $0xbc] sm:$0xf]
        %v10179 = vld [vmem:[%s195 + $0xc8] sm:$0xf]
        %v10180 = vld [vmem:[%s195 + $0xcc] sm:$0xf]
        %v10181 = vld [vmem:[%s195 + $0xd8] sm:$0xf]
        %v10182 = vld [vmem:[%s195 + $0xdc] sm:$0xf]
        %v10183 = vld [vmem:[%s195 + $0xe8] sm:$0xf]
        %v10184 = vld [vmem:[%s195 + $0xec] sm:$0xf]
        %v10185 = vld [vmem:[%s195 + $0xf8] sm:$0xf]
        %v10186 = vld [vmem:[%s195 + $0xfc] sm:$0xf]
        %10219 = vrot.lane.b32.xlu0 %v10155, 32
        %v10220 = vpop.permute.xlu0 %10219
        %10221 = vrot.lane.b32.xlu0 %v10156, 32
        %v10222 = vpop.permute.xlu0 %10221
        %10223 = vrot.lane.b32.xlu0 %v10157, 32
        %v10224 = vpop.permute.xlu0 %10223
        %10225 = vrot.lane.b32.xlu0 %v10158, 32
        %v10226 = vpop.permute.xlu0 %10225
        %10227 = vrot.lane.b32.xlu0 %v10159, 32
        %v10228 = vpop.permute.xlu0 %10227
        %10229 = vrot.lane.b32.xlu0 %v10160, 32
        %v10230 = vpop.permute.xlu0 %10229
        %10231 = vrot.lane.b32.xlu0 %v10161, 32
        %v10232 = vpop.permute.xlu0 %10231
        %10233 = vrot.lane.b32.xlu0 %v10162, 32
        %v10234 = vpop.permute.xlu0 %10233
        %10235 = vrot.lane.b32.xlu0 %v10163, 32
        %v10236 = vpop.permute.xlu0 %10235
        %10237 = vrot.lane.b32.xlu0 %v10164, 32
        %v10238 = vpop.permute.xlu0 %10237
        %10239 = vrot.lane.b32.xlu0 %v10165, 32
        %v10240 = vpop.permute.xlu0 %10239
        %10241 = vrot.lane.b32.xlu0 %v10166, 32
        %v10242 = vpop.permute.xlu0 %10241
        %10243 = vrot.lane.b32.xlu0 %v10167, 32
        %v10244 = vpop.permute.xlu0 %10243
        %10245 = vrot.lane.b32.xlu0 %v10168, 32
        %v10246 = vpop.permute.xlu0 %10245
        %10247 = vrot.lane.b32.xlu0 %v10169, 32
        %v10248 = vpop.permute.xlu0 %10247
        %10249 = vrot.lane.b32.xlu0 %v10170, 32
        %v10250 = vpop.permute.xlu0 %10249
        %10251 = vrot.lane.b32.xlu0 %v10171, 32
        %v10252 = vpop.permute.xlu0 %10251
        %10253 = vrot.lane.b32.xlu0 %v10172, 32
        %v10254 = vpop.permute.xlu0 %10253
        %10255 = vrot.lane.b32.xlu0 %v10173, 32
        %v10256 = vpop.permute.xlu0 %10255
        %10257 = vrot.lane.b32.xlu0 %v10174, 32
        %v10258 = vpop.permute.xlu0 %10257
        %10259 = vrot.lane.b32.xlu0 %v10175, 32
        %v10260 = vpop.permute.xlu0 %10259
        %10261 = vrot.lane.b32.xlu0 %v10176, 32
        %v10262 = vpop.permute.xlu0 %10261
        %10263 = vrot.lane.b32.xlu0 %v10177, 32
        %v10264 = vpop.permute.xlu0 %10263
        %10265 = vrot.lane.b32.xlu0 %v10178, 32
        %v10266 = vpop.permute.xlu0 %10265
        %10267 = vrot.lane.b32.xlu0 %v10179, 32
        %v10268 = vpop.permute.xlu0 %10267
        %10269 = vrot.lane.b32.xlu0 %v10180, 32
        %v10270 = vpop.permute.xlu0 %10269
        %10271 = vrot.lane.b32.xlu0 %v10181, 32
        %v10272 = vpop.permute.xlu0 %10271
        %10273 = vrot.lane.b32.xlu0 %v10182, 32
        %v10274 = vpop.permute.xlu0 %10273
        %10275 = vrot.lane.b32.xlu0 %v10183, 32
        %v10276 = vpop.permute.xlu0 %10275
        %10277 = vrot.lane.b32.xlu0 %v10184, 32
        %v10278 = vpop.permute.xlu0 %10277
        %10279 = vrot.lane.b32.xlu0 %v10185, 32
        %v10280 = vpop.permute.xlu0 %10279
        %10281 = vrot.lane.b32.xlu0 %v10186, 32
        %v10282 = vpop.permute.xlu0 %10281
        %10315 = vst.msk [vmem:[#allocation2] sm:$0xf] %vm1390, %v10220
        %10316 = vst.msk [vmem:[#allocation2 + $0x4] sm:$0xf] %vm1390, %v10222
        %10317 = vst.msk [vmem:[#allocation2 + $0x8] sm:$0xf] %vm1390, %v10224
        %10318 = vst.msk [vmem:[#allocation2 + $0xc] sm:$0xf] %vm1390, %v10226
        %10319 = vst.msk [vmem:[#allocation2 + $0x10] sm:$0xf] %vm1390, %v10228
        %10320 = vst.msk [vmem:[#allocation2 + $0x14] sm:$0xf] %vm1390, %v10230
        %10321 = vst.msk [vmem:[#allocation2 + $0x18] sm:$0xf] %vm1390, %v10232
        %10322 = vst.msk [vmem:[#allocation2 + $0x1c] sm:$0xf] %vm1390, %v10234
        %10323 = vst.msk [vmem:[#allocation2 + $0x20] sm:$0xf] %vm1390, %v10236
        %10324 = vst.msk [vmem:[#allocation2 + $0x24] sm:$0xf] %vm1390, %v10238
        %10325 = vst.msk [vmem:[#allocation2 + $0x28] sm:$0xf] %vm1390, %v10240
        %10326 = vst.msk [vmem:[#allocation2 + $0x2c] sm:$0xf] %vm1390, %v10242
        %10327 = vst.msk [vmem:[#allocation2 + $0x30] sm:$0xf] %vm1390, %v10244
        %10328 = vst.msk [vmem:[#allocation2 + $0x34] sm:$0xf] %vm1390, %v10246
        %10329 = vst.msk [vmem:[#allocation2 + $0x38] sm:$0xf] %vm1390, %v10248
        %10330 = vst.msk [vmem:[#allocation2 + $0x3c] sm:$0xf] %vm1390, %v10250
        %10331 = vst.msk [vmem:[#allocation2 + $0x40] sm:$0xf] %vm1390, %v10252
        %10332 = vst.msk [vmem:[#allocation2 + $0x44] sm:$0xf] %vm1390, %v10254
        %10333 = vst.msk [vmem:[#allocation2 + $0x48] sm:$0xf] %vm1390, %v10256
        %10334 = vst.msk [vmem:[#allocation2 + $0x4c] sm:$0xf] %vm1390, %v10258
        %10335 = vst.msk [vmem:[#allocation2 + $0x50] sm:$0xf] %vm1390, %v10260
        %10336 = vst.msk [vmem:[#allocation2 + $0x54] sm:$0xf] %vm1390, %v10262
        %10337 = vst.msk [vmem:[#allocation2 + $0x58] sm:$0xf] %vm1390, %v10264
        %10338 = vst.msk [vmem:[#allocation2 + $0x5c] sm:$0xf] %vm1390, %v10266
        %10339 = vst.msk [vmem:[#allocation2 + $0x60] sm:$0xf] %vm1390, %v10268
        %10340 = vst.msk [vmem:[#allocation2 + $0x64] sm:$0xf] %vm1390, %v10270
        %10341 = vst.msk [vmem:[#allocation2 + $0x68] sm:$0xf] %vm1390, %v10272
        %10342 = vst.msk [vmem:[#allocation2 + $0x6c] sm:$0xf] %vm1390, %v10274
        %10343 = vst.msk [vmem:[#allocation2 + $0x70] sm:$0xf] %vm1390, %v10276
        %10344 = vst.msk [vmem:[#allocation2 + $0x74] sm:$0xf] %vm1390, %v10278
        %10345 = vst.msk [vmem:[#allocation2 + $0x78] sm:$0xf] %vm1390, %v10280
        %10346 = vst.msk [vmem:[#allocation2 + $0x7c] sm:$0xf] %vm1390, %v10282
        %v10347 = vld [vmem:[%s1423] sm:$0xf]
        %v10348 = vld [vmem:[%s1423 + $0x4] sm:$0xf]
        %v10349 = vld [vmem:[%s1423 + $0x10] sm:$0xf]
        %v10350 = vld [vmem:[%s1423 + $0x14] sm:$0xf]
        %v10351 = vld [vmem:[%s1423 + $0x20] sm:$0xf]
        %v10352 = vld [vmem:[%s1423 + $0x24] sm:$0xf]
        %v10353 = vld [vmem:[%s1423 + $0x30] sm:$0xf]
        %v10354 = vld [vmem:[%s1423 + $0x34] sm:$0xf]
        %v10355 = vld [vmem:[%s1423 + $0x40] sm:$0xf]
        %v10356 = vld [vmem:[%s1423 + $0x44] sm:$0xf]
        %v10357 = vld [vmem:[%s1423 + $0x50] sm:$0xf]
        %v10358 = vld [vmem:[%s1423 + $0x54] sm:$0xf]
        %v10359 = vld [vmem:[%s1423 + $0x60] sm:$0xf]
        %v10360 = vld [vmem:[%s1423 + $0x64] sm:$0xf]
        %v10361 = vld [vmem:[%s1423 + $0x70] sm:$0xf]
        %v10362 = vld [vmem:[%s1423 + $0x74] sm:$0xf]
        %v10363 = vld [vmem:[%s1423 + $0x80] sm:$0xf]
        %v10364 = vld [vmem:[%s1423 + $0x84] sm:$0xf]
        %v10365 = vld [vmem:[%s1423 + $0x90] sm:$0xf]
        %v10366 = vld [vmem:[%s1423 + $0x94] sm:$0xf]
        %v10367 = vld [vmem:[%s1423 + $0xa0] sm:$0xf]
        %v10368 = vld [vmem:[%s1423 + $0xa4] sm:$0xf]
        %v10369 = vld [vmem:[%s1423 + $0xb0] sm:$0xf]
        %v10370 = vld [vmem:[%s1423 + $0xb4] sm:$0xf]
        %v10371 = vld [vmem:[%s1423 + $0xc0] sm:$0xf]
        %v10372 = vld [vmem:[%s1423 + $0xc4] sm:$0xf]
        %v10373 = vld [vmem:[%s1423 + $0xd0] sm:$0xf]
        %v10374 = vld [vmem:[%s1423 + $0xd4] sm:$0xf]
        %v10375 = vld [vmem:[%s1423 + $0xe0] sm:$0xf]
        %v10376 = vld [vmem:[%s1423 + $0xe4] sm:$0xf]
        %v10377 = vld [vmem:[%s1423 + $0xf0] sm:$0xf]
        %v10378 = vld [vmem:[%s1423 + $0xf4] sm:$0xf]
        %10411 = vrot.lane.b32.xlu0 %v10347, 48
        %v10412 = vpop.permute.xlu0 %10411
        %10413 = vrot.lane.b32.xlu0 %v10348, 48
        %v10414 = vpop.permute.xlu0 %10413
        %10415 = vrot.lane.b32.xlu0 %v10349, 48
        %v10416 = vpop.permute.xlu0 %10415
        %10417 = vrot.lane.b32.xlu0 %v10350, 48
        %v10418 = vpop.permute.xlu0 %10417
        %10419 = vrot.lane.b32.xlu0 %v10351, 48
        %v10420 = vpop.permute.xlu0 %10419
        %10421 = vrot.lane.b32.xlu0 %v10352, 48
        %v10422 = vpop.permute.xlu0 %10421
        %10423 = vrot.lane.b32.xlu0 %v10353, 48
        %v10424 = vpop.permute.xlu0 %10423
        %10425 = vrot.lane.b32.xlu0 %v10354, 48
        %v10426 = vpop.permute.xlu0 %10425
        %10427 = vrot.lane.b32.xlu0 %v10355, 48
        %v10428 = vpop.permute.xlu0 %10427
        %10429 = vrot.lane.b32.xlu0 %v10356, 48
        %v10430 = vpop.permute.xlu0 %10429
        %10431 = vrot.lane.b32.xlu0 %v10357, 48
        %v10432 = vpop.permute.xlu0 %10431
        %10433 = vrot.lane.b32.xlu0 %v10358, 48
        %v10434 = vpop.permute.xlu0 %10433
        %10435 = vrot.lane.b32.xlu0 %v10359, 48
        %v10436 = vpop.permute.xlu0 %10435
        %10437 = vrot.lane.b32.xlu0 %v10360, 48
        %v10438 = vpop.permute.xlu0 %10437
        %10439 = vrot.lane.b32.xlu0 %v10361, 48
        %v10440 = vpop.permute.xlu0 %10439
        %10441 = vrot.lane.b32.xlu0 %v10362, 48
        %v10442 = vpop.permute.xlu0 %10441
        %10443 = vrot.lane.b32.xlu0 %v10363, 48
        %v10444 = vpop.permute.xlu0 %10443
        %10445 = vrot.lane.b32.xlu0 %v10364, 48
        %v10446 = vpop.permute.xlu0 %10445
        %10447 = vrot.lane.b32.xlu0 %v10365, 48
        %v10448 = vpop.permute.xlu0 %10447
        %10449 = vrot.lane.b32.xlu0 %v10366, 48
        %v10450 = vpop.permute.xlu0 %10449
        %10451 = vrot.lane.b32.xlu0 %v10367, 48
        %v10452 = vpop.permute.xlu0 %10451
        %10453 = vrot.lane.b32.xlu0 %v10368, 48
        %v10454 = vpop.permute.xlu0 %10453
        %10455 = vrot.lane.b32.xlu0 %v10369, 48
        %v10456 = vpop.permute.xlu0 %10455
        %10457 = vrot.lane.b32.xlu0 %v10370, 48
        %v10458 = vpop.permute.xlu0 %10457
        %10459 = vrot.lane.b32.xlu0 %v10371, 48
        %v10460 = vpop.permute.xlu0 %10459
        %10461 = vrot.lane.b32.xlu0 %v10372, 48
        %v10462 = vpop.permute.xlu0 %10461
        %10463 = vrot.lane.b32.xlu0 %v10373, 48
        %v10464 = vpop.permute.xlu0 %10463
        %10465 = vrot.lane.b32.xlu0 %v10374, 48
        %v10466 = vpop.permute.xlu0 %10465
        %10467 = vrot.lane.b32.xlu0 %v10375, 48
        %v10468 = vpop.permute.xlu0 %10467
        %10469 = vrot.lane.b32.xlu0 %v10376, 48
        %v10470 = vpop.permute.xlu0 %10469
        %10471 = vrot.lane.b32.xlu0 %v10377, 48
        %v10472 = vpop.permute.xlu0 %10471
        %10473 = vrot.lane.b32.xlu0 %v10378, 48
        %v10474 = vpop.permute.xlu0 %10473
        %10507 = vst.msk [vmem:[#allocation2] sm:$0xf] %vm1920, %v10412
        %10508 = vst.msk [vmem:[#allocation2 + $0x4] sm:$0xf] %vm1920, %v10414
        %10509 = vst.msk [vmem:[#allocation2 + $0x8] sm:$0xf] %vm1920, %v10416
        %10510 = vst.msk [vmem:[#allocation2 + $0xc] sm:$0xf] %vm1920, %v10418
        %10511 = vst.msk [vmem:[#allocation2 + $0x10] sm:$0xf] %vm1920, %v10420
        %10512 = vst.msk [vmem:[#allocation2 + $0x14] sm:$0xf] %vm1920, %v10422
        %10513 = vst.msk [vmem:[#allocation2 + $0x18] sm:$0xf] %vm1920, %v10424
        %10514 = vst.msk [vmem:[#allocation2 + $0x1c] sm:$0xf] %vm1920, %v10426
        %10515 = vst.msk [vmem:[#allocation2 + $0x20] sm:$0xf] %vm1920, %v10428
        %10516 = vst.msk [vmem:[#allocation2 + $0x24] sm:$0xf] %vm1920, %v10430
        %10517 = vst.msk [vmem:[#allocation2 + $0x28] sm:$0xf] %vm1920, %v10432
        %10518 = vst.msk [vmem:[#allocation2 + $0x2c] sm:$0xf] %vm1920, %v10434
        %10519 = vst.msk [vmem:[#allocation2 + $0x30] sm:$0xf] %vm1920, %v10436
        %10520 = vst.msk [vmem:[#allocation2 + $0x34] sm:$0xf] %vm1920, %v10438
        %10521 = vst.msk [vmem:[#allocation2 + $0x38] sm:$0xf] %vm1920, %v10440
        %10522 = vst.msk [vmem:[#allocation2 + $0x3c] sm:$0xf] %vm1920, %v10442
        %10523 = vst.msk [vmem:[#allocation2 + $0x40] sm:$0xf] %vm1920, %v10444
        %10524 = vst.msk [vmem:[#allocation2 + $0x44] sm:$0xf] %vm1920, %v10446
        %10525 = vst.msk [vmem:[#allocation2 + $0x48] sm:$0xf] %vm1920, %v10448
        %10526 = vst.msk [vmem:[#allocation2 + $0x4c] sm:$0xf] %vm1920, %v10450
        %10527 = vst.msk [vmem:[#allocation2 + $0x50] sm:$0xf] %vm1920, %v10452
        %10528 = vst.msk [vmem:[#allocation2 + $0x54] sm:$0xf] %vm1920, %v10454
        %10529 = vst.msk [vmem:[#allocation2 + $0x58] sm:$0xf] %vm1920, %v10456
        %10530 = vst.msk [vmem:[#allocation2 + $0x5c] sm:$0xf] %vm1920, %v10458
        %10531 = vst.msk [vmem:[#allocation2 + $0x60] sm:$0xf] %vm1920, %v10460
        %10532 = vst.msk [vmem:[#allocation2 + $0x64] sm:$0xf] %vm1920, %v10462
        %10533 = vst.msk [vmem:[#allocation2 + $0x68] sm:$0xf] %vm1920, %v10464
        %10534 = vst.msk [vmem:[#allocation2 + $0x6c] sm:$0xf] %vm1920, %v10466
        %10535 = vst.msk [vmem:[#allocation2 + $0x70] sm:$0xf] %vm1920, %v10468
        %10536 = vst.msk [vmem:[#allocation2 + $0x74] sm:$0xf] %vm1920, %v10470
        %10537 = vst.msk [vmem:[#allocation2 + $0x78] sm:$0xf] %vm1920, %v10472
        %10538 = vst.msk [vmem:[#allocation2 + $0x7c] sm:$0xf] %vm1920, %v10474
        %v10539 = vld [vmem:[%s1423 + $0x8] sm:$0xf]
        %v10540 = vld [vmem:[%s1423 + $0xc] sm:$0xf]
        %v10541 = vld [vmem:[%s1423 + $0x18] sm:$0xf]
        %v10542 = vld [vmem:[%s1423 + $0x1c] sm:$0xf]
        %v10543 = vld [vmem:[%s1423 + $0x28] sm:$0xf]
        %v10544 = vld [vmem:[%s1423 + $0x2c] sm:$0xf]
        %v10545 = vld [vmem:[%s1423 + $0x38] sm:$0xf]
        %v10546 = vld [vmem:[%s1423 + $0x3c] sm:$0xf]
        %v10547 = vld [vmem:[%s1423 + $0x48] sm:$0xf]
        %v10548 = vld [vmem:[%s1423 + $0x4c] sm:$0xf]
        %v10549 = vld [vmem:[%s1423 + $0x58] sm:$0xf]
        %v10550 = vld [vmem:[%s1423 + $0x5c] sm:$0xf]
        %v10551 = vld [vmem:[%s1423 + $0x68] sm:$0xf]
        %v10552 = vld [vmem:[%s1423 + $0x6c] sm:$0xf]
        %v10553 = vld [vmem:[%s1423 + $0x78] sm:$0xf]
        %v10554 = vld [vmem:[%s1423 + $0x7c] sm:$0xf]
        %v10555 = vld [vmem:[%s1423 + $0x88] sm:$0xf]
        %v10556 = vld [vmem:[%s1423 + $0x8c] sm:$0xf]
        %v10557 = vld [vmem:[%s1423 + $0x98] sm:$0xf]
        %v10558 = vld [vmem:[%s1423 + $0x9c] sm:$0xf]
        %v10559 = vld [vmem:[%s1423 + $0xa8] sm:$0xf]
        %v10560 = vld [vmem:[%s1423 + $0xac] sm:$0xf]
        %v10561 = vld [vmem:[%s1423 + $0xb8] sm:$0xf]
        %v10562 = vld [vmem:[%s1423 + $0xbc] sm:$0xf]
        %v10563 = vld [vmem:[%s1423 + $0xc8] sm:$0xf]
        %v10564 = vld [vmem:[%s1423 + $0xcc] sm:$0xf]
        %v10565 = vld [vmem:[%s1423 + $0xd8] sm:$0xf]
        %v10566 = vld [vmem:[%s1423 + $0xdc] sm:$0xf]
        %v10567 = vld [vmem:[%s1423 + $0xe8] sm:$0xf]
        %v10568 = vld [vmem:[%s1423 + $0xec] sm:$0xf]
        %v10569 = vld [vmem:[%s1423 + $0xf8] sm:$0xf]
        %v10570 = vld [vmem:[%s1423 + $0xfc] sm:$0xf]
        %10603 = vrot.lane.b32.xlu0 %v10539, 64
        %v10604 = vpop.permute.xlu0 %10603
        %10605 = vrot.lane.b32.xlu0 %v10540, 64
        %v10606 = vpop.permute.xlu0 %10605
        %10607 = vrot.lane.b32.xlu0 %v10541, 64
        %v10608 = vpop.permute.xlu0 %10607
        %10609 = vrot.lane.b32.xlu0 %v10542, 64
        %v10610 = vpop.permute.xlu0 %10609
        %10611 = vrot.lane.b32.xlu0 %v10543, 64
        %v10612 = vpop.permute.xlu0 %10611
        %10613 = vrot.lane.b32.xlu0 %v10544, 64
        %v10614 = vpop.permute.xlu0 %10613
        %10615 = vrot.lane.b32.xlu0 %v10545, 64
        %v10616 = vpop.permute.xlu0 %10615
        %10617 = vrot.lane.b32.xlu0 %v10546, 64
        %v10618 = vpop.permute.xlu0 %10617
        %10619 = vrot.lane.b32.xlu0 %v10547, 64
        %v10620 = vpop.permute.xlu0 %10619
        %10621 = vrot.lane.b32.xlu0 %v10548, 64
        %v10622 = vpop.permute.xlu0 %10621
        %10623 = vrot.lane.b32.xlu0 %v10549, 64
        %v10624 = vpop.permute.xlu0 %10623
        %10625 = vrot.lane.b32.xlu0 %v10550, 64
        %v10626 = vpop.permute.xlu0 %10625
        %10627 = vrot.lane.b32.xlu0 %v10551, 64
        %v10628 = vpop.permute.xlu0 %10627
        %10629 = vrot.lane.b32.xlu0 %v10552, 64
        %v10630 = vpop.permute.xlu0 %10629
        %10631 = vrot.lane.b32.xlu0 %v10553, 64
        %v10632 = vpop.permute.xlu0 %10631
        %10633 = vrot.lane.b32.xlu0 %v10554, 64
        %v10634 = vpop.permute.xlu0 %10633
        %10635 = vrot.lane.b32.xlu0 %v10555, 64
        %v10636 = vpop.permute.xlu0 %10635
        %10637 = vrot.lane.b32.xlu0 %v10556, 64
        %v10638 = vpop.permute.xlu0 %10637
        %10639 = vrot.lane.b32.xlu0 %v10557, 64
        %v10640 = vpop.permute.xlu0 %10639
        %10641 = vrot.lane.b32.xlu0 %v10558, 64
        %v10642 = vpop.permute.xlu0 %10641
        %10643 = vrot.lane.b32.xlu0 %v10559, 64
        %v10644 = vpop.permute.xlu0 %10643
        %10645 = vrot.lane.b32.xlu0 %v10560, 64
        %v10646 = vpop.permute.xlu0 %10645
        %10647 = vrot.lane.b32.xlu0 %v10561, 64
        %v10648 = vpop.permute.xlu0 %10647
        %10649 = vrot.lane.b32.xlu0 %v10562, 64
        %v10650 = vpop.permute.xlu0 %10649
        %10651 = vrot.lane.b32.xlu0 %v10563, 64
        %v10652 = vpop.permute.xlu0 %10651
        %10653 = vrot.lane.b32.xlu0 %v10564, 64
        %v10654 = vpop.permute.xlu0 %10653
        %10655 = vrot.lane.b32.xlu0 %v10565, 64
        %v10656 = vpop.permute.xlu0 %10655
        %10657 = vrot.lane.b32.xlu0 %v10566, 64
        %v10658 = vpop.permute.xlu0 %10657
        %10659 = vrot.lane.b32.xlu0 %v10567, 64
        %v10660 = vpop.permute.xlu0 %10659
        %10661 = vrot.lane.b32.xlu0 %v10568, 64
        %v10662 = vpop.permute.xlu0 %10661
        %10663 = vrot.lane.b32.xlu0 %v10569, 64
        %v10664 = vpop.permute.xlu0 %10663
        %10665 = vrot.lane.b32.xlu0 %v10570, 64
        %v10666 = vpop.permute.xlu0 %10665
        %10699 = vst.msk [vmem:[#allocation2] sm:$0xf] %vm2481, %v10604
        %10700 = vst.msk [vmem:[#allocation2 + $0x4] sm:$0xf] %vm2481, %v10606
        %10701 = vst.msk [vmem:[#allocation2 + $0x8] sm:$0xf] %vm2481, %v10608
        %10702 = vst.msk [vmem:[#allocation2 + $0xc] sm:$0xf] %vm2481, %v10610
        %10703 = vst.msk [vmem:[#allocation2 + $0x10] sm:$0xf] %vm2481, %v10612
        %10704 = vst.msk [vmem:[#allocation2 + $0x14] sm:$0xf] %vm2481, %v10614
        %10705 = vst.msk [vmem:[#allocation2 + $0x18] sm:$0xf] %vm2481, %v10616
        %10706 = vst.msk [vmem:[#allocation2 + $0x1c] sm:$0xf] %vm2481, %v10618
        %10707 = vst.msk [vmem:[#allocation2 + $0x20] sm:$0xf] %vm2481, %v10620
        %10708 = vst.msk [vmem:[#allocation2 + $0x24] sm:$0xf] %vm2481, %v10622
        %10709 = vst.msk [vmem:[#allocation2 + $0x28] sm:$0xf] %vm2481, %v10624
        %10710 = vst.msk [vmem:[#allocation2 + $0x2c] sm:$0xf] %vm2481, %v10626
        %10711 = vst.msk [vmem:[#allocation2 + $0x30] sm:$0xf] %vm2481, %v10628
        %10712 = vst.msk [vmem:[#allocation2 + $0x34] sm:$0xf] %vm2481, %v10630
        %10713 = vst.msk [vmem:[#allocation2 + $0x38] sm:$0xf] %vm2481, %v10632
        %10714 = vst.msk [vmem:[#allocation2 + $0x3c] sm:$0xf] %vm2481, %v10634
        %10715 = vst.msk [vmem:[#allocation2 + $0x40] sm:$0xf] %vm2481, %v10636
        %10716 = vst.msk [vmem:[#allocation2 + $0x44] sm:$0xf] %vm2481, %v10638
        %10717 = vst.msk [vmem:[#allocation2 + $0x48] sm:$0xf] %vm2481, %v10640
        %10718 = vst.msk [vmem:[#allocation2 + $0x4c] sm:$0xf] %vm2481, %v10642
        %10719 = vst.msk [vmem:[#allocation2 + $0x50] sm:$0xf] %vm2481, %v10644
        %10720 = vst.msk [vmem:[#allocation2 + $0x54] sm:$0xf] %vm2481, %v10646
        %10721 = vst.msk [vmem:[#allocation2 + $0x58] sm:$0xf] %vm2481, %v10648
        %10722 = vst.msk [vmem:[#allocation2 + $0x5c] sm:$0xf] %vm2481, %v10650
        %10723 = vst.msk [vmem:[#allocation2 + $0x60] sm:$0xf] %vm2481, %v10652
        %10724 = vst.msk [vmem:[#allocation2 + $0x64] sm:$0xf] %vm2481, %v10654
        %10725 = vst.msk [vmem:[#allocation2 + $0x68] sm:$0xf] %vm2481, %v10656
        %10726 = vst.msk [vmem:[#allocation2 + $0x6c] sm:$0xf] %vm2481, %v10658
        %10727 = vst.msk [vmem:[#allocation2 + $0x70] sm:$0xf] %vm2481, %v10660
        %10728 = vst.msk [vmem:[#allocation2 + $0x74] sm:$0xf] %vm2481, %v10662
        %10729 = vst.msk [vmem:[#allocation2 + $0x78] sm:$0xf] %vm2481, %v10664
        %10730 = vst.msk [vmem:[#allocation2 + $0x7c] sm:$0xf] %vm2481, %v10666
        %s10731 = scalar_lea.vmem %s195, 256
        %v10732 = vld [vmem:[%s10731] sm:$0xf]
        %v10733 = vld [vmem:[%s10731 + $0x4] sm:$0xf]
        %v10734 = vld [vmem:[%s10731 + $0x10] sm:$0xf]
        %v10735 = vld [vmem:[%s10731 + $0x14] sm:$0xf]
        %v10736 = vld [vmem:[%s10731 + $0x20] sm:$0xf]
        %v10737 = vld [vmem:[%s10731 + $0x24] sm:$0xf]
        %v10738 = vld [vmem:[%s10731 + $0x30] sm:$0xf]
        %v10739 = vld [vmem:[%s10731 + $0x34] sm:$0xf]
        %v10740 = vld [vmem:[%s10731 + $0x40] sm:$0xf]
        %v10741 = vld [vmem:[%s10731 + $0x44] sm:$0xf]
        %v10742 = vld [vmem:[%s10731 + $0x50] sm:$0xf]
        %v10743 = vld [vmem:[%s10731 + $0x54] sm:$0xf]
        %v10744 = vld [vmem:[%s10731 + $0x60] sm:$0xf]
        %v10745 = vld [vmem:[%s10731 + $0x64] sm:$0xf]
        %v10746 = vld [vmem:[%s10731 + $0x70] sm:$0xf]
        %v10747 = vld [vmem:[%s10731 + $0x74] sm:$0xf]
        %v10748 = vld [vmem:[%s10731 + $0x80] sm:$0xf]
        %v10749 = vld [vmem:[%s10731 + $0x84] sm:$0xf]
        %v10750 = vld [vmem:[%s10731 + $0x90] sm:$0xf]
        %v10751 = vld [vmem:[%s10731 + $0x94] sm:$0xf]
        %v10752 = vld [vmem:[%s10731 + $0xa0] sm:$0xf]
        %v10753 = vld [vmem:[%s10731 + $0xa4] sm:$0xf]
        %v10754 = vld [vmem:[%s10731 + $0xb0] sm:$0xf]
        %v10755 = vld [vmem:[%s10731 + $0xb4] sm:$0xf]
        %v10756 = vld [vmem:[%s10731 + $0xc0] sm:$0xf]
        %v10757 = vld [vmem:[%s10731 + $0xc4] sm:$0xf]
        %v10758 = vld [vmem:[%s10731 + $0xd0] sm:$0xf]
        %v10759 = vld [vmem:[%s10731 + $0xd4] sm:$0xf]
        %v10760 = vld [vmem:[%s10731 + $0xe0] sm:$0xf]
        %v10761 = vld [vmem:[%s10731 + $0xe4] sm:$0xf]
        %v10762 = vld [vmem:[%s10731 + $0xf0] sm:$0xf]
        %v10763 = vld [vmem:[%s10731 + $0xf4] sm:$0xf]
        %10796 = vrot.lane.b32.xlu0 %v10732, 80
        %v10797 = vpop.permute.xlu0 %10796
        %10798 = vrot.lane.b32.xlu0 %v10733, 80
        %v10799 = vpop.permute.xlu0 %10798
        %10800 = vrot.lane.b32.xlu0 %v10734, 80
        %v10801 = vpop.permute.xlu0 %10800
        %10802 = vrot.lane.b32.xlu0 %v10735, 80
        %v10803 = vpop.permute.xlu0 %10802
        %10804 = vrot.lane.b32.xlu0 %v10736, 80
        %v10805 = vpop.permute.xlu0 %10804
        %10806 = vrot.lane.b32.xlu0 %v10737, 80
        %v10807 = vpop.permute.xlu0 %10806
        %10808 = vrot.lane.b32.xlu0 %v10738, 80
        %v10809 = vpop.permute.xlu0 %10808
        %10810 = vrot.lane.b32.xlu0 %v10739, 80
        %v10811 = vpop.permute.xlu0 %10810
        %10812 = vrot.lane.b32.xlu0 %v10740, 80
        %v10813 = vpop.permute.xlu0 %10812
        %10814 = vrot.lane.b32.xlu0 %v10741, 80
        %v10815 = vpop.permute.xlu0 %10814
        %10816 = vrot.lane.b32.xlu0 %v10742, 80
        %v10817 = vpop.permute.xlu0 %10816
        %10818 = vrot.lane.b32.xlu0 %v10743, 80
        %v10819 = vpop.permute.xlu0 %10818
        %10820 = vrot.lane.b32.xlu0 %v10744, 80
        %v10821 = vpop.permute.xlu0 %10820
        %10822 = vrot.lane.b32.xlu0 %v10745, 80
        %v10823 = vpop.permute.xlu0 %10822
        %10824 = vrot.lane.b32.xlu0 %v10746, 80
        %v10825 = vpop.permute.xlu0 %10824
        %10826 = vrot.lane.b32.xlu0 %v10747, 80
        %v10827 = vpop.permute.xlu0 %10826
        %10828 = vrot.lane.b32.xlu0 %v10748, 80
        %v10829 = vpop.permute.xlu0 %10828
        %10830 = vrot.lane.b32.xlu0 %v10749, 80
        %v10831 = vpop.permute.xlu0 %10830
        %10832 = vrot.lane.b32.xlu0 %v10750, 80
        %v10833 = vpop.permute.xlu0 %10832
        %10834 = vrot.lane.b32.xlu0 %v10751, 80
        %v10835 = vpop.permute.xlu0 %10834
        %10836 = vrot.lane.b32.xlu0 %v10752, 80
        %v10837 = vpop.permute.xlu0 %10836
        %10838 = vrot.lane.b32.xlu0 %v10753, 80
        %v10839 = vpop.permute.xlu0 %10838
        %10840 = vrot.lane.b32.xlu0 %v10754, 80
        %v10841 = vpop.permute.xlu0 %10840
        %10842 = vrot.lane.b32.xlu0 %v10755, 80
        %v10843 = vpop.permute.xlu0 %10842
        %10844 = vrot.lane.b32.xlu0 %v10756, 80
        %v10845 = vpop.permute.xlu0 %10844
        %10846 = vrot.lane.b32.xlu0 %v10757, 80
        %v10847 = vpop.permute.xlu0 %10846
        %10848 = vrot.lane.b32.xlu0 %v10758, 80
        %v10849 = vpop.permute.xlu0 %10848
        %10850 = vrot.lane.b32.xlu0 %v10759, 80
        %v10851 = vpop.permute.xlu0 %10850
        %10852 = vrot.lane.b32.xlu0 %v10760, 80
        %v10853 = vpop.permute.xlu0 %10852
        %10854 = vrot.lane.b32.xlu0 %v10761, 80
        %v10855 = vpop.permute.xlu0 %10854
        %10856 = vrot.lane.b32.xlu0 %v10762, 80
        %v10857 = vpop.permute.xlu0 %10856
        %10858 = vrot.lane.b32.xlu0 %v10763, 80
        %v10859 = vpop.permute.xlu0 %10858
        %10892 = vst.msk [vmem:[#allocation2] sm:$0xf] %vm3011, %v10797
        %10893 = vst.msk [vmem:[#allocation2 + $0x4] sm:$0xf] %vm3011, %v10799
        %10894 = vst.msk [vmem:[#allocation2 + $0x8] sm:$0xf] %vm3011, %v10801
        %10895 = vst.msk [vmem:[#allocation2 + $0xc] sm:$0xf] %vm3011, %v10803
        %10896 = vst.msk [vmem:[#allocation2 + $0x10] sm:$0xf] %vm3011, %v10805
        %10897 = vst.msk [vmem:[#allocation2 + $0x14] sm:$0xf] %vm3011, %v10807
        %10898 = vst.msk [vmem:[#allocation2 + $0x18] sm:$0xf] %vm3011, %v10809
        %10899 = vst.msk [vmem:[#allocation2 + $0x1c] sm:$0xf] %vm3011, %v10811
        %10900 = vst.msk [vmem:[#allocation2 + $0x20] sm:$0xf] %vm3011, %v10813
        %10901 = vst.msk [vmem:[#allocation2 + $0x24] sm:$0xf] %vm3011, %v10815
        %10902 = vst.msk [vmem:[#allocation2 + $0x28] sm:$0xf] %vm3011, %v10817
        %10903 = vst.msk [vmem:[#allocation2 + $0x2c] sm:$0xf] %vm3011, %v10819
        %10904 = vst.msk [vmem:[#allocation2 + $0x30] sm:$0xf] %vm3011, %v10821
        %10905 = vst.msk [vmem:[#allocation2 + $0x34] sm:$0xf] %vm3011, %v10823
        %10906 = vst.msk [vmem:[#allocation2 + $0x38] sm:$0xf] %vm3011, %v10825
        %10907 = vst.msk [vmem:[#allocation2 + $0x3c] sm:$0xf] %vm3011, %v10827
        %10908 = vst.msk [vmem:[#allocation2 + $0x40] sm:$0xf] %vm3011, %v10829
        %10909 = vst.msk [vmem:[#allocation2 + $0x44] sm:$0xf] %vm3011, %v10831
        %10910 = vst.msk [vmem:[#allocation2 + $0x48] sm:$0xf] %vm3011, %v10833
        %10911 = vst.msk [vmem:[#allocation2 + $0x4c] sm:$0xf] %vm3011, %v10835
        %10912 = vst.msk [vmem:[#allocation2 + $0x50] sm:$0xf] %vm3011, %v10837
        %10913 = vst.msk [vmem:[#allocation2 + $0x54] sm:$0xf] %vm3011, %v10839
        %10914 = vst.msk [vmem:[#allocation2 + $0x58] sm:$0xf] %vm3011, %v10841
        %10915 = vst.msk [vmem:[#allocation2 + $0x5c] sm:$0xf] %vm3011, %v10843
        %10916 = vst.msk [vmem:[#allocation2 + $0x60] sm:$0xf] %vm3011, %v10845
        %10917 = vst.msk [vmem:[#allocation2 + $0x64] sm:$0xf] %vm3011, %v10847
        %10918 = vst.msk [vmem:[#allocation2 + $0x68] sm:$0xf] %vm3011, %v10849
        %10919 = vst.msk [vmem:[#allocation2 + $0x6c] sm:$0xf] %vm3011, %v10851
        %10920 = vst.msk [vmem:[#allocation2 + $0x70] sm:$0xf] %vm3011, %v10853
        %10921 = vst.msk [vmem:[#allocation2 + $0x74] sm:$0xf] %vm3011, %v10855
        %10922 = vst.msk [vmem:[#allocation2 + $0x78] sm:$0xf] %vm3011, %v10857
        %10923 = vst.msk [vmem:[#allocation2 + $0x7c] sm:$0xf] %vm3011, %v10859
        %v10924 = vld [vmem:[%s10731 + $0x4] sm:$0xf]
        %v10925 = vld [vmem:[%s10731 + $0x8] sm:$0xf]
        %v10926 = vld [vmem:[%s10731 + $0x14] sm:$0xf]
        %v10927 = vld [vmem:[%s10731 + $0x18] sm:$0xf]
        %v10928 = vld [vmem:[%s10731 + $0x24] sm:$0xf]
        %v10929 = vld [vmem:[%s10731 + $0x28] sm:$0xf]
        %v10930 = vld [vmem:[%s10731 + $0x34] sm:$0xf]
        %v10931 = vld [vmem:[%s10731 + $0x38] sm:$0xf]
        %v10932 = vld [vmem:[%s10731 + $0x44] sm:$0xf]
        %v10933 = vld [vmem:[%s10731 + $0x48] sm:$0xf]
        %v10934 = vld [vmem:[%s10731 + $0x54] sm:$0xf]
        %v10935 = vld [vmem:[%s10731 + $0x58] sm:$0xf]
        %v10936 = vld [vmem:[%s10731 + $0x64] sm:$0xf]
        %v10937 = vld [vmem:[%s10731 + $0x68] sm:$0xf]
        %v10938 = vld [vmem:[%s10731 + $0x74] sm:$0xf]
        %v10939 = vld [vmem:[%s10731 + $0x78] sm:$0xf]
        %v10940 = vld [vmem:[%s10731 + $0x84] sm:$0xf]
        %v10941 = vld [vmem:[%s10731 + $0x88] sm:$0xf]
        %v10942 = vld [vmem:[%s10731 + $0x94] sm:$0xf]
        %v10943 = vld [vmem:[%s10731 + $0x98] sm:$0xf]
        %v10944 = vld [vmem:[%s10731 + $0xa4] sm:$0xf]
        %v10945 = vld [vmem:[%s10731 + $0xa8] sm:$0xf]
        %v10946 = vld [vmem:[%s10731 + $0xb4] sm:$0xf]
        %v10947 = vld [vmem:[%s10731 + $0xb8] sm:$0xf]
        %v10948 = vld [vmem:[%s10731 + $0xc4] sm:$0xf]
        %v10949 = vld [vmem:[%s10731 + $0xc8] sm:$0xf]
        %v10950 = vld [vmem:[%s10731 + $0xd4] sm:$0xf]
        %v10951 = vld [vmem:[%s10731 + $0xd8] sm:$0xf]
        %v10952 = vld [vmem:[%s10731 + $0xe4] sm:$0xf]
        %v10953 = vld [vmem:[%s10731 + $0xe8] sm:$0xf]
        %v10954 = vld [vmem:[%s10731 + $0xf4] sm:$0xf]
        %v10955 = vld [vmem:[%s10731 + $0xf8] sm:$0xf]
        %10988 = vrot.lane.b32.xlu0 %v10924, 96
        %v10989 = vpop.permute.xlu0 %10988
        %10990 = vrot.lane.b32.xlu0 %v10925, 96
        %v10991 = vpop.permute.xlu0 %10990
        %10992 = vrot.lane.b32.xlu0 %v10926, 96
        %v10993 = vpop.permute.xlu0 %10992
        %10994 = vrot.lane.b32.xlu0 %v10927, 96
        %v10995 = vpop.permute.xlu0 %10994
        %10996 = vrot.lane.b32.xlu0 %v10928, 96
        %v10997 = vpop.permute.xlu0 %10996
        %10998 = vrot.lane.b32.xlu0 %v10929, 96
        %v10999 = vpop.permute.xlu0 %10998
        %11000 = vrot.lane.b32.xlu0 %v10930, 96
        %v11001 = vpop.permute.xlu0 %11000
        %11002 = vrot.lane.b32.xlu0 %v10931, 96
        %v11003 = vpop.permute.xlu0 %11002
        %11004 = vrot.lane.b32.xlu0 %v10932, 96
        %v11005 = vpop.permute.xlu0 %11004
        %11006 = vrot.lane.b32.xlu0 %v10933, 96
        %v11007 = vpop.permute.xlu0 %11006
        %11008 = vrot.lane.b32.xlu0 %v10934, 96
        %v11009 = vpop.permute.xlu0 %11008
        %11010 = vrot.lane.b32.xlu0 %v10935, 96
        %v11011 = vpop.permute.xlu0 %11010
        %11012 = vrot.lane.b32.xlu0 %v10936, 96
        %v11013 = vpop.permute.xlu0 %11012
        %11014 = vrot.lane.b32.xlu0 %v10937, 96
        %v11015 = vpop.permute.xlu0 %11014
        %11016 = vrot.lane.b32.xlu0 %v10938, 96
        %v11017 = vpop.permute.xlu0 %11016
        %11018 = vrot.lane.b32.xlu0 %v10939, 96
        %v11019 = vpop.permute.xlu0 %11018
        %11020 = vrot.lane.b32.xlu0 %v10940, 96
        %v11021 = vpop.permute.xlu0 %11020
        %11022 = vrot.lane.b32.xlu0 %v10941, 96
        %v11023 = vpop.permute.xlu0 %11022
        %11024 = vrot.lane.b32.xlu0 %v10942, 96
        %v11025 = vpop.permute.xlu0 %11024
        %11026 = vrot.lane.b32.xlu0 %v10943, 96
        %v11027 = vpop.permute.xlu0 %11026
        %11028 = vrot.lane.b32.xlu0 %v10944, 96
        %v11029 = vpop.permute.xlu0 %11028
        %11030 = vrot.lane.b32.xlu0 %v10945, 96
        %v11031 = vpop.permute.xlu0 %11030
        %11032 = vrot.lane.b32.xlu0 %v10946, 96
        %v11033 = vpop.permute.xlu0 %11032
        %11034 = vrot.lane.b32.xlu0 %v10947, 96
        %v11035 = vpop.permute.xlu0 %11034
        %11036 = vrot.lane.b32.xlu0 %v10948, 96
        %v11037 = vpop.permute.xlu0 %11036
        %11038 = vrot.lane.b32.xlu0 %v10949, 96
        %v11039 = vpop.permute.xlu0 %11038
        %11040 = vrot.lane.b32.xlu0 %v10950, 96
        %v11041 = vpop.permute.xlu0 %11040
        %11042 = vrot.lane.b32.xlu0 %v10951, 96
        %v11043 = vpop.permute.xlu0 %11042
        %11044 = vrot.lane.b32.xlu0 %v10952, 96
        %v11045 = vpop.permute.xlu0 %11044
        %11046 = vrot.lane.b32.xlu0 %v10953, 96
        %v11047 = vpop.permute.xlu0 %11046
        %11048 = vrot.lane.b32.xlu0 %v10954, 96
        %v11049 = vpop.permute.xlu0 %11048
        %11050 = vrot.lane.b32.xlu0 %v10955, 96
        %v11051 = vpop.permute.xlu0 %11050
        %11084 = vst.msk [vmem:[#allocation2] sm:$0xf] %vm3204, %v10989
        %11085 = vst.msk [vmem:[#allocation2 + $0x4] sm:$0xf] %vm3204, %v10991
        %11086 = vst.msk [vmem:[#allocation2 + $0x8] sm:$0xf] %vm3204, %v10993
        %11087 = vst.msk [vmem:[#allocation2 + $0xc] sm:$0xf] %vm3204, %v10995
        %11088 = vst.msk [vmem:[#allocation2 + $0x10] sm:$0xf] %vm3204, %v10997
        %11089 = vst.msk [vmem:[#allocation2 + $0x14] sm:$0xf] %vm3204, %v10999
        %11090 = vst.msk [vmem:[#allocation2 + $0x18] sm:$0xf] %vm3204, %v11001
        %11091 = vst.msk [vmem:[#allocation2 + $0x1c] sm:$0xf] %vm3204, %v11003
        %11092 = vst.msk [vmem:[#allocation2 + $0x20] sm:$0xf] %vm3204, %v11005
        %11093 = vst.msk [vmem:[#allocation2 + $0x24] sm:$0xf] %vm3204, %v11007
        %11094 = vst.msk [vmem:[#allocation2 + $0x28] sm:$0xf] %vm3204, %v11009
        %11095 = vst.msk [vmem:[#allocation2 + $0x2c] sm:$0xf] %vm3204, %v11011
        %11096 = vst.msk [vmem:[#allocation2 + $0x30] sm:$0xf] %vm3204, %v11013
        %11097 = vst.msk [vmem:[#allocation2 + $0x34] sm:$0xf] %vm3204, %v11015
        %11098 = vst.msk [vmem:[#allocation2 + $0x38] sm:$0xf] %vm3204, %v11017
        %11099 = vst.msk [vmem:[#allocation2 + $0x3c] sm:$0xf] %vm3204, %v11019
        %11100 = vst.msk [vmem:[#allocation2 + $0x40] sm:$0xf] %vm3204, %v11021
        %11101 = vst.msk [vmem:[#allocation2 + $0x44] sm:$0xf] %vm3204, %v11023
        %11102 = vst.msk [vmem:[#allocation2 + $0x48] sm:$0xf] %vm3204, %v11025
        %11103 = vst.msk [vmem:[#allocation2 + $0x4c] sm:$0xf] %vm3204, %v11027
        %11104 = vst.msk [vmem:[#allocation2 + $0x50] sm:$0xf] %vm3204, %v11029
        %11105 = vst.msk [vmem:[#allocation2 + $0x54] sm:$0xf] %vm3204, %v11031
        %11106 = vst.msk [vmem:[#allocation2 + $0x58] sm:$0xf] %vm3204, %v11033
        %11107 = vst.msk [vmem:[#allocation2 + $0x5c] sm:$0xf] %vm3204, %v11035
        %11108 = vst.msk [vmem:[#allocation2 + $0x60] sm:$0xf] %vm3204, %v11037
        %11109 = vst.msk [vmem:[#allocation2 + $0x64] sm:$0xf] %vm3204, %v11039
        %11110 = vst.msk [vmem:[#allocation2 + $0x68] sm:$0xf] %vm3204, %v11041
        %11111 = vst.msk [vmem:[#allocation2 + $0x6c] sm:$0xf] %vm3204, %v11043
        %11112 = vst.msk [vmem:[#allocation2 + $0x70] sm:$0xf] %vm3204, %v11045
        %11113 = vst.msk [vmem:[#allocation2 + $0x74] sm:$0xf] %vm3204, %v11047
        %11114 = vst.msk [vmem:[#allocation2 + $0x78] sm:$0xf] %vm3204, %v11049
        %11115 = vst.msk [vmem:[#allocation2 + $0x7c] sm:$0xf] %vm3204, %v11051
        %v11116 = vld [vmem:[%s10731 + $0x8] sm:$0xf]
        %v11117 = vld [vmem:[%s10731 + $0xc] sm:$0xf]
        %v11118 = vld [vmem:[%s10731 + $0x18] sm:$0xf]
        %v11119 = vld [vmem:[%s10731 + $0x1c] sm:$0xf]
        %v11120 = vld [vmem:[%s10731 + $0x28] sm:$0xf]
        %v11121 = vld [vmem:[%s10731 + $0x2c] sm:$0xf]
        %v11122 = vld [vmem:[%s10731 + $0x38] sm:$0xf]
        %v11123 = vld [vmem:[%s10731 + $0x3c] sm:$0xf]
        %v11124 = vld [vmem:[%s10731 + $0x48] sm:$0xf]
        %v11125 = vld [vmem:[%s10731 + $0x4c] sm:$0xf]
        %v11126 = vld [vmem:[%s10731 + $0x58] sm:$0xf]
        %v11127 = vld [vmem:[%s10731 + $0x5c] sm:$0xf]
        %v11128 = vld [vmem:[%s10731 + $0x68] sm:$0xf]
        %v11129 = vld [vmem:[%s10731 + $0x6c] sm:$0xf]
        %v11130 = vld [vmem:[%s10731 + $0x78] sm:$0xf]
        %v11131 = vld [vmem:[%s10731 + $0x7c] sm:$0xf]
        %v11132 = vld [vmem:[%s10731 + $0x88] sm:$0xf]
        %v11133 = vld [vmem:[%s10731 + $0x8c] sm:$0xf]
        %v11134 = vld [vmem:[%s10731 + $0x98] sm:$0xf]
        %v11135 = vld [vmem:[%s10731 + $0x9c] sm:$0xf]
        %v11136 = vld [vmem:[%s10731 + $0xa8] sm:$0xf]
        %v11137 = vld [vmem:[%s10731 + $0xac] sm:$0xf]
        %v11138 = vld [vmem:[%s10731 + $0xb8] sm:$0xf]
        %v11139 = vld [vmem:[%s10731 + $0xbc] sm:$0xf]
        %v11140 = vld [vmem:[%s10731 + $0xc8] sm:$0xf]
        %v11141 = vld [vmem:[%s10731 + $0xcc] sm:$0xf]
        %v11142 = vld [vmem:[%s10731 + $0xd8] sm:$0xf]
        %v11143 = vld [vmem:[%s10731 + $0xdc] sm:$0xf]
        %v11144 = vld [vmem:[%s10731 + $0xe8] sm:$0xf]
        %v11145 = vld [vmem:[%s10731 + $0xec] sm:$0xf]
        %v11146 = vld [vmem:[%s10731 + $0xf8] sm:$0xf]
        %v11147 = vld [vmem:[%s10731 + $0xfc] sm:$0xf]
        %11180 = vrot.lane.b32.xlu0 %v11116, 112
        %v11181 = vpop.permute.xlu0 %11180
        %11182 = vrot.lane.b32.xlu0 %v11117, 112
        %v11183 = vpop.permute.xlu0 %11182
        %11184 = vrot.lane.b32.xlu0 %v11118, 112
        %v11185 = vpop.permute.xlu0 %11184
        %11186 = vrot.lane.b32.xlu0 %v11119, 112
        %v11187 = vpop.permute.xlu0 %11186
        %11188 = vrot.lane.b32.xlu0 %v11120, 112
        %v11189 = vpop.permute.xlu0 %11188
        %11190 = vrot.lane.b32.xlu0 %v11121, 112
        %v11191 = vpop.permute.xlu0 %11190
        %11192 = vrot.lane.b32.xlu0 %v11122, 112
        %v11193 = vpop.permute.xlu0 %11192
        %11194 = vrot.lane.b32.xlu0 %v11123, 112
        %v11195 = vpop.permute.xlu0 %11194
        %11196 = vrot.lane.b32.xlu0 %v11124, 112
        %v11197 = vpop.permute.xlu0 %11196
        %11198 = vrot.lane.b32.xlu0 %v11125, 112
        %v11199 = vpop.permute.xlu0 %11198
        %11200 = vrot.lane.b32.xlu0 %v11126, 112
        %v11201 = vpop.permute.xlu0 %11200
        %11202 = vrot.lane.b32.xlu0 %v11127, 112
        %v11203 = vpop.permute.xlu0 %11202
        %11204 = vrot.lane.b32.xlu0 %v11128, 112
        %v11205 = vpop.permute.xlu0 %11204
        %11206 = vrot.lane.b32.xlu0 %v11129, 112
        %v11207 = vpop.permute.xlu0 %11206
        %11208 = vrot.lane.b32.xlu0 %v11130, 112
        %v11209 = vpop.permute.xlu0 %11208
        %11210 = vrot.lane.b32.xlu0 %v11131, 112
        %v11211 = vpop.permute.xlu0 %11210
        %11212 = vrot.lane.b32.xlu0 %v11132, 112
        %v11213 = vpop.permute.xlu0 %11212
        %11214 = vrot.lane.b32.xlu0 %v11133, 112
        %v11215 = vpop.permute.xlu0 %11214
        %11216 = vrot.lane.b32.xlu0 %v11134, 112
        %v11217 = vpop.permute.xlu0 %11216
        %11218 = vrot.lane.b32.xlu0 %v11135, 112
        %v11219 = vpop.permute.xlu0 %11218
        %11220 = vrot.lane.b32.xlu0 %v11136, 112
        %v11221 = vpop.permute.xlu0 %11220
        %11222 = vrot.lane.b32.xlu0 %v11137, 112
        %v11223 = vpop.permute.xlu0 %11222
        %11224 = vrot.lane.b32.xlu0 %v11138, 112
        %v11225 = vpop.permute.xlu0 %11224
        %11226 = vrot.lane.b32.xlu0 %v11139, 112
        %v11227 = vpop.permute.xlu0 %11226
        %11228 = vrot.lane.b32.xlu0 %v11140, 112
        %v11229 = vpop.permute.xlu0 %11228
        %11230 = vrot.lane.b32.xlu0 %v11141, 112
        %v11231 = vpop.permute.xlu0 %11230
        %11232 = vrot.lane.b32.xlu0 %v11142, 112
        %v11233 = vpop.permute.xlu0 %11232
        %11234 = vrot.lane.b32.xlu0 %v11143, 112
        %v11235 = vpop.permute.xlu0 %11234
        %11236 = vrot.lane.b32.xlu0 %v11144, 112
        %v11237 = vpop.permute.xlu0 %11236
        %11238 = vrot.lane.b32.xlu0 %v11145, 112
        %v11239 = vpop.permute.xlu0 %11238
        %11240 = vrot.lane.b32.xlu0 %v11146, 112
        %v11241 = vpop.permute.xlu0 %11240
        %11242 = vrot.lane.b32.xlu0 %v11147, 112
        %v11243 = vpop.permute.xlu0 %11242
        %11276 = vst.msk [vmem:[#allocation2] sm:$0xf] %vm3765, %v11181
        %11277 = vst.msk [vmem:[#allocation2 + $0x4] sm:$0xf] %vm3765, %v11183
        %11278 = vst.msk [vmem:[#allocation2 + $0x8] sm:$0xf] %vm3765, %v11185
        %11279 = vst.msk [vmem:[#allocation2 + $0xc] sm:$0xf] %vm3765, %v11187
        %11280 = vst.msk [vmem:[#allocation2 + $0x10] sm:$0xf] %vm3765, %v11189
        %11281 = vst.msk [vmem:[#allocation2 + $0x14] sm:$0xf] %vm3765, %v11191
        %11282 = vst.msk [vmem:[#allocation2 + $0x18] sm:$0xf] %vm3765, %v11193
        %11283 = vst.msk [vmem:[#allocation2 + $0x1c] sm:$0xf] %vm3765, %v11195
        %11284 = vst.msk [vmem:[#allocation2 + $0x20] sm:$0xf] %vm3765, %v11197
        %11285 = vst.msk [vmem:[#allocation2 + $0x24] sm:$0xf] %vm3765, %v11199
        %11286 = vst.msk [vmem:[#allocation2 + $0x28] sm:$0xf] %vm3765, %v11201
        %11287 = vst.msk [vmem:[#allocation2 + $0x2c] sm:$0xf] %vm3765, %v11203
        %11288 = vst.msk [vmem:[#allocation2 + $0x30] sm:$0xf] %vm3765, %v11205
        %11289 = vst.msk [vmem:[#allocation2 + $0x34] sm:$0xf] %vm3765, %v11207
        %11290 = vst.msk [vmem:[#allocation2 + $0x38] sm:$0xf] %vm3765, %v11209
        %11291 = vst.msk [vmem:[#allocation2 + $0x3c] sm:$0xf] %vm3765, %v11211
        %11292 = vst.msk [vmem:[#allocation2 + $0x40] sm:$0xf] %vm3765, %v11213
        %11293 = vst.msk [vmem:[#allocation2 + $0x44] sm:$0xf] %vm3765, %v11215
        %11294 = vst.msk [vmem:[#allocation2 + $0x48] sm:$0xf] %vm3765, %v11217
        %11295 = vst.msk [vmem:[#allocation2 + $0x4c] sm:$0xf] %vm3765, %v11219
        %11296 = vst.msk [vmem:[#allocation2 + $0x50] sm:$0xf] %vm3765, %v11221
        %11297 = vst.msk [vmem:[#allocation2 + $0x54] sm:$0xf] %vm3765, %v11223
        %11298 = vst.msk [vmem:[#allocation2 + $0x58] sm:$0xf] %vm3765, %v11225
        %11299 = vst.msk [vmem:[#allocation2 + $0x5c] sm:$0xf] %vm3765, %v11227
        %11300 = vst.msk [vmem:[#allocation2 + $0x60] sm:$0xf] %vm3765, %v11229
        %11301 = vst.msk [vmem:[#allocation2 + $0x64] sm:$0xf] %vm3765, %v11231
        %11302 = vst.msk [vmem:[#allocation2 + $0x68] sm:$0xf] %vm3765, %v11233
        %11303 = vst.msk [vmem:[#allocation2 + $0x6c] sm:$0xf] %vm3765, %v11235
        %11304 = vst.msk [vmem:[#allocation2 + $0x70] sm:$0xf] %vm3765, %v11237
        %11305 = vst.msk [vmem:[#allocation2 + $0x74] sm:$0xf] %vm3765, %v11239
        %11306 = vst.msk [vmem:[#allocation2 + $0x78] sm:$0xf] %vm3765, %v11241
        %11307 = vst.msk [vmem:[#allocation2 + $0x7c] sm:$0xf] %vm3765, %v11243
        %v11308 = vld [vmem:[#allocation2] sm:$0xf]
        %v11309 = vld [vmem:[#allocation2 + $0x4] sm:$0xf]
        %v11310 = vld [vmem:[#allocation2 + $0x8] sm:$0xf]
        %v11311 = vld [vmem:[#allocation2 + $0xc] sm:$0xf]
        %v11312 = vld [vmem:[#allocation2 + $0x10] sm:$0xf]
        %v11313 = vld [vmem:[#allocation2 + $0x14] sm:$0xf]
        %v11314 = vld [vmem:[#allocation2 + $0x18] sm:$0xf]
        %v11315 = vld [vmem:[#allocation2 + $0x1c] sm:$0xf]
        %v11316 = vld [vmem:[#allocation2 + $0x20] sm:$0xf]
        %v11317 = vld [vmem:[#allocation2 + $0x24] sm:$0xf]
        %v11318 = vld [vmem:[#allocation2 + $0x28] sm:$0xf]
        %v11319 = vld [vmem:[#allocation2 + $0x2c] sm:$0xf]
        %v11320 = vld [vmem:[#allocation2 + $0x30] sm:$0xf]
        %v11321 = vld [vmem:[#allocation2 + $0x34] sm:$0xf]
        %v11322 = vld [vmem:[#allocation2 + $0x38] sm:$0xf]
        %v11323 = vld [vmem:[#allocation2 + $0x3c] sm:$0xf]
        %v11324 = vld [vmem:[#allocation2 + $0x40] sm:$0xf]
        %v11325 = vld [vmem:[#allocation2 + $0x44] sm:$0xf]
        %v11326 = vld [vmem:[#allocation2 + $0x48] sm:$0xf]
        %v11327 = vld [vmem:[#allocation2 + $0x4c] sm:$0xf]
        %v11328 = vld [vmem:[#allocation2 + $0x50] sm:$0xf]
        %v11329 = vld [vmem:[#allocation2 + $0x54] sm:$0xf]
        %v11330 = vld [vmem:[#allocation2 + $0x58] sm:$0xf]
        %v11331 = vld [vmem:[#allocation2 + $0x5c] sm:$0xf]
        %v11332 = vld [vmem:[#allocation2 + $0x60] sm:$0xf]
        %v11333 = vld [vmem:[#allocation2 + $0x64] sm:$0xf]
        %v11334 = vld [vmem:[#allocation2 + $0x68] sm:$0xf]
        %v11335 = vld [vmem:[#allocation2 + $0x6c] sm:$0xf]
        %v11336 = vld [vmem:[#allocation2 + $0x70] sm:$0xf]
        %v11337 = vld [vmem:[#allocation2 + $0x74] sm:$0xf]
        %v11338 = vld [vmem:[#allocation2 + $0x78] sm:$0xf]
        %v11339 = vld [vmem:[#allocation2 + $0x7c] sm:$0xf]
        %s11340 = scalar_lea.vmem %s1, 192
        %v11341 = vld [vmem:[%s11340] sm:$0xf]
        %v11342 = vld [vmem:[%s11340 + $0x4] sm:$0xf]
        %v11343 = vld [vmem:[%s11340 + $0x8] sm:$0xf]
        %v11344 = vld [vmem:[%s11340 + $0xc] sm:$0xf]
        %v11345 = vld [vmem:[%s11340 + $0x10] sm:$0xf]
        %v11346 = vld [vmem:[%s11340 + $0x14] sm:$0xf]
        %v11347 = vld [vmem:[%s11340 + $0x18] sm:$0xf]
        %v11348 = vld [vmem:[%s11340 + $0x1c] sm:$0xf]
        %v11349 = vld [vmem:[%s11340 + $0x20] sm:$0xf]
        %v11350 = vld [vmem:[%s11340 + $0x24] sm:$0xf]
        %v11351 = vld [vmem:[%s11340 + $0x28] sm:$0xf]
        %v11352 = vld [vmem:[%s11340 + $0x2c] sm:$0xf]
        %v11353 = vld [vmem:[%s11340 + $0x30] sm:$0xf]
        %v11354 = vld [vmem:[%s11340 + $0x34] sm:$0xf]
        %v11355 = vld [vmem:[%s11340 + $0x38] sm:$0xf]
        %v11356 = vld [vmem:[%s11340 + $0x3c] sm:$0xf]
        %v11389 = vunpack.c.l.b16 %v11308
        %v11390 = vunpack.c.l.b16 %v11309
        %v11391 = vunpack.c.l.b16 %v11310
        %v11392 = vunpack.c.l.b16 %v11311
        %v11393 = vunpack.c.l.b16 %v11312
        %v11394 = vunpack.c.l.b16 %v11313
        %v11395 = vunpack.c.l.b16 %v11314
        %v11396 = vunpack.c.l.b16 %v11315
        %v11397 = vunpack.c.l.b16 %v11316
        %v11398 = vunpack.c.l.b16 %v11317
        %v11399 = vunpack.c.l.b16 %v11318
        %v11400 = vunpack.c.l.b16 %v11319
        %v11401 = vunpack.c.l.b16 %v11320
        %v11402 = vunpack.c.l.b16 %v11321
        %v11403 = vunpack.c.l.b16 %v11322
        %v11404 = vunpack.c.l.b16 %v11323
        %v11405 = vunpack.c.l.b16 %v11324
        %v11406 = vunpack.c.l.b16 %v11325
        %v11407 = vunpack.c.l.b16 %v11326
        %v11408 = vunpack.c.l.b16 %v11327
        %v11409 = vunpack.c.l.b16 %v11328
        %v11410 = vunpack.c.l.b16 %v11329
        %v11411 = vunpack.c.l.b16 %v11330
        %v11412 = vunpack.c.l.b16 %v11331
        %v11413 = vunpack.c.l.b16 %v11332
        %v11414 = vunpack.c.l.b16 %v11333
        %v11415 = vunpack.c.l.b16 %v11334
        %v11416 = vunpack.c.l.b16 %v11335
        %v11417 = vunpack.c.l.b16 %v11336
        %v11418 = vunpack.c.l.b16 %v11337
        %v11419 = vunpack.c.l.b16 %v11338
        %v11420 = vunpack.c.l.b16 %v11339
        %v11421 = vpack.c.b16 %v11390, %v11389
        %v11422 = vpack.c.b16 %v11392, %v11391
        %v11423 = vpack.c.b16 %v11394, %v11393
        %v11424 = vpack.c.b16 %v11396, %v11395
        %v11425 = vpack.c.b16 %v11398, %v11397
        %v11426 = vpack.c.b16 %v11400, %v11399
        %v11427 = vpack.c.b16 %v11402, %v11401
        %v11428 = vpack.c.b16 %v11404, %v11403
        %v11429 = vpack.c.b16 %v11406, %v11405
        %v11430 = vpack.c.b16 %v11408, %v11407
        %v11431 = vpack.c.b16 %v11410, %v11409
        %v11432 = vpack.c.b16 %v11412, %v11411
        %v11433 = vpack.c.b16 %v11414, %v11413
        %v11434 = vpack.c.b16 %v11416, %v11415
        %v11435 = vpack.c.b16 %v11418, %v11417
        %v11436 = vpack.c.b16 %v11420, %v11419
        %v11469 = vunpack.c.l.b16 %v11341
        %v11470 = vunpack.c.l.b16 %v11342
        %v11471 = vunpack.c.l.b16 %v11343
        %v11472 = vunpack.c.l.b16 %v11344
        %v11473 = vunpack.c.l.b16 %v11345
        %v11474 = vunpack.c.l.b16 %v11346
        %v11475 = vunpack.c.l.b16 %v11347
        %v11476 = vunpack.c.l.b16 %v11348
        %v11477 = vunpack.c.l.b16 %v11349
        %v11478 = vunpack.c.l.b16 %v11350
        %v11479 = vunpack.c.l.b16 %v11351
        %v11480 = vunpack.c.l.b16 %v11352
        %v11481 = vunpack.c.l.b16 %v11353
        %v11482 = vunpack.c.l.b16 %v11354
        %v11483 = vunpack.c.l.b16 %v11355
        %v11484 = vunpack.c.l.b16 %v11356
        %v11485 = vpack.c.b16 %v11470, %v11469
        %v11486 = vpack.c.b16 %v11472, %v11471
        %v11487 = vpack.c.b16 %v11474, %v11473
        %v11488 = vpack.c.b16 %v11476, %v11475
        %v11489 = vpack.c.b16 %v11478, %v11477
        %v11490 = vpack.c.b16 %v11480, %v11479
        %v11491 = vpack.c.b16 %v11482, %v11481
        %v11492 = vpack.c.b16 %v11484, %v11483
        %11501 = vmatprep.subr.bf16.mxu0 0
        %11502 = vmatpush1.bf16.msra.mxu0 %v11492
        %11503 = vmatprep.subr.bf16.mxu0 0
        %11504 = vmatpush1.bf16.msra.mxu0 %v11491
        %11505 = vmatprep.subr.bf16.mxu0 0
        %11506 = vmatpush1.bf16.msra.mxu0 %v11490
        %11507 = vmatprep.subr.bf16.mxu0 0
        %11508 = vmatpush1.bf16.msra.mxu0 %v11489
        %11509 = vmatprep.subr.bf16.mxu0 0
        %11510 = vmatpush1.bf16.msra.mxu0 %v11488
        %11511 = vmatprep.subr.bf16.mxu0 0
        %11512 = vmatpush1.bf16.msra.mxu0 %v11487
        %11513 = vmatprep.subr.bf16.mxu0 0
        %11514 = vmatpush1.bf16.msra.mxu0 %v11486
        %11515 = vmatprep.subr.bf16.mxu0 0
        %11516 = vmatpush1.bf16.msra.mxu0 %v11485
        %11517 = vmatprep.subr.bf16.mxu0 0
        %11518 = vmatpush2.bf16.msra.mxu0 0
        %11519 = vmatprep.subr.bf16.mxu0 0
        %11520 = vmatpush2.bf16.msra.mxu0 0
        %11521 = vmatprep.subr.bf16.mxu0 0
        %11522 = vmatpush2.bf16.msra.mxu0 0
        %11523 = vmatprep.subr.bf16.mxu0 0
        %11524 = vmatpush2.bf16.msra.mxu0 0
        %11525 = vmatprep.subr.bf16.mxu0 0
        %11526 = vmatpush2.bf16.msra.mxu0 0
        %11527 = vmatprep.subr.bf16.mxu0 0
        %11528 = vmatpush2.bf16.msra.mxu0 0
        %11529 = vmatprep.subr.bf16.mxu0 0
        %11530 = vmatpush2.bf16.msra.mxu0 0
        %11531 = vmatprep.subr.bf16.mxu0 0
        %11532 = vmatpush2.bf16.msra.mxu0 0
        %11533 = vmatprep.mubr.bf16.mxu0 0
        %11534 = vmatmul.mubr.bf16.gmra.mxu0 %v11421
        %v11535 = vpop.f32.mrf.mxu0
        %v11536 = vadd.f32 0.0, %v11535
        %v11537 = vpop.f32.mrf.mxu0
        %v11538 = vpop.f32.mrf.mxu0
        %v11539 = vadd.f32 0.0, %v11538
        %v11540 = vpop.f32.mrf.mxu0
        %11541 = vmatprep.mubr.bf16.mxu0 0
        %11542 = vmatmul.mubr.bf16.gmra.mxu0 %v11422
        %v11543 = vpop.f32.mrf.mxu0
        %v11544 = vadd.f32 0.0, %v11543
        %v11545 = vpop.f32.mrf.mxu0
        %v11546 = vpop.f32.mrf.mxu0
        %v11547 = vadd.f32 0.0, %v11546
        %v11548 = vpop.f32.mrf.mxu0
        %11549 = vmatprep.mubr.bf16.mxu0 0
        %11550 = vmatmul.mubr.bf16.gmra.mxu0 %v11423
        %v11551 = vpop.f32.mrf.mxu0
        %v11552 = vadd.f32 0.0, %v11551
        %v11553 = vpop.f32.mrf.mxu0
        %v11554 = vpop.f32.mrf.mxu0
        %v11555 = vadd.f32 0.0, %v11554
        %v11556 = vpop.f32.mrf.mxu0
        %11557 = vmatprep.mubr.bf16.mxu0 0
        %11558 = vmatmul.mubr.bf16.gmra.mxu0 %v11424
        %v11559 = vpop.f32.mrf.mxu0
        %v11560 = vadd.f32 0.0, %v11559
        %v11561 = vpop.f32.mrf.mxu0
        %v11562 = vpop.f32.mrf.mxu0
        %v11563 = vadd.f32 0.0, %v11562
        %v11564 = vpop.f32.mrf.mxu0
        %11565 = vmatprep.mubr.bf16.mxu0 0
        %11566 = vmatmul.mubr.bf16.gmra.mxu0 %v11425
        %v11567 = vpop.f32.mrf.mxu0
        %v11568 = vadd.f32 0.0, %v11567
        %v11569 = vpop.f32.mrf.mxu0
        %v11570 = vpop.f32.mrf.mxu0
        %v11571 = vadd.f32 0.0, %v11570
        %v11572 = vpop.f32.mrf.mxu0
        %11573 = vmatprep.mubr.bf16.mxu0 0
        %11574 = vmatmul.mubr.bf16.gmra.mxu0 %v11426
        %v11575 = vpop.f32.mrf.mxu0
        %v11576 = vadd.f32 0.0, %v11575
        %v11577 = vpop.f32.mrf.mxu0
        %v11578 = vpop.f32.mrf.mxu0
        %v11579 = vadd.f32 0.0, %v11578
        %v11580 = vpop.f32.mrf.mxu0
        %11581 = vmatprep.mubr.bf16.mxu0 0
        %11582 = vmatmul.mubr.bf16.gmra.mxu0 %v11427
        %v11583 = vpop.f32.mrf.mxu0
        %v11584 = vadd.f32 0.0, %v11583
        %v11585 = vpop.f32.mrf.mxu0
        %v11586 = vpop.f32.mrf.mxu0
        %v11587 = vadd.f32 0.0, %v11586
        %v11588 = vpop.f32.mrf.mxu0
        %11589 = vmatprep.mubr.bf16.mxu0 0
        %11590 = vmatmul.mubr.bf16.gmra.mxu0 %v11428
        %v11591 = vpop.f32.mrf.mxu0
        %v11592 = vadd.f32 0.0, %v11591
        %v11593 = vpop.f32.mrf.mxu0
        %v11594 = vpop.f32.mrf.mxu0
        %v11595 = vadd.f32 0.0, %v11594
        %v11596 = vpop.f32.mrf.mxu0
        %11597 = vmatprep.mubr.bf16.mxu0 0
        %11598 = vmatmul.mubr.bf16.gmra.mxu0 %v11429
        %v11599 = vpop.f32.mrf.mxu0
        %v11600 = vadd.f32 0.0, %v11599
        %v11601 = vpop.f32.mrf.mxu0
        %v11602 = vpop.f32.mrf.mxu0
        %v11603 = vadd.f32 0.0, %v11602
        %v11604 = vpop.f32.mrf.mxu0
        %11605 = vmatprep.mubr.bf16.mxu0 0
        %11606 = vmatmul.mubr.bf16.gmra.mxu0 %v11430
        %v11607 = vpop.f32.mrf.mxu0
        %v11608 = vadd.f32 0.0, %v11607
        %v11609 = vpop.f32.mrf.mxu0
        %v11610 = vpop.f32.mrf.mxu0
        %v11611 = vadd.f32 0.0, %v11610
        %v11612 = vpop.f32.mrf.mxu0
        %11613 = vmatprep.mubr.bf16.mxu0 0
        %11614 = vmatmul.mubr.bf16.gmra.mxu0 %v11431
        %v11615 = vpop.f32.mrf.mxu0
        %v11616 = vadd.f32 0.0, %v11615
        %v11617 = vpop.f32.mrf.mxu0
        %v11618 = vpop.f32.mrf.mxu0
        %v11619 = vadd.f32 0.0, %v11618
        %v11620 = vpop.f32.mrf.mxu0
        %11621 = vmatprep.mubr.bf16.mxu0 0
        %11622 = vmatmul.mubr.bf16.gmra.mxu0 %v11432
        %v11623 = vpop.f32.mrf.mxu0
        %v11624 = vadd.f32 0.0, %v11623
        %v11625 = vpop.f32.mrf.mxu0
        %v11626 = vpop.f32.mrf.mxu0
        %v11627 = vadd.f32 0.0, %v11626
        %v11628 = vpop.f32.mrf.mxu0
        %11629 = vmatprep.mubr.bf16.mxu0 0
        %11630 = vmatmul.mubr.bf16.gmra.mxu0 %v11433
        %v11631 = vpop.f32.mrf.mxu0
        %v11632 = vadd.f32 0.0, %v11631
        %v11633 = vpop.f32.mrf.mxu0
        %v11634 = vpop.f32.mrf.mxu0
        %v11635 = vadd.f32 0.0, %v11634
        %v11636 = vpop.f32.mrf.mxu0
        %11637 = vmatprep.mubr.bf16.mxu0 0
        %11638 = vmatmul.mubr.bf16.gmra.mxu0 %v11434
        %v11639 = vpop.f32.mrf.mxu0
        %v11640 = vadd.f32 0.0, %v11639
        %v11641 = vpop.f32.mrf.mxu0
        %v11642 = vpop.f32.mrf.mxu0
        %v11643 = vadd.f32 0.0, %v11642
        %v11644 = vpop.f32.mrf.mxu0
        %11645 = vmatprep.mubr.bf16.mxu0 0
        %11646 = vmatmul.mubr.bf16.gmra.mxu0 %v11435
        %v11647 = vpop.f32.mrf.mxu0
        %v11648 = vadd.f32 0.0, %v11647
        %v11649 = vpop.f32.mrf.mxu0
        %v11650 = vpop.f32.mrf.mxu0
        %v11651 = vadd.f32 0.0, %v11650
        %v11652 = vpop.f32.mrf.mxu0
        %11653 = vmatprep.mubr.bf16.mxu0 0
        %11654 = vmatmul.mubr.bf16.gmra.mxu0 %v11436
        %v11655 = vpop.f32.mrf.mxu0
        %v11656 = vadd.f32 0.0, %v11655
        %v11657 = vpop.f32.mrf.mxu0
        %v11658 = vpop.f32.mrf.mxu0
        %v11659 = vadd.f32 0.0, %v11658
        %v11660 = vpop.f32.mrf.mxu0
        %11661 = vdwg.mxu0
        %11694 = vrot.lane.b32.xlu0 %v11536, 12
        %v11695 = vpop.permute.xlu0 %11694
        %11696 = vrot.lane.b32.xlu0 %v11539, 12
        %v11697 = vpop.permute.xlu0 %11696
        %11698 = vrot.lane.b32.xlu0 %v11544, 12
        %v11699 = vpop.permute.xlu0 %11698
        %11700 = vrot.lane.b32.xlu0 %v11547, 12
        %v11701 = vpop.permute.xlu0 %11700
        %11702 = vrot.lane.b32.xlu0 %v11552, 12
        %v11703 = vpop.permute.xlu0 %11702
        %11704 = vrot.lane.b32.xlu0 %v11555, 12
        %v11705 = vpop.permute.xlu0 %11704
        %11706 = vrot.lane.b32.xlu0 %v11560, 12
        %v11707 = vpop.permute.xlu0 %11706
        %11708 = vrot.lane.b32.xlu0 %v11563, 12
        %v11709 = vpop.permute.xlu0 %11708
        %11710 = vrot.lane.b32.xlu0 %v11568, 12
        %v11711 = vpop.permute.xlu0 %11710
        %11712 = vrot.lane.b32.xlu0 %v11571, 12
        %v11713 = vpop.permute.xlu0 %11712
        %11714 = vrot.lane.b32.xlu0 %v11576, 12
        %v11715 = vpop.permute.xlu0 %11714
        %11716 = vrot.lane.b32.xlu0 %v11579, 12
        %v11717 = vpop.permute.xlu0 %11716
        %11718 = vrot.lane.b32.xlu0 %v11584, 12
        %v11719 = vpop.permute.xlu0 %11718
        %11720 = vrot.lane.b32.xlu0 %v11587, 12
        %v11721 = vpop.permute.xlu0 %11720
        %11722 = vrot.lane.b32.xlu0 %v11592, 12
        %v11723 = vpop.permute.xlu0 %11722
        %11724 = vrot.lane.b32.xlu0 %v11595, 12
        %v11725 = vpop.permute.xlu0 %11724
        %11726 = vrot.lane.b32.xlu0 %v11600, 12
        %v11727 = vpop.permute.xlu0 %11726
        %11728 = vrot.lane.b32.xlu0 %v11603, 12
        %v11729 = vpop.permute.xlu0 %11728
        %11730 = vrot.lane.b32.xlu0 %v11608, 12
        %v11731 = vpop.permute.xlu0 %11730
        %11732 = vrot.lane.b32.xlu0 %v11611, 12
        %v11733 = vpop.permute.xlu0 %11732
        %11734 = vrot.lane.b32.xlu0 %v11616, 12
        %v11735 = vpop.permute.xlu0 %11734
        %11736 = vrot.lane.b32.xlu0 %v11619, 12
        %v11737 = vpop.permute.xlu0 %11736
        %11738 = vrot.lane.b32.xlu0 %v11624, 12
        %v11739 = vpop.permute.xlu0 %11738
        %11740 = vrot.lane.b32.xlu0 %v11627, 12
        %v11741 = vpop.permute.xlu0 %11740
        %11742 = vrot.lane.b32.xlu0 %v11632, 12
        %v11743 = vpop.permute.xlu0 %11742
        %11744 = vrot.lane.b32.xlu0 %v11635, 12
        %v11745 = vpop.permute.xlu0 %11744
        %11746 = vrot.lane.b32.xlu0 %v11640, 12
        %v11747 = vpop.permute.xlu0 %11746
        %11748 = vrot.lane.b32.xlu0 %v11643, 12
        %v11749 = vpop.permute.xlu0 %11748
        %11750 = vrot.lane.b32.xlu0 %v11648, 12
        %v11751 = vpop.permute.xlu0 %11750
        %11752 = vrot.lane.b32.xlu0 %v11651, 12
        %v11753 = vpop.permute.xlu0 %11752
        %11754 = vrot.lane.b32.xlu0 %v11656, 12
        %v11755 = vpop.permute.xlu0 %11754
        %11756 = vrot.lane.b32.xlu0 %v11659, 12
        %v11757 = vpop.permute.xlu0 %11756
        %vm11790 = vcmask 130144
        %11791 = vst.msk [vmem:[#allocation3] sm:$0xff] %vm11790, %v11695
        %11792 = vst.msk [vmem:[#allocation3 + $0x8] sm:$0xff] %vm11790, %v11697
        %11793 = vst.msk [vmem:[#allocation3 + $0x10] sm:$0xff] %vm11790, %v11699
        %11794 = vst.msk [vmem:[#allocation3 + $0x18] sm:$0xff] %vm11790, %v11701
        %11795 = vst.msk [vmem:[#allocation3 + $0x20] sm:$0xff] %vm11790, %v11703
        %11796 = vst.msk [vmem:[#allocation3 + $0x28] sm:$0xff] %vm11790, %v11705
        %11797 = vst.msk [vmem:[#allocation3 + $0x30] sm:$0xff] %vm11790, %v11707
        %11798 = vst.msk [vmem:[#allocation3 + $0x38] sm:$0xff] %vm11790, %v11709
        %11799 = vst.msk [vmem:[#allocation3 + $0x40] sm:$0xff] %vm11790, %v11711
        %11800 = vst.msk [vmem:[#allocation3 + $0x48] sm:$0xff] %vm11790, %v11713
        %11801 = vst.msk [vmem:[#allocation3 + $0x50] sm:$0xff] %vm11790, %v11715
        %11802 = vst.msk [vmem:[#allocation3 + $0x58] sm:$0xff] %vm11790, %v11717
        %11803 = vst.msk [vmem:[#allocation3 + $0x60] sm:$0xff] %vm11790, %v11719
        %11804 = vst.msk [vmem:[#allocation3 + $0x68] sm:$0xff] %vm11790, %v11721
        %11805 = vst.msk [vmem:[#allocation3 + $0x70] sm:$0xff] %vm11790, %v11723
        %11806 = vst.msk [vmem:[#allocation3 + $0x78] sm:$0xff] %vm11790, %v11725
        %11807 = vst.msk [vmem:[#allocation3 + $0x80] sm:$0xff] %vm11790, %v11727
        %11808 = vst.msk [vmem:[#allocation3 + $0x88] sm:$0xff] %vm11790, %v11729
        %11809 = vst.msk [vmem:[#allocation3 + $0x90] sm:$0xff] %vm11790, %v11731
        %11810 = vst.msk [vmem:[#allocation3 + $0x98] sm:$0xff] %vm11790, %v11733
        %11811 = vst.msk [vmem:[#allocation3 + $0xa0] sm:$0xff] %vm11790, %v11735
        %11812 = vst.msk [vmem:[#allocation3 + $0xa8] sm:$0xff] %vm11790, %v11737
        %11813 = vst.msk [vmem:[#allocation3 + $0xb0] sm:$0xff] %vm11790, %v11739
        %11814 = vst.msk [vmem:[#allocation3 + $0xb8] sm:$0xff] %vm11790, %v11741
        %11815 = vst.msk [vmem:[#allocation3 + $0xc0] sm:$0xff] %vm11790, %v11743
        %11816 = vst.msk [vmem:[#allocation3 + $0xc8] sm:$0xff] %vm11790, %v11745
        %11817 = vst.msk [vmem:[#allocation3 + $0xd0] sm:$0xff] %vm11790, %v11747
        %11818 = vst.msk [vmem:[#allocation3 + $0xd8] sm:$0xff] %vm11790, %v11749
        %11819 = vst.msk [vmem:[#allocation3 + $0xe0] sm:$0xff] %vm11790, %v11751
        %11820 = vst.msk [vmem:[#allocation3 + $0xe8] sm:$0xff] %vm11790, %v11753
        %11821 = vst.msk [vmem:[#allocation3 + $0xf0] sm:$0xff] %vm11790, %v11755
        %11822 = vst.msk [vmem:[#allocation3 + $0xf8] sm:$0xff] %vm11790, %v11757
        %v11823 = vld [vmem:[%s1423 + $0x4] sm:$0xf]
        %v11824 = vld [vmem:[%s1423 + $0x8] sm:$0xf]
        %v11825 = vld [vmem:[%s1423 + $0x14] sm:$0xf]
        %v11826 = vld [vmem:[%s1423 + $0x18] sm:$0xf]
        %v11827 = vld [vmem:[%s1423 + $0x24] sm:$0xf]
        %v11828 = vld [vmem:[%s1423 + $0x28] sm:$0xf]
        %v11829 = vld [vmem:[%s1423 + $0x34] sm:$0xf]
        %v11830 = vld [vmem:[%s1423 + $0x38] sm:$0xf]
        %v11831 = vld [vmem:[%s1423 + $0x44] sm:$0xf]
        %v11832 = vld [vmem:[%s1423 + $0x48] sm:$0xf]
        %v11833 = vld [vmem:[%s1423 + $0x54] sm:$0xf]
        %v11834 = vld [vmem:[%s1423 + $0x58] sm:$0xf]
        %v11835 = vld [vmem:[%s1423 + $0x64] sm:$0xf]
        %v11836 = vld [vmem:[%s1423 + $0x68] sm:$0xf]
        %v11837 = vld [vmem:[%s1423 + $0x74] sm:$0xf]
        %v11838 = vld [vmem:[%s1423 + $0x78] sm:$0xf]
        %v11839 = vld [vmem:[%s1423 + $0x84] sm:$0xf]
        %v11840 = vld [vmem:[%s1423 + $0x88] sm:$0xf]
        %v11841 = vld [vmem:[%s1423 + $0x94] sm:$0xf]
        %v11842 = vld [vmem:[%s1423 + $0x98] sm:$0xf]
        %v11843 = vld [vmem:[%s1423 + $0xa4] sm:$0xf]
        %v11844 = vld [vmem:[%s1423 + $0xa8] sm:$0xf]
        %v11845 = vld [vmem:[%s1423 + $0xb4] sm:$0xf]
        %v11846 = vld [vmem:[%s1423 + $0xb8] sm:$0xf]
        %v11847 = vld [vmem:[%s1423 + $0xc4] sm:$0xf]
        %v11848 = vld [vmem:[%s1423 + $0xc8] sm:$0xf]
        %v11849 = vld [vmem:[%s1423 + $0xd4] sm:$0xf]
        %v11850 = vld [vmem:[%s1423 + $0xd8] sm:$0xf]
        %v11851 = vld [vmem:[%s1423 + $0xe4] sm:$0xf]
        %v11852 = vld [vmem:[%s1423 + $0xe8] sm:$0xf]
        %v11853 = vld [vmem:[%s1423 + $0xf4] sm:$0xf]
        %v11854 = vld [vmem:[%s1423 + $0xf8] sm:$0xf]
        %v11855 = vld [vmem:[#allocation3] sm:$0xff]
        %v11856 = vld [vmem:[#allocation3 + $0x8] sm:$0xff]
        %v11857 = vld [vmem:[#allocation3 + $0x10] sm:$0xff]
        %v11858 = vld [vmem:[#allocation3 + $0x18] sm:$0xff]
        %v11859 = vld [vmem:[#allocation3 + $0x20] sm:$0xff]
        %v11860 = vld [vmem:[#allocation3 + $0x28] sm:$0xff]
        %v11861 = vld [vmem:[#allocation3 + $0x30] sm:$0xff]
        %v11862 = vld [vmem:[#allocation3 + $0x38] sm:$0xff]
        %v11863 = vld [vmem:[#allocation3 + $0x40] sm:$0xff]
        %v11864 = vld [vmem:[#allocation3 + $0x48] sm:$0xff]
        %v11865 = vld [vmem:[#allocation3 + $0x50] sm:$0xff]
        %v11866 = vld [vmem:[#allocation3 + $0x58] sm:$0xff]
        %v11867 = vld [vmem:[#allocation3 + $0x60] sm:$0xff]
        %v11868 = vld [vmem:[#allocation3 + $0x68] sm:$0xff]
        %v11869 = vld [vmem:[#allocation3 + $0x70] sm:$0xff]
        %v11870 = vld [vmem:[#allocation3 + $0x78] sm:$0xff]
        %v11871 = vld [vmem:[#allocation3 + $0x80] sm:$0xff]
        %v11872 = vld [vmem:[#allocation3 + $0x88] sm:$0xff]
        %v11873 = vld [vmem:[#allocation3 + $0x90] sm:$0xff]
        %v11874 = vld [vmem:[#allocation3 + $0x98] sm:$0xff]
        %v11875 = vld [vmem:[#allocation3 + $0xa0] sm:$0xff]
        %v11876 = vld [vmem:[#allocation3 + $0xa8] sm:$0xff]
        %v11877 = vld [vmem:[#allocation3 + $0xb0] sm:$0xff]
        %v11878 = vld [vmem:[#allocation3 + $0xb8] sm:$0xff]
        %v11879 = vld [vmem:[#allocation3 + $0xc0] sm:$0xff]
        %v11880 = vld [vmem:[#allocation3 + $0xc8] sm:$0xff]
        %v11881 = vld [vmem:[#allocation3 + $0xd0] sm:$0xff]
        %v11882 = vld [vmem:[#allocation3 + $0xd8] sm:$0xff]
        %v11883 = vld [vmem:[#allocation3 + $0xe0] sm:$0xff]
        %v11884 = vld [vmem:[#allocation3 + $0xe8] sm:$0xff]
        %v11885 = vld [vmem:[#allocation3 + $0xf0] sm:$0xff]
        %v11886 = vld [vmem:[#allocation3 + $0xf8] sm:$0xff]
        %v11887 = vld [vmem:[%s2] sm:$0xf]
        %v11888 = vld [vmem:[%s2 + $0x4] sm:$0xf]
        %v11921 = vunpack.c.l.b16 %v11823
        %v11922 = vunpack.c.l.b16 %v11824
        %v11923 = vunpack.c.l.b16 %v11825
        %v11924 = vunpack.c.l.b16 %v11826
        %v11925 = vunpack.c.l.b16 %v11827
        %v11926 = vunpack.c.l.b16 %v11828
        %v11927 = vunpack.c.l.b16 %v11829
        %v11928 = vunpack.c.l.b16 %v11830
        %v11929 = vunpack.c.l.b16 %v11831
        %v11930 = vunpack.c.l.b16 %v11832
        %v11931 = vunpack.c.l.b16 %v11833
        %v11932 = vunpack.c.l.b16 %v11834
        %v11933 = vunpack.c.l.b16 %v11835
        %v11934 = vunpack.c.l.b16 %v11836
        %v11935 = vunpack.c.l.b16 %v11837
        %v11936 = vunpack.c.l.b16 %v11838
        %v11937 = vunpack.c.l.b16 %v11839
        %v11938 = vunpack.c.l.b16 %v11840
        %v11939 = vunpack.c.l.b16 %v11841
        %v11940 = vunpack.c.l.b16 %v11842
        %v11941 = vunpack.c.l.b16 %v11843
        %v11942 = vunpack.c.l.b16 %v11844
        %v11943 = vunpack.c.l.b16 %v11845
        %v11944 = vunpack.c.l.b16 %v11846
        %v11945 = vunpack.c.l.b16 %v11847
        %v11946 = vunpack.c.l.b16 %v11848
        %v11947 = vunpack.c.l.b16 %v11849
        %v11948 = vunpack.c.l.b16 %v11850
        %v11949 = vunpack.c.l.b16 %v11851
        %v11950 = vunpack.c.l.b16 %v11852
        %v11951 = vunpack.c.l.b16 %v11853
        %v11952 = vunpack.c.l.b16 %v11854
        %v11953 = vpack.c.b16 %v11922, %v11921
        %v11954 = vpack.c.b16 %v11924, %v11923
        %v11955 = vpack.c.b16 %v11926, %v11925
        %v11956 = vpack.c.b16 %v11928, %v11927
        %v11957 = vpack.c.b16 %v11930, %v11929
        %v11958 = vpack.c.b16 %v11932, %v11931
        %v11959 = vpack.c.b16 %v11934, %v11933
        %v11960 = vpack.c.b16 %v11936, %v11935
        %v11961 = vpack.c.b16 %v11938, %v11937
        %v11962 = vpack.c.b16 %v11940, %v11939
        %v11963 = vpack.c.b16 %v11942, %v11941
        %v11964 = vpack.c.b16 %v11944, %v11943
        %v11965 = vpack.c.b16 %v11946, %v11945
        %v11966 = vpack.c.b16 %v11948, %v11947
        %v11967 = vpack.c.b16 %v11950, %v11949
        %v11968 = vpack.c.b16 %v11952, %v11951
        %v11971 = vunpack.c.l.b16 %v11887
        %v11972 = vunpack.c.l.b16 %v11888
        %v11973 = vpack.c.b16 %v11972, %v11971
        %vm11975 = vcmask 130048
        %v11977 = vsel %vm11975, %v11953, 0
        %v11980 = vsel %vm11975, %v11954, 0
        %v11983 = vsel %vm11975, %v11955, 0
        %v11986 = vsel %vm11975, %v11956, 0
        %v11989 = vsel %vm11975, %v11957, 0
        %v11992 = vsel %vm11975, %v11958, 0
        %v11995 = vsel %vm11975, %v11959, 0
        %v11998 = vsel %vm11975, %v11960, 0
        %v12001 = vsel %vm11975, %v11961, 0
        %v12004 = vsel %vm11975, %v11962, 0
        %v12007 = vsel %vm11975, %v11963, 0
        %v12010 = vsel %vm11975, %v11964, 0
        %v12013 = vsel %vm11975, %v11965, 0
        %v12016 = vsel %vm11975, %v11966, 0
        %v12019 = vsel %vm11975, %v11967, 0
        %v12022 = vsel %vm11975, %v11968, 0
        %12024 = vmatprep.subr.bf16.mxu0 0
        %12025 = vmatpush1.bf16.msra.mxu0 0
        %12026 = vmatprep.subr.bf16.mxu0 0
        %12027 = vmatpush1.bf16.msra.mxu0 0
        %12028 = vmatprep.subr.bf16.mxu0 0
        %12029 = vmatpush1.bf16.msra.mxu0 0
        %12030 = vmatprep.subr.bf16.mxu0 0
        %12031 = vmatpush1.bf16.msra.mxu0 0
        %12032 = vmatprep.subr.bf16.mxu0 0
        %12033 = vmatpush1.bf16.msra.mxu0 0
        %12034 = vmatprep.subr.bf16.mxu0 0
        %12035 = vmatpush1.bf16.msra.mxu0 0
        %12036 = vmatprep.subr.bf16.mxu0 0
        %12037 = vmatpush1.bf16.msra.mxu0 0
        %12038 = vmatprep.subr.bf16.mxu0 0
        %12039 = vmatpush1.bf16.msra.mxu0 %v11973
        %12040 = vmatprep.subr.bf16.mxu0 0
        %12041 = vmatpush2.bf16.msra.mxu0 0
        %12042 = vmatprep.subr.bf16.mxu0 0
        %12043 = vmatpush2.bf16.msra.mxu0 0
        %12044 = vmatprep.subr.bf16.mxu0 0
        %12045 = vmatpush2.bf16.msra.mxu0 0
        %12046 = vmatprep.subr.bf16.mxu0 0
        %12047 = vmatpush2.bf16.msra.mxu0 0
        %12048 = vmatprep.subr.bf16.mxu0 0
        %12049 = vmatpush2.bf16.msra.mxu0 0
        %12050 = vmatprep.subr.bf16.mxu0 0
        %12051 = vmatpush2.bf16.msra.mxu0 0
        %12052 = vmatprep.subr.bf16.mxu0 0
        %12053 = vmatpush2.bf16.msra.mxu0 0
        %12054 = vmatprep.subr.bf16.mxu0 0
        %12055 = vmatpush2.bf16.msra.mxu0 0
        %12056 = vmatprep.mubr.bf16.mxu0 0
        %12057 = vmatmul.mubr.bf16.gmra.mxu0 %v11977
        %v12058 = vpop.f32.mrf.mxu0
        %v12059 = vadd.f32 0.0, %v12058
        %v12060 = vpop.f32.mrf.mxu0
        %v12061 = vpop.f32.mrf.mxu0
        %v12062 = vadd.f32 0.0, %v12061
        %v12063 = vpop.f32.mrf.mxu0
        %12064 = vmatprep.mubr.bf16.mxu0 0
        %12065 = vmatmul.mubr.bf16.gmra.mxu0 %v11980
        %v12066 = vpop.f32.mrf.mxu0
        %v12067 = vadd.f32 0.0, %v12066
        %v12068 = vpop.f32.mrf.mxu0
        %v12069 = vpop.f32.mrf.mxu0
        %v12070 = vadd.f32 0.0, %v12069
        %v12071 = vpop.f32.mrf.mxu0
        %12072 = vmatprep.mubr.bf16.mxu0 0
        %12073 = vmatmul.mubr.bf16.gmra.mxu0 %v11983
        %v12074 = vpop.f32.mrf.mxu0
        %v12075 = vadd.f32 0.0, %v12074
        %v12076 = vpop.f32.mrf.mxu0
        %v12077 = vpop.f32.mrf.mxu0
        %v12078 = vadd.f32 0.0, %v12077
        %v12079 = vpop.f32.mrf.mxu0
        %12080 = vmatprep.mubr.bf16.mxu0 0
        %12081 = vmatmul.mubr.bf16.gmra.mxu0 %v11986
        %v12082 = vpop.f32.mrf.mxu0
        %v12083 = vadd.f32 0.0, %v12082
        %v12084 = vpop.f32.mrf.mxu0
        %v12085 = vpop.f32.mrf.mxu0
        %v12086 = vadd.f32 0.0, %v12085
        %v12087 = vpop.f32.mrf.mxu0
        %12088 = vmatprep.mubr.bf16.mxu0 0
        %12089 = vmatmul.mubr.bf16.gmra.mxu0 %v11989
        %v12090 = vpop.f32.mrf.mxu0
        %v12091 = vadd.f32 0.0, %v12090
        %v12092 = vpop.f32.mrf.mxu0
        %v12093 = vpop.f32.mrf.mxu0
        %v12094 = vadd.f32 0.0, %v12093
        %v12095 = vpop.f32.mrf.mxu0
        %12096 = vmatprep.mubr.bf16.mxu0 0
        %12097 = vmatmul.mubr.bf16.gmra.mxu0 %v11992
        %v12098 = vpop.f32.mrf.mxu0
        %v12099 = vadd.f32 0.0, %v12098
        %v12100 = vpop.f32.mrf.mxu0
        %v12101 = vpop.f32.mrf.mxu0
        %v12102 = vadd.f32 0.0, %v12101
        %v12103 = vpop.f32.mrf.mxu0
        %12104 = vmatprep.mubr.bf16.mxu0 0
        %12105 = vmatmul.mubr.bf16.gmra.mxu0 %v11995
        %v12106 = vpop.f32.mrf.mxu0
        %v12107 = vadd.f32 0.0, %v12106
        %v12108 = vpop.f32.mrf.mxu0
        %v12109 = vpop.f32.mrf.mxu0
        %v12110 = vadd.f32 0.0, %v12109
        %v12111 = vpop.f32.mrf.mxu0
        %12112 = vmatprep.mubr.bf16.mxu0 0
        %12113 = vmatmul.mubr.bf16.gmra.mxu0 %v11998
        %v12114 = vpop.f32.mrf.mxu0
        %v12115 = vadd.f32 0.0, %v12114
        %v12116 = vpop.f32.mrf.mxu0
        %v12117 = vpop.f32.mrf.mxu0
        %v12118 = vadd.f32 0.0, %v12117
        %v12119 = vpop.f32.mrf.mxu0
        %12120 = vmatprep.mubr.bf16.mxu0 0
        %12121 = vmatmul.mubr.bf16.gmra.mxu0 %v12001
        %v12122 = vpop.f32.mrf.mxu0
        %v12123 = vadd.f32 0.0, %v12122
        %v12124 = vpop.f32.mrf.mxu0
        %v12125 = vpop.f32.mrf.mxu0
        %v12126 = vadd.f32 0.0, %v12125
        %v12127 = vpop.f32.mrf.mxu0
        %12128 = vmatprep.mubr.bf16.mxu0 0
        %12129 = vmatmul.mubr.bf16.gmra.mxu0 %v12004
        %v12130 = vpop.f32.mrf.mxu0
        %v12131 = vadd.f32 0.0, %v12130
        %v12132 = vpop.f32.mrf.mxu0
        %v12133 = vpop.f32.mrf.mxu0
        %v12134 = vadd.f32 0.0, %v12133
        %v12135 = vpop.f32.mrf.mxu0
        %12136 = vmatprep.mubr.bf16.mxu0 0
        %12137 = vmatmul.mubr.bf16.gmra.mxu0 %v12007
        %v12138 = vpop.f32.mrf.mxu0
        %v12139 = vadd.f32 0.0, %v12138
        %v12140 = vpop.f32.mrf.mxu0
        %v12141 = vpop.f32.mrf.mxu0
        %v12142 = vadd.f32 0.0, %v12141
        %v12143 = vpop.f32.mrf.mxu0
        %12144 = vmatprep.mubr.bf16.mxu0 0
        %12145 = vmatmul.mubr.bf16.gmra.mxu0 %v12010
        %v12146 = vpop.f32.mrf.mxu0
        %v12147 = vadd.f32 0.0, %v12146
        %v12148 = vpop.f32.mrf.mxu0
        %v12149 = vpop.f32.mrf.mxu0
        %v12150 = vadd.f32 0.0, %v12149
        %v12151 = vpop.f32.mrf.mxu0
        %12152 = vmatprep.mubr.bf16.mxu0 0
        %12153 = vmatmul.mubr.bf16.gmra.mxu0 %v12013
        %v12154 = vpop.f32.mrf.mxu0
        %v12155 = vadd.f32 0.0, %v12154
        %v12156 = vpop.f32.mrf.mxu0
        %v12157 = vpop.f32.mrf.mxu0
        %v12158 = vadd.f32 0.0, %v12157
        %v12159 = vpop.f32.mrf.mxu0
        %12160 = vmatprep.mubr.bf16.mxu0 0
        %12161 = vmatmul.mubr.bf16.gmra.mxu0 %v12016
        %v12162 = vpop.f32.mrf.mxu0
        %v12163 = vadd.f32 0.0, %v12162
        %v12164 = vpop.f32.mrf.mxu0
        %v12165 = vpop.f32.mrf.mxu0
        %v12166 = vadd.f32 0.0, %v12165
        %v12167 = vpop.f32.mrf.mxu0
        %12168 = vmatprep.mubr.bf16.mxu0 0
        %12169 = vmatmul.mubr.bf16.gmra.mxu0 %v12019
        %v12170 = vpop.f32.mrf.mxu0
        %v12171 = vadd.f32 0.0, %v12170
        %v12172 = vpop.f32.mrf.mxu0
        %v12173 = vpop.f32.mrf.mxu0
        %v12174 = vadd.f32 0.0, %v12173
        %v12175 = vpop.f32.mrf.mxu0
        %12176 = vmatprep.mubr.bf16.mxu0 0
        %12177 = vmatmul.mubr.bf16.gmra.mxu0 %v12022
        %v12178 = vpop.f32.mrf.mxu0
        %v12179 = vadd.f32 0.0, %v12178
        %v12180 = vpop.f32.mrf.mxu0
        %v12181 = vpop.f32.mrf.mxu0
        %v12182 = vadd.f32 0.0, %v12181
        %v12183 = vpop.f32.mrf.mxu0
        %12184 = vdwg.mxu0
        %v12185 = vadd.f32 %v11855, %v12059
        %v12186 = vadd.f32 %v11856, %v12062
        %v12187 = vadd.f32 %v11857, %v12067
        %v12188 = vadd.f32 %v11858, %v12070
        %v12189 = vadd.f32 %v11859, %v12075
        %v12190 = vadd.f32 %v11860, %v12078
        %v12191 = vadd.f32 %v11861, %v12083
        %v12192 = vadd.f32 %v11862, %v12086
        %v12193 = vadd.f32 %v11863, %v12091
        %v12194 = vadd.f32 %v11864, %v12094
        %v12195 = vadd.f32 %v11865, %v12099
        %v12196 = vadd.f32 %v11866, %v12102
        %v12197 = vadd.f32 %v11867, %v12107
        %v12198 = vadd.f32 %v11868, %v12110
        %v12199 = vadd.f32 %v11869, %v12115
        %v12200 = vadd.f32 %v11870, %v12118
        %v12201 = vadd.f32 %v11871, %v12123
        %v12202 = vadd.f32 %v11872, %v12126
        %v12203 = vadd.f32 %v11873, %v12131
        %v12204 = vadd.f32 %v11874, %v12134
        %v12205 = vadd.f32 %v11875, %v12139
        %v12206 = vadd.f32 %v11876, %v12142
        %v12207 = vadd.f32 %v11877, %v12147
        %v12208 = vadd.f32 %v11878, %v12150
        %v12209 = vadd.f32 %v11879, %v12155
        %v12210 = vadd.f32 %v11880, %v12158
        %v12211 = vadd.f32 %v11881, %v12163
        %v12212 = vadd.f32 %v11882, %v12166
        %v12213 = vadd.f32 %v11883, %v12171
        %v12214 = vadd.f32 %v11884, %v12174
        %v12215 = vadd.f32 %v11885, %v12179
        %v12216 = vadd.f32 %v11886, %v12182
        %v12217 = vld [vmem:[%s3] sm:$0x1]
        %v12219 = vlaneseq
        %v12220 = vshrl.u32 %v12219, 7
        %v12221 = vsub.s32 0, %v12220
        %v12222 = vrot.slane %v12217, %v12221
        %v12224 = vadd.f32 %v12185, %v12222
        %v12225 = vadd.f32 %v12186, %v12222
        %v12226 = vadd.f32 %v12187, %v12222
        %v12227 = vadd.f32 %v12188, %v12222
        %v12228 = vadd.f32 %v12189, %v12222
        %v12229 = vadd.f32 %v12190, %v12222
        %v12230 = vadd.f32 %v12191, %v12222
        %v12231 = vadd.f32 %v12192, %v12222
        %v12232 = vadd.f32 %v12193, %v12222
        %v12233 = vadd.f32 %v12194, %v12222
        %v12234 = vadd.f32 %v12195, %v12222
        %v12235 = vadd.f32 %v12196, %v12222
        %v12236 = vadd.f32 %v12197, %v12222
        %v12237 = vadd.f32 %v12198, %v12222
        %v12238 = vadd.f32 %v12199, %v12222
        %v12239 = vadd.f32 %v12200, %v12222
        %v12240 = vadd.f32 %v12201, %v12222
        %v12241 = vadd.f32 %v12202, %v12222
        %v12242 = vadd.f32 %v12203, %v12222
        %v12243 = vadd.f32 %v12204, %v12222
        %v12244 = vadd.f32 %v12205, %v12222
        %v12245 = vadd.f32 %v12206, %v12222
        %v12246 = vadd.f32 %v12207, %v12222
        %v12247 = vadd.f32 %v12208, %v12222
        %v12248 = vadd.f32 %v12209, %v12222
        %v12249 = vadd.f32 %v12210, %v12222
        %v12250 = vadd.f32 %v12211, %v12222
        %v12251 = vadd.f32 %v12212, %v12222
        %v12252 = vadd.f32 %v12213, %v12222
        %v12253 = vadd.f32 %v12214, %v12222
        %v12254 = vadd.f32 %v12215, %v12222
        %v12255 = vadd.f32 %v12216, %v12222
        %v12256 = vmax.f32 %v12224, 0.0
        %v12257 = vmax.f32 %v12225, 0.0
        %v12258 = vmax.f32 %v12226, 0.0
        %v12259 = vmax.f32 %v12227, 0.0
        %v12260 = vmax.f32 %v12228, 0.0
        %v12261 = vmax.f32 %v12229, 0.0
        %v12262 = vmax.f32 %v12230, 0.0
        %v12263 = vmax.f32 %v12231, 0.0
        %v12264 = vmax.f32 %v12232, 0.0
        %v12265 = vmax.f32 %v12233, 0.0
        %v12266 = vmax.f32 %v12234, 0.0
        %v12267 = vmax.f32 %v12235, 0.0
        %v12268 = vmax.f32 %v12236, 0.0
        %v12269 = vmax.f32 %v12237, 0.0
        %v12270 = vmax.f32 %v12238, 0.0
        %v12271 = vmax.f32 %v12239, 0.0
        %v12272 = vmax.f32 %v12240, 0.0
        %v12273 = vmax.f32 %v12241, 0.0
        %v12274 = vmax.f32 %v12242, 0.0
        %v12275 = vmax.f32 %v12243, 0.0
        %v12276 = vmax.f32 %v12244, 0.0
        %v12277 = vmax.f32 %v12245, 0.0
        %v12278 = vmax.f32 %v12246, 0.0
        %v12279 = vmax.f32 %v12247, 0.0
        %v12280 = vmax.f32 %v12248, 0.0
        %v12281 = vmax.f32 %v12249, 0.0
        %v12282 = vmax.f32 %v12250, 0.0
        %v12283 = vmax.f32 %v12251, 0.0
        %v12284 = vmax.f32 %v12252, 0.0
        %v12285 = vmax.f32 %v12253, 0.0
        %v12286 = vmax.f32 %v12254, 0.0
        %v12287 = vmax.f32 %v12255, 0.0
        %v12288 = vpack.c.bf16 %v12257, %v12256
        %v12289 = vpack.c.bf16 %v12259, %v12258
        %v12290 = vpack.c.bf16 %v12261, %v12260
        %v12291 = vpack.c.bf16 %v12263, %v12262
        %v12292 = vpack.c.bf16 %v12265, %v12264
        %v12293 = vpack.c.bf16 %v12267, %v12266
        %v12294 = vpack.c.bf16 %v12269, %v12268
        %v12295 = vpack.c.bf16 %v12271, %v12270
        %v12296 = vpack.c.bf16 %v12273, %v12272
        %v12297 = vpack.c.bf16 %v12275, %v12274
        %v12298 = vpack.c.bf16 %v12277, %v12276
        %v12299 = vpack.c.bf16 %v12279, %v12278
        %v12300 = vpack.c.bf16 %v12281, %v12280
        %v12301 = vpack.c.bf16 %v12283, %v12282
        %v12302 = vpack.c.bf16 %v12285, %v12284
        %v12303 = vpack.c.bf16 %v12287, %v12286
        %v12320 = vunpack.c.l.b16 %v12288
        %v12321 = vunpack.c.h.b16 %v12288
        %v12322 = vunpack.c.l.b16 %v12289
        %v12323 = vunpack.c.h.b16 %v12289
        %v12324 = vunpack.c.l.b16 %v12290
        %v12325 = vunpack.c.h.b16 %v12290
        %v12326 = vunpack.c.l.b16 %v12291
        %v12327 = vunpack.c.h.b16 %v12291
        %v12328 = vunpack.c.l.b16 %v12292
        %v12329 = vunpack.c.h.b16 %v12292
        %v12330 = vunpack.c.l.b16 %v12293
        %v12331 = vunpack.c.h.b16 %v12293
        %v12332 = vunpack.c.l.b16 %v12294
        %v12333 = vunpack.c.h.b16 %v12294
        %v12334 = vunpack.c.l.b16 %v12295
        %v12335 = vunpack.c.h.b16 %v12295
        %v12336 = vunpack.c.l.b16 %v12296
        %v12337 = vunpack.c.h.b16 %v12296
        %v12338 = vunpack.c.l.b16 %v12297
        %v12339 = vunpack.c.h.b16 %v12297
        %v12340 = vunpack.c.l.b16 %v12298
        %v12341 = vunpack.c.h.b16 %v12298
        %v12342 = vunpack.c.l.b16 %v12299
        %v12343 = vunpack.c.h.b16 %v12299
        %v12344 = vunpack.c.l.b16 %v12300
        %v12345 = vunpack.c.h.b16 %v12300
        %v12346 = vunpack.c.l.b16 %v12301
        %v12347 = vunpack.c.h.b16 %v12301
        %v12348 = vunpack.c.l.b16 %v12302
        %v12349 = vunpack.c.h.b16 %v12302
        %v12350 = vunpack.c.l.b16 %v12303
        %v12351 = vunpack.c.h.b16 %v12303
        %v12352 = vpack.c.b16 %v12320, %v12320
        %v12353 = vpack.c.b16 %v12321, %v12321
        %v12354 = vpack.c.b16 %v12322, %v12322
        %v12355 = vpack.c.b16 %v12323, %v12323
        %v12356 = vpack.c.b16 %v12324, %v12324
        %v12357 = vpack.c.b16 %v12325, %v12325
        %v12358 = vpack.c.b16 %v12326, %v12326
        %v12359 = vpack.c.b16 %v12327, %v12327
        %v12360 = vpack.c.b16 %v12328, %v12328
        %v12361 = vpack.c.b16 %v12329, %v12329
        %v12362 = vpack.c.b16 %v12330, %v12330
        %v12363 = vpack.c.b16 %v12331, %v12331
        %v12364 = vpack.c.b16 %v12332, %v12332
        %v12365 = vpack.c.b16 %v12333, %v12333
        %v12366 = vpack.c.b16 %v12334, %v12334
        %v12367 = vpack.c.b16 %v12335, %v12335
        %v12368 = vpack.c.b16 %v12336, %v12336
        %v12369 = vpack.c.b16 %v12337, %v12337
        %v12370 = vpack.c.b16 %v12338, %v12338
        %v12371 = vpack.c.b16 %v12339, %v12339
        %v12372 = vpack.c.b16 %v12340, %v12340
        %v12373 = vpack.c.b16 %v12341, %v12341
        %v12374 = vpack.c.b16 %v12342, %v12342
        %v12375 = vpack.c.b16 %v12343, %v12343
        %v12376 = vpack.c.b16 %v12344, %v12344
        %v12377 = vpack.c.b16 %v12345, %v12345
        %v12378 = vpack.c.b16 %v12346, %v12346
        %v12379 = vpack.c.b16 %v12347, %v12347
        %v12380 = vpack.c.b16 %v12348, %v12348
        %v12381 = vpack.c.b16 %v12349, %v12349
        %v12382 = vpack.c.b16 %v12350, %v12350
        %v12383 = vpack.c.b16 %v12351, %v12351
        %12416 = vst.msk [vmem:[%s190] sm:$0xf] %vm633, %v12352
        %12417 = vst.msk [vmem:[%s190 + $0x4] sm:$0xf] %vm633, %v12353
        %12418 = vst.msk [vmem:[%s190 + $0x8] sm:$0xf] %vm633, %v12354
        %12419 = vst.msk [vmem:[%s190 + $0xc] sm:$0xf] %vm633, %v12355
        %12420 = vst.msk [vmem:[%s190 + $0x10] sm:$0xf] %vm633, %v12356
        %12421 = vst.msk [vmem:[%s190 + $0x14] sm:$0xf] %vm633, %v12357
        %12422 = vst.msk [vmem:[%s190 + $0x18] sm:$0xf] %vm633, %v12358
        %12423 = vst.msk [vmem:[%s190 + $0x1c] sm:$0xf] %vm633, %v12359
        %12424 = vst.msk [vmem:[%s190 + $0x20] sm:$0xf] %vm633, %v12360
        %12425 = vst.msk [vmem:[%s190 + $0x24] sm:$0xf] %vm633, %v12361
        %12426 = vst.msk [vmem:[%s190 + $0x28] sm:$0xf] %vm633, %v12362
        %12427 = vst.msk [vmem:[%s190 + $0x2c] sm:$0xf] %vm633, %v12363
        %12428 = vst.msk [vmem:[%s190 + $0x30] sm:$0xf] %vm633, %v12364
        %12429 = vst.msk [vmem:[%s190 + $0x34] sm:$0xf] %vm633, %v12365
        %12430 = vst.msk [vmem:[%s190 + $0x38] sm:$0xf] %vm633, %v12366
        %12431 = vst.msk [vmem:[%s190 + $0x3c] sm:$0xf] %vm633, %v12367
        %12432 = vst.msk [vmem:[%s190 + $0x40] sm:$0xf] %vm633, %v12368
        %12433 = vst.msk [vmem:[%s190 + $0x44] sm:$0xf] %vm633, %v12369
        %12434 = vst.msk [vmem:[%s190 + $0x48] sm:$0xf] %vm633, %v12370
        %12435 = vst.msk [vmem:[%s190 + $0x4c] sm:$0xf] %vm633, %v12371
        %12436 = vst.msk [vmem:[%s190 + $0x50] sm:$0xf] %vm633, %v12372
        %12437 = vst.msk [vmem:[%s190 + $0x54] sm:$0xf] %vm633, %v12373
        %12438 = vst.msk [vmem:[%s190 + $0x58] sm:$0xf] %vm633, %v12374
        %12439 = vst.msk [vmem:[%s190 + $0x5c] sm:$0xf] %vm633, %v12375
        %12440 = vst.msk [vmem:[%s190 + $0x60] sm:$0xf] %vm633, %v12376
        %12441 = vst.msk [vmem:[%s190 + $0x64] sm:$0xf] %vm633, %v12377
        %12442 = vst.msk [vmem:[%s190 + $0x68] sm:$0xf] %vm633, %v12378
        %12443 = vst.msk [vmem:[%s190 + $0x6c] sm:$0xf] %vm633, %v12379
        %12444 = vst.msk [vmem:[%s190 + $0x70] sm:$0xf] %vm633, %v12380
        %12445 = vst.msk [vmem:[%s190 + $0x74] sm:$0xf] %vm633, %v12381
        %12446 = vst.msk [vmem:[%s190 + $0x78] sm:$0xf] %vm633, %v12382
        %12447 = vst.msk [vmem:[%s190 + $0x7c] sm:$0xf] %vm633, %v12383
        %s12448 = sand.u32 %s115, 1
        %s12449 = scalar_lea.sflag [#allocation5], %s12448
        %s12450 = sand.u32 %s115, 1
        %s12451 = smul.addr %s12450, 128
        %s12452 = scalar_lea.vmem [#allocation4], %s12451
        // Predicated region
        $region37: #{tpu_custom_call.1} parent=35 // pred_check
          %p12453 = pneg %p125
        $region38: #{tpu_custom_call.1} parent=35 // pred_check_branch
          %12455 = sbr.rel (%p12453) target = $region40
        $region39: #{tpu_custom_call.1} parent=35 // pred_region
          %s12457 = ssub.s32 2048, 2048
          %12458 = vsyncadd %s12449, %s12457
          %s12459 = smul.addr %s18, 32
          %s12460 = smul.addr %s12459, 64
          %s12461 = scalar_lea.hbm %s4, %s12460
          %s12462 = sshll.u32 %s12452, 4
          %s12463 = int_to_ptr.vmem [resolvable:$true] %s12462
          %12468 = dma.vmem_to_hbm [thread:$0]  %s12463, 2048, %s12461, %s12449, 64, 64, 4
        $region40: #{tpu_custom_call.1} parent=35 // pred_fallthru
          _
      $region36: #{tpu_custom_call.1} parent=5 // pred_fallthru
        _
      %p12469 = scmp.le.s32.totalorder 2, %s13
      // Predicated region
      $region41: #{tpu_custom_call.1} parent=5 // pred_check
        %p12470 = pneg %p12469
      $region42: #{tpu_custom_call.1} parent=5 // pred_check_branch
        %12472 = sbr.rel (%p12470) target = $region44
      $region43: #{tpu_custom_call.1} parent=5 // pred_region
        %s12473 = ssub.s32 %s13, 2
        // Predicated region
        $region45: #{tpu_custom_call.1} parent=43 // pred_check
          %p12474 = pneg %p131
        $region46: #{tpu_custom_call.1} parent=43 // pred_check_branch
          %12476 = sbr.rel (%p12474) target = $region48
        $region47: #{tpu_custom_call.1} parent=43 // pred_region
          %s12477 = sand.u32 %s116, 1
          %s12478 = scalar_lea.sflag [#allocation5], %s12477
          %s12479 = sand.u32 %s116, 1
          %s12480 = smul.addr %s12479, 128
          %s12481 = scalar_lea.vmem [#allocation4], %s12480
          %12482 = dma.done %s12478, 2048
        $region48: #{tpu_custom_call.1} parent=43 // pred_fallthru
          _
      $region44: #{tpu_custom_call.1} parent=5 // pred_fallthru
        _
    $region6: #{tpu_custom_call.1} parent=1 // loop_footer
      %s17 = sadd.s32 1, %s13
    $region7: #{tpu_custom_call.1} parent=1 // loop_footer_branch
      %12 = sbr.rel target = $region3
    $region8: #{tpu_custom_call.1} parent=1 // loop_exit
      _
    %12483 = vsyncpa [#allocation5], 1
    %s12484 = scalar_lea.sflag [#allocation5], 1
    %12485 = vsyncpa %s12484, 1

</llo_original>
